<compile_context>
chip_gen: v6e
topology: v6e:2x2x1
jax: 0.10.0
libtpu: 0.0.40
codegen_flags: <defaults>
</compile_context>

<pallas_src>
import functools

import jax
import jax.numpy as jnp
from jax.experimental import pallas as pl
from jax.experimental.pallas import tpu as pltpu


def _round_up(x, m):
    return ((x + m - 1) // m) * m


_VMEM_LIMIT = 32 * 1024 * 1024  # safe on v5e/v6e/v7x


# ----------------------------------------------------------------------------
# Tiled matmul kernel with fused bias + pre-activation + output activation
# ----------------------------------------------------------------------------

def _mm_kernel(a_ref, b_ref, bias_ref, o_ref, acc_ref, *, act_in, act_out):
    k = pl.program_id(2)

    @pl.when(k == 0)
    def _():
        acc_ref[...] = jnp.zeros_like(acc_ref)

    a = a_ref[...]
    # Pre-activation fused on the A tile (pointwise, commutes with im2col; pad
    # zeros map to zero under both lrelu and relu).
    if act_in == "lrelu":
        a = jnp.where(a > 0, a, a * 0.2)
    elif act_in == "relu":
        a = jnp.maximum(a, 0.0)

    acc_ref[...] += jnp.dot(a, b_ref[...], preferred_element_type=jnp.float32)

    @pl.when(k == pl.num_programs(2) - 1)
    def _():
        out = acc_ref[...] + bias_ref[...]
        if act_out == "tanh":
            out = jnp.tanh(out)
        o_ref[...] = out.astype(o_ref.dtype)


def matmul_bias_act(a, b, bias, act_in=None, act_out=None):
    """(M,K) @ (K,Nc) + bias, with fused pre/post activation.  Returns f32 (M,Nc)."""
    M, K = a.shape
    _, Nc = b.shape

    Npad = _round_up(Nc, 128)
    Kpad = _round_up(K, 128)
    tn = 256 if Npad % 256 == 0 else 128
    tk = 256 if Kpad % 256 == 0 else 128
    tm = 256 if M >= 256 else _round_up(M, 8)
    Mpad = _round_up(M, tm)

    a_p = jnp.pad(a.astype(jnp.bfloat16), ((0, Mpad - M), (0, Kpad - K)))
    b_p = jnp.pad(b.astype(jnp.bfloat16), ((0, Kpad - K), (0, Npad - Nc)))
    bias_p = jnp.pad(bias.astype(jnp.float32).reshape(1, Nc),
                     ((0, 0), (0, Npad - Nc)))

    grid = (Mpad // tm, Npad // tn, Kpad // tk)
    kern = functools.partial(_mm_kernel, act_in=act_in, act_out=act_out)

    out = pl.pallas_call(
        kern,
        out_shape=jax.ShapeDtypeStruct((Mpad, Npad), jnp.float32),
        grid_spec=pltpu.PrefetchScalarGridSpec(
            num_scalar_prefetch=0,
            grid=grid,
            in_specs=[pl.BlockSpec((tm, tk), lambda i, j, k: (i, k)),
                      pl.BlockSpec((tk, tn), lambda i, j, k: (k, j)),
                      pl.BlockSpec((1, tn), lambda i, j, k: (0, j))],
            out_specs=pl.BlockSpec((tm, tn), lambda i, j, k: (i, j)),
            scratch_shapes=[pltpu.VMEM((tm, tn), jnp.float32)]),
        compiler_params=pltpu.CompilerParams(
            dimension_semantics=("parallel", "parallel", "arbitrary"),
            vmem_limit_bytes=_VMEM_LIMIT),
    )(a_p, b_p, bias_p)
    return out[:M, :Nc]


# ----------------------------------------------------------------------------
# Tiled BatchNorm (training-mode batch statistics, affine weight=1 / bias=0)
# ----------------------------------------------------------------------------

def _bn_stats_kernel(x_ref, sum_ref, sq_ref, acc_s, acc_q):
    @pl.when(pl.program_id(0) == 0)
    def _():
        acc_s[...] = jnp.zeros_like(acc_s)
        acc_q[...] = jnp.zeros_like(acc_q)

    x = x_ref[...]
    acc_s[...] += jnp.sum(x, axis=0, keepdims=True)
    acc_q[...] += jnp.sum(x * x, axis=0, keepdims=True)

    @pl.when(pl.program_id(0) == pl.num_programs(0) - 1)
    def _():
        sum_ref[...] = acc_s[...]
        sq_ref[...] = acc_q[...]


def _bn_apply_kernel(x_ref, mean_ref, inv_ref, o_ref):
    o_ref[...] = (x_ref[...] - mean_ref[...]) * inv_ref[...]


def pallas_batchnorm(x_nhwc, eps=1e-5):
    N, H, W, C = x_nhwc.shape
    x = x_nhwc.astype(jnp.float32)
    total = N * H * W * C

    # Lane-dense folding: channels already a multiple of 128, or fold several
    # pixels' channels into one 128-lane row (C divides 128).
    if C % 128 == 0:
        Cl, fold = C, 1
    elif (128 % C == 0) and (total % 128 == 0):
        Cl, fold = 128, 128 // C
    else:
        Cl, fold = C, 1  # lane-sparse fallback (still correct)

    R = total // Cl
    x2 = x.reshape(R, Cl)
    rb = 512 if R >= 512 else _round_up(R, 8)
    Rp = _round_up(R, rb)
    if Rp != R:
        x2 = jnp.pad(x2, ((0, Rp - R), (0, 0)))  # zero rows: no effect on sums
    grid = (Rp // rb,)

    sums, sqs = pl.pallas_call(
        _bn_stats_kernel,
        out_shape=(jax.ShapeDtypeStruct((1, Cl), jnp.float32),
                   jax.ShapeDtypeStruct((1, Cl), jnp.float32)),
        grid_spec=pltpu.PrefetchScalarGridSpec(
            num_scalar_prefetch=0,
            grid=grid,
            in_specs=[pl.BlockSpec((rb, Cl), lambda i: (i, 0))],
            out_specs=[pl.BlockSpec((1, Cl), lambda i: (0, 0)),
                       pl.BlockSpec((1, Cl), lambda i: (0, 0))],
            scratch_shapes=[pltpu.VMEM((1, Cl), jnp.float32),
                            pltpu.VMEM((1, Cl), jnp.float32)]),
        compiler_params=pltpu.CompilerParams(
            dimension_semantics=("arbitrary",),
            vmem_limit_bytes=_VMEM_LIMIT),
    )(x2)

    cnt = jnp.float32(N * H * W)
    s_c = sums.reshape(fold, C).sum(axis=0)
    q_c = sqs.reshape(fold, C).sum(axis=0)
    mean_c = s_c / cnt
    var_c = jnp.maximum(q_c / cnt - mean_c * mean_c, 0.0)   # biased variance
    inv_c = jax.lax.rsqrt(var_c + eps)
    mean_l = jnp.tile(mean_c, fold).reshape(1, Cl)
    inv_l = jnp.tile(inv_c, fold).reshape(1, Cl)

    y2 = pl.pallas_call(
        _bn_apply_kernel,
        out_shape=jax.ShapeDtypeStruct((Rp, Cl), jnp.float32),
        grid_spec=pltpu.PrefetchScalarGridSpec(
            num_scalar_prefetch=0,
            grid=grid,
            in_specs=[pl.BlockSpec((rb, Cl), lambda i: (i, 0)),
                      pl.BlockSpec((1, Cl), lambda i: (0, 0)),
                      pl.BlockSpec((1, Cl), lambda i: (0, 0))],
            out_specs=pl.BlockSpec((rb, Cl), lambda i: (i, 0))),
        compiler_params=pltpu.CompilerParams(
            dimension_semantics=("parallel",),
            vmem_limit_bytes=_VMEM_LIMIT),
    )(x2, mean_l, inv_l)

    return y2[:R].reshape(N, H, W, C)


# ----------------------------------------------------------------------------
# Conv / ConvTranspose as (bf16) im2col + tiled Pallas matmul
# ----------------------------------------------------------------------------

def _im2col(x, k, s, p):
    """k x k patches, stride s, padding p.  Returns (M, k*k*C), (N, Ho, Wo)."""
    N, H, W, C = x.shape
    xp = jnp.pad(x, ((0, 0), (p, p), (p, p), (0, 0)))
    Ho = (H + 2 * p - k) // s + 1
    Wo = (W + 2 * p - k) // s + 1
    patches = []
    for dy in range(k):
        for dx in range(k):
            patches.append(xp[:, dy:dy + Ho * s:s, dx:dx + Wo * s:s, :])
    pat = jnp.stack(patches, axis=3)                     # (N, Ho, Wo, k*k, C)
    return pat.reshape(N * Ho * Wo, k * k * C), (N, Ho, Wo)


def conv_down(x_nhwc, w, bias=None, act_in=None):
    """[act_in ->] Conv2d(kernel=4, stride=2, pad=1).  w: (Cout, Cin, 4, 4)."""
    Cout = w.shape[0]
    a, (N, Ho, Wo) = _im2col(x_nhwc.astype(jnp.bfloat16), k=4, s=2, p=1)
    B = jnp.transpose(w, (2, 3, 1, 0)).reshape(-1, Cout)   # (kh*kw*Cin, Cout)
    if bias is None:
        bias = jnp.zeros((Cout,), jnp.float32)
    y = matmul_bias_act(a, B, bias, act_in=act_in)
    return y.reshape(N, Ho, Wo, Cout)


def conv_up(x_nhwc, w_t, bias=None, act_in="relu", act_out=None):
    """[act_in ->] ConvTranspose2d(4, stride=2, pad=1) [-> act_out].

    w_t: (Cin, Cout, 4, 4) (PyTorch ConvTranspose2d layout).
    Implemented as a 2x2 sub-pixel decomposition: 4 dense per-output-phase
    2x2 sub-convolutions (no zero-dilated input), then interleave.
    """
    N, H, W, Cin = x_nhwc.shape
    Cout = w_t.shape[1]
    if bias is None:
        bias = jnp.zeros((Cout,), jnp.float32)

    xp = jnp.pad(x_nhwc.astype(jnp.bfloat16), ((0, 0), (1, 1), (1, 1), (0, 0)))

    phase_outs = []
    for py in (0, 1):
        for px in (0, 1):
            cols, wts = [], []
            for dy in (0, 1):
                for dx in (0, 1):
                    oy = py + dy                      # offset into padded input
                    ox = px + dx
                    ky = (3 - 2 * dy) if py == 0 else (2 - 2 * dy)
                    kx = (3 - 2 * dx) if px == 0 else (2 - 2 * dx)
                    cols.append(xp[:, oy:oy + H, ox:ox + W, :])
                    wts.append(w_t[:, :, ky, kx])     # (Cin, Cout)
            a = jnp.stack(cols, axis=3).reshape(N * H * W, 4 * Cin)
            bmat = jnp.stack(wts, axis=0).reshape(4 * Cin, Cout)
            y = matmul_bias_act(a, bmat, bias, act_in=act_in, act_out=act_out)
            phase_outs.append(y.reshape(N, H, W, Cout))

    y = jnp.stack(phase_outs, axis=3)                 # (N, H, W, 4, Cout)
    y = y.reshape(N, H, W, 2, 2, Cout).transpose(0, 1, 3, 2, 4, 5)
    return y.reshape(N, 2 * H, 2 * W, Cout)


# ----------------------------------------------------------------------------
# U-Net parameters + forward (mirrors UnetSkipConnectionBlock)
# ----------------------------------------------------------------------------

def _init_block(key, outer_nc, inner_nc, input_nc=None, submodule=None,
                outermost=False, innermost=False):
    if input_nc is None:
        input_nc = outer_nc
    k1, k2, k3 = jax.random.split(key, 3)
    up_in = inner_nc if innermost else inner_nc * 2
    return {
        "outermost": outermost,
        "innermost": innermost,
        "down_w": 0.02 * jax.random.normal(k1, (inner_nc, input_nc, 4, 4), jnp.float32),
        "up_w": 0.02 * jax.random.normal(k2, (up_in, outer_nc, 4, 4), jnp.float32),
        # With BatchNorm norm_layer use_bias=False everywhere; only the
        # outermost ConvTranspose2d keeps its default bias=True.
        "up_b": (0.02 * jax.random.normal(k3, (outer_nc,), jnp.float32)
                 if outermost else jnp.zeros((outer_nc,), jnp.float32)),
        "sub": submodule,
    }


def init_unet_params(key, input_nc, output_nc, num_downs, ngf):
    keys = jax.random.split(key, num_downs + 1)
    ki = iter(range(len(keys)))
    blk = _init_block(keys[next(ki)], ngf * 8, ngf * 8, innermost=True)
    for _ in range(num_downs - 5):
        blk = _init_block(keys[next(ki)], ngf * 8, ngf * 8, submodule=blk)
    blk = _init_block(keys[next(ki)], ngf * 4, ngf * 8, submodule=blk)
    blk = _init_block(keys[next(ki)], ngf * 2, ngf * 4, submodule=blk)
    blk = _init_block(keys[next(ki)], ngf, ngf * 2, submodule=blk)
    blk = _init_block(keys[next(ki)], output_nc, ngf, input_nc=input_nc,
                      submodule=blk, outermost=True)
    return blk


def unet_block_forward(p, x_nhwc):
    outermost, innermost = p["outermost"], p["innermost"]
    # ---- down path: [downrelu ->] downconv [-> downnorm] (relu fused in matmul)
    h = conv_down(x_nhwc, p["down_w"],
                  act_in=None if outermost else "lrelu")
    if (not outermost) and (not innermost):
        h = pallas_batchnorm(h)                         # downnorm
    # ---- submodule ----
    if p["sub"] is not None:
        h = unet_block_forward(p["sub"], h)
    # ---- up path: uprelu -> upconv [-> tanh | upnorm] (relu/tanh fused) ----
    h = conv_up(h, p["up_w"], p["up_b"], act_in="relu",
                act_out="tanh" if outermost else None)
    if outermost:
        return h
    h = pallas_batchnorm(h)                             # upnorm
    # TODO(synk): use_dropout=False assumed; Dropout(0.5) (train-mode RNG) not modeled.
    # TODO(synk): write the up-conv output directly into the concat buffer
    # (channel-offset out BlockSpec) to avoid this extra full read+write.
    return jnp.concatenate([x_nhwc, h], axis=-1)        # torch.cat([x, model(x)], 1)


def unet_generator_forward(params, x_nchw):
    x_nhwc = jnp.transpose(x_nchw, (0, 2, 3, 1)).astype(jnp.float32)
    y_nhwc = unet_block_forward(params, x_nhwc)
    return jnp.transpose(y_nhwc, (0, 3, 1, 2))


# ----------------------------------------------------------------------------
# main
# ----------------------------------------------------------------------------

if __name__ == "__main__":
    # Small but structurally faithful config: num_downs=5 => spatial must be >= 32.
    input_nc, output_nc, num_downs, ngf = 3, 3, 5, 8
    N, H, W = 2, 32, 32

    key = jax.random.PRNGKey(0)
    k_params, k_x = jax.random.split(key)
    params = init_unet_params(k_params, input_nc, output_nc, num_downs, ngf)
    x = jax.random.normal(k_x, (N, input_nc, H, W), jnp.float32)   # NCHW like PyTorch

    fwd = jax.jit(lambda xx: unet_generator_forward(params, xx))
    y = jax.block_until_ready(fwd(x))

    assert y.shape == (N, output_nc, H, W), y.shape
    assert bool(jnp.all(jnp.isfinite(y)))
    assert bool(jnp.all(jnp.abs(y) <= 1.0 + 1e-6))   # final Tanh bound

    print("KERNEL_OK")
</pallas_src>

<mosaic_0001>
module attributes {stable_mosaic.version = 11 : i64} {
  func.func @_mm_kernel(%arg0: i32, %arg1: i32, %arg2: i32, %arg3: memref<256x128xbf16, #tpu.memory_space<vmem>>, %arg4: memref<128x128xbf16, #tpu.memory_space<vmem>>, %arg5: memref<1x128xf32, #tpu.memory_space<vmem>>, %arg6: memref<256x128xf32, #tpu.memory_space<vmem>>, %arg7: memref<256x128xf32, #tpu.memory_space<vmem>>) attributes {dimension_semantics = [#tpu.dimension_semantics<parallel>, #tpu.dimension_semantics<parallel>, #tpu.dimension_semantics<arbitrary>], iteration_bounds = array<i64: 2, 1, 1>, scalar_prefetch = 0 : i64, scratch_operands = 1 : i64, tpu.core_type = #tpu.core_type<tc>, window_params = [{transform_indices = @transform_0, window_bounds = array<i64: 256, 128>}, {transform_indices = @transform_1, window_bounds = array<i64: 128, 128>}, {transform_indices = @transform_2, window_bounds = array<i64: 1, 128>}, {transform_indices = @transform_3, window_bounds = array<i64: 256, 128>}]} {
    %c0_i32 = arith.constant 0 : i32
    %0 = arith.cmpi eq, %arg2, %c0_i32 : i32
    %1 = arith.extui %0 : i1 to i32
    %c0_i32_0 = arith.constant 0 : i32
    %2 = arith.cmpi ne, %1, %c0_i32_0 : i32
    scf.if %2 {
      %cst_10 = arith.constant 0.000000e+00 : f32
      %12 = vector.broadcast %cst_10 : f32 to vector<256x128xf32>
      %c0_11 = arith.constant 0 : index
      %c0_12 = arith.constant 0 : index
      %13 = vector.load %arg7[%c0_11, %c0_12] : memref<256x128xf32, #tpu.memory_space<vmem>>, vector<256x128xf32>
      tpu.vector_store %arg7[%c0_11, %c0_12], %12 {strides = array<i32>} : memref<256x128xf32, #tpu.memory_space<vmem>>, vector<256x128xf32>,
    } else {
    }
    %c0 = arith.constant 0 : index
    %c0_1 = arith.constant 0 : index
    %3 = vector.load %arg3[%c0, %c0_1] : memref<256x128xbf16, #tpu.memory_space<vmem>>, vector<256x128xbf16>
    %c0_2 = arith.constant 0 : index
    %c0_3 = arith.constant 0 : index
    %4 = vector.load %arg7[%c0_2, %c0_3] : memref<256x128xf32, #tpu.memory_space<vmem>>, vector<256x128xf32>
    %c0_4 = arith.constant 0 : index
    %c0_5 = arith.constant 0 : index
    %5 = vector.load %arg4[%c0_4, %c0_5] : memref<128x128xbf16, #tpu.memory_space<vmem>>, vector<128x128xbf16>
    %cst = arith.constant dense<0.000000e+00> : vector<256x128xf32>
    %6 = tpu.matmul %3, %5, %cst {dimension_numbers = #tpu.dot_dimension_numbers<[1], [0], [0], [1], [0, 0, 1, 1], [], []>} : vector<256x128xbf16>, vector<128x128xbf16>, vector<256x128xf32> -> vector<256x128xf32>
    %7 = arith.addf %4, %6 : vector<256x128xf32>
    %c0_6 = arith.constant 0 : index
    %c0_7 = arith.constant 0 : index
    %8 = vector.load %arg7[%c0_6, %c0_7] : memref<256x128xf32, #tpu.memory_space<vmem>>, vector<256x128xf32>
    tpu.vector_store %arg7[%c0_6, %c0_7], %7 {strides = array<i32>} : memref<256x128xf32, #tpu.memory_space<vmem>>, vector<256x128xf32>,
    %c0_i32_8 = arith.constant 0 : i32
    %9 = arith.cmpi eq, %arg2, %c0_i32_8 : i32
    %10 = arith.extui %9 : i1 to i32
    %c0_i32_9 = arith.constant 0 : i32
    %11 = arith.cmpi ne, %10, %c0_i32_9 : i32
    scf.if %11 {
      %c0_10 = arith.constant 0 : index
      %c0_11 = arith.constant 0 : index
      %12 = vector.load %arg7[%c0_10, %c0_11] : memref<256x128xf32, #tpu.memory_space<vmem>>, vector<256x128xf32>
      %c0_12 = arith.constant 0 : index
      %c0_13 = arith.constant 0 : index
      %13 = vector.load %arg5[%c0_12, %c0_13] : memref<1x128xf32, #tpu.memory_space<vmem>>, vector<1x128xf32>
      %14 = vector.broadcast %13 : vector<1x128xf32> to vector<256x128xf32>
      %15 = arith.addf %12, %14 : vector<256x128xf32>
      %c0_14 = arith.constant 0 : index
      %c0_15 = arith.constant 0 : index
      %16 = vector.load %arg6[%c0_14, %c0_15] : memref<256x128xf32, #tpu.memory_space<vmem>>, vector<256x128xf32>
      tpu.vector_store %arg6[%c0_14, %c0_15], %15 {strides = array<i32>} : memref<256x128xf32, #tpu.memory_space<vmem>>, vector<256x128xf32>,
    } else {
    }
    return
  }
  func.func @transform_0(%arg0: i32, %arg1: i32, %arg2: i32) -> (i32, i32) {
    %c0_i32 = arith.constant 0 : i32
    return %arg0, %arg2 : i32, i32
  }
  func.func @transform_1(%arg0: i32, %arg1: i32, %arg2: i32) -> (i32, i32) {
    %c0_i32 = arith.constant 0 : i32
    return %arg2, %arg1 : i32, i32
  }
  func.func @transform_2(%arg0: i32, %arg1: i32, %arg2: i32) -> (i32, i32) {
    %c0_i32 = arith.constant 0 : i32
    %c0_i32_0 = arith.constant 0 : i32
    return %c0_i32, %arg1 : i32, i32
  }
  func.func @transform_3(%arg0: i32, %arg1: i32, %arg2: i32) -> (i32, i32) {
    %c0_i32 = arith.constant 0 : i32
    return %arg0, %arg1 : i32, i32
  }
}

module attributes {stable_mosaic.version = 11 : i64} {
  func.func @_mm_kernel(%arg0: i32, %arg1: i32, %arg2: i32, %arg3: memref<128x128xbf16, #tpu.memory_space<vmem>>, %arg4: memref<128x128xbf16, #tpu.memory_space<vmem>>, %arg5: memref<1x128xf32, #tpu.memory_space<vmem>>, %arg6: memref<128x128xf32, #tpu.memory_space<vmem>>, %arg7: memref<128x128xf32, #tpu.memory_space<vmem>>) attributes {dimension_semantics = [#tpu.dimension_semantics<parallel>, #tpu.dimension_semantics<parallel>, #tpu.dimension_semantics<arbitrary>], iteration_bounds = array<i64: 1, 1, 1>, scalar_prefetch = 0 : i64, scratch_operands = 1 : i64, tpu.core_type = #tpu.core_type<tc>, window_params = [{transform_indices = @transform_0, window_bounds = array<i64: 128, 128>}, {transform_indices = @transform_1, window_bounds = array<i64: 128, 128>}, {transform_indices = @transform_2, window_bounds = array<i64: 1, 128>}, {transform_indices = @transform_3, window_bounds = array<i64: 128, 128>}]} {
    %c0_i32 = arith.constant 0 : i32
    %0 = arith.cmpi eq, %arg2, %c0_i32 : i32
    %1 = arith.extui %0 : i1 to i32
    %c0_i32_0 = arith.constant 0 : i32
    %2 = arith.cmpi ne, %1, %c0_i32_0 : i32
    scf.if %2 {
      %cst_12 = arith.constant 0.000000e+00 : f32
      %17 = vector.broadcast %cst_12 : f32 to vector<128x128xf32>
      %c0_13 = arith.constant 0 : index
      %c0_14 = arith.constant 0 : index
      %18 = vector.load %arg7[%c0_13, %c0_14] : memref<128x128xf32, #tpu.memory_space<vmem>>, vector<128x128xf32>
      tpu.vector_store %arg7[%c0_13, %c0_14], %17 {strides = array<i32>} : memref<128x128xf32, #tpu.memory_space<vmem>>, vector<128x128xf32>,
    } else {
    }
    %c0 = arith.constant 0 : index
    %c0_1 = arith.constant 0 : index
    %3 = vector.load %arg3[%c0, %c0_1] : memref<128x128xbf16, #tpu.memory_space<vmem>>, vector<128x128xbf16>
    %cst = arith.constant 0.000000e+00 : bf16
    %4 = vector.broadcast %cst : bf16 to vector<128x128xbf16>
    %5 = arith.cmpf ogt, %3, %4 : vector<128x128xbf16>
    %cst_2 = arith.constant 2.001950e-01 : bf16
    %6 = vector.broadcast %cst_2 : bf16 to vector<128x128xbf16>
    %7 = arith.mulf %3, %6 : vector<128x128xbf16>
    %8 = arith.select %5, %3, %7 : vector<128x128xi1>, vector<128x128xbf16>
    %c0_3 = arith.constant 0 : index
    %c0_4 = arith.constant 0 : index
    %9 = vector.load %arg7[%c0_3, %c0_4] : memref<128x128xf32, #tpu.memory_space<vmem>>, vector<128x128xf32>
    %c0_5 = arith.constant 0 : index
    %c0_6 = arith.constant 0 : index
    %10 = vector.load %arg4[%c0_5, %c0_6] : memref<128x128xbf16, #tpu.memory_space<vmem>>, vector<128x128xbf16>
    %cst_7 = arith.constant dense<0.000000e+00> : vector<128x128xf32>
    %11 = tpu.matmul %8, %10, %cst_7 {dimension_numbers = #tpu.dot_dimension_numbers<[1], [0], [0], [1], [0, 0, 1, 1], [], []>} : vector<128x128xbf16>, vector<128x128xbf16>, vector<128x128xf32> -> vector<128x128xf32>
    %12 = arith.addf %9, %11 : vector<128x128xf32>
    %c0_8 = arith.constant 0 : index
    %c0_9 = arith.constant 0 : index
    %13 = vector.load %arg7[%c0_8, %c0_9] : memref<128x128xf32, #tpu.memory_space<vmem>>, vector<128x128xf32>
    tpu.vector_store %arg7[%c0_8, %c0_9], %12 {strides = array<i32>} : memref<128x128xf32, #tpu.memory_space<vmem>>, vector<128x128xf32>,
    %c0_i32_10 = arith.constant 0 : i32
    %14 = arith.cmpi eq, %arg2, %c0_i32_10 : i32
    %15 = arith.extui %14 : i1 to i32
    %c0_i32_11 = arith.constant 0 : i32
    %16 = arith.cmpi ne, %15, %c0_i32_11 : i32
    scf.if %16 {
      %c0_12 = arith.constant 0 : index
      %c0_13 = arith.constant 0 : index
      %17 = vector.load %arg7[%c0_12, %c0_13] : memref<128x128xf32, #tpu.memory_space<vmem>>, vector<128x128xf32>
      %c0_14 = arith.constant 0 : index
      %c0_15 = arith.constant 0 : index
      %18 = vector.load %arg5[%c0_14, %c0_15] : memref<1x128xf32, #tpu.memory_space<vmem>>, vector<1x128xf32>
      %19 = vector.broadcast %18 : vector<1x128xf32> to vector<128x128xf32>
      %20 = arith.addf %17, %19 : vector<128x128xf32>
      %c0_16 = arith.constant 0 : index
      %c0_17 = arith.constant 0 : index
      %21 = vector.load %arg6[%c0_16, %c0_17] : memref<128x128xf32, #tpu.memory_space<vmem>>, vector<128x128xf32>
      tpu.vector_store %arg6[%c0_16, %c0_17], %20 {strides = array<i32>} : memref<128x128xf32, #tpu.memory_space<vmem>>, vector<128x128xf32>,
    } else {
    }
    return
  }
  func.func @transform_0(%arg0: i32, %arg1: i32, %arg2: i32) -> (i32, i32) {
    %c0_i32 = arith.constant 0 : i32
    return %arg0, %arg2 : i32, i32
  }
  func.func @transform_1(%arg0: i32, %arg1: i32, %arg2: i32) -> (i32, i32) {
    %c0_i32 = arith.constant 0 : i32
    return %arg2, %arg1 : i32, i32
  }
  func.func @transform_2(%arg0: i32, %arg1: i32, %arg2: i32) -> (i32, i32) {
    %c0_i32 = arith.constant 0 : i32
    %c0_i32_0 = arith.constant 0 : i32
    return %c0_i32, %arg1 : i32, i32
  }
  func.func @transform_3(%arg0: i32, %arg1: i32, %arg2: i32) -> (i32, i32) {
    %c0_i32 = arith.constant 0 : i32
    return %arg0, %arg1 : i32, i32
  }
}

module attributes {stable_mosaic.version = 11 : i64} {
  func.func @_bn_stats_kernel(%arg0: i32, %arg1: memref<16x128xf32, #tpu.memory_space<vmem>>, %arg2: memref<1x128xf32, #tpu.memory_space<vmem>>, %arg3: memref<1x128xf32, #tpu.memory_space<vmem>>, %arg4: memref<1x128xf32, #tpu.memory_space<vmem>>, %arg5: memref<1x128xf32, #tpu.memory_space<vmem>>) attributes {dimension_semantics = [#tpu.dimension_semantics<arbitrary>], iteration_bounds = array<i64: 1>, scalar_prefetch = 0 : i64, scratch_operands = 2 : i64, tpu.core_type = #tpu.core_type<tc>, window_params = [{transform_indices = @transform_0, window_bounds = array<i64: 16, 128>}, {pipeline_mode = #tpu.pipeline_mode<synchronous>, transform_indices = @transform_1, window_bounds = array<i64: 1, 128>}, {pipeline_mode = #tpu.pipeline_mode<synchronous>, transform_indices = @transform_2, window_bounds = array<i64: 1, 128>}]} {
    %c0_i32 = arith.constant 0 : i32
    %0 = arith.cmpi eq, %arg0, %c0_i32 : i32
    %1 = arith.extui %0 : i1 to i32
    %c0_i32_0 = arith.constant 0 : i32
    %2 = arith.cmpi ne, %1, %c0_i32_0 : i32
    scf.if %2 {
      %cst_13 = arith.constant 0.000000e+00 : f32
      %18 = vector.broadcast %cst_13 : f32 to vector<1x128xf32>
      %c0_14 = arith.constant 0 : index
      %c0_15 = arith.constant 0 : index
      %19 = vector.load %arg4[%c0_14, %c0_15] : memref<1x128xf32, #tpu.memory_space<vmem>>, vector<1x128xf32>
      tpu.vector_store %arg4[%c0_14, %c0_15], %18 {strides = array<i32>} : memref<1x128xf32, #tpu.memory_space<vmem>>, vector<1x128xf32>,
      %cst_16 = arith.constant 0.000000e+00 : f32
      %20 = vector.broadcast %cst_16 : f32 to vector<1x128xf32>
      %c0_17 = arith.constant 0 : index
      %c0_18 = arith.constant 0 : index
      %21 = vector.load %arg5[%c0_17, %c0_18] : memref<1x128xf32, #tpu.memory_space<vmem>>, vector<1x128xf32>
      tpu.vector_store %arg5[%c0_17, %c0_18], %20 {strides = array<i32>} : memref<1x128xf32, #tpu.memory_space<vmem>>, vector<1x128xf32>,
    } else {
    }
    %c0 = arith.constant 0 : index
    %c0_1 = arith.constant 0 : index
    %3 = vector.load %arg1[%c0, %c0_1] : memref<16x128xf32, #tpu.memory_space<vmem>>, vector<16x128xf32>
    %c0_2 = arith.constant 0 : index
    %c0_3 = arith.constant 0 : index
    %4 = vector.load %arg4[%c0_2, %c0_3] : memref<1x128xf32, #tpu.memory_space<vmem>>, vector<1x128xf32>
    %cst = arith.constant dense<0.000000e+00> : vector<128xf32>
    %5 = vector.multi_reduction <add>, %3, %cst [0] : vector<16x128xf32> to vector<128xf32>
    %6 = vector.shape_cast %5 : vector<128xf32> to vector<1x128xf32>
    %7 = arith.addf %4, %6 : vector<1x128xf32>
    %c0_4 = arith.constant 0 : index
    %c0_5 = arith.constant 0 : index
    %8 = vector.load %arg4[%c0_4, %c0_5] : memref<1x128xf32, #tpu.memory_space<vmem>>, vector<1x128xf32>
    tpu.vector_store %arg4[%c0_4, %c0_5], %7 {strides = array<i32>} : memref<1x128xf32, #tpu.memory_space<vmem>>, vector<1x128xf32>,
    %c0_6 = arith.constant 0 : index
    %c0_7 = arith.constant 0 : index
    %9 = vector.load %arg5[%c0_6, %c0_7] : memref<1x128xf32, #tpu.memory_space<vmem>>, vector<1x128xf32>
    %10 = arith.mulf %3, %3 : vector<16x128xf32>
    %cst_8 = arith.constant dense<0.000000e+00> : vector<128xf32>
    %11 = vector.multi_reduction <add>, %10, %cst_8 [0] : vector<16x128xf32> to vector<128xf32>
    %12 = vector.shape_cast %11 : vector<128xf32> to vector<1x128xf32>
    %13 = arith.addf %9, %12 : vector<1x128xf32>
    %c0_9 = arith.constant 0 : index
    %c0_10 = arith.constant 0 : index
    %14 = vector.load %arg5[%c0_9, %c0_10] : memref<1x128xf32, #tpu.memory_space<vmem>>, vector<1x128xf32>
    tpu.vector_store %arg5[%c0_9, %c0_10], %13 {strides = array<i32>} : memref<1x128xf32, #tpu.memory_space<vmem>>, vector<1x128xf32>,
    %c0_i32_11 = arith.constant 0 : i32
    %15 = arith.cmpi eq, %arg0, %c0_i32_11 : i32
    %16 = arith.extui %15 : i1 to i32
    %c0_i32_12 = arith.constant 0 : i32
    %17 = arith.cmpi ne, %16, %c0_i32_12 : i32
    scf.if %17 {
      %c0_13 = arith.constant 0 : index
      %c0_14 = arith.constant 0 : index
      %18 = vector.load %arg4[%c0_13, %c0_14] : memref<1x128xf32, #tpu.memory_space<vmem>>, vector<1x128xf32>
      %c0_15 = arith.constant 0 : index
      %c0_16 = arith.constant 0 : index
      %19 = vector.load %arg2[%c0_15, %c0_16] : memref<1x128xf32, #tpu.memory_space<vmem>>, vector<1x128xf32>
      tpu.vector_store %arg2[%c0_15, %c0_16], %18 {strides = array<i32>} : memref<1x128xf32, #tpu.memory_space<vmem>>, vector<1x128xf32>,
      %c0_17 = arith.constant 0 : index
      %c0_18 = arith.constant 0 : index
      %20 = vector.load %arg5[%c0_17, %c0_18] : memref<1x128xf32, #tpu.memory_space<vmem>>, vector<1x128xf32>
      %c0_19 = arith.constant 0 : index
      %c0_20 = arith.constant 0 : index
      %21 = vector.load %arg3[%c0_19, %c0_20] : memref<1x128xf32, #tpu.memory_space<vmem>>, vector<1x128xf32>
      tpu.vector_store %arg3[%c0_19, %c0_20], %20 {strides = array<i32>} : memref<1x128xf32, #tpu.memory_space<vmem>>, vector<1x128xf32>,
    } else {
    }
    return
  }
  func.func @transform_0(%arg0: i32) -> (i32, i32) {
    %c0_i32 = arith.constant 0 : i32
    %c0_i32_0 = arith.constant 0 : i32
    return %arg0, %c0_i32 : i32, i32
  }
  func.func @transform_1(%arg0: i32) -> (i32, i32) {
    %c0_i32 = arith.constant 0 : i32
    %c0_i32_0 = arith.constant 0 : i32
    %c0_i32_1 = arith.constant 0 : i32
    return %c0_i32, %c0_i32_0 : i32, i32
  }
  func.func @transform_2(%arg0: i32) -> (i32, i32) {
    %c0_i32 = arith.constant 0 : i32
    %c0_i32_0 = arith.constant 0 : i32
    %c0_i32_1 = arith.constant 0 : i32
    return %c0_i32, %c0_i32_0 : i32, i32
  }
}

module attributes {stable_mosaic.version = 11 : i64} {
  func.func @_bn_apply_kernel(%arg0: i32, %arg1: memref<16x128xf32, #tpu.memory_space<vmem>>, %arg2: memref<1x128xf32, #tpu.memory_space<vmem>>, %arg3: memref<1x128xf32, #tpu.memory_space<vmem>>, %arg4: memref<16x128xf32, #tpu.memory_space<vmem>>) attributes {dimension_semantics = [#tpu.dimension_semantics<parallel>], iteration_bounds = array<i64: 1>, scalar_prefetch = 0 : i64, scratch_operands = 0 : i64, tpu.core_type = #tpu.core_type<tc>, window_params = [{transform_indices = @transform_0, window_bounds = array<i64: 16, 128>}, {pipeline_mode = #tpu.pipeline_mode<synchronous>, transform_indices = @transform_1, window_bounds = array<i64: 1, 128>}, {pipeline_mode = #tpu.pipeline_mode<synchronous>, transform_indices = @transform_2, window_bounds = array<i64: 1, 128>}, {transform_indices = @transform_3, window_bounds = array<i64: 16, 128>}]} {
    %c0 = arith.constant 0 : index
    %c0_0 = arith.constant 0 : index
    %0 = vector.load %arg1[%c0, %c0_0] : memref<16x128xf32, #tpu.memory_space<vmem>>, vector<16x128xf32>
    %c0_1 = arith.constant 0 : index
    %c0_2 = arith.constant 0 : index
    %1 = vector.load %arg2[%c0_1, %c0_2] : memref<1x128xf32, #tpu.memory_space<vmem>>, vector<1x128xf32>
    %2 = vector.broadcast %1 : vector<1x128xf32> to vector<16x128xf32>
    %3 = arith.subf %0, %2 : vector<16x128xf32>
    %c0_3 = arith.constant 0 : index
    %c0_4 = arith.constant 0 : index
    %4 = vector.load %arg3[%c0_3, %c0_4] : memref<1x128xf32, #tpu.memory_space<vmem>>, vector<1x128xf32>
    %5 = vector.broadcast %4 : vector<1x128xf32> to vector<16x128xf32>
    %6 = arith.mulf %3, %5 : vector<16x128xf32>
    %c0_5 = arith.constant 0 : index
    %c0_6 = arith.constant 0 : index
    %7 = vector.load %arg4[%c0_5, %c0_6] : memref<16x128xf32, #tpu.memory_space<vmem>>, vector<16x128xf32>
    tpu.vector_store %arg4[%c0_5, %c0_6], %6 {strides = array<i32>} : memref<16x128xf32, #tpu.memory_space<vmem>>, vector<16x128xf32>,
    return
  }
  func.func @transform_0(%arg0: i32) -> (i32, i32) {
    %c0_i32 = arith.constant 0 : i32
    %c0_i32_0 = arith.constant 0 : i32
    return %arg0, %c0_i32 : i32, i32
  }
  func.func @transform_1(%arg0: i32) -> (i32, i32) {
    %c0_i32 = arith.constant 0 : i32
    %c0_i32_0 = arith.constant 0 : i32
    %c0_i32_1 = arith.constant 0 : i32
    return %c0_i32, %c0_i32_0 : i32, i32
  }
  func.func @transform_2(%arg0: i32) -> (i32, i32) {
    %c0_i32 = arith.constant 0 : i32
    %c0_i32_0 = arith.constant 0 : i32
    %c0_i32_1 = arith.constant 0 : i32
    return %c0_i32, %c0_i32_0 : i32, i32
  }
  func.func @transform_3(%arg0: i32) -> (i32, i32) {
    %c0_i32 = arith.constant 0 : i32
    %c0_i32_0 = arith.constant 0 : i32
    return %arg0, %c0_i32 : i32, i32
  }
}

module attributes {stable_mosaic.version = 11 : i64} {
  func.func @_bn_stats_kernel(%arg0: i32, %arg1: memref<8x128xf32, #tpu.memory_space<vmem>>, %arg2: memref<1x128xf32, #tpu.memory_space<vmem>>, %arg3: memref<1x128xf32, #tpu.memory_space<vmem>>, %arg4: memref<1x128xf32, #tpu.memory_space<vmem>>, %arg5: memref<1x128xf32, #tpu.memory_space<vmem>>) attributes {dimension_semantics = [#tpu.dimension_semantics<arbitrary>], iteration_bounds = array<i64: 1>, scalar_prefetch = 0 : i64, scratch_operands = 2 : i64, tpu.core_type = #tpu.core_type<tc>, window_params = [{transform_indices = @transform_0, window_bounds = array<i64: 8, 128>}, {pipeline_mode = #tpu.pipeline_mode<synchronous>, transform_indices = @transform_1, window_bounds = array<i64: 1, 128>}, {pipeline_mode = #tpu.pipeline_mode<synchronous>, transform_indices = @transform_2, window_bounds = array<i64: 1, 128>}]} {
    %c0_i32 = arith.constant 0 : i32
    %0 = arith.cmpi eq, %arg0, %c0_i32 : i32
    %1 = arith.extui %0 : i1 to i32
    %c0_i32_0 = arith.constant 0 : i32
    %2 = arith.cmpi ne, %1, %c0_i32_0 : i32
    scf.if %2 {
      %cst_13 = arith.constant 0.000000e+00 : f32
      %18 = vector.broadcast %cst_13 : f32 to vector<1x128xf32>
      %c0_14 = arith.constant 0 : index
      %c0_15 = arith.constant 0 : index
      %19 = vector.load %arg4[%c0_14, %c0_15] : memref<1x128xf32, #tpu.memory_space<vmem>>, vector<1x128xf32>
      tpu.vector_store %arg4[%c0_14, %c0_15], %18 {strides = array<i32>} : memref<1x128xf32, #tpu.memory_space<vmem>>, vector<1x128xf32>,
      %cst_16 = arith.constant 0.000000e+00 : f32
      %20 = vector.broadcast %cst_16 : f32 to vector<1x128xf32>
      %c0_17 = arith.constant 0 : index
      %c0_18 = arith.constant 0 : index
      %21 = vector.load %arg5[%c0_17, %c0_18] : memref<1x128xf32, #tpu.memory_space<vmem>>, vector<1x128xf32>
      tpu.vector_store %arg5[%c0_17, %c0_18], %20 {strides = array<i32>} : memref<1x128xf32, #tpu.memory_space<vmem>>, vector<1x128xf32>,
    } else {
    }
    %c0 = arith.constant 0 : index
    %c0_1 = arith.constant 0 : index
    %3 = vector.load %arg1[%c0, %c0_1] : memref<8x128xf32, #tpu.memory_space<vmem>>, vector<8x128xf32>
    %c0_2 = arith.constant 0 : index
    %c0_3 = arith.constant 0 : index
    %4 = vector.load %arg4[%c0_2, %c0_3] : memref<1x128xf32, #tpu.memory_space<vmem>>, vector<1x128xf32>
    %cst = arith.constant dense<0.000000e+00> : vector<128xf32>
    %5 = vector.multi_reduction <add>, %3, %cst [0] : vector<8x128xf32> to vector<128xf32>
    %6 = vector.shape_cast %5 : vector<128xf32> to vector<1x128xf32>
    %7 = arith.addf %4, %6 : vector<1x128xf32>
    %c0_4 = arith.constant 0 : index
    %c0_5 = arith.constant 0 : index
    %8 = vector.load %arg4[%c0_4, %c0_5] : memref<1x128xf32, #tpu.memory_space<vmem>>, vector<1x128xf32>
    tpu.vector_store %arg4[%c0_4, %c0_5], %7 {strides = array<i32>} : memref<1x128xf32, #tpu.memory_space<vmem>>, vector<1x128xf32>,
    %c0_6 = arith.constant 0 : index
    %c0_7 = arith.constant 0 : index
    %9 = vector.load %arg5[%c0_6, %c0_7] : memref<1x128xf32, #tpu.memory_space<vmem>>, vector<1x128xf32>
    %10 = arith.mulf %3, %3 : vector<8x128xf32>
    %cst_8 = arith.constant dense<0.000000e+00> : vector<128xf32>
    %11 = vector.multi_reduction <add>, %10, %cst_8 [0] : vector<8x128xf32> to vector<128xf32>
    %12 = vector.shape_cast %11 : vector<128xf32> to vector<1x128xf32>
    %13 = arith.addf %9, %12 : vector<1x128xf32>
    %c0_9 = arith.constant 0 : index
    %c0_10 = arith.constant 0 : index
    %14 = vector.load %arg5[%c0_9, %c0_10] : memref<1x128xf32, #tpu.memory_space<vmem>>, vector<1x128xf32>
    tpu.vector_store %arg5[%c0_9, %c0_10], %13 {strides = array<i32>} : memref<1x128xf32, #tpu.memory_space<vmem>>, vector<1x128xf32>,
    %c0_i32_11 = arith.constant 0 : i32
    %15 = arith.cmpi eq, %arg0, %c0_i32_11 : i32
    %16 = arith.extui %15 : i1 to i32
    %c0_i32_12 = arith.constant 0 : i32
    %17 = arith.cmpi ne, %16, %c0_i32_12 : i32
    scf.if %17 {
      %c0_13 = arith.constant 0 : index
      %c0_14 = arith.constant 0 : index
      %18 = vector.load %arg4[%c0_13, %c0_14] : memref<1x128xf32, #tpu.memory_space<vmem>>, vector<1x128xf32>
      %c0_15 = arith.constant 0 : index
      %c0_16 = arith.constant 0 : index
      %19 = vector.load %arg2[%c0_15, %c0_16] : memref<1x128xf32, #tpu.memory_space<vmem>>, vector<1x128xf32>
      tpu.vector_store %arg2[%c0_15, %c0_16], %18 {strides = array<i32>} : memref<1x128xf32, #tpu.memory_space<vmem>>, vector<1x128xf32>,
      %c0_17 = arith.constant 0 : index
      %c0_18 = arith.constant 0 : index
      %20 = vector.load %arg5[%c0_17, %c0_18] : memref<1x128xf32, #tpu.memory_space<vmem>>, vector<1x128xf32>
      %c0_19 = arith.constant 0 : index
      %c0_20 = arith.constant 0 : index
      %21 = vector.load %arg3[%c0_19, %c0_20] : memref<1x128xf32, #tpu.memory_space<vmem>>, vector<1x128xf32>
      tpu.vector_store %arg3[%c0_19, %c0_20], %20 {strides = array<i32>} : memref<1x128xf32, #tpu.memory_space<vmem>>, vector<1x128xf32>,
    } else {
    }
    return
  }
  func.func @transform_0(%arg0: i32) -> (i32, i32) {
    %c0_i32 = arith.constant 0 : i32
    %c0_i32_0 = arith.constant 0 : i32
    return %arg0, %c0_i32 : i32, i32
  }
  func.func @transform_1(%arg0: i32) -> (i32, i32) {
    %c0_i32 = arith.constant 0 : i32
    %c0_i32_0 = arith.constant 0 : i32
    %c0_i32_1 = arith.constant 0 : i32
    return %c0_i32, %c0_i32_0 : i32, i32
  }
  func.func @transform_2(%arg0: i32) -> (i32, i32) {
    %c0_i32 = arith.constant 0 : i32
    %c0_i32_0 = arith.constant 0 : i32
    %c0_i32_1 = arith.constant 0 : i32
    return %c0_i32, %c0_i32_0 : i32, i32
  }
}

module attributes {stable_mosaic.version = 11 : i64} {
  func.func @_mm_kernel(%arg0: i32, %arg1: i32, %arg2: i32, %arg3: memref<32x256xbf16, #tpu.memory_space<vmem>>, %arg4: memref<256x128xbf16, #tpu.memory_space<vmem>>, %arg5: memref<1x128xf32, #tpu.memory_space<vmem>>, %arg6: memref<32x128xf32, #tpu.memory_space<vmem>>, %arg7: memref<32x128xf32, #tpu.memory_space<vmem>>) attributes {dimension_semantics = [#tpu.dimension_semantics<parallel>, #tpu.dimension_semantics<parallel>, #tpu.dimension_semantics<arbitrary>], iteration_bounds = array<i64: 1, 1, 1>, scalar_prefetch = 0 : i64, scratch_operands = 1 : i64, tpu.core_type = #tpu.core_type<tc>, window_params = [{transform_indices = @transform_0, window_bounds = array<i64: 32, 256>}, {transform_indices = @transform_1, window_bounds = array<i64: 256, 128>}, {transform_indices = @transform_2, window_bounds = array<i64: 1, 128>}, {transform_indices = @transform_3, window_bounds = array<i64: 32, 128>}]} {
    %c0_i32 = arith.constant 0 : i32
    %0 = arith.cmpi eq, %arg2, %c0_i32 : i32
    %1 = arith.extui %0 : i1 to i32
    %c0_i32_0 = arith.constant 0 : i32
    %2 = arith.cmpi ne, %1, %c0_i32_0 : i32
    scf.if %2 {
      %cst_12 = arith.constant 0.000000e+00 : f32
      %17 = vector.broadcast %cst_12 : f32 to vector<32x128xf32>
      %c0_13 = arith.constant 0 : index
      %c0_14 = arith.constant 0 : index
      %18 = vector.load %arg7[%c0_13, %c0_14] : memref<32x128xf32, #tpu.memory_space<vmem>>, vector<32x128xf32>
      tpu.vector_store %arg7[%c0_13, %c0_14], %17 {strides = array<i32>} : memref<32x128xf32, #tpu.memory_space<vmem>>, vector<32x128xf32>,
    } else {
    }
    %c0 = arith.constant 0 : index
    %c0_1 = arith.constant 0 : index
    %3 = vector.load %arg3[%c0, %c0_1] : memref<32x256xbf16, #tpu.memory_space<vmem>>, vector<32x256xbf16>
    %cst = arith.constant 0.000000e+00 : bf16
    %4 = vector.broadcast %cst : bf16 to vector<32x256xbf16>
    %5 = arith.cmpf ogt, %3, %4 : vector<32x256xbf16>
    %cst_2 = arith.constant 2.001950e-01 : bf16
    %6 = vector.broadcast %cst_2 : bf16 to vector<32x256xbf16>
    %7 = arith.mulf %3, %6 : vector<32x256xbf16>
    %8 = arith.select %5, %3, %7 : vector<32x256xi1>, vector<32x256xbf16>
    %c0_3 = arith.constant 0 : index
    %c0_4 = arith.constant 0 : index
    %9 = vector.load %arg7[%c0_3, %c0_4] : memref<32x128xf32, #tpu.memory_space<vmem>>, vector<32x128xf32>
    %c0_5 = arith.constant 0 : index
    %c0_6 = arith.constant 0 : index
    %10 = vector.load %arg4[%c0_5, %c0_6] : memref<256x128xbf16, #tpu.memory_space<vmem>>, vector<256x128xbf16>
    %cst_7 = arith.constant dense<0.000000e+00> : vector<32x128xf32>
    %11 = tpu.matmul %8, %10, %cst_7 {dimension_numbers = #tpu.dot_dimension_numbers<[1], [0], [0], [1], [0, 0, 1, 1], [], []>} : vector<32x256xbf16>, vector<256x128xbf16>, vector<32x128xf32> -> vector<32x128xf32>
    %12 = arith.addf %9, %11 : vector<32x128xf32>
    %c0_8 = arith.constant 0 : index
    %c0_9 = arith.constant 0 : index
    %13 = vector.load %arg7[%c0_8, %c0_9] : memref<32x128xf32, #tpu.memory_space<vmem>>, vector<32x128xf32>
    tpu.vector_store %arg7[%c0_8, %c0_9], %12 {strides = array<i32>} : memref<32x128xf32, #tpu.memory_space<vmem>>, vector<32x128xf32>,
    %c0_i32_10 = arith.constant 0 : i32
    %14 = arith.cmpi eq, %arg2, %c0_i32_10 : i32
    %15 = arith.extui %14 : i1 to i32
    %c0_i32_11 = arith.constant 0 : i32
    %16 = arith.cmpi ne, %15, %c0_i32_11 : i32
    scf.if %16 {
      %c0_12 = arith.constant 0 : index
      %c0_13 = arith.constant 0 : index
      %17 = vector.load %arg7[%c0_12, %c0_13] : memref<32x128xf32, #tpu.memory_space<vmem>>, vector<32x128xf32>
      %c0_14 = arith.constant 0 : index
      %c0_15 = arith.constant 0 : index
      %18 = vector.load %arg5[%c0_14, %c0_15] : memref<1x128xf32, #tpu.memory_space<vmem>>, vector<1x128xf32>
      %19 = vector.broadcast %18 : vector<1x128xf32> to vector<32x128xf32>
      %20 = arith.addf %17, %19 : vector<32x128xf32>
      %c0_16 = arith.constant 0 : index
      %c0_17 = arith.constant 0 : index
      %21 = vector.load %arg6[%c0_16, %c0_17] : memref<32x128xf32, #tpu.memory_space<vmem>>, vector<32x128xf32>
      tpu.vector_store %arg6[%c0_16, %c0_17], %20 {strides = array<i32>} : memref<32x128xf32, #tpu.memory_space<vmem>>, vector<32x128xf32>,
    } else {
    }
    return
  }
  func.func @transform_0(%arg0: i32, %arg1: i32, %arg2: i32) -> (i32, i32) {
    %c0_i32 = arith.constant 0 : i32
    return %arg0, %arg2 : i32, i32
  }
  func.func @transform_1(%arg0: i32, %arg1: i32, %arg2: i32) -> (i32, i32) {
    %c0_i32 = arith.constant 0 : i32
    return %arg2, %arg1 : i32, i32
  }
  func.func @transform_2(%arg0: i32, %arg1: i32, %arg2: i32) -> (i32, i32) {
    %c0_i32 = arith.constant 0 : i32
    %c0_i32_0 = arith.constant 0 : i32
    return %c0_i32, %arg1 : i32, i32
  }
  func.func @transform_3(%arg0: i32, %arg1: i32, %arg2: i32) -> (i32, i32) {
    %c0_i32 = arith.constant 0 : i32
    return %arg0, %arg1 : i32, i32
  }
}

module attributes {stable_mosaic.version = 11 : i64} {
  func.func @_bn_apply_kernel(%arg0: i32, %arg1: memref<8x128xf32, #tpu.memory_space<vmem>>, %arg2: memref<1x128xf32, #tpu.memory_space<vmem>>, %arg3: memref<1x128xf32, #tpu.memory_space<vmem>>, %arg4: memref<8x128xf32, #tpu.memory_space<vmem>>) attributes {dimension_semantics = [#tpu.dimension_semantics<parallel>], iteration_bounds = array<i64: 1>, scalar_prefetch = 0 : i64, scratch_operands = 0 : i64, tpu.core_type = #tpu.core_type<tc>, window_params = [{transform_indices = @transform_0, window_bounds = array<i64: 8, 128>}, {pipeline_mode = #tpu.pipeline_mode<synchronous>, transform_indices = @transform_1, window_bounds = array<i64: 1, 128>}, {pipeline_mode = #tpu.pipeline_mode<synchronous>, transform_indices = @transform_2, window_bounds = array<i64: 1, 128>}, {transform_indices = @transform_3, window_bounds = array<i64: 8, 128>}]} {
    %c0 = arith.constant 0 : index
    %c0_0 = arith.constant 0 : index
    %0 = vector.load %arg1[%c0, %c0_0] : memref<8x128xf32, #tpu.memory_space<vmem>>, vector<8x128xf32>
    %c0_1 = arith.constant 0 : index
    %c0_2 = arith.constant 0 : index
    %1 = vector.load %arg2[%c0_1, %c0_2] : memref<1x128xf32, #tpu.memory_space<vmem>>, vector<1x128xf32>
    %2 = vector.broadcast %1 : vector<1x128xf32> to vector<8x128xf32>
    %3 = arith.subf %0, %2 : vector<8x128xf32>
    %c0_3 = arith.constant 0 : index
    %c0_4 = arith.constant 0 : index
    %4 = vector.load %arg3[%c0_3, %c0_4] : memref<1x128xf32, #tpu.memory_space<vmem>>, vector<1x128xf32>
    %5 = vector.broadcast %4 : vector<1x128xf32> to vector<8x128xf32>
    %6 = arith.mulf %3, %5 : vector<8x128xf32>
    %c0_5 = arith.constant 0 : index
    %c0_6 = arith.constant 0 : index
    %7 = vector.load %arg4[%c0_5, %c0_6] : memref<8x128xf32, #tpu.memory_space<vmem>>, vector<8x128xf32>
    tpu.vector_store %arg4[%c0_5, %c0_6], %6 {strides = array<i32>} : memref<8x128xf32, #tpu.memory_space<vmem>>, vector<8x128xf32>,
    return
  }
  func.func @transform_0(%arg0: i32) -> (i32, i32) {
    %c0_i32 = arith.constant 0 : i32
    %c0_i32_0 = arith.constant 0 : i32
    return %arg0, %c0_i32 : i32, i32
  }
  func.func @transform_1(%arg0: i32) -> (i32, i32) {
    %c0_i32 = arith.constant 0 : i32
    %c0_i32_0 = arith.constant 0 : i32
    %c0_i32_1 = arith.constant 0 : i32
    return %c0_i32, %c0_i32_0 : i32, i32
  }
  func.func @transform_2(%arg0: i32) -> (i32, i32) {
    %c0_i32 = arith.constant 0 : i32
    %c0_i32_0 = arith.constant 0 : i32
    %c0_i32_1 = arith.constant 0 : i32
    return %c0_i32, %c0_i32_0 : i32, i32
  }
  func.func @transform_3(%arg0: i32) -> (i32, i32) {
    %c0_i32 = arith.constant 0 : i32
    %c0_i32_0 = arith.constant 0 : i32
    return %arg0, %c0_i32 : i32, i32
  }
}

module attributes {stable_mosaic.version = 11 : i64} {
  func.func @_mm_kernel(%arg0: i32, %arg1: i32, %arg2: i32, %arg3: memref<8x256xbf16, #tpu.memory_space<vmem>>, %arg4: memref<256x128xbf16, #tpu.memory_space<vmem>>, %arg5: memref<1x128xf32, #tpu.memory_space<vmem>>, %arg6: memref<8x128xf32, #tpu.memory_space<vmem>>, %arg7: memref<8x128xf32, #tpu.memory_space<vmem>>) attributes {dimension_semantics = [#tpu.dimension_semantics<parallel>, #tpu.dimension_semantics<parallel>, #tpu.dimension_semantics<arbitrary>], iteration_bounds = array<i64: 1, 1, 2>, scalar_prefetch = 0 : i64, scratch_operands = 1 : i64, tpu.core_type = #tpu.core_type<tc>, window_params = [{transform_indices = @transform_0, window_bounds = array<i64: 8, 256>}, {transform_indices = @transform_1, window_bounds = array<i64: 256, 128>}, {transform_indices = @transform_2, window_bounds = array<i64: 1, 128>}, {transform_indices = @transform_3, window_bounds = array<i64: 8, 128>}]} {
    %c0_i32 = arith.constant 0 : i32
    %0 = arith.cmpi eq, %arg2, %c0_i32 : i32
    %1 = arith.extui %0 : i1 to i32
    %c0_i32_0 = arith.constant 0 : i32
    %2 = arith.cmpi ne, %1, %c0_i32_0 : i32
    scf.if %2 {
      %cst_11 = arith.constant 0.000000e+00 : f32
      %17 = vector.broadcast %cst_11 : f32 to vector<8x128xf32>
      %c0_12 = arith.constant 0 : index
      %c0_13 = arith.constant 0 : index
      %18 = vector.load %arg7[%c0_12, %c0_13] : memref<8x128xf32, #tpu.memory_space<vmem>>, vector<8x128xf32>
      tpu.vector_store %arg7[%c0_12, %c0_13], %17 {strides = array<i32>} : memref<8x128xf32, #tpu.memory_space<vmem>>, vector<8x128xf32>,
    } else {
    }
    %c0 = arith.constant 0 : index
    %c0_1 = arith.constant 0 : index
    %3 = vector.load %arg3[%c0, %c0_1] : memref<8x256xbf16, #tpu.memory_space<vmem>>, vector<8x256xbf16>
    %cst = arith.constant 0.000000e+00 : bf16
    %4 = vector.broadcast %cst : bf16 to vector<8x256xbf16>
    %5 = arith.cmpf ogt, %3, %4 : vector<8x256xbf16>
    %cst_2 = arith.constant 2.001950e-01 : bf16
    %6 = vector.broadcast %cst_2 : bf16 to vector<8x256xbf16>
    %7 = arith.mulf %3, %6 : vector<8x256xbf16>
    %8 = arith.select %5, %3, %7 : vector<8x256xi1>, vector<8x256xbf16>
    %c0_3 = arith.constant 0 : index
    %c0_4 = arith.constant 0 : index
    %9 = vector.load %arg7[%c0_3, %c0_4] : memref<8x128xf32, #tpu.memory_space<vmem>>, vector<8x128xf32>
    %c0_5 = arith.constant 0 : index
    %c0_6 = arith.constant 0 : index
    %10 = vector.load %arg4[%c0_5, %c0_6] : memref<256x128xbf16, #tpu.memory_space<vmem>>, vector<256x128xbf16>
    %cst_7 = arith.constant dense<0.000000e+00> : vector<8x128xf32>
    %11 = tpu.matmul %8, %10, %cst_7 {dimension_numbers = #tpu.dot_dimension_numbers<[1], [0], [0], [1], [0, 0, 1, 1], [], []>} : vector<8x256xbf16>, vector<256x128xbf16>, vector<8x128xf32> -> vector<8x128xf32>
    %12 = arith.addf %9, %11 : vector<8x128xf32>
    %c0_8 = arith.constant 0 : index
    %c0_9 = arith.constant 0 : index
    %13 = vector.load %arg7[%c0_8, %c0_9] : memref<8x128xf32, #tpu.memory_space<vmem>>, vector<8x128xf32>
    tpu.vector_store %arg7[%c0_8, %c0_9], %12 {strides = array<i32>} : memref<8x128xf32, #tpu.memory_space<vmem>>, vector<8x128xf32>,
    %c1_i32 = arith.constant 1 : i32
    %14 = arith.cmpi eq, %arg2, %c1_i32 : i32
    %15 = arith.extui %14 : i1 to i32
    %c0_i32_10 = arith.constant 0 : i32
    %16 = arith.cmpi ne, %15, %c0_i32_10 : i32
    scf.if %16 {
      %c0_11 = arith.constant 0 : index
      %c0_12 = arith.constant 0 : index
      %17 = vector.load %arg7[%c0_11, %c0_12] : memref<8x128xf32, #tpu.memory_space<vmem>>, vector<8x128xf32>
      %c0_13 = arith.constant 0 : index
      %c0_14 = arith.constant 0 : index
      %18 = vector.load %arg5[%c0_13, %c0_14] : memref<1x128xf32, #tpu.memory_space<vmem>>, vector<1x128xf32>
      %19 = vector.broadcast %18 : vector<1x128xf32> to vector<8x128xf32>
      %20 = arith.addf %17, %19 : vector<8x128xf32>
      %c0_15 = arith.constant 0 : index
      %c0_16 = arith.constant 0 : index
      %21 = vector.load %arg6[%c0_15, %c0_16] : memref<8x128xf32, #tpu.memory_space<vmem>>, vector<8x128xf32>
      tpu.vector_store %arg6[%c0_15, %c0_16], %20 {strides = array<i32>} : memref<8x128xf32, #tpu.memory_space<vmem>>, vector<8x128xf32>,
    } else {
    }
    return
  }
  func.func @transform_0(%arg0: i32, %arg1: i32, %arg2: i32) -> (i32, i32) {
    %c0_i32 = arith.constant 0 : i32
    return %arg0, %arg2 : i32, i32
  }
  func.func @transform_1(%arg0: i32, %arg1: i32, %arg2: i32) -> (i32, i32) {
    %c0_i32 = arith.constant 0 : i32
    return %arg2, %arg1 : i32, i32
  }
  func.func @transform_2(%arg0: i32, %arg1: i32, %arg2: i32) -> (i32, i32) {
    %c0_i32 = arith.constant 0 : i32
    %c0_i32_0 = arith.constant 0 : i32
    return %c0_i32, %arg1 : i32, i32
  }
  func.func @transform_3(%arg0: i32, %arg1: i32, %arg2: i32) -> (i32, i32) {
    %c0_i32 = arith.constant 0 : i32
    return %arg0, %arg1 : i32, i32
  }
}

module attributes {stable_mosaic.version = 11 : i64} {
  func.func @_mm_kernel(%arg0: i32, %arg1: i32, %arg2: i32, %arg3: memref<8x256xbf16, #tpu.memory_space<vmem>>, %arg4: memref<256x128xbf16, #tpu.memory_space<vmem>>, %arg5: memref<1x128xf32, #tpu.memory_space<vmem>>, %arg6: memref<8x128xf32, #tpu.memory_space<vmem>>, %arg7: memref<8x128xf32, #tpu.memory_space<vmem>>) attributes {dimension_semantics = [#tpu.dimension_semantics<parallel>, #tpu.dimension_semantics<parallel>, #tpu.dimension_semantics<arbitrary>], iteration_bounds = array<i64: 1, 1, 1>, scalar_prefetch = 0 : i64, scratch_operands = 1 : i64, tpu.core_type = #tpu.core_type<tc>, window_params = [{transform_indices = @transform_0, window_bounds = array<i64: 8, 256>}, {transform_indices = @transform_1, window_bounds = array<i64: 256, 128>}, {transform_indices = @transform_2, window_bounds = array<i64: 1, 128>}, {transform_indices = @transform_3, window_bounds = array<i64: 8, 128>}]} {
    %c0_i32 = arith.constant 0 : i32
    %0 = arith.cmpi eq, %arg2, %c0_i32 : i32
    %1 = arith.extui %0 : i1 to i32
    %c0_i32_0 = arith.constant 0 : i32
    %2 = arith.cmpi ne, %1, %c0_i32_0 : i32
    scf.if %2 {
      %cst_11 = arith.constant 0.000000e+00 : f32
      %14 = vector.broadcast %cst_11 : f32 to vector<8x128xf32>
      %c0_12 = arith.constant 0 : index
      %c0_13 = arith.constant 0 : index
      %15 = vector.load %arg7[%c0_12, %c0_13] : memref<8x128xf32, #tpu.memory_space<vmem>>, vector<8x128xf32>
      tpu.vector_store %arg7[%c0_12, %c0_13], %14 {strides = array<i32>} : memref<8x128xf32, #tpu.memory_space<vmem>>, vector<8x128xf32>,
    } else {
    }
    %c0 = arith.constant 0 : index
    %c0_1 = arith.constant 0 : index
    %3 = vector.load %arg3[%c0, %c0_1] : memref<8x256xbf16, #tpu.memory_space<vmem>>, vector<8x256xbf16>
    %cst = arith.constant 0.000000e+00 : bf16
    %4 = vector.broadcast %cst : bf16 to vector<8x256xbf16>
    %5 = arith.maximumf %3, %4 : vector<8x256xbf16>
    %c0_2 = arith.constant 0 : index
    %c0_3 = arith.constant 0 : index
    %6 = vector.load %arg7[%c0_2, %c0_3] : memref<8x128xf32, #tpu.memory_space<vmem>>, vector<8x128xf32>
    %c0_4 = arith.constant 0 : index
    %c0_5 = arith.constant 0 : index
    %7 = vector.load %arg4[%c0_4, %c0_5] : memref<256x128xbf16, #tpu.memory_space<vmem>>, vector<256x128xbf16>
    %cst_6 = arith.constant dense<0.000000e+00> : vector<8x128xf32>
    %8 = tpu.matmul %5, %7, %cst_6 {dimension_numbers = #tpu.dot_dimension_numbers<[1], [0], [0], [1], [0, 0, 1, 1], [], []>} : vector<8x256xbf16>, vector<256x128xbf16>, vector<8x128xf32> -> vector<8x128xf32>
    %9 = arith.addf %6, %8 : vector<8x128xf32>
    %c0_7 = arith.constant 0 : index
    %c0_8 = arith.constant 0 : index
    %10 = vector.load %arg7[%c0_7, %c0_8] : memref<8x128xf32, #tpu.memory_space<vmem>>, vector<8x128xf32>
    tpu.vector_store %arg7[%c0_7, %c0_8], %9 {strides = array<i32>} : memref<8x128xf32, #tpu.memory_space<vmem>>, vector<8x128xf32>,
    %c0_i32_9 = arith.constant 0 : i32
    %11 = arith.cmpi eq, %arg2, %c0_i32_9 : i32
    %12 = arith.extui %11 : i1 to i32
    %c0_i32_10 = arith.constant 0 : i32
    %13 = arith.cmpi ne, %12, %c0_i32_10 : i32
    scf.if %13 {
      %c0_11 = arith.constant 0 : index
      %c0_12 = arith.constant 0 : index
      %14 = vector.load %arg7[%c0_11, %c0_12] : memref<8x128xf32, #tpu.memory_space<vmem>>, vector<8x128xf32>
      %c0_13 = arith.constant 0 : index
      %c0_14 = arith.constant 0 : index
      %15 = vector.load %arg5[%c0_13, %c0_14] : memref<1x128xf32, #tpu.memory_space<vmem>>, vector<1x128xf32>
      %16 = vector.broadcast %15 : vector<1x128xf32> to vector<8x128xf32>
      %17 = arith.addf %14, %16 : vector<8x128xf32>
      %c0_15 = arith.constant 0 : index
      %c0_16 = arith.constant 0 : index
      %18 = vector.load %arg6[%c0_15, %c0_16] : memref<8x128xf32, #tpu.memory_space<vmem>>, vector<8x128xf32>
      tpu.vector_store %arg6[%c0_15, %c0_16], %17 {strides = array<i32>} : memref<8x128xf32, #tpu.memory_space<vmem>>, vector<8x128xf32>,
    } else {
    }
    return
  }
  func.func @transform_0(%arg0: i32, %arg1: i32, %arg2: i32) -> (i32, i32) {
    %c0_i32 = arith.constant 0 : i32
    return %arg0, %arg2 : i32, i32
  }
  func.func @transform_1(%arg0: i32, %arg1: i32, %arg2: i32) -> (i32, i32) {
    %c0_i32 = arith.constant 0 : i32
    return %arg2, %arg1 : i32, i32
  }
  func.func @transform_2(%arg0: i32, %arg1: i32, %arg2: i32) -> (i32, i32) {
    %c0_i32 = arith.constant 0 : i32
    %c0_i32_0 = arith.constant 0 : i32
    return %c0_i32, %arg1 : i32, i32
  }
  func.func @transform_3(%arg0: i32, %arg1: i32, %arg2: i32) -> (i32, i32) {
    %c0_i32 = arith.constant 0 : i32
    return %arg0, %arg1 : i32, i32
  }
}

module attributes {stable_mosaic.version = 11 : i64} {
  func.func @_mm_kernel(%arg0: i32, %arg1: i32, %arg2: i32, %arg3: memref<8x256xbf16, #tpu.memory_space<vmem>>, %arg4: memref<256x128xbf16, #tpu.memory_space<vmem>>, %arg5: memref<1x128xf32, #tpu.memory_space<vmem>>, %arg6: memref<8x128xf32, #tpu.memory_space<vmem>>, %arg7: memref<8x128xf32, #tpu.memory_space<vmem>>) attributes {dimension_semantics = [#tpu.dimension_semantics<parallel>, #tpu.dimension_semantics<parallel>, #tpu.dimension_semantics<arbitrary>], iteration_bounds = array<i64: 1, 1, 4>, scalar_prefetch = 0 : i64, scratch_operands = 1 : i64, tpu.core_type = #tpu.core_type<tc>, window_params = [{transform_indices = @transform_0, window_bounds = array<i64: 8, 256>}, {transform_indices = @transform_1, window_bounds = array<i64: 256, 128>}, {transform_indices = @transform_2, window_bounds = array<i64: 1, 128>}, {transform_indices = @transform_3, window_bounds = array<i64: 8, 128>}]} {
    %c0_i32 = arith.constant 0 : i32
    %0 = arith.cmpi eq, %arg2, %c0_i32 : i32
    %1 = arith.extui %0 : i1 to i32
    %c0_i32_0 = arith.constant 0 : i32
    %2 = arith.cmpi ne, %1, %c0_i32_0 : i32
    scf.if %2 {
      %cst_11 = arith.constant 0.000000e+00 : f32
      %17 = vector.broadcast %cst_11 : f32 to vector<8x128xf32>
      %c0_12 = arith.constant 0 : index
      %c0_13 = arith.constant 0 : index
      %18 = vector.load %arg7[%c0_12, %c0_13] : memref<8x128xf32, #tpu.memory_space<vmem>>, vector<8x128xf32>
      tpu.vector_store %arg7[%c0_12, %c0_13], %17 {strides = array<i32>} : memref<8x128xf32, #tpu.memory_space<vmem>>, vector<8x128xf32>,
    } else {
    }
    %c0 = arith.constant 0 : index
    %c0_1 = arith.constant 0 : index
    %3 = vector.load %arg3[%c0, %c0_1] : memref<8x256xbf16, #tpu.memory_space<vmem>>, vector<8x256xbf16>
    %cst = arith.constant 0.000000e+00 : bf16
    %4 = vector.broadcast %cst : bf16 to vector<8x256xbf16>
    %5 = arith.cmpf ogt, %3, %4 : vector<8x256xbf16>
    %cst_2 = arith.constant 2.001950e-01 : bf16
    %6 = vector.broadcast %cst_2 : bf16 to vector<8x256xbf16>
    %7 = arith.mulf %3, %6 : vector<8x256xbf16>
    %8 = arith.select %5, %3, %7 : vector<8x256xi1>, vector<8x256xbf16>
    %c0_3 = arith.constant 0 : index
    %c0_4 = arith.constant 0 : index
    %9 = vector.load %arg7[%c0_3, %c0_4] : memref<8x128xf32, #tpu.memory_space<vmem>>, vector<8x128xf32>
    %c0_5 = arith.constant 0 : index
    %c0_6 = arith.constant 0 : index
    %10 = vector.load %arg4[%c0_5, %c0_6] : memref<256x128xbf16, #tpu.memory_space<vmem>>, vector<256x128xbf16>
    %cst_7 = arith.constant dense<0.000000e+00> : vector<8x128xf32>
    %11 = tpu.matmul %8, %10, %cst_7 {dimension_numbers = #tpu.dot_dimension_numbers<[1], [0], [0], [1], [0, 0, 1, 1], [], []>} : vector<8x256xbf16>, vector<256x128xbf16>, vector<8x128xf32> -> vector<8x128xf32>
    %12 = arith.addf %9, %11 : vector<8x128xf32>
    %c0_8 = arith.constant 0 : index
    %c0_9 = arith.constant 0 : index
    %13 = vector.load %arg7[%c0_8, %c0_9] : memref<8x128xf32, #tpu.memory_space<vmem>>, vector<8x128xf32>
    tpu.vector_store %arg7[%c0_8, %c0_9], %12 {strides = array<i32>} : memref<8x128xf32, #tpu.memory_space<vmem>>, vector<8x128xf32>,
    %c3_i32 = arith.constant 3 : i32
    %14 = arith.cmpi eq, %arg2, %c3_i32 : i32
    %15 = arith.extui %14 : i1 to i32
    %c0_i32_10 = arith.constant 0 : i32
    %16 = arith.cmpi ne, %15, %c0_i32_10 : i32
    scf.if %16 {
      %c0_11 = arith.constant 0 : index
      %c0_12 = arith.constant 0 : index
      %17 = vector.load %arg7[%c0_11, %c0_12] : memref<8x128xf32, #tpu.memory_space<vmem>>, vector<8x128xf32>
      %c0_13 = arith.constant 0 : index
      %c0_14 = arith.constant 0 : index
      %18 = vector.load %arg5[%c0_13, %c0_14] : memref<1x128xf32, #tpu.memory_space<vmem>>, vector<1x128xf32>
      %19 = vector.broadcast %18 : vector<1x128xf32> to vector<8x128xf32>
      %20 = arith.addf %17, %19 : vector<8x128xf32>
      %c0_15 = arith.constant 0 : index
      %c0_16 = arith.constant 0 : index
      %21 = vector.load %arg6[%c0_15, %c0_16] : memref<8x128xf32, #tpu.memory_space<vmem>>, vector<8x128xf32>
      tpu.vector_store %arg6[%c0_15, %c0_16], %20 {strides = array<i32>} : memref<8x128xf32, #tpu.memory_space<vmem>>, vector<8x128xf32>,
    } else {
    }
    return
  }
  func.func @transform_0(%arg0: i32, %arg1: i32, %arg2: i32) -> (i32, i32) {
    %c0_i32 = arith.constant 0 : i32
    return %arg0, %arg2 : i32, i32
  }
  func.func @transform_1(%arg0: i32, %arg1: i32, %arg2: i32) -> (i32, i32) {
    %c0_i32 = arith.constant 0 : i32
    return %arg2, %arg1 : i32, i32
  }
  func.func @transform_2(%arg0: i32, %arg1: i32, %arg2: i32) -> (i32, i32) {
    %c0_i32 = arith.constant 0 : i32
    %c0_i32_0 = arith.constant 0 : i32
    return %c0_i32, %arg1 : i32, i32
  }
  func.func @transform_3(%arg0: i32, %arg1: i32, %arg2: i32) -> (i32, i32) {
    %c0_i32 = arith.constant 0 : i32
    return %arg0, %arg1 : i32, i32
  }
}

module attributes {stable_mosaic.version = 11 : i64} {
  func.func @_mm_kernel(%arg0: i32, %arg1: i32, %arg2: i32, %arg3: memref<8x256xbf16, #tpu.memory_space<vmem>>, %arg4: memref<256x128xbf16, #tpu.memory_space<vmem>>, %arg5: memref<1x128xf32, #tpu.memory_space<vmem>>, %arg6: memref<8x128xf32, #tpu.memory_space<vmem>>, %arg7: memref<8x128xf32, #tpu.memory_space<vmem>>) attributes {dimension_semantics = [#tpu.dimension_semantics<parallel>, #tpu.dimension_semantics<parallel>, #tpu.dimension_semantics<arbitrary>], iteration_bounds = array<i64: 1, 1, 2>, scalar_prefetch = 0 : i64, scratch_operands = 1 : i64, tpu.core_type = #tpu.core_type<tc>, window_params = [{transform_indices = @transform_0, window_bounds = array<i64: 8, 256>}, {transform_indices = @transform_1, window_bounds = array<i64: 256, 128>}, {transform_indices = @transform_2, window_bounds = array<i64: 1, 128>}, {transform_indices = @transform_3, window_bounds = array<i64: 8, 128>}]} {
    %c0_i32 = arith.constant 0 : i32
    %0 = arith.cmpi eq, %arg2, %c0_i32 : i32
    %1 = arith.extui %0 : i1 to i32
    %c0_i32_0 = arith.constant 0 : i32
    %2 = arith.cmpi ne, %1, %c0_i32_0 : i32
    scf.if %2 {
      %cst_10 = arith.constant 0.000000e+00 : f32
      %14 = vector.broadcast %cst_10 : f32 to vector<8x128xf32>
      %c0_11 = arith.constant 0 : index
      %c0_12 = arith.constant 0 : index
      %15 = vector.load %arg7[%c0_11, %c0_12] : memref<8x128xf32, #tpu.memory_space<vmem>>, vector<8x128xf32>
      tpu.vector_store %arg7[%c0_11, %c0_12], %14 {strides = array<i32>} : memref<8x128xf32, #tpu.memory_space<vmem>>, vector<8x128xf32>,
    } else {
    }
    %c0 = arith.constant 0 : index
    %c0_1 = arith.constant 0 : index
    %3 = vector.load %arg3[%c0, %c0_1] : memref<8x256xbf16, #tpu.memory_space<vmem>>, vector<8x256xbf16>
    %cst = arith.constant 0.000000e+00 : bf16
    %4 = vector.broadcast %cst : bf16 to vector<8x256xbf16>
    %5 = arith.maximumf %3, %4 : vector<8x256xbf16>
    %c0_2 = arith.constant 0 : index
    %c0_3 = arith.constant 0 : index
    %6 = vector.load %arg7[%c0_2, %c0_3] : memref<8x128xf32, #tpu.memory_space<vmem>>, vector<8x128xf32>
    %c0_4 = arith.constant 0 : index
    %c0_5 = arith.constant 0 : index
    %7 = vector.load %arg4[%c0_4, %c0_5] : memref<256x128xbf16, #tpu.memory_space<vmem>>, vector<256x128xbf16>
    %cst_6 = arith.constant dense<0.000000e+00> : vector<8x128xf32>
    %8 = tpu.matmul %5, %7, %cst_6 {dimension_numbers = #tpu.dot_dimension_numbers<[1], [0], [0], [1], [0, 0, 1, 1], [], []>} : vector<8x256xbf16>, vector<256x128xbf16>, vector<8x128xf32> -> vector<8x128xf32>
    %9 = arith.addf %6, %8 : vector<8x128xf32>
    %c0_7 = arith.constant 0 : index
    %c0_8 = arith.constant 0 : index
    %10 = vector.load %arg7[%c0_7, %c0_8] : memref<8x128xf32, #tpu.memory_space<vmem>>, vector<8x128xf32>
    tpu.vector_store %arg7[%c0_7, %c0_8], %9 {strides = array<i32>} : memref<8x128xf32, #tpu.memory_space<vmem>>, vector<8x128xf32>,
    %c1_i32 = arith.constant 1 : i32
    %11 = arith.cmpi eq, %arg2, %c1_i32 : i32
    %12 = arith.extui %11 : i1 to i32
    %c0_i32_9 = arith.constant 0 : i32
    %13 = arith.cmpi ne, %12, %c0_i32_9 : i32
    scf.if %13 {
      %c0_10 = arith.constant 0 : index
      %c0_11 = arith.constant 0 : index
      %14 = vector.load %arg7[%c0_10, %c0_11] : memref<8x128xf32, #tpu.memory_space<vmem>>, vector<8x128xf32>
      %c0_12 = arith.constant 0 : index
      %c0_13 = arith.constant 0 : index
      %15 = vector.load %arg5[%c0_12, %c0_13] : memref<1x128xf32, #tpu.memory_space<vmem>>, vector<1x128xf32>
      %16 = vector.broadcast %15 : vector<1x128xf32> to vector<8x128xf32>
      %17 = arith.addf %14, %16 : vector<8x128xf32>
      %c0_14 = arith.constant 0 : index
      %c0_15 = arith.constant 0 : index
      %18 = vector.load %arg6[%c0_14, %c0_15] : memref<8x128xf32, #tpu.memory_space<vmem>>, vector<8x128xf32>
      tpu.vector_store %arg6[%c0_14, %c0_15], %17 {strides = array<i32>} : memref<8x128xf32, #tpu.memory_space<vmem>>, vector<8x128xf32>,
    } else {
    }
    return
  }
  func.func @transform_0(%arg0: i32, %arg1: i32, %arg2: i32) -> (i32, i32) {
    %c0_i32 = arith.constant 0 : i32
    return %arg0, %arg2 : i32, i32
  }
  func.func @transform_1(%arg0: i32, %arg1: i32, %arg2: i32) -> (i32, i32) {
    %c0_i32 = arith.constant 0 : i32
    return %arg2, %arg1 : i32, i32
  }
  func.func @transform_2(%arg0: i32, %arg1: i32, %arg2: i32) -> (i32, i32) {
    %c0_i32 = arith.constant 0 : i32
    %c0_i32_0 = arith.constant 0 : i32
    return %c0_i32, %arg1 : i32, i32
  }
  func.func @transform_3(%arg0: i32, %arg1: i32, %arg2: i32) -> (i32, i32) {
    %c0_i32 = arith.constant 0 : i32
    return %arg0, %arg1 : i32, i32
  }
}

module attributes {stable_mosaic.version = 11 : i64} {
  func.func @_mm_kernel(%arg0: i32, %arg1: i32, %arg2: i32, %arg3: memref<32x256xbf16, #tpu.memory_space<vmem>>, %arg4: memref<256x128xbf16, #tpu.memory_space<vmem>>, %arg5: memref<1x128xf32, #tpu.memory_space<vmem>>, %arg6: memref<32x128xf32, #tpu.memory_space<vmem>>, %arg7: memref<32x128xf32, #tpu.memory_space<vmem>>) attributes {dimension_semantics = [#tpu.dimension_semantics<parallel>, #tpu.dimension_semantics<parallel>, #tpu.dimension_semantics<arbitrary>], iteration_bounds = array<i64: 1, 1, 1>, scalar_prefetch = 0 : i64, scratch_operands = 1 : i64, tpu.core_type = #tpu.core_type<tc>, window_params = [{transform_indices = @transform_0, window_bounds = array<i64: 32, 256>}, {transform_indices = @transform_1, window_bounds = array<i64: 256, 128>}, {transform_indices = @transform_2, window_bounds = array<i64: 1, 128>}, {transform_indices = @transform_3, window_bounds = array<i64: 32, 128>}]} {
    %c0_i32 = arith.constant 0 : i32
    %0 = arith.cmpi eq, %arg2, %c0_i32 : i32
    %1 = arith.extui %0 : i1 to i32
    %c0_i32_0 = arith.constant 0 : i32
    %2 = arith.cmpi ne, %1, %c0_i32_0 : i32
    scf.if %2 {
      %cst_11 = arith.constant 0.000000e+00 : f32
      %14 = vector.broadcast %cst_11 : f32 to vector<32x128xf32>
      %c0_12 = arith.constant 0 : index
      %c0_13 = arith.constant 0 : index
      %15 = vector.load %arg7[%c0_12, %c0_13] : memref<32x128xf32, #tpu.memory_space<vmem>>, vector<32x128xf32>
      tpu.vector_store %arg7[%c0_12, %c0_13], %14 {strides = array<i32>} : memref<32x128xf32, #tpu.memory_space<vmem>>, vector<32x128xf32>,
    } else {
    }
    %c0 = arith.constant 0 : index
    %c0_1 = arith.constant 0 : index
    %3 = vector.load %arg3[%c0, %c0_1] : memref<32x256xbf16, #tpu.memory_space<vmem>>, vector<32x256xbf16>
    %cst = arith.constant 0.000000e+00 : bf16
    %4 = vector.broadcast %cst : bf16 to vector<32x256xbf16>
    %5 = arith.maximumf %3, %4 : vector<32x256xbf16>
    %c0_2 = arith.constant 0 : index
    %c0_3 = arith.constant 0 : index
    %6 = vector.load %arg7[%c0_2, %c0_3] : memref<32x128xf32, #tpu.memory_space<vmem>>, vector<32x128xf32>
    %c0_4 = arith.constant 0 : index
    %c0_5 = arith.constant 0 : index
    %7 = vector.load %arg4[%c0_4, %c0_5] : memref<256x128xbf16, #tpu.memory_space<vmem>>, vector<256x128xbf16>
    %cst_6 = arith.constant dense<0.000000e+00> : vector<32x128xf32>
    %8 = tpu.matmul %5, %7, %cst_6 {dimension_numbers = #tpu.dot_dimension_numbers<[1], [0], [0], [1], [0, 0, 1, 1], [], []>} : vector<32x256xbf16>, vector<256x128xbf16>, vector<32x128xf32> -> vector<32x128xf32>
    %9 = arith.addf %6, %8 : vector<32x128xf32>
    %c0_7 = arith.constant 0 : index
    %c0_8 = arith.constant 0 : index
    %10 = vector.load %arg7[%c0_7, %c0_8] : memref<32x128xf32, #tpu.memory_space<vmem>>, vector<32x128xf32>
    tpu.vector_store %arg7[%c0_7, %c0_8], %9 {strides = array<i32>} : memref<32x128xf32, #tpu.memory_space<vmem>>, vector<32x128xf32>,
    %c0_i32_9 = arith.constant 0 : i32
    %11 = arith.cmpi eq, %arg2, %c0_i32_9 : i32
    %12 = arith.extui %11 : i1 to i32
    %c0_i32_10 = arith.constant 0 : i32
    %13 = arith.cmpi ne, %12, %c0_i32_10 : i32
    scf.if %13 {
      %c0_11 = arith.constant 0 : index
      %c0_12 = arith.constant 0 : index
      %14 = vector.load %arg7[%c0_11, %c0_12] : memref<32x128xf32, #tpu.memory_space<vmem>>, vector<32x128xf32>
      %c0_13 = arith.constant 0 : index
      %c0_14 = arith.constant 0 : index
      %15 = vector.load %arg5[%c0_13, %c0_14] : memref<1x128xf32, #tpu.memory_space<vmem>>, vector<1x128xf32>
      %16 = vector.broadcast %15 : vector<1x128xf32> to vector<32x128xf32>
      %17 = arith.addf %14, %16 : vector<32x128xf32>
      %c0_15 = arith.constant 0 : index
      %c0_16 = arith.constant 0 : index
      %18 = vector.load %arg6[%c0_15, %c0_16] : memref<32x128xf32, #tpu.memory_space<vmem>>, vector<32x128xf32>
      tpu.vector_store %arg6[%c0_15, %c0_16], %17 {strides = array<i32>} : memref<32x128xf32, #tpu.memory_space<vmem>>, vector<32x128xf32>,
    } else {
    }
    return
  }
  func.func @transform_0(%arg0: i32, %arg1: i32, %arg2: i32) -> (i32, i32) {
    %c0_i32 = arith.constant 0 : i32
    return %arg0, %arg2 : i32, i32
  }
  func.func @transform_1(%arg0: i32, %arg1: i32, %arg2: i32) -> (i32, i32) {
    %c0_i32 = arith.constant 0 : i32
    return %arg2, %arg1 : i32, i32
  }
  func.func @transform_2(%arg0: i32, %arg1: i32, %arg2: i32) -> (i32, i32) {
    %c0_i32 = arith.constant 0 : i32
    %c0_i32_0 = arith.constant 0 : i32
    return %c0_i32, %arg1 : i32, i32
  }
  func.func @transform_3(%arg0: i32, %arg1: i32, %arg2: i32) -> (i32, i32) {
    %c0_i32 = arith.constant 0 : i32
    return %arg0, %arg1 : i32, i32
  }
}

module attributes {stable_mosaic.version = 11 : i64} {
  func.func @_mm_kernel(%arg0: i32, %arg1: i32, %arg2: i32, %arg3: memref<128x128xbf16, #tpu.memory_space<vmem>>, %arg4: memref<128x128xbf16, #tpu.memory_space<vmem>>, %arg5: memref<1x128xf32, #tpu.memory_space<vmem>>, %arg6: memref<128x128xf32, #tpu.memory_space<vmem>>, %arg7: memref<128x128xf32, #tpu.memory_space<vmem>>) attributes {dimension_semantics = [#tpu.dimension_semantics<parallel>, #tpu.dimension_semantics<parallel>, #tpu.dimension_semantics<arbitrary>], iteration_bounds = array<i64: 1, 1, 1>, scalar_prefetch = 0 : i64, scratch_operands = 1 : i64, tpu.core_type = #tpu.core_type<tc>, window_params = [{transform_indices = @transform_0, window_bounds = array<i64: 128, 128>}, {transform_indices = @transform_1, window_bounds = array<i64: 128, 128>}, {transform_indices = @transform_2, window_bounds = array<i64: 1, 128>}, {transform_indices = @transform_3, window_bounds = array<i64: 128, 128>}]} {
    %c0_i32 = arith.constant 0 : i32
    %0 = arith.cmpi eq, %arg2, %c0_i32 : i32
    %1 = arith.extui %0 : i1 to i32
    %c0_i32_0 = arith.constant 0 : i32
    %2 = arith.cmpi ne, %1, %c0_i32_0 : i32
    scf.if %2 {
      %cst_11 = arith.constant 0.000000e+00 : f32
      %14 = vector.broadcast %cst_11 : f32 to vector<128x128xf32>
      %c0_12 = arith.constant 0 : index
      %c0_13 = arith.constant 0 : index
      %15 = vector.load %arg7[%c0_12, %c0_13] : memref<128x128xf32, #tpu.memory_space<vmem>>, vector<128x128xf32>
      tpu.vector_store %arg7[%c0_12, %c0_13], %14 {strides = array<i32>} : memref<128x128xf32, #tpu.memory_space<vmem>>, vector<128x128xf32>,
    } else {
    }
    %c0 = arith.constant 0 : index
    %c0_1 = arith.constant 0 : index
    %3 = vector.load %arg3[%c0, %c0_1] : memref<128x128xbf16, #tpu.memory_space<vmem>>, vector<128x128xbf16>
    %cst = arith.constant 0.000000e+00 : bf16
    %4 = vector.broadcast %cst : bf16 to vector<128x128xbf16>
    %5 = arith.maximumf %3, %4 : vector<128x128xbf16>
    %c0_2 = arith.constant 0 : index
    %c0_3 = arith.constant 0 : index
    %6 = vector.load %arg7[%c0_2, %c0_3] : memref<128x128xf32, #tpu.memory_space<vmem>>, vector<128x128xf32>
    %c0_4 = arith.constant 0 : index
    %c0_5 = arith.constant 0 : index
    %7 = vector.load %arg4[%c0_4, %c0_5] : memref<128x128xbf16, #tpu.memory_space<vmem>>, vector<128x128xbf16>
    %cst_6 = arith.constant dense<0.000000e+00> : vector<128x128xf32>
    %8 = tpu.matmul %5, %7, %cst_6 {dimension_numbers = #tpu.dot_dimension_numbers<[1], [0], [0], [1], [0, 0, 1, 1], [], []>} : vector<128x128xbf16>, vector<128x128xbf16>, vector<128x128xf32> -> vector<128x128xf32>
    %9 = arith.addf %6, %8 : vector<128x128xf32>
    %c0_7 = arith.constant 0 : index
    %c0_8 = arith.constant 0 : index
    %10 = vector.load %arg7[%c0_7, %c0_8] : memref<128x128xf32, #tpu.memory_space<vmem>>, vector<128x128xf32>
    tpu.vector_store %arg7[%c0_7, %c0_8], %9 {strides = array<i32>} : memref<128x128xf32, #tpu.memory_space<vmem>>, vector<128x128xf32>,
    %c0_i32_9 = arith.constant 0 : i32
    %11 = arith.cmpi eq, %arg2, %c0_i32_9 : i32
    %12 = arith.extui %11 : i1 to i32
    %c0_i32_10 = arith.constant 0 : i32
    %13 = arith.cmpi ne, %12, %c0_i32_10 : i32
    scf.if %13 {
      %c0_11 = arith.constant 0 : index
      %c0_12 = arith.constant 0 : index
      %14 = vector.load %arg7[%c0_11, %c0_12] : memref<128x128xf32, #tpu.memory_space<vmem>>, vector<128x128xf32>
      %c0_13 = arith.constant 0 : index
      %c0_14 = arith.constant 0 : index
      %15 = vector.load %arg5[%c0_13, %c0_14] : memref<1x128xf32, #tpu.memory_space<vmem>>, vector<1x128xf32>
      %16 = vector.broadcast %15 : vector<1x128xf32> to vector<128x128xf32>
      %17 = arith.addf %14, %16 : vector<128x128xf32>
      %c0_15 = arith.constant 0 : index
      %c0_16 = arith.constant 0 : index
      %18 = vector.load %arg6[%c0_15, %c0_16] : memref<128x128xf32, #tpu.memory_space<vmem>>, vector<128x128xf32>
      tpu.vector_store %arg6[%c0_15, %c0_16], %17 {strides = array<i32>} : memref<128x128xf32, #tpu.memory_space<vmem>>, vector<128x128xf32>,
    } else {
    }
    return
  }
  func.func @transform_0(%arg0: i32, %arg1: i32, %arg2: i32) -> (i32, i32) {
    %c0_i32 = arith.constant 0 : i32
    return %arg0, %arg2 : i32, i32
  }
  func.func @transform_1(%arg0: i32, %arg1: i32, %arg2: i32) -> (i32, i32) {
    %c0_i32 = arith.constant 0 : i32
    return %arg2, %arg1 : i32, i32
  }
  func.func @transform_2(%arg0: i32, %arg1: i32, %arg2: i32) -> (i32, i32) {
    %c0_i32 = arith.constant 0 : i32
    %c0_i32_0 = arith.constant 0 : i32
    return %c0_i32, %arg1 : i32, i32
  }
  func.func @transform_3(%arg0: i32, %arg1: i32, %arg2: i32) -> (i32, i32) {
    %c0_i32 = arith.constant 0 : i32
    return %arg0, %arg1 : i32, i32
  }
}

module attributes {stable_mosaic.version = 11 : i64} {
  func.func @_bn_stats_kernel(%arg0: i32, %arg1: memref<32x128xf32, #tpu.memory_space<vmem>>, %arg2: memref<1x128xf32, #tpu.memory_space<vmem>>, %arg3: memref<1x128xf32, #tpu.memory_space<vmem>>, %arg4: memref<1x128xf32, #tpu.memory_space<vmem>>, %arg5: memref<1x128xf32, #tpu.memory_space<vmem>>) attributes {dimension_semantics = [#tpu.dimension_semantics<arbitrary>], iteration_bounds = array<i64: 1>, scalar_prefetch = 0 : i64, scratch_operands = 2 : i64, tpu.core_type = #tpu.core_type<tc>, window_params = [{transform_indices = @transform_0, window_bounds = array<i64: 32, 128>}, {pipeline_mode = #tpu.pipeline_mode<synchronous>, transform_indices = @transform_1, window_bounds = array<i64: 1, 128>}, {pipeline_mode = #tpu.pipeline_mode<synchronous>, transform_indices = @transform_2, window_bounds = array<i64: 1, 128>}]} {
    %c0_i32 = arith.constant 0 : i32
    %0 = arith.cmpi eq, %arg0, %c0_i32 : i32
    %1 = arith.extui %0 : i1 to i32
    %c0_i32_0 = arith.constant 0 : i32
    %2 = arith.cmpi ne, %1, %c0_i32_0 : i32
    scf.if %2 {
      %cst_13 = arith.constant 0.000000e+00 : f32
      %18 = vector.broadcast %cst_13 : f32 to vector<1x128xf32>
      %c0_14 = arith.constant 0 : index
      %c0_15 = arith.constant 0 : index
      %19 = vector.load %arg4[%c0_14, %c0_15] : memref<1x128xf32, #tpu.memory_space<vmem>>, vector<1x128xf32>
      tpu.vector_store %arg4[%c0_14, %c0_15], %18 {strides = array<i32>} : memref<1x128xf32, #tpu.memory_space<vmem>>, vector<1x128xf32>,
      %cst_16 = arith.constant 0.000000e+00 : f32
      %20 = vector.broadcast %cst_16 : f32 to vector<1x128xf32>
      %c0_17 = arith.constant 0 : index
      %c0_18 = arith.constant 0 : index
      %21 = vector.load %arg5[%c0_17, %c0_18] : memref<1x128xf32, #tpu.memory_space<vmem>>, vector<1x128xf32>
      tpu.vector_store %arg5[%c0_17, %c0_18], %20 {strides = array<i32>} : memref<1x128xf32, #tpu.memory_space<vmem>>, vector<1x128xf32>,
    } else {
    }
    %c0 = arith.constant 0 : index
    %c0_1 = arith.constant 0 : index
    %3 = vector.load %arg1[%c0, %c0_1] : memref<32x128xf32, #tpu.memory_space<vmem>>, vector<32x128xf32>
    %c0_2 = arith.constant 0 : index
    %c0_3 = arith.constant 0 : index
    %4 = vector.load %arg4[%c0_2, %c0_3] : memref<1x128xf32, #tpu.memory_space<vmem>>, vector<1x128xf32>
    %cst = arith.constant dense<0.000000e+00> : vector<128xf32>
    %5 = vector.multi_reduction <add>, %3, %cst [0] : vector<32x128xf32> to vector<128xf32>
    %6 = vector.shape_cast %5 : vector<128xf32> to vector<1x128xf32>
    %7 = arith.addf %4, %6 : vector<1x128xf32>
    %c0_4 = arith.constant 0 : index
    %c0_5 = arith.constant 0 : index
    %8 = vector.load %arg4[%c0_4, %c0_5] : memref<1x128xf32, #tpu.memory_space<vmem>>, vector<1x128xf32>
    tpu.vector_store %arg4[%c0_4, %c0_5], %7 {strides = array<i32>} : memref<1x128xf32, #tpu.memory_space<vmem>>, vector<1x128xf32>,
    %c0_6 = arith.constant 0 : index
    %c0_7 = arith.constant 0 : index
    %9 = vector.load %arg5[%c0_6, %c0_7] : memref<1x128xf32, #tpu.memory_space<vmem>>, vector<1x128xf32>
    %10 = arith.mulf %3, %3 : vector<32x128xf32>
    %cst_8 = arith.constant dense<0.000000e+00> : vector<128xf32>
    %11 = vector.multi_reduction <add>, %10, %cst_8 [0] : vector<32x128xf32> to vector<128xf32>
    %12 = vector.shape_cast %11 : vector<128xf32> to vector<1x128xf32>
    %13 = arith.addf %9, %12 : vector<1x128xf32>
    %c0_9 = arith.constant 0 : index
    %c0_10 = arith.constant 0 : index
    %14 = vector.load %arg5[%c0_9, %c0_10] : memref<1x128xf32, #tpu.memory_space<vmem>>, vector<1x128xf32>
    tpu.vector_store %arg5[%c0_9, %c0_10], %13 {strides = array<i32>} : memref<1x128xf32, #tpu.memory_space<vmem>>, vector<1x128xf32>,
    %c0_i32_11 = arith.constant 0 : i32
    %15 = arith.cmpi eq, %arg0, %c0_i32_11 : i32
    %16 = arith.extui %15 : i1 to i32
    %c0_i32_12 = arith.constant 0 : i32
    %17 = arith.cmpi ne, %16, %c0_i32_12 : i32
    scf.if %17 {
      %c0_13 = arith.constant 0 : index
      %c0_14 = arith.constant 0 : index
      %18 = vector.load %arg4[%c0_13, %c0_14] : memref<1x128xf32, #tpu.memory_space<vmem>>, vector<1x128xf32>
      %c0_15 = arith.constant 0 : index
      %c0_16 = arith.constant 0 : index
      %19 = vector.load %arg2[%c0_15, %c0_16] : memref<1x128xf32, #tpu.memory_space<vmem>>, vector<1x128xf32>
      tpu.vector_store %arg2[%c0_15, %c0_16], %18 {strides = array<i32>} : memref<1x128xf32, #tpu.memory_space<vmem>>, vector<1x128xf32>,
      %c0_17 = arith.constant 0 : index
      %c0_18 = arith.constant 0 : index
      %20 = vector.load %arg5[%c0_17, %c0_18] : memref<1x128xf32, #tpu.memory_space<vmem>>, vector<1x128xf32>
      %c0_19 = arith.constant 0 : index
      %c0_20 = arith.constant 0 : index
      %21 = vector.load %arg3[%c0_19, %c0_20] : memref<1x128xf32, #tpu.memory_space<vmem>>, vector<1x128xf32>
      tpu.vector_store %arg3[%c0_19, %c0_20], %20 {strides = array<i32>} : memref<1x128xf32, #tpu.memory_space<vmem>>, vector<1x128xf32>,
    } else {
    }
    return
  }
  func.func @transform_0(%arg0: i32) -> (i32, i32) {
    %c0_i32 = arith.constant 0 : i32
    %c0_i32_0 = arith.constant 0 : i32
    return %arg0, %c0_i32 : i32, i32
  }
  func.func @transform_1(%arg0: i32) -> (i32, i32) {
    %c0_i32 = arith.constant 0 : i32
    %c0_i32_0 = arith.constant 0 : i32
    %c0_i32_1 = arith.constant 0 : i32
    return %c0_i32, %c0_i32_0 : i32, i32
  }
  func.func @transform_2(%arg0: i32) -> (i32, i32) {
    %c0_i32 = arith.constant 0 : i32
    %c0_i32_0 = arith.constant 0 : i32
    %c0_i32_1 = arith.constant 0 : i32
    return %c0_i32, %c0_i32_0 : i32, i32
  }
}

module attributes {stable_mosaic.version = 11 : i64} {
  func.func @_bn_apply_kernel(%arg0: i32, %arg1: memref<32x128xf32, #tpu.memory_space<vmem>>, %arg2: memref<1x128xf32, #tpu.memory_space<vmem>>, %arg3: memref<1x128xf32, #tpu.memory_space<vmem>>, %arg4: memref<32x128xf32, #tpu.memory_space<vmem>>) attributes {dimension_semantics = [#tpu.dimension_semantics<parallel>], iteration_bounds = array<i64: 1>, scalar_prefetch = 0 : i64, scratch_operands = 0 : i64, tpu.core_type = #tpu.core_type<tc>, window_params = [{transform_indices = @transform_0, window_bounds = array<i64: 32, 128>}, {pipeline_mode = #tpu.pipeline_mode<synchronous>, transform_indices = @transform_1, window_bounds = array<i64: 1, 128>}, {pipeline_mode = #tpu.pipeline_mode<synchronous>, transform_indices = @transform_2, window_bounds = array<i64: 1, 128>}, {transform_indices = @transform_3, window_bounds = array<i64: 32, 128>}]} {
    %c0 = arith.constant 0 : index
    %c0_0 = arith.constant 0 : index
    %0 = vector.load %arg1[%c0, %c0_0] : memref<32x128xf32, #tpu.memory_space<vmem>>, vector<32x128xf32>
    %c0_1 = arith.constant 0 : index
    %c0_2 = arith.constant 0 : index
    %1 = vector.load %arg2[%c0_1, %c0_2] : memref<1x128xf32, #tpu.memory_space<vmem>>, vector<1x128xf32>
    %2 = vector.broadcast %1 : vector<1x128xf32> to vector<32x128xf32>
    %3 = arith.subf %0, %2 : vector<32x128xf32>
    %c0_3 = arith.constant 0 : index
    %c0_4 = arith.constant 0 : index
    %4 = vector.load %arg3[%c0_3, %c0_4] : memref<1x128xf32, #tpu.memory_space<vmem>>, vector<1x128xf32>
    %5 = vector.broadcast %4 : vector<1x128xf32> to vector<32x128xf32>
    %6 = arith.mulf %3, %5 : vector<32x128xf32>
    %c0_5 = arith.constant 0 : index
    %c0_6 = arith.constant 0 : index
    %7 = vector.load %arg4[%c0_5, %c0_6] : memref<32x128xf32, #tpu.memory_space<vmem>>, vector<32x128xf32>
    tpu.vector_store %arg4[%c0_5, %c0_6], %6 {strides = array<i32>} : memref<32x128xf32, #tpu.memory_space<vmem>>, vector<32x128xf32>,
    return
  }
  func.func @transform_0(%arg0: i32) -> (i32, i32) {
    %c0_i32 = arith.constant 0 : i32
    %c0_i32_0 = arith.constant 0 : i32
    return %arg0, %c0_i32 : i32, i32
  }
  func.func @transform_1(%arg0: i32) -> (i32, i32) {
    %c0_i32 = arith.constant 0 : i32
    %c0_i32_0 = arith.constant 0 : i32
    %c0_i32_1 = arith.constant 0 : i32
    return %c0_i32, %c0_i32_0 : i32, i32
  }
  func.func @transform_2(%arg0: i32) -> (i32, i32) {
    %c0_i32 = arith.constant 0 : i32
    %c0_i32_0 = arith.constant 0 : i32
    %c0_i32_1 = arith.constant 0 : i32
    return %c0_i32, %c0_i32_0 : i32, i32
  }
  func.func @transform_3(%arg0: i32) -> (i32, i32) {
    %c0_i32 = arith.constant 0 : i32
    %c0_i32_0 = arith.constant 0 : i32
    return %arg0, %c0_i32 : i32, i32
  }
}

module attributes {stable_mosaic.version = 11 : i64} {
  func.func @_mm_kernel(%arg0: i32, %arg1: i32, %arg2: i32, %arg3: memref<256x128xbf16, #tpu.memory_space<vmem>>, %arg4: memref<128x128xbf16, #tpu.memory_space<vmem>>, %arg5: memref<1x128xf32, #tpu.memory_space<vmem>>, %arg6: memref<256x128xf32, #tpu.memory_space<vmem>>, %arg7: memref<256x128xf32, #tpu.memory_space<vmem>>) attributes {dimension_semantics = [#tpu.dimension_semantics<parallel>, #tpu.dimension_semantics<parallel>, #tpu.dimension_semantics<arbitrary>], iteration_bounds = array<i64: 2, 1, 1>, scalar_prefetch = 0 : i64, scratch_operands = 1 : i64, tpu.core_type = #tpu.core_type<tc>, window_params = [{transform_indices = @transform_0, window_bounds = array<i64: 256, 128>}, {transform_indices = @transform_1, window_bounds = array<i64: 128, 128>}, {transform_indices = @transform_2, window_bounds = array<i64: 1, 128>}, {transform_indices = @transform_3, window_bounds = array<i64: 256, 128>}]} {
    %c0_i32 = arith.constant 0 : i32
    %0 = arith.cmpi eq, %arg2, %c0_i32 : i32
    %1 = arith.extui %0 : i1 to i32
    %c0_i32_0 = arith.constant 0 : i32
    %2 = arith.cmpi ne, %1, %c0_i32_0 : i32
    scf.if %2 {
      %cst_11 = arith.constant 0.000000e+00 : f32
      %14 = vector.broadcast %cst_11 : f32 to vector<256x128xf32>
      %c0_12 = arith.constant 0 : index
      %c0_13 = arith.constant 0 : index
      %15 = vector.load %arg7[%c0_12, %c0_13] : memref<256x128xf32, #tpu.memory_space<vmem>>, vector<256x128xf32>
      tpu.vector_store %arg7[%c0_12, %c0_13], %14 {strides = array<i32>} : memref<256x128xf32, #tpu.memory_space<vmem>>, vector<256x128xf32>,
    } else {
    }
    %c0 = arith.constant 0 : index
    %c0_1 = arith.constant 0 : index
    %3 = vector.load %arg3[%c0, %c0_1] : memref<256x128xbf16, #tpu.memory_space<vmem>>, vector<256x128xbf16>
    %cst = arith.constant 0.000000e+00 : bf16
    %4 = vector.broadcast %cst : bf16 to vector<256x128xbf16>
    %5 = arith.maximumf %3, %4 : vector<256x128xbf16>
    %c0_2 = arith.constant 0 : index
    %c0_3 = arith.constant 0 : index
    %6 = vector.load %arg7[%c0_2, %c0_3] : memref<256x128xf32, #tpu.memory_space<vmem>>, vector<256x128xf32>
    %c0_4 = arith.constant 0 : index
    %c0_5 = arith.constant 0 : index
    %7 = vector.load %arg4[%c0_4, %c0_5] : memref<128x128xbf16, #tpu.memory_space<vmem>>, vector<128x128xbf16>
    %cst_6 = arith.constant dense<0.000000e+00> : vector<256x128xf32>
    %8 = tpu.matmul %5, %7, %cst_6 {dimension_numbers = #tpu.dot_dimension_numbers<[1], [0], [0], [1], [0, 0, 1, 1], [], []>} : vector<256x128xbf16>, vector<128x128xbf16>, vector<256x128xf32> -> vector<256x128xf32>
    %9 = arith.addf %6, %8 : vector<256x128xf32>
    %c0_7 = arith.constant 0 : index
    %c0_8 = arith.constant 0 : index
    %10 = vector.load %arg7[%c0_7, %c0_8] : memref<256x128xf32, #tpu.memory_space<vmem>>, vector<256x128xf32>
    tpu.vector_store %arg7[%c0_7, %c0_8], %9 {strides = array<i32>} : memref<256x128xf32, #tpu.memory_space<vmem>>, vector<256x128xf32>,
    %c0_i32_9 = arith.constant 0 : i32
    %11 = arith.cmpi eq, %arg2, %c0_i32_9 : i32
    %12 = arith.extui %11 : i1 to i32
    %c0_i32_10 = arith.constant 0 : i32
    %13 = arith.cmpi ne, %12, %c0_i32_10 : i32
    scf.if %13 {
      %c0_11 = arith.constant 0 : index
      %c0_12 = arith.constant 0 : index
      %14 = vector.load %arg7[%c0_11, %c0_12] : memref<256x128xf32, #tpu.memory_space<vmem>>, vector<256x128xf32>
      %c0_13 = arith.constant 0 : index
      %c0_14 = arith.constant 0 : index
      %15 = vector.load %arg5[%c0_13, %c0_14] : memref<1x128xf32, #tpu.memory_space<vmem>>, vector<1x128xf32>
      %16 = vector.broadcast %15 : vector<1x128xf32> to vector<256x128xf32>
      %17 = arith.addf %14, %16 : vector<256x128xf32>
      %18 = math.tanh %17 : vector<256x128xf32>
      %c0_15 = arith.constant 0 : index
      %c0_16 = arith.constant 0 : index
      %19 = vector.load %arg6[%c0_15, %c0_16] : memref<256x128xf32, #tpu.memory_space<vmem>>, vector<256x128xf32>
      tpu.vector_store %arg6[%c0_15, %c0_16], %18 {strides = array<i32>} : memref<256x128xf32, #tpu.memory_space<vmem>>, vector<256x128xf32>,
    } else {
    }
    return
  }
  func.func @transform_0(%arg0: i32, %arg1: i32, %arg2: i32) -> (i32, i32) {
    %c0_i32 = arith.constant 0 : i32
    return %arg0, %arg2 : i32, i32
  }
  func.func @transform_1(%arg0: i32, %arg1: i32, %arg2: i32) -> (i32, i32) {
    %c0_i32 = arith.constant 0 : i32
    return %arg2, %arg1 : i32, i32
  }
  func.func @transform_2(%arg0: i32, %arg1: i32, %arg2: i32) -> (i32, i32) {
    %c0_i32 = arith.constant 0 : i32
    %c0_i32_0 = arith.constant 0 : i32
    return %c0_i32, %arg1 : i32, i32
  }
  func.func @transform_3(%arg0: i32, %arg1: i32, %arg2: i32) -> (i32, i32) {
    %c0_i32 = arith.constant 0 : i32
    return %arg0, %arg1 : i32, i32
  }
}

</mosaic_0001>

<llo_original>
// kernel: _lambda_.39
$region0: #{_lambda_.39}
  #allocation0 [shape = 'u32[]', space=smem, size = 0x4, offset = 0x4, fixed_abs, tag = 'smem constant byte address 0x4 - core index']
  #allocation1 [shape = 'u32[144,128]{1,0:T(1,128)}', space=vmem, size = 0x12000, scoped, tag = 'internal scratch']
  #allocation2 [shape = 'f32[256,128]{1,0:T(8,128)}', space=vmem, size = 0x20000, scoped, tag = 'scratch operand']
  %s0 = inlined_call_operand.vmem [shape: bf16[512,128], index: 0, kind: input, shape index: {}]
  %s1 = inlined_call_operand.vmem [shape: bf16[128,128], index: 1, kind: input, shape index: {}]
  %s2 = inlined_call_operand.vmem [shape: f32[1,128], index: 2, kind: input, shape index: {}]
  %s3 = inlined_call_operand.vmem [shape: f32[512,128], index: 3, kind: output, shape index: {}]
  %s4 = sld [smem:[#allocation0]]
  $region53: #{_lambda_.39} parent=0
    _
  %s6 = ssub.s32 1, %s4
  %s7 = scalar_select 0, %s6, %s4
  loop: start=0, step=1, limit=4
  $region2: #{_lambda_.39} parent=0 // loop_pre_header
    _
  $region3: #{_lambda_.39} parent=0 // loop_header
    %s9 = sphi 0, %s13
    %p10 = scmp.ge.s32.totalorder %s9, 4
    %s16 = sphi 0, %s35
    %s17 = sphi 0, %s31
    %s18 = sphi 0, %s27
    %s19 = sphi 0, %s16
    %s20 = sphi 0, %s17
    %s21 = sphi 0, %s18
    %s22 = sphi 0, %s19
    %s23 = sphi 0, %s20
    %s24 = sphi 0, %s21
    %s40 = sphi 0, %s42
    %s43 = sphi 0, %s40
    %s44 = sphi 0, %s43
    %s60 = sphi 0, %s44
    %s68 = sphi 0, %s70
    %s71 = sphi 0, %s68
    %s72 = sphi 0, %s71
    %s88 = sphi 0, %s72
    %s94 = sphi 0, %s96
    %s97 = sphi 0, %s94
    %s98 = sphi 0, %s97
    %s114 = sphi 0, %s98
    %s122 = sphi 0, %s124
    %s125 = sphi 0, %s122
    %s126 = sphi 0, %s125
    %s142 = sphi 0, %s126
  $region4: #{_lambda_.39} parent=0 // loop_header_branch
    %12 = sbr.rel (%p10) target = $region8
  $region5: #{_lambda_.39} parent=0 // loop_body
    %s14 = ssub.s32 %s9, 1
    %s15 = ssub.s32 %s9, 2
    %s25 = sadd.s32 1, %s18
    %p26 = scmp.ge.s32.totalorder %s25, 1
    %s27 = scalar_select %p26, 0, %s25
    %s28 = sadd.s32 1, %s17
    %s29 = scalar_select %p26, %s28, %s17
    %p30 = scmp.ge.s32.totalorder %s29, 1
    %s31 = scalar_select %p30, 0, %s29
    %s32 = sadd.s32 1, %s16
    %s33 = scalar_select %p30, %s32, %s16
    %p34 = scmp.ge.s32.totalorder %s33, 2
    %s35 = scalar_select %p34, 0, %s33
    %s36 = ssub.s32 %s16, %s35
    %s37 = ssub.s32 %s18, %s27
    %s38 = sor.u32 %s36, %s37
    %p39 = scmp.eq.s32.totalorder %s38, 0
    %s41 = sadd.s32 %s40, 1
    %s42 = scalar_select %p39, %s40, %s41
    %p45 = pneg %p39
    %p46 = scmp.eq.s32.totalorder %s9, 1
    %p47 = por %p45, %p46
    %p48 = scmp.ne.s32.totalorder %s40, %s43
    %p49 = scmp.eq.s32.totalorder %s9, 0
    %p50 = por %p48, %p49
    %p51 = scmp.ne.s32.totalorder %s40, %s43
    %p52 = scmp.eq.s32.totalorder %s14, 1
    %p53 = por %p51, %p52
    %p54 = scmp.ne.s32.totalorder %s43, %s44
    %p55 = scmp.eq.s32.totalorder %s14, 0
    %p56 = por %p54, %p55
    %p57 = scmp.ne.s32.totalorder %s43, %s44
    %p58 = scmp.eq.s32.totalorder %s15, 1
    %p59 = por %p57, %p58
    %p61 = scmp.ne.s32.totalorder %s44, %s60
    %p62 = scmp.eq.s32.totalorder %s15, 0
    %p63 = por %p61, %p62
    %s64 = ssub.s32 %s18, %s27
    %s65 = ssub.s32 %s17, %s31
    %s66 = sor.u32 %s64, %s65
    %p67 = scmp.eq.s32.totalorder %s66, 0
    %s69 = sadd.s32 %s68, 1
    %s70 = scalar_select %p67, %s68, %s69
    %p73 = pneg %p67
    %p74 = scmp.eq.s32.totalorder %s9, 1
    %p75 = por %p73, %p74
    %p76 = scmp.ne.s32.totalorder %s68, %s71
    %p77 = scmp.eq.s32.totalorder %s9, 0
    %p78 = por %p76, %p77
    %p79 = scmp.ne.s32.totalorder %s68, %s71
    %p80 = scmp.eq.s32.totalorder %s14, 1
    %p81 = por %p79, %p80
    %p82 = scmp.ne.s32.totalorder %s71, %s72
    %p83 = scmp.eq.s32.totalorder %s14, 0
    %p84 = por %p82, %p83
    %p85 = scmp.ne.s32.totalorder %s71, %s72
    %p86 = scmp.eq.s32.totalorder %s15, 1
    %p87 = por %p85, %p86
    %p89 = scmp.ne.s32.totalorder %s72, %s88
    %p90 = scmp.eq.s32.totalorder %s15, 0
    %p91 = por %p89, %p90
    %s92 = ssub.s32 %s17, %s31
    %p93 = scmp.eq.s32.totalorder %s92, 0
    %s95 = sadd.s32 %s94, 1
    %s96 = scalar_select %p93, %s94, %s95
    %p99 = pneg %p93
    %p100 = scmp.eq.s32.totalorder %s9, 1
    %p101 = por %p99, %p100
    %p102 = scmp.ne.s32.totalorder %s94, %s97
    %p103 = scmp.eq.s32.totalorder %s9, 0
    %p104 = por %p102, %p103
    %p105 = scmp.ne.s32.totalorder %s94, %s97
    %p106 = scmp.eq.s32.totalorder %s14, 1
    %p107 = por %p105, %p106
    %p108 = scmp.ne.s32.totalorder %s97, %s98
    %p109 = scmp.eq.s32.totalorder %s14, 0
    %p110 = por %p108, %p109
    %p111 = scmp.ne.s32.totalorder %s97, %s98
    %p112 = scmp.eq.s32.totalorder %s15, 1
    %p113 = por %p111, %p112
    %p115 = scmp.ne.s32.totalorder %s98, %s114
    %p116 = scmp.eq.s32.totalorder %s15, 0
    %p117 = por %p115, %p116
    %s118 = ssub.s32 %s16, %s35
    %s119 = ssub.s32 %s17, %s31
    %s120 = sor.u32 %s118, %s119
    %p121 = scmp.eq.s32.totalorder %s120, 0
    %s123 = sadd.s32 %s122, 1
    %s124 = scalar_select %p121, %s122, %s123
    %p127 = pneg %p121
    %p128 = scmp.eq.s32.totalorder %s9, 1
    %p129 = por %p127, %p128
    %p130 = scmp.ne.s32.totalorder %s122, %s125
    %p131 = scmp.eq.s32.totalorder %s9, 0
    %p132 = por %p130, %p131
    %p133 = scmp.ne.s32.totalorder %s122, %s125
    %p134 = scmp.eq.s32.totalorder %s14, 1
    %p135 = por %p133, %p134
    %p136 = scmp.ne.s32.totalorder %s125, %s126
    %p137 = scmp.eq.s32.totalorder %s14, 0
    %p138 = por %p136, %p137
    %p139 = scmp.ne.s32.totalorder %s125, %s126
    %p140 = scmp.eq.s32.totalorder %s15, 1
    %p141 = por %p139, %p140
    %p143 = scmp.ne.s32.totalorder %s126, %s142
    %p144 = scmp.eq.s32.totalorder %s15, 0
    %p145 = por %p143, %p144
    %p146 = scmp.le.s32.totalorder 1, %s9
    %p147 = scmp.lt.s32.totalorder %s9, 3
    %p148 = pnand %p146, %p147
    %p149 = pneg %p148
    // Predicated region
    $region9: #{_lambda_.39} parent=5 // pred_check
      _
    $region10: #{_lambda_.39} parent=5 // pred_check_branch
      %151 = sbr.rel (%p148) target = $region12
    $region11: #{_lambda_.39} parent=5 // pred_region
      %s152 = ssub.s32 %s9, 1
      // Predicated region
      $region13: #{_lambda_.39} parent=11 // pred_check
        %p153 = pneg %p84
      $region14: #{_lambda_.39} parent=11 // pred_check_branch
        %155 = sbr.rel (%p153) target = $region16
      $region15: #{_lambda_.39} parent=11 // pred_region
        %s156 = smul.u32 16, %s21
        %p157 = scmp.lt.s32.totalorder %s156, 15
        %s158 = scalar_select %p157, %s156, 15
        %p159 = scmp.lt.s32.totalorder %s20, 0
        %s160 = scalar_select %p159, %s20, 0
        %s161 = sadd.s32 %s160, %s158
        %s162 = smul.addr %s161, 4
        %s163 = scalar_lea.vmem %s1, %s162
        %s164 = smul.u32 16, %s21
      $region16: #{_lambda_.39} parent=11 // pred_fallthru
        _
      // Predicated region
      $region17: #{_lambda_.39} parent=11 // pred_check
        %p165 = pneg %p110
      $region18: #{_lambda_.39} parent=11 // pred_check_branch
        %167 = sbr.rel (%p165) target = $region20
      $region19: #{_lambda_.39} parent=11 // pred_region
        %p168 = scmp.lt.s32.totalorder %s20, 0
        %s169 = scalar_select %p168, %s20, 0
        %s170 = scalar_lea.vmem %s2, %s169
      $region20: #{_lambda_.39} parent=11 // pred_fallthru
        _
    $region12: #{_lambda_.39} parent=5 // pred_fallthru
      _
    %p171 = scmp.lt.s32.totalorder %s9, 2
    // Predicated region
    $region21: #{_lambda_.39} parent=5 // pred_check
      %p172 = pneg %p171
    $region22: #{_lambda_.39} parent=5 // pred_check_branch
      %174 = sbr.rel (%p172) target = $region24
    $region23: #{_lambda_.39} parent=5 // pred_region
      // Predicated region
      $region25: #{_lambda_.39} parent=23 // pred_check
        %p175 = pneg %p50
      $region26: #{_lambda_.39} parent=23 // pred_check_branch
        %177 = sbr.rel (%p175) target = $region28
      $region27: #{_lambda_.39} parent=23 // pred_region
        %s178 = smul.u32 32, %s16
        %p179 = scmp.lt.s32.totalorder %s178, 63
        %s180 = scalar_select %p179, %s178, 63
        %p181 = scmp.lt.s32.totalorder %s18, 0
        %s182 = scalar_select %p181, %s18, 0
        %s183 = sadd.s32 %s182, %s180
        %s184 = smul.addr %s183, 4
        %s185 = scalar_lea.vmem %s0, %s184
        %s186 = smul.u32 32, %s16
      $region28: #{_lambda_.39} parent=23 // pred_fallthru
        _
    $region24: #{_lambda_.39} parent=5 // pred_fallthru
      _
    %p187 = scmp.le.s32.totalorder 1, %s9
    %p188 = scmp.lt.s32.totalorder %s9, 3
    %p189 = pnand %p187, %p188
    %p190 = pneg %p189
    // Predicated region
    $region29: #{_lambda_.39} parent=5 // pred_check
      _
    $region30: #{_lambda_.39} parent=5 // pred_check_branch
      %192 = sbr.rel (%p189) target = $region32
    $region31: #{_lambda_.39} parent=5 // pred_region
      %s193 = ssub.s32 %s9, 1
      %s194 = smul.u32 32, %s19
      %p195 = scmp.lt.s32.totalorder %s194, 63
      %s196 = scalar_select %p195, %s194, 63
      %p197 = scmp.lt.s32.totalorder %s21, 0
      %s198 = scalar_select %p197, %s21, 0
      %s199 = sadd.s32 %s198, %s196
      %s200 = smul.addr %s199, 4
      %s201 = scalar_lea.vmem %s0, %s200
      %p202 = pneg %p56
      %p203 = pneg %p53
      %s204 = smul.u32 16, %s21
      %p205 = scmp.lt.s32.totalorder %s204, 15
      %s206 = scalar_select %p205, %s204, 15
      %p207 = scmp.lt.s32.totalorder %s20, 0
      %s208 = scalar_select %p207, %s20, 0
      %s209 = sadd.s32 %s208, %s206
      %s210 = smul.addr %s209, 4
      %s211 = scalar_lea.vmem %s1, %s210
      %p212 = pneg %p84
      %p213 = pneg %p81
      %p214 = scmp.lt.s32.totalorder %s20, 0
      %s215 = scalar_select %p214, %s20, 0
      %s216 = scalar_lea.vmem %s2, %s215
      %p217 = pneg %p110
      %p218 = pneg %p107
      %p219 = pneg %p138
      %p220 = pneg %p135
      %s221 = smul.u32 32, %s19
      %p222 = scmp.lt.s32.totalorder %s221, 63
      %s223 = scalar_select %p222, %s221, 63
      %p224 = scmp.lt.s32.totalorder %s20, 0
      %s225 = scalar_select %p224, %s20, 0
      %s226 = sadd.s32 %s225, %s223
      %s227 = smul.addr %s226, 8
      %s228 = scalar_lea.vmem %s3, %s227
      %s229 = smul.u32 32, %s19
      %p230 = scmp.lt.s32.totalorder %s229, 63
      %s231 = scalar_select %p230, %s229, 63
      %p232 = scmp.lt.s32.totalorder %s21, 0
      %s233 = scalar_select %p232, %s21, 0
      %s234 = sadd.s32 %s233, %s231
      %s235 = smul.addr %s234, 4
      %s236 = scalar_lea.vmem %s0, %s235
      %s237 = smul.u32 32, %s19
      %s238 = smul.u32 16, %s21
      %p239 = scmp.lt.s32.totalorder %s238, 15
      %s240 = scalar_select %p239, %s238, 15
      %p241 = scmp.lt.s32.totalorder %s20, 0
      %s242 = scalar_select %p241, %s20, 0
      %s243 = sadd.s32 %s242, %s240
      %s244 = smul.addr %s243, 4
      %s245 = scalar_lea.vmem %s1, %s244
      %s246 = smul.u32 16, %s21
      %p247 = scmp.lt.s32.totalorder %s20, 0
      %s248 = scalar_select %p247, %s20, 0
      %s249 = scalar_lea.vmem %s2, %s248
      %s250 = smul.u32 32, %s19
      %p251 = scmp.lt.s32.totalorder %s250, 63
      %s252 = scalar_select %p251, %s250, 63
      %p253 = scmp.lt.s32.totalorder %s20, 0
      %s254 = scalar_select %p253, %s20, 0
      %s255 = sadd.s32 %s254, %s252
      %s256 = smul.addr %s255, 8
      %s257 = scalar_lea.vmem %s3, %s256
      %s258 = smul.u32 32, %s19
      %p260 = scmp.eq.s32.totalorder %s21, 0
      // Predicated region
      $region33: #{_lambda_.39} parent=31 // pred_check
        %p261 = pneg %p260
      $region34: #{_lambda_.39} parent=31 // pred_check_branch
        %263 = sbr.rel (%p261) target = $region36
      $region35: #{_lambda_.39} parent=31 // pred_region
        %264 = vst [vmem:[#allocation2] sm:$0xff] 0.0
        %265 = vst [vmem:[#allocation2 + $0x8] sm:$0xff] 0.0
        %266 = vst [vmem:[#allocation2 + $0x10] sm:$0xff] 0.0
        %267 = vst [vmem:[#allocation2 + $0x18] sm:$0xff] 0.0
        %268 = vst [vmem:[#allocation2 + $0x20] sm:$0xff] 0.0
        %269 = vst [vmem:[#allocation2 + $0x28] sm:$0xff] 0.0
        %270 = vst [vmem:[#allocation2 + $0x30] sm:$0xff] 0.0
        %271 = vst [vmem:[#allocation2 + $0x38] sm:$0xff] 0.0
        %272 = vst [vmem:[#allocation2 + $0x40] sm:$0xff] 0.0
        %273 = vst [vmem:[#allocation2 + $0x48] sm:$0xff] 0.0
        %274 = vst [vmem:[#allocation2 + $0x50] sm:$0xff] 0.0
        %275 = vst [vmem:[#allocation2 + $0x58] sm:$0xff] 0.0
        %276 = vst [vmem:[#allocation2 + $0x60] sm:$0xff] 0.0
        %277 = vst [vmem:[#allocation2 + $0x68] sm:$0xff] 0.0
        %278 = vst [vmem:[#allocation2 + $0x70] sm:$0xff] 0.0
        %279 = vst [vmem:[#allocation2 + $0x78] sm:$0xff] 0.0
        %280 = vst [vmem:[#allocation2 + $0x80] sm:$0xff] 0.0
        %281 = vst [vmem:[#allocation2 + $0x88] sm:$0xff] 0.0
        %282 = vst [vmem:[#allocation2 + $0x90] sm:$0xff] 0.0
        %283 = vst [vmem:[#allocation2 + $0x98] sm:$0xff] 0.0
        %284 = vst [vmem:[#allocation2 + $0xa0] sm:$0xff] 0.0
        %285 = vst [vmem:[#allocation2 + $0xa8] sm:$0xff] 0.0
        %286 = vst [vmem:[#allocation2 + $0xb0] sm:$0xff] 0.0
        %287 = vst [vmem:[#allocation2 + $0xb8] sm:$0xff] 0.0
        %288 = vst [vmem:[#allocation2 + $0xc0] sm:$0xff] 0.0
        %289 = vst [vmem:[#allocation2 + $0xc8] sm:$0xff] 0.0
        %290 = vst [vmem:[#allocation2 + $0xd0] sm:$0xff] 0.0
        %291 = vst [vmem:[#allocation2 + $0xd8] sm:$0xff] 0.0
        %292 = vst [vmem:[#allocation2 + $0xe0] sm:$0xff] 0.0
        %293 = vst [vmem:[#allocation2 + $0xe8] sm:$0xff] 0.0
        %294 = vst [vmem:[#allocation2 + $0xf0] sm:$0xff] 0.0
        %295 = vst [vmem:[#allocation2 + $0xf8] sm:$0xff] 0.0
      $region36: #{_lambda_.39} parent=31 // pred_fallthru
        _
      %v296 = vld [vmem:[%s236] sm:$0xf]
      %v297 = vld [vmem:[%s236 + $0x4] sm:$0xf]
      %v298 = vld [vmem:[%s236 + $0x8] sm:$0xf]
      %v299 = vld [vmem:[%s236 + $0xc] sm:$0xf]
      %v300 = vld [vmem:[%s236 + $0x10] sm:$0xf]
      %v301 = vld [vmem:[%s236 + $0x14] sm:$0xf]
      %v302 = vld [vmem:[%s236 + $0x18] sm:$0xf]
      %v303 = vld [vmem:[%s236 + $0x1c] sm:$0xf]
      %v304 = vld [vmem:[%s236 + $0x20] sm:$0xf]
      %v305 = vld [vmem:[%s236 + $0x24] sm:$0xf]
      %v306 = vld [vmem:[%s236 + $0x28] sm:$0xf]
      %v307 = vld [vmem:[%s236 + $0x2c] sm:$0xf]
      %v308 = vld [vmem:[%s236 + $0x30] sm:$0xf]
      %v309 = vld [vmem:[%s236 + $0x34] sm:$0xf]
      %v310 = vld [vmem:[%s236 + $0x38] sm:$0xf]
      %v311 = vld [vmem:[%s236 + $0x3c] sm:$0xf]
      %v312 = vld [vmem:[%s236 + $0x40] sm:$0xf]
      %v313 = vld [vmem:[%s236 + $0x44] sm:$0xf]
      %v314 = vld [vmem:[%s236 + $0x48] sm:$0xf]
      %v315 = vld [vmem:[%s236 + $0x4c] sm:$0xf]
      %v316 = vld [vmem:[%s236 + $0x50] sm:$0xf]
      %v317 = vld [vmem:[%s236 + $0x54] sm:$0xf]
      %v318 = vld [vmem:[%s236 + $0x58] sm:$0xf]
      %v319 = vld [vmem:[%s236 + $0x5c] sm:$0xf]
      %v320 = vld [vmem:[%s236 + $0x60] sm:$0xf]
      %v321 = vld [vmem:[%s236 + $0x64] sm:$0xf]
      %v322 = vld [vmem:[%s236 + $0x68] sm:$0xf]
      %v323 = vld [vmem:[%s236 + $0x6c] sm:$0xf]
      %v324 = vld [vmem:[%s236 + $0x70] sm:$0xf]
      %v325 = vld [vmem:[%s236 + $0x74] sm:$0xf]
      %v326 = vld [vmem:[%s236 + $0x78] sm:$0xf]
      %v327 = vld [vmem:[%s236 + $0x7c] sm:$0xf]
      %v328 = vld [vmem:[#allocation2] sm:$0xff]
      %v329 = vld [vmem:[#allocation2 + $0x8] sm:$0xff]
      %v330 = vld [vmem:[#allocation2 + $0x10] sm:$0xff]
      %v331 = vld [vmem:[#allocation2 + $0x18] sm:$0xff]
      %v332 = vld [vmem:[#allocation2 + $0x20] sm:$0xff]
      %v333 = vld [vmem:[#allocation2 + $0x28] sm:$0xff]
      %v334 = vld [vmem:[#allocation2 + $0x30] sm:$0xff]
      %v335 = vld [vmem:[#allocation2 + $0x38] sm:$0xff]
      %v336 = vld [vmem:[#allocation2 + $0x40] sm:$0xff]
      %v337 = vld [vmem:[#allocation2 + $0x48] sm:$0xff]
      %v338 = vld [vmem:[#allocation2 + $0x50] sm:$0xff]
      %v339 = vld [vmem:[#allocation2 + $0x58] sm:$0xff]
      %v340 = vld [vmem:[#allocation2 + $0x60] sm:$0xff]
      %v341 = vld [vmem:[#allocation2 + $0x68] sm:$0xff]
      %v342 = vld [vmem:[#allocation2 + $0x70] sm:$0xff]
      %v343 = vld [vmem:[#allocation2 + $0x78] sm:$0xff]
      %v344 = vld [vmem:[#allocation2 + $0x80] sm:$0xff]
      %v345 = vld [vmem:[#allocation2 + $0x88] sm:$0xff]
      %v346 = vld [vmem:[#allocation2 + $0x90] sm:$0xff]
      %v347 = vld [vmem:[#allocation2 + $0x98] sm:$0xff]
      %v348 = vld [vmem:[#allocation2 + $0xa0] sm:$0xff]
      %v349 = vld [vmem:[#allocation2 + $0xa8] sm:$0xff]
      %v350 = vld [vmem:[#allocation2 + $0xb0] sm:$0xff]
      %v351 = vld [vmem:[#allocation2 + $0xb8] sm:$0xff]
      %v352 = vld [vmem:[#allocation2 + $0xc0] sm:$0xff]
      %v353 = vld [vmem:[#allocation2 + $0xc8] sm:$0xff]
      %v354 = vld [vmem:[#allocation2 + $0xd0] sm:$0xff]
      %v355 = vld [vmem:[#allocation2 + $0xd8] sm:$0xff]
      %v356 = vld [vmem:[#allocation2 + $0xe0] sm:$0xff]
      %v357 = vld [vmem:[#allocation2 + $0xe8] sm:$0xff]
      %v358 = vld [vmem:[#allocation2 + $0xf0] sm:$0xff]
      %v359 = vld [vmem:[#allocation2 + $0xf8] sm:$0xff]
      %v360 = vld [vmem:[%s245] sm:$0xf]
      %v361 = vld [vmem:[%s245 + $0x4] sm:$0xf]
      %v362 = vld [vmem:[%s245 + $0x8] sm:$0xf]
      %v363 = vld [vmem:[%s245 + $0xc] sm:$0xf]
      %v364 = vld [vmem:[%s245 + $0x10] sm:$0xf]
      %v365 = vld [vmem:[%s245 + $0x14] sm:$0xf]
      %v366 = vld [vmem:[%s245 + $0x18] sm:$0xf]
      %v367 = vld [vmem:[%s245 + $0x1c] sm:$0xf]
      %v368 = vld [vmem:[%s245 + $0x20] sm:$0xf]
      %v369 = vld [vmem:[%s245 + $0x24] sm:$0xf]
      %v370 = vld [vmem:[%s245 + $0x28] sm:$0xf]
      %v371 = vld [vmem:[%s245 + $0x2c] sm:$0xf]
      %v372 = vld [vmem:[%s245 + $0x30] sm:$0xf]
      %v373 = vld [vmem:[%s245 + $0x34] sm:$0xf]
      %v374 = vld [vmem:[%s245 + $0x38] sm:$0xf]
      %v375 = vld [vmem:[%s245 + $0x3c] sm:$0xf]
      %v408 = vunpack.c.l.b16 %v296
      %v409 = vunpack.c.l.b16 %v297
      %v410 = vunpack.c.l.b16 %v298
      %v411 = vunpack.c.l.b16 %v299
      %v412 = vunpack.c.l.b16 %v300
      %v413 = vunpack.c.l.b16 %v301
      %v414 = vunpack.c.l.b16 %v302
      %v415 = vunpack.c.l.b16 %v303
      %v416 = vunpack.c.l.b16 %v304
      %v417 = vunpack.c.l.b16 %v305
      %v418 = vunpack.c.l.b16 %v306
      %v419 = vunpack.c.l.b16 %v307
      %v420 = vunpack.c.l.b16 %v308
      %v421 = vunpack.c.l.b16 %v309
      %v422 = vunpack.c.l.b16 %v310
      %v423 = vunpack.c.l.b16 %v311
      %v424 = vunpack.c.l.b16 %v312
      %v425 = vunpack.c.l.b16 %v313
      %v426 = vunpack.c.l.b16 %v314
      %v427 = vunpack.c.l.b16 %v315
      %v428 = vunpack.c.l.b16 %v316
      %v429 = vunpack.c.l.b16 %v317
      %v430 = vunpack.c.l.b16 %v318
      %v431 = vunpack.c.l.b16 %v319
      %v432 = vunpack.c.l.b16 %v320
      %v433 = vunpack.c.l.b16 %v321
      %v434 = vunpack.c.l.b16 %v322
      %v435 = vunpack.c.l.b16 %v323
      %v436 = vunpack.c.l.b16 %v324
      %v437 = vunpack.c.l.b16 %v325
      %v438 = vunpack.c.l.b16 %v326
      %v439 = vunpack.c.l.b16 %v327
      %v440 = vpack.c.b16 %v409, %v408
      %v441 = vpack.c.b16 %v411, %v410
      %v442 = vpack.c.b16 %v413, %v412
      %v443 = vpack.c.b16 %v415, %v414
      %v444 = vpack.c.b16 %v417, %v416
      %v445 = vpack.c.b16 %v419, %v418
      %v446 = vpack.c.b16 %v421, %v420
      %v447 = vpack.c.b16 %v423, %v422
      %v448 = vpack.c.b16 %v425, %v424
      %v449 = vpack.c.b16 %v427, %v426
      %v450 = vpack.c.b16 %v429, %v428
      %v451 = vpack.c.b16 %v431, %v430
      %v452 = vpack.c.b16 %v433, %v432
      %v453 = vpack.c.b16 %v435, %v434
      %v454 = vpack.c.b16 %v437, %v436
      %v455 = vpack.c.b16 %v439, %v438
      %v488 = vunpack.c.l.b16 %v360
      %v489 = vunpack.c.l.b16 %v361
      %v490 = vunpack.c.l.b16 %v362
      %v491 = vunpack.c.l.b16 %v363
      %v492 = vunpack.c.l.b16 %v364
      %v493 = vunpack.c.l.b16 %v365
      %v494 = vunpack.c.l.b16 %v366
      %v495 = vunpack.c.l.b16 %v367
      %v496 = vunpack.c.l.b16 %v368
      %v497 = vunpack.c.l.b16 %v369
      %v498 = vunpack.c.l.b16 %v370
      %v499 = vunpack.c.l.b16 %v371
      %v500 = vunpack.c.l.b16 %v372
      %v501 = vunpack.c.l.b16 %v373
      %v502 = vunpack.c.l.b16 %v374
      %v503 = vunpack.c.l.b16 %v375
      %v504 = vpack.c.b16 %v489, %v488
      %v505 = vpack.c.b16 %v491, %v490
      %v506 = vpack.c.b16 %v493, %v492
      %v507 = vpack.c.b16 %v495, %v494
      %v508 = vpack.c.b16 %v497, %v496
      %v509 = vpack.c.b16 %v499, %v498
      %v510 = vpack.c.b16 %v501, %v500
      %v511 = vpack.c.b16 %v503, %v502
      %520 = vmatprep.subr.bf16.mxu0 0
      %521 = vmatpush1.bf16.msra.mxu0 %v511
      %522 = vmatprep.subr.bf16.mxu0 0
      %523 = vmatpush1.bf16.msra.mxu0 %v510
      %524 = vmatprep.subr.bf16.mxu0 0
      %525 = vmatpush1.bf16.msra.mxu0 %v509
      %526 = vmatprep.subr.bf16.mxu0 0
      %527 = vmatpush1.bf16.msra.mxu0 %v508
      %528 = vmatprep.subr.bf16.mxu0 0
      %529 = vmatpush1.bf16.msra.mxu0 %v507
      %530 = vmatprep.subr.bf16.mxu0 0
      %531 = vmatpush1.bf16.msra.mxu0 %v506
      %532 = vmatprep.subr.bf16.mxu0 0
      %533 = vmatpush1.bf16.msra.mxu0 %v505
      %534 = vmatprep.subr.bf16.mxu0 0
      %535 = vmatpush1.bf16.msra.mxu0 %v504
      %536 = vmatprep.subr.bf16.mxu0 0
      %537 = vmatpush2.bf16.msra.mxu0 0
      %538 = vmatprep.subr.bf16.mxu0 0
      %539 = vmatpush2.bf16.msra.mxu0 0
      %540 = vmatprep.subr.bf16.mxu0 0
      %541 = vmatpush2.bf16.msra.mxu0 0
      %542 = vmatprep.subr.bf16.mxu0 0
      %543 = vmatpush2.bf16.msra.mxu0 0
      %544 = vmatprep.subr.bf16.mxu0 0
      %545 = vmatpush2.bf16.msra.mxu0 0
      %546 = vmatprep.subr.bf16.mxu0 0
      %547 = vmatpush2.bf16.msra.mxu0 0
      %548 = vmatprep.subr.bf16.mxu0 0
      %549 = vmatpush2.bf16.msra.mxu0 0
      %550 = vmatprep.subr.bf16.mxu0 0
      %551 = vmatpush2.bf16.msra.mxu0 0
      %552 = vmatprep.mubr.bf16.mxu0 0
      %553 = vmatmul.mubr.bf16.gmra.mxu0 %v440
      %v554 = vpop.f32.mrf.mxu0
      %v555 = vadd.f32 0.0, %v554
      %v556 = vpop.f32.mrf.mxu0
      %v557 = vpop.f32.mrf.mxu0
      %v558 = vadd.f32 0.0, %v557
      %v559 = vpop.f32.mrf.mxu0
      %560 = vmatprep.mubr.bf16.mxu0 0
      %561 = vmatmul.mubr.bf16.gmra.mxu0 %v441
      %v562 = vpop.f32.mrf.mxu0
      %v563 = vadd.f32 0.0, %v562
      %v564 = vpop.f32.mrf.mxu0
      %v565 = vpop.f32.mrf.mxu0
      %v566 = vadd.f32 0.0, %v565
      %v567 = vpop.f32.mrf.mxu0
      %568 = vmatprep.mubr.bf16.mxu0 0
      %569 = vmatmul.mubr.bf16.gmra.mxu0 %v442
      %v570 = vpop.f32.mrf.mxu0
      %v571 = vadd.f32 0.0, %v570
      %v572 = vpop.f32.mrf.mxu0
      %v573 = vpop.f32.mrf.mxu0
      %v574 = vadd.f32 0.0, %v573
      %v575 = vpop.f32.mrf.mxu0
      %576 = vmatprep.mubr.bf16.mxu0 0
      %577 = vmatmul.mubr.bf16.gmra.mxu0 %v443
      %v578 = vpop.f32.mrf.mxu0
      %v579 = vadd.f32 0.0, %v578
      %v580 = vpop.f32.mrf.mxu0
      %v581 = vpop.f32.mrf.mxu0
      %v582 = vadd.f32 0.0, %v581
      %v583 = vpop.f32.mrf.mxu0
      %584 = vmatprep.mubr.bf16.mxu0 0
      %585 = vmatmul.mubr.bf16.gmra.mxu0 %v444
      %v586 = vpop.f32.mrf.mxu0
      %v587 = vadd.f32 0.0, %v586
      %v588 = vpop.f32.mrf.mxu0
      %v589 = vpop.f32.mrf.mxu0
      %v590 = vadd.f32 0.0, %v589
      %v591 = vpop.f32.mrf.mxu0
      %592 = vmatprep.mubr.bf16.mxu0 0
      %593 = vmatmul.mubr.bf16.gmra.mxu0 %v445
      %v594 = vpop.f32.mrf.mxu0
      %v595 = vadd.f32 0.0, %v594
      %v596 = vpop.f32.mrf.mxu0
      %v597 = vpop.f32.mrf.mxu0
      %v598 = vadd.f32 0.0, %v597
      %v599 = vpop.f32.mrf.mxu0
      %600 = vmatprep.mubr.bf16.mxu0 0
      %601 = vmatmul.mubr.bf16.gmra.mxu0 %v446
      %v602 = vpop.f32.mrf.mxu0
      %v603 = vadd.f32 0.0, %v602
      %v604 = vpop.f32.mrf.mxu0
      %v605 = vpop.f32.mrf.mxu0
      %v606 = vadd.f32 0.0, %v605
      %v607 = vpop.f32.mrf.mxu0
      %608 = vmatprep.mubr.bf16.mxu0 0
      %609 = vmatmul.mubr.bf16.gmra.mxu0 %v447
      %v610 = vpop.f32.mrf.mxu0
      %v611 = vadd.f32 0.0, %v610
      %v612 = vpop.f32.mrf.mxu0
      %v613 = vpop.f32.mrf.mxu0
      %v614 = vadd.f32 0.0, %v613
      %v615 = vpop.f32.mrf.mxu0
      %616 = vmatprep.mubr.bf16.mxu0 0
      %617 = vmatmul.mubr.bf16.gmra.mxu0 %v448
      %v618 = vpop.f32.mrf.mxu0
      %v619 = vadd.f32 0.0, %v618
      %v620 = vpop.f32.mrf.mxu0
      %v621 = vpop.f32.mrf.mxu0
      %v622 = vadd.f32 0.0, %v621
      %v623 = vpop.f32.mrf.mxu0
      %624 = vmatprep.mubr.bf16.mxu0 0
      %625 = vmatmul.mubr.bf16.gmra.mxu0 %v449
      %v626 = vpop.f32.mrf.mxu0
      %v627 = vadd.f32 0.0, %v626
      %v628 = vpop.f32.mrf.mxu0
      %v629 = vpop.f32.mrf.mxu0
      %v630 = vadd.f32 0.0, %v629
      %v631 = vpop.f32.mrf.mxu0
      %632 = vmatprep.mubr.bf16.mxu0 0
      %633 = vmatmul.mubr.bf16.gmra.mxu0 %v450
      %v634 = vpop.f32.mrf.mxu0
      %v635 = vadd.f32 0.0, %v634
      %v636 = vpop.f32.mrf.mxu0
      %v637 = vpop.f32.mrf.mxu0
      %v638 = vadd.f32 0.0, %v637
      %v639 = vpop.f32.mrf.mxu0
      %640 = vmatprep.mubr.bf16.mxu0 0
      %641 = vmatmul.mubr.bf16.gmra.mxu0 %v451
      %v642 = vpop.f32.mrf.mxu0
      %v643 = vadd.f32 0.0, %v642
      %v644 = vpop.f32.mrf.mxu0
      %v645 = vpop.f32.mrf.mxu0
      %v646 = vadd.f32 0.0, %v645
      %v647 = vpop.f32.mrf.mxu0
      %648 = vmatprep.mubr.bf16.mxu0 0
      %649 = vmatmul.mubr.bf16.gmra.mxu0 %v452
      %v650 = vpop.f32.mrf.mxu0
      %v651 = vadd.f32 0.0, %v650
      %v652 = vpop.f32.mrf.mxu0
      %v653 = vpop.f32.mrf.mxu0
      %v654 = vadd.f32 0.0, %v653
      %v655 = vpop.f32.mrf.mxu0
      %656 = vmatprep.mubr.bf16.mxu0 0
      %657 = vmatmul.mubr.bf16.gmra.mxu0 %v453
      %v658 = vpop.f32.mrf.mxu0
      %v659 = vadd.f32 0.0, %v658
      %v660 = vpop.f32.mrf.mxu0
      %v661 = vpop.f32.mrf.mxu0
      %v662 = vadd.f32 0.0, %v661
      %v663 = vpop.f32.mrf.mxu0
      %664 = vmatprep.mubr.bf16.mxu0 0
      %665 = vmatmul.mubr.bf16.gmra.mxu0 %v454
      %v666 = vpop.f32.mrf.mxu0
      %v667 = vadd.f32 0.0, %v666
      %v668 = vpop.f32.mrf.mxu0
      %v669 = vpop.f32.mrf.mxu0
      %v670 = vadd.f32 0.0, %v669
      %v671 = vpop.f32.mrf.mxu0
      %672 = vmatprep.mubr.bf16.mxu0 0
      %673 = vmatmul.mubr.bf16.gmra.mxu0 %v455
      %v674 = vpop.f32.mrf.mxu0
      %v675 = vadd.f32 0.0, %v674
      %v676 = vpop.f32.mrf.mxu0
      %v677 = vpop.f32.mrf.mxu0
      %v678 = vadd.f32 0.0, %v677
      %v679 = vpop.f32.mrf.mxu0
      %680 = vdwg.mxu0
      %v681 = vadd.f32 %v328, %v555
      %v682 = vadd.f32 %v329, %v558
      %v683 = vadd.f32 %v330, %v563
      %v684 = vadd.f32 %v331, %v566
      %v685 = vadd.f32 %v332, %v571
      %v686 = vadd.f32 %v333, %v574
      %v687 = vadd.f32 %v334, %v579
      %v688 = vadd.f32 %v335, %v582
      %v689 = vadd.f32 %v336, %v587
      %v690 = vadd.f32 %v337, %v590
      %v691 = vadd.f32 %v338, %v595
      %v692 = vadd.f32 %v339, %v598
      %v693 = vadd.f32 %v340, %v603
      %v694 = vadd.f32 %v341, %v606
      %v695 = vadd.f32 %v342, %v611
      %v696 = vadd.f32 %v343, %v614
      %v697 = vadd.f32 %v344, %v619
      %v698 = vadd.f32 %v345, %v622
      %v699 = vadd.f32 %v346, %v627
      %v700 = vadd.f32 %v347, %v630
      %v701 = vadd.f32 %v348, %v635
      %v702 = vadd.f32 %v349, %v638
      %v703 = vadd.f32 %v350, %v643
      %v704 = vadd.f32 %v351, %v646
      %v705 = vadd.f32 %v352, %v651
      %v706 = vadd.f32 %v353, %v654
      %v707 = vadd.f32 %v354, %v659
      %v708 = vadd.f32 %v355, %v662
      %v709 = vadd.f32 %v356, %v667
      %v710 = vadd.f32 %v357, %v670
      %v711 = vadd.f32 %v358, %v675
      %v712 = vadd.f32 %v359, %v678
      %713 = vst [vmem:[#allocation2] sm:$0xff] %v681
      %714 = vst [vmem:[#allocation2 + $0x8] sm:$0xff] %v682
      %715 = vst [vmem:[#allocation2 + $0x10] sm:$0xff] %v683
      %716 = vst [vmem:[#allocation2 + $0x18] sm:$0xff] %v684
      %717 = vst [vmem:[#allocation2 + $0x20] sm:$0xff] %v685
      %718 = vst [vmem:[#allocation2 + $0x28] sm:$0xff] %v686
      %719 = vst [vmem:[#allocation2 + $0x30] sm:$0xff] %v687
      %720 = vst [vmem:[#allocation2 + $0x38] sm:$0xff] %v688
      %721 = vst [vmem:[#allocation2 + $0x40] sm:$0xff] %v689
      %722 = vst [vmem:[#allocation2 + $0x48] sm:$0xff] %v690
      %723 = vst [vmem:[#allocation2 + $0x50] sm:$0xff] %v691
      %724 = vst [vmem:[#allocation2 + $0x58] sm:$0xff] %v692
      %725 = vst [vmem:[#allocation2 + $0x60] sm:$0xff] %v693
      %726 = vst [vmem:[#allocation2 + $0x68] sm:$0xff] %v694
      %727 = vst [vmem:[#allocation2 + $0x70] sm:$0xff] %v695
      %728 = vst [vmem:[#allocation2 + $0x78] sm:$0xff] %v696
      %729 = vst [vmem:[#allocation2 + $0x80] sm:$0xff] %v697
      %730 = vst [vmem:[#allocation2 + $0x88] sm:$0xff] %v698
      %731 = vst [vmem:[#allocation2 + $0x90] sm:$0xff] %v699
      %732 = vst [vmem:[#allocation2 + $0x98] sm:$0xff] %v700
      %733 = vst [vmem:[#allocation2 + $0xa0] sm:$0xff] %v701
      %734 = vst [vmem:[#allocation2 + $0xa8] sm:$0xff] %v702
      %735 = vst [vmem:[#allocation2 + $0xb0] sm:$0xff] %v703
      %736 = vst [vmem:[#allocation2 + $0xb8] sm:$0xff] %v704
      %737 = vst [vmem:[#allocation2 + $0xc0] sm:$0xff] %v705
      %738 = vst [vmem:[#allocation2 + $0xc8] sm:$0xff] %v706
      %739 = vst [vmem:[#allocation2 + $0xd0] sm:$0xff] %v707
      %740 = vst [vmem:[#allocation2 + $0xd8] sm:$0xff] %v708
      %741 = vst [vmem:[#allocation2 + $0xe0] sm:$0xff] %v709
      %742 = vst [vmem:[#allocation2 + $0xe8] sm:$0xff] %v710
      %743 = vst [vmem:[#allocation2 + $0xf0] sm:$0xff] %v711
      %744 = vst [vmem:[#allocation2 + $0xf8] sm:$0xff] %v712
      // Predicated region
      $region37: #{_lambda_.39} parent=31 // pred_check
        %p745 = pneg %p260
      $region38: #{_lambda_.39} parent=31 // pred_check_branch
        %747 = sbr.rel (%p745) target = $region40
      $region39: #{_lambda_.39} parent=31 // pred_region
        %v748 = vld [vmem:[#allocation2] sm:$0xff]
        %v749 = vld [vmem:[#allocation2 + $0x8] sm:$0xff]
        %v750 = vld [vmem:[#allocation2 + $0x10] sm:$0xff]
        %v751 = vld [vmem:[#allocation2 + $0x18] sm:$0xff]
        %v752 = vld [vmem:[#allocation2 + $0x20] sm:$0xff]
        %v753 = vld [vmem:[#allocation2 + $0x28] sm:$0xff]
        %v754 = vld [vmem:[#allocation2 + $0x30] sm:$0xff]
        %v755 = vld [vmem:[#allocation2 + $0x38] sm:$0xff]
        %v756 = vld [vmem:[#allocation2 + $0x40] sm:$0xff]
        %v757 = vld [vmem:[#allocation2 + $0x48] sm:$0xff]
        %v758 = vld [vmem:[#allocation2 + $0x50] sm:$0xff]
        %v759 = vld [vmem:[#allocation2 + $0x58] sm:$0xff]
        %v760 = vld [vmem:[#allocation2 + $0x60] sm:$0xff]
        %v761 = vld [vmem:[#allocation2 + $0x68] sm:$0xff]
        %v762 = vld [vmem:[#allocation2 + $0x70] sm:$0xff]
        %v763 = vld [vmem:[#allocation2 + $0x78] sm:$0xff]
        %v764 = vld [vmem:[#allocation2 + $0x80] sm:$0xff]
        %v765 = vld [vmem:[#allocation2 + $0x88] sm:$0xff]
        %v766 = vld [vmem:[#allocation2 + $0x90] sm:$0xff]
        %v767 = vld [vmem:[#allocation2 + $0x98] sm:$0xff]
        %v768 = vld [vmem:[#allocation2 + $0xa0] sm:$0xff]
        %v769 = vld [vmem:[#allocation2 + $0xa8] sm:$0xff]
        %v770 = vld [vmem:[#allocation2 + $0xb0] sm:$0xff]
        %v771 = vld [vmem:[#allocation2 + $0xb8] sm:$0xff]
        %v772 = vld [vmem:[#allocation2 + $0xc0] sm:$0xff]
        %v773 = vld [vmem:[#allocation2 + $0xc8] sm:$0xff]
        %v774 = vld [vmem:[#allocation2 + $0xd0] sm:$0xff]
        %v775 = vld [vmem:[#allocation2 + $0xd8] sm:$0xff]
        %v776 = vld [vmem:[#allocation2 + $0xe0] sm:$0xff]
        %v777 = vld [vmem:[#allocation2 + $0xe8] sm:$0xff]
        %v778 = vld [vmem:[#allocation2 + $0xf0] sm:$0xff]
        %v779 = vld [vmem:[#allocation2 + $0xf8] sm:$0xff]
        %v780 = vld [vmem:[%s249] sm:$0x1]
        %v782 = vlaneseq
        %v783 = vshrl.u32 %v782, 7
        %v784 = vsub.s32 0, %v783
        %v785 = vrot.slane %v780, %v784
        %v787 = vadd.f32 %v748, %v785
        %v788 = vadd.f32 %v749, %v785
        %v789 = vadd.f32 %v750, %v785
        %v790 = vadd.f32 %v751, %v785
        %v791 = vadd.f32 %v752, %v785
        %v792 = vadd.f32 %v753, %v785
        %v793 = vadd.f32 %v754, %v785
        %v794 = vadd.f32 %v755, %v785
        %v795 = vadd.f32 %v756, %v785
        %v796 = vadd.f32 %v757, %v785
        %v797 = vadd.f32 %v758, %v785
        %v798 = vadd.f32 %v759, %v785
        %v799 = vadd.f32 %v760, %v785
        %v800 = vadd.f32 %v761, %v785
        %v801 = vadd.f32 %v762, %v785
        %v802 = vadd.f32 %v763, %v785
        %v803 = vadd.f32 %v764, %v785
        %v804 = vadd.f32 %v765, %v785
        %v805 = vadd.f32 %v766, %v785
        %v806 = vadd.f32 %v767, %v785
        %v807 = vadd.f32 %v768, %v785
        %v808 = vadd.f32 %v769, %v785
        %v809 = vadd.f32 %v770, %v785
        %v810 = vadd.f32 %v771, %v785
        %v811 = vadd.f32 %v772, %v785
        %v812 = vadd.f32 %v773, %v785
        %v813 = vadd.f32 %v774, %v785
        %v814 = vadd.f32 %v775, %v785
        %v815 = vadd.f32 %v776, %v785
        %v816 = vadd.f32 %v777, %v785
        %v817 = vadd.f32 %v778, %v785
        %v818 = vadd.f32 %v779, %v785
        %819 = vst [vmem:[%s257] sm:$0xff] %v787
        %820 = vst [vmem:[%s257 + $0x8] sm:$0xff] %v788
        %821 = vst [vmem:[%s257 + $0x10] sm:$0xff] %v789
        %822 = vst [vmem:[%s257 + $0x18] sm:$0xff] %v790
        %823 = vst [vmem:[%s257 + $0x20] sm:$0xff] %v791
        %824 = vst [vmem:[%s257 + $0x28] sm:$0xff] %v792
        %825 = vst [vmem:[%s257 + $0x30] sm:$0xff] %v793
        %826 = vst [vmem:[%s257 + $0x38] sm:$0xff] %v794
        %827 = vst [vmem:[%s257 + $0x40] sm:$0xff] %v795
        %828 = vst [vmem:[%s257 + $0x48] sm:$0xff] %v796
        %829 = vst [vmem:[%s257 + $0x50] sm:$0xff] %v797
        %830 = vst [vmem:[%s257 + $0x58] sm:$0xff] %v798
        %831 = vst [vmem:[%s257 + $0x60] sm:$0xff] %v799
        %832 = vst [vmem:[%s257 + $0x68] sm:$0xff] %v800
        %833 = vst [vmem:[%s257 + $0x70] sm:$0xff] %v801
        %834 = vst [vmem:[%s257 + $0x78] sm:$0xff] %v802
        %835 = vst [vmem:[%s257 + $0x80] sm:$0xff] %v803
        %836 = vst [vmem:[%s257 + $0x88] sm:$0xff] %v804
        %837 = vst [vmem:[%s257 + $0x90] sm:$0xff] %v805
        %838 = vst [vmem:[%s257 + $0x98] sm:$0xff] %v806
        %839 = vst [vmem:[%s257 + $0xa0] sm:$0xff] %v807
        %840 = vst [vmem:[%s257 + $0xa8] sm:$0xff] %v808
        %841 = vst [vmem:[%s257 + $0xb0] sm:$0xff] %v809
        %842 = vst [vmem:[%s257 + $0xb8] sm:$0xff] %v810
        %843 = vst [vmem:[%s257 + $0xc0] sm:$0xff] %v811
        %844 = vst [vmem:[%s257 + $0xc8] sm:$0xff] %v812
        %845 = vst [vmem:[%s257 + $0xd0] sm:$0xff] %v813
        %846 = vst [vmem:[%s257 + $0xd8] sm:$0xff] %v814
        %847 = vst [vmem:[%s257 + $0xe0] sm:$0xff] %v815
        %848 = vst [vmem:[%s257 + $0xe8] sm:$0xff] %v816
        %849 = vst [vmem:[%s257 + $0xf0] sm:$0xff] %v817
        %850 = vst [vmem:[%s257 + $0xf8] sm:$0xff] %v818
      $region40: #{_lambda_.39} parent=31 // pred_fallthru
        _
      %s851 = smul.u32 32, %s19
      %p852 = scmp.lt.s32.totalorder %s851, 63
      %s853 = scalar_select %p852, %s851, 63
      %p854 = scmp.lt.s32.totalorder %s20, 0
      %s855 = scalar_select %p854, %s20, 0
      %s856 = sadd.s32 %s855, %s853
      %s857 = smul.addr %s856, 8
      %s858 = scalar_lea.vmem %s3, %s857
      // Predicated region
      $region41: #{_lambda_.39} parent=31 // pred_check
        %p859 = pneg %p135
      $region42: #{_lambda_.39} parent=31 // pred_check_branch
        %861 = sbr.rel (%p859) target = $region44
      $region43: #{_lambda_.39} parent=31 // pred_region
        %s862 = smul.u32 32, %s19
      $region44: #{_lambda_.39} parent=31 // pred_fallthru
        _
    $region32: #{_lambda_.39} parent=5 // pred_fallthru
      _
    %p863 = scmp.le.s32.totalorder 2, %s9
    // Predicated region
    $region45: #{_lambda_.39} parent=5 // pred_check
      %p864 = pneg %p863
    $region46: #{_lambda_.39} parent=5 // pred_check_branch
      %866 = sbr.rel (%p864) target = $region48
    $region47: #{_lambda_.39} parent=5 // pred_region
      %s867 = ssub.s32 %s9, 2
      // Predicated region
      $region49: #{_lambda_.39} parent=47 // pred_check
        %p868 = pneg %p141
      $region50: #{_lambda_.39} parent=47 // pred_check_branch
        %870 = sbr.rel (%p868) target = $region52
      $region51: #{_lambda_.39} parent=47 // pred_region
        %s871 = smul.u32 32, %s22
        %p872 = scmp.lt.s32.totalorder %s871, 63
        %s873 = scalar_select %p872, %s871, 63
        %p874 = scmp.lt.s32.totalorder %s23, 0
        %s875 = scalar_select %p874, %s23, 0
        %s876 = sadd.s32 %s875, %s873
        %s877 = smul.addr %s876, 8
        %s878 = scalar_lea.vmem %s3, %s877
      $region52: #{_lambda_.39} parent=47 // pred_fallthru
        _
    $region48: #{_lambda_.39} parent=5 // pred_fallthru
      _
  $region6: #{_lambda_.39} parent=0 // loop_footer
    %s13 = sadd.s32 1, %s9
  $region7: #{_lambda_.39} parent=0 // loop_footer_branch
    %8 = sbr.rel target = $region3
  $region8: #{_lambda_.39} parent=0 // loop_exit
    _

// kernel: _lambda_.40
$region0: #{_lambda_.40}
  #allocation0 [shape = 'u32[]', space=smem, size = 0x4, offset = 0x4, fixed_abs, tag = 'smem constant byte address 0x4 - core index']
  #allocation1 [shape = 'u32[144,128]{1,0:T(1,128)}', space=vmem, size = 0x12000, scoped, tag = 'internal scratch']
  #allocation2 [shape = 'f32[128,128]{1,0:T(8,128)}', space=vmem, size = 0x10000, scoped, tag = 'scratch operand']
  %s0 = inlined_call_operand.vmem [shape: bf16[128,128], index: 0, kind: input, shape index: {}]
  %s1 = inlined_call_operand.vmem [shape: bf16[128,128], index: 1, kind: input, shape index: {}]
  %s2 = inlined_call_operand.vmem [shape: f32[1,128], index: 2, kind: input, shape index: {}]
  %s3 = inlined_call_operand.vmem [shape: f32[128,128], index: 3, kind: output, shape index: {}]
  %s4 = sld [smem:[#allocation0]]
  $region30: #{_lambda_.40} parent=0
    _
  %s6 = ssub.s32 1, %s4
  %s7 = scalar_select 0, %s6, %s4
  // Predicated region
  $region2: #{_lambda_.40} parent=0 // pred_check
    _
  $region3: #{_lambda_.40} parent=0 // pred_check_branch
    %9 = sbr.rel (0) target = $region5
  $region4: #{_lambda_.40} parent=0 // pred_region
    _
  $region5: #{_lambda_.40} parent=0 // pred_fallthru
    _
  // Predicated region
  $region6: #{_lambda_.40} parent=0 // pred_check
    _
  $region7: #{_lambda_.40} parent=0 // pred_check_branch
    %11 = sbr.rel (0) target = $region9
  $region8: #{_lambda_.40} parent=0 // pred_region
    _
  $region9: #{_lambda_.40} parent=0 // pred_fallthru
    _
  // Predicated region
  $region10: #{_lambda_.40} parent=0 // pred_check
    _
  $region11: #{_lambda_.40} parent=0 // pred_check_branch
    %13 = sbr.rel (0) target = $region13
  $region12: #{_lambda_.40} parent=0 // pred_region
    _
  $region13: #{_lambda_.40} parent=0 // pred_fallthru
    _
  %p16 = scmp.eq.s32.totalorder 0, 0
  // Predicated region
  $region14: #{_lambda_.40} parent=0 // pred_check
    %p17 = pneg %p16
  $region15: #{_lambda_.40} parent=0 // pred_check_branch
    %19 = sbr.rel (%p17) target = $region17
  $region16: #{_lambda_.40} parent=0 // pred_region
    %20 = vst [vmem:[#allocation2] sm:$0xff] 0.0
    %21 = vst [vmem:[#allocation2 + $0x8] sm:$0xff] 0.0
    %22 = vst [vmem:[#allocation2 + $0x10] sm:$0xff] 0.0
    %23 = vst [vmem:[#allocation2 + $0x18] sm:$0xff] 0.0
    %24 = vst [vmem:[#allocation2 + $0x20] sm:$0xff] 0.0
    %25 = vst [vmem:[#allocation2 + $0x28] sm:$0xff] 0.0
    %26 = vst [vmem:[#allocation2 + $0x30] sm:$0xff] 0.0
    %27 = vst [vmem:[#allocation2 + $0x38] sm:$0xff] 0.0
    %28 = vst [vmem:[#allocation2 + $0x40] sm:$0xff] 0.0
    %29 = vst [vmem:[#allocation2 + $0x48] sm:$0xff] 0.0
    %30 = vst [vmem:[#allocation2 + $0x50] sm:$0xff] 0.0
    %31 = vst [vmem:[#allocation2 + $0x58] sm:$0xff] 0.0
    %32 = vst [vmem:[#allocation2 + $0x60] sm:$0xff] 0.0
    %33 = vst [vmem:[#allocation2 + $0x68] sm:$0xff] 0.0
    %34 = vst [vmem:[#allocation2 + $0x70] sm:$0xff] 0.0
    %35 = vst [vmem:[#allocation2 + $0x78] sm:$0xff] 0.0
  $region17: #{_lambda_.40} parent=0 // pred_fallthru
    _
  %v36 = vld [vmem:[%s0] sm:$0xf]
  %v37 = vld [vmem:[%s0 + $0x4] sm:$0xf]
  %v38 = vld [vmem:[%s0 + $0x8] sm:$0xf]
  %v39 = vld [vmem:[%s0 + $0xc] sm:$0xf]
  %v40 = vld [vmem:[%s0 + $0x10] sm:$0xf]
  %v41 = vld [vmem:[%s0 + $0x14] sm:$0xf]
  %v42 = vld [vmem:[%s0 + $0x18] sm:$0xf]
  %v43 = vld [vmem:[%s0 + $0x1c] sm:$0xf]
  %v44 = vld [vmem:[%s0 + $0x20] sm:$0xf]
  %v45 = vld [vmem:[%s0 + $0x24] sm:$0xf]
  %v46 = vld [vmem:[%s0 + $0x28] sm:$0xf]
  %v47 = vld [vmem:[%s0 + $0x2c] sm:$0xf]
  %v48 = vld [vmem:[%s0 + $0x30] sm:$0xf]
  %v49 = vld [vmem:[%s0 + $0x34] sm:$0xf]
  %v50 = vld [vmem:[%s0 + $0x38] sm:$0xf]
  %v51 = vld [vmem:[%s0 + $0x3c] sm:$0xf]
  %vm52 = vcmp.gt.bf16.partialorder %v36, 0
  %vm53 = vcmp.gt.bf16.partialorder %v37, 0
  %vm54 = vcmp.gt.bf16.partialorder %v38, 0
  %vm55 = vcmp.gt.bf16.partialorder %v39, 0
  %vm56 = vcmp.gt.bf16.partialorder %v40, 0
  %vm57 = vcmp.gt.bf16.partialorder %v41, 0
  %vm58 = vcmp.gt.bf16.partialorder %v42, 0
  %vm59 = vcmp.gt.bf16.partialorder %v43, 0
  %vm60 = vcmp.gt.bf16.partialorder %v44, 0
  %vm61 = vcmp.gt.bf16.partialorder %v45, 0
  %vm62 = vcmp.gt.bf16.partialorder %v46, 0
  %vm63 = vcmp.gt.bf16.partialorder %v47, 0
  %vm64 = vcmp.gt.bf16.partialorder %v48, 0
  %vm65 = vcmp.gt.bf16.partialorder %v49, 0
  %vm66 = vcmp.gt.bf16.partialorder %v50, 0
  %vm67 = vcmp.gt.bf16.partialorder %v51, 0
  %v68 = vmul.bf16 %v36, 1045249613
  %v69 = vmul.bf16 %v37, 1045249613
  %v70 = vmul.bf16 %v38, 1045249613
  %v71 = vmul.bf16 %v39, 1045249613
  %v72 = vmul.bf16 %v40, 1045249613
  %v73 = vmul.bf16 %v41, 1045249613
  %v74 = vmul.bf16 %v42, 1045249613
  %v75 = vmul.bf16 %v43, 1045249613
  %v76 = vmul.bf16 %v44, 1045249613
  %v77 = vmul.bf16 %v45, 1045249613
  %v78 = vmul.bf16 %v46, 1045249613
  %v79 = vmul.bf16 %v47, 1045249613
  %v80 = vmul.bf16 %v48, 1045249613
  %v81 = vmul.bf16 %v49, 1045249613
  %v82 = vmul.bf16 %v50, 1045249613
  %v83 = vmul.bf16 %v51, 1045249613
  %v84 = vsel %vm52, %v36, %v68
  %v85 = vsel %vm53, %v37, %v69
  %v86 = vsel %vm54, %v38, %v70
  %v87 = vsel %vm55, %v39, %v71
  %v88 = vsel %vm56, %v40, %v72
  %v89 = vsel %vm57, %v41, %v73
  %v90 = vsel %vm58, %v42, %v74
  %v91 = vsel %vm59, %v43, %v75
  %v92 = vsel %vm60, %v44, %v76
  %v93 = vsel %vm61, %v45, %v77
  %v94 = vsel %vm62, %v46, %v78
  %v95 = vsel %vm63, %v47, %v79
  %v96 = vsel %vm64, %v48, %v80
  %v97 = vsel %vm65, %v49, %v81
  %v98 = vsel %vm66, %v50, %v82
  %v99 = vsel %vm67, %v51, %v83
  %v100 = vld [vmem:[#allocation2] sm:$0xff]
  %v101 = vld [vmem:[#allocation2 + $0x8] sm:$0xff]
  %v102 = vld [vmem:[#allocation2 + $0x10] sm:$0xff]
  %v103 = vld [vmem:[#allocation2 + $0x18] sm:$0xff]
  %v104 = vld [vmem:[#allocation2 + $0x20] sm:$0xff]
  %v105 = vld [vmem:[#allocation2 + $0x28] sm:$0xff]
  %v106 = vld [vmem:[#allocation2 + $0x30] sm:$0xff]
  %v107 = vld [vmem:[#allocation2 + $0x38] sm:$0xff]
  %v108 = vld [vmem:[#allocation2 + $0x40] sm:$0xff]
  %v109 = vld [vmem:[#allocation2 + $0x48] sm:$0xff]
  %v110 = vld [vmem:[#allocation2 + $0x50] sm:$0xff]
  %v111 = vld [vmem:[#allocation2 + $0x58] sm:$0xff]
  %v112 = vld [vmem:[#allocation2 + $0x60] sm:$0xff]
  %v113 = vld [vmem:[#allocation2 + $0x68] sm:$0xff]
  %v114 = vld [vmem:[#allocation2 + $0x70] sm:$0xff]
  %v115 = vld [vmem:[#allocation2 + $0x78] sm:$0xff]
  %v116 = vld [vmem:[%s1] sm:$0xf]
  %v117 = vld [vmem:[%s1 + $0x4] sm:$0xf]
  %v118 = vld [vmem:[%s1 + $0x8] sm:$0xf]
  %v119 = vld [vmem:[%s1 + $0xc] sm:$0xf]
  %v120 = vld [vmem:[%s1 + $0x10] sm:$0xf]
  %v121 = vld [vmem:[%s1 + $0x14] sm:$0xf]
  %v122 = vld [vmem:[%s1 + $0x18] sm:$0xf]
  %v123 = vld [vmem:[%s1 + $0x1c] sm:$0xf]
  %v124 = vld [vmem:[%s1 + $0x20] sm:$0xf]
  %v125 = vld [vmem:[%s1 + $0x24] sm:$0xf]
  %v126 = vld [vmem:[%s1 + $0x28] sm:$0xf]
  %v127 = vld [vmem:[%s1 + $0x2c] sm:$0xf]
  %v128 = vld [vmem:[%s1 + $0x30] sm:$0xf]
  %v129 = vld [vmem:[%s1 + $0x34] sm:$0xf]
  %v130 = vld [vmem:[%s1 + $0x38] sm:$0xf]
  %v131 = vld [vmem:[%s1 + $0x3c] sm:$0xf]
  %v148 = vunpack.c.l.b16 %v84
  %v149 = vunpack.c.l.b16 %v85
  %v150 = vunpack.c.l.b16 %v86
  %v151 = vunpack.c.l.b16 %v87
  %v152 = vunpack.c.l.b16 %v88
  %v153 = vunpack.c.l.b16 %v89
  %v154 = vunpack.c.l.b16 %v90
  %v155 = vunpack.c.l.b16 %v91
  %v156 = vunpack.c.l.b16 %v92
  %v157 = vunpack.c.l.b16 %v93
  %v158 = vunpack.c.l.b16 %v94
  %v159 = vunpack.c.l.b16 %v95
  %v160 = vunpack.c.l.b16 %v96
  %v161 = vunpack.c.l.b16 %v97
  %v162 = vunpack.c.l.b16 %v98
  %v163 = vunpack.c.l.b16 %v99
  %v164 = vpack.c.b16 %v149, %v148
  %v165 = vpack.c.b16 %v151, %v150
  %v166 = vpack.c.b16 %v153, %v152
  %v167 = vpack.c.b16 %v155, %v154
  %v168 = vpack.c.b16 %v157, %v156
  %v169 = vpack.c.b16 %v159, %v158
  %v170 = vpack.c.b16 %v161, %v160
  %v171 = vpack.c.b16 %v163, %v162
  %v196 = vunpack.c.l.b16 %v116
  %v197 = vunpack.c.l.b16 %v117
  %v198 = vunpack.c.l.b16 %v118
  %v199 = vunpack.c.l.b16 %v119
  %v200 = vunpack.c.l.b16 %v120
  %v201 = vunpack.c.l.b16 %v121
  %v202 = vunpack.c.l.b16 %v122
  %v203 = vunpack.c.l.b16 %v123
  %v204 = vunpack.c.l.b16 %v124
  %v205 = vunpack.c.l.b16 %v125
  %v206 = vunpack.c.l.b16 %v126
  %v207 = vunpack.c.l.b16 %v127
  %v208 = vunpack.c.l.b16 %v128
  %v209 = vunpack.c.l.b16 %v129
  %v210 = vunpack.c.l.b16 %v130
  %v211 = vunpack.c.l.b16 %v131
  %v212 = vpack.c.b16 %v197, %v196
  %v213 = vpack.c.b16 %v199, %v198
  %v214 = vpack.c.b16 %v201, %v200
  %v215 = vpack.c.b16 %v203, %v202
  %v216 = vpack.c.b16 %v205, %v204
  %v217 = vpack.c.b16 %v207, %v206
  %v218 = vpack.c.b16 %v209, %v208
  %v219 = vpack.c.b16 %v211, %v210
  %228 = vmatprep.subr.bf16.mxu0 0
  %229 = vmatpush1.bf16.msra.mxu0 %v219
  %230 = vmatprep.subr.bf16.mxu0 0
  %231 = vmatpush1.bf16.msra.mxu0 %v218
  %232 = vmatprep.subr.bf16.mxu0 0
  %233 = vmatpush1.bf16.msra.mxu0 %v217
  %234 = vmatprep.subr.bf16.mxu0 0
  %235 = vmatpush1.bf16.msra.mxu0 %v216
  %236 = vmatprep.subr.bf16.mxu0 0
  %237 = vmatpush1.bf16.msra.mxu0 %v215
  %238 = vmatprep.subr.bf16.mxu0 0
  %239 = vmatpush1.bf16.msra.mxu0 %v214
  %240 = vmatprep.subr.bf16.mxu0 0
  %241 = vmatpush1.bf16.msra.mxu0 %v213
  %242 = vmatprep.subr.bf16.mxu0 0
  %243 = vmatpush1.bf16.msra.mxu0 %v212
  %244 = vmatprep.subr.bf16.mxu0 0
  %245 = vmatpush2.bf16.msra.mxu0 0
  %246 = vmatprep.subr.bf16.mxu0 0
  %247 = vmatpush2.bf16.msra.mxu0 0
  %248 = vmatprep.subr.bf16.mxu0 0
  %249 = vmatpush2.bf16.msra.mxu0 0
  %250 = vmatprep.subr.bf16.mxu0 0
  %251 = vmatpush2.bf16.msra.mxu0 0
  %252 = vmatprep.subr.bf16.mxu0 0
  %253 = vmatpush2.bf16.msra.mxu0 0
  %254 = vmatprep.subr.bf16.mxu0 0
  %255 = vmatpush2.bf16.msra.mxu0 0
  %256 = vmatprep.subr.bf16.mxu0 0
  %257 = vmatpush2.bf16.msra.mxu0 0
  %258 = vmatprep.subr.bf16.mxu0 0
  %259 = vmatpush2.bf16.msra.mxu0 0
  %260 = vmatprep.mubr.bf16.mxu0 0
  %261 = vmatmul.mubr.bf16.gmra.mxu0 %v164
  %v262 = vpop.f32.mrf.mxu0
  %v263 = vadd.f32 0.0, %v262
  %v264 = vpop.f32.mrf.mxu0
  %v265 = vpop.f32.mrf.mxu0
  %v266 = vadd.f32 0.0, %v265
  %v267 = vpop.f32.mrf.mxu0
  %268 = vmatprep.mubr.bf16.mxu0 0
  %269 = vmatmul.mubr.bf16.gmra.mxu0 %v165
  %v270 = vpop.f32.mrf.mxu0
  %v271 = vadd.f32 0.0, %v270
  %v272 = vpop.f32.mrf.mxu0
  %v273 = vpop.f32.mrf.mxu0
  %v274 = vadd.f32 0.0, %v273
  %v275 = vpop.f32.mrf.mxu0
  %276 = vmatprep.mubr.bf16.mxu0 0
  %277 = vmatmul.mubr.bf16.gmra.mxu0 %v166
  %v278 = vpop.f32.mrf.mxu0
  %v279 = vadd.f32 0.0, %v278
  %v280 = vpop.f32.mrf.mxu0
  %v281 = vpop.f32.mrf.mxu0
  %v282 = vadd.f32 0.0, %v281
  %v283 = vpop.f32.mrf.mxu0
  %284 = vmatprep.mubr.bf16.mxu0 0
  %285 = vmatmul.mubr.bf16.gmra.mxu0 %v167
  %v286 = vpop.f32.mrf.mxu0
  %v287 = vadd.f32 0.0, %v286
  %v288 = vpop.f32.mrf.mxu0
  %v289 = vpop.f32.mrf.mxu0
  %v290 = vadd.f32 0.0, %v289
  %v291 = vpop.f32.mrf.mxu0
  %292 = vmatprep.mubr.bf16.mxu0 0
  %293 = vmatmul.mubr.bf16.gmra.mxu0 %v168
  %v294 = vpop.f32.mrf.mxu0
  %v295 = vadd.f32 0.0, %v294
  %v296 = vpop.f32.mrf.mxu0
  %v297 = vpop.f32.mrf.mxu0
  %v298 = vadd.f32 0.0, %v297
  %v299 = vpop.f32.mrf.mxu0
  %300 = vmatprep.mubr.bf16.mxu0 0
  %301 = vmatmul.mubr.bf16.gmra.mxu0 %v169
  %v302 = vpop.f32.mrf.mxu0
  %v303 = vadd.f32 0.0, %v302
  %v304 = vpop.f32.mrf.mxu0
  %v305 = vpop.f32.mrf.mxu0
  %v306 = vadd.f32 0.0, %v305
  %v307 = vpop.f32.mrf.mxu0
  %308 = vmatprep.mubr.bf16.mxu0 0
  %309 = vmatmul.mubr.bf16.gmra.mxu0 %v170
  %v310 = vpop.f32.mrf.mxu0
  %v311 = vadd.f32 0.0, %v310
  %v312 = vpop.f32.mrf.mxu0
  %v313 = vpop.f32.mrf.mxu0
  %v314 = vadd.f32 0.0, %v313
  %v315 = vpop.f32.mrf.mxu0
  %316 = vmatprep.mubr.bf16.mxu0 0
  %317 = vmatmul.mubr.bf16.gmra.mxu0 %v171
  %v318 = vpop.f32.mrf.mxu0
  %v319 = vadd.f32 0.0, %v318
  %v320 = vpop.f32.mrf.mxu0
  %v321 = vpop.f32.mrf.mxu0
  %v322 = vadd.f32 0.0, %v321
  %v323 = vpop.f32.mrf.mxu0
  %324 = vdwg.mxu0
  %v325 = vadd.f32 %v100, %v263
  %v326 = vadd.f32 %v101, %v266
  %v327 = vadd.f32 %v102, %v271
  %v328 = vadd.f32 %v103, %v274
  %v329 = vadd.f32 %v104, %v279
  %v330 = vadd.f32 %v105, %v282
  %v331 = vadd.f32 %v106, %v287
  %v332 = vadd.f32 %v107, %v290
  %v333 = vadd.f32 %v108, %v295
  %v334 = vadd.f32 %v109, %v298
  %v335 = vadd.f32 %v110, %v303
  %v336 = vadd.f32 %v111, %v306
  %v337 = vadd.f32 %v112, %v311
  %v338 = vadd.f32 %v113, %v314
  %v339 = vadd.f32 %v114, %v319
  %v340 = vadd.f32 %v115, %v322
  %341 = vst [vmem:[#allocation2] sm:$0xff] %v325
  %342 = vst [vmem:[#allocation2 + $0x8] sm:$0xff] %v326
  %343 = vst [vmem:[#allocation2 + $0x10] sm:$0xff] %v327
  %344 = vst [vmem:[#allocation2 + $0x18] sm:$0xff] %v328
  %345 = vst [vmem:[#allocation2 + $0x20] sm:$0xff] %v329
  %346 = vst [vmem:[#allocation2 + $0x28] sm:$0xff] %v330
  %347 = vst [vmem:[#allocation2 + $0x30] sm:$0xff] %v331
  %348 = vst [vmem:[#allocation2 + $0x38] sm:$0xff] %v332
  %349 = vst [vmem:[#allocation2 + $0x40] sm:$0xff] %v333
  %350 = vst [vmem:[#allocation2 + $0x48] sm:$0xff] %v334
  %351 = vst [vmem:[#allocation2 + $0x50] sm:$0xff] %v335
  %352 = vst [vmem:[#allocation2 + $0x58] sm:$0xff] %v336
  %353 = vst [vmem:[#allocation2 + $0x60] sm:$0xff] %v337
  %354 = vst [vmem:[#allocation2 + $0x68] sm:$0xff] %v338
  %355 = vst [vmem:[#allocation2 + $0x70] sm:$0xff] %v339
  %356 = vst [vmem:[#allocation2 + $0x78] sm:$0xff] %v340
  // Predicated region
  $region18: #{_lambda_.40} parent=0 // pred_check
    %p357 = pneg %p16
  $region19: #{_lambda_.40} parent=0 // pred_check_branch
    %359 = sbr.rel (%p357) target = $region21
  $region20: #{_lambda_.40} parent=0 // pred_region
    %v360 = vld [vmem:[#allocation2] sm:$0xff]
    %v361 = vld [vmem:[#allocation2 + $0x8] sm:$0xff]
    %v362 = vld [vmem:[#allocation2 + $0x10] sm:$0xff]
    %v363 = vld [vmem:[#allocation2 + $0x18] sm:$0xff]
    %v364 = vld [vmem:[#allocation2 + $0x20] sm:$0xff]
    %v365 = vld [vmem:[#allocation2 + $0x28] sm:$0xff]
    %v366 = vld [vmem:[#allocation2 + $0x30] sm:$0xff]
    %v367 = vld [vmem:[#allocation2 + $0x38] sm:$0xff]
    %v368 = vld [vmem:[#allocation2 + $0x40] sm:$0xff]
    %v369 = vld [vmem:[#allocation2 + $0x48] sm:$0xff]
    %v370 = vld [vmem:[#allocation2 + $0x50] sm:$0xff]
    %v371 = vld [vmem:[#allocation2 + $0x58] sm:$0xff]
    %v372 = vld [vmem:[#allocation2 + $0x60] sm:$0xff]
    %v373 = vld [vmem:[#allocation2 + $0x68] sm:$0xff]
    %v374 = vld [vmem:[#allocation2 + $0x70] sm:$0xff]
    %v375 = vld [vmem:[#allocation2 + $0x78] sm:$0xff]
    %v376 = vld [vmem:[%s2] sm:$0x1]
    %v378 = vlaneseq
    %v379 = vshrl.u32 %v378, 7
    %v380 = vsub.s32 0, %v379
    %v381 = vrot.slane %v376, %v380
    %v383 = vadd.f32 %v360, %v381
    %v384 = vadd.f32 %v361, %v381
    %v385 = vadd.f32 %v362, %v381
    %v386 = vadd.f32 %v363, %v381
    %v387 = vadd.f32 %v364, %v381
    %v388 = vadd.f32 %v365, %v381
    %v389 = vadd.f32 %v366, %v381
    %v390 = vadd.f32 %v367, %v381
    %v391 = vadd.f32 %v368, %v381
    %v392 = vadd.f32 %v369, %v381
    %v393 = vadd.f32 %v370, %v381
    %v394 = vadd.f32 %v371, %v381
    %v395 = vadd.f32 %v372, %v381
    %v396 = vadd.f32 %v373, %v381
    %v397 = vadd.f32 %v374, %v381
    %v398 = vadd.f32 %v375, %v381
    %399 = vst [vmem:[%s3] sm:$0xff] %v383
    %400 = vst [vmem:[%s3 + $0x8] sm:$0xff] %v384
    %401 = vst [vmem:[%s3 + $0x10] sm:$0xff] %v385
    %402 = vst [vmem:[%s3 + $0x18] sm:$0xff] %v386
    %403 = vst [vmem:[%s3 + $0x20] sm:$0xff] %v387
    %404 = vst [vmem:[%s3 + $0x28] sm:$0xff] %v388
    %405 = vst [vmem:[%s3 + $0x30] sm:$0xff] %v389
    %406 = vst [vmem:[%s3 + $0x38] sm:$0xff] %v390
    %407 = vst [vmem:[%s3 + $0x40] sm:$0xff] %v391
    %408 = vst [vmem:[%s3 + $0x48] sm:$0xff] %v392
    %409 = vst [vmem:[%s3 + $0x50] sm:$0xff] %v393
    %410 = vst [vmem:[%s3 + $0x58] sm:$0xff] %v394
    %411 = vst [vmem:[%s3 + $0x60] sm:$0xff] %v395
    %412 = vst [vmem:[%s3 + $0x68] sm:$0xff] %v396
    %413 = vst [vmem:[%s3 + $0x70] sm:$0xff] %v397
    %414 = vst [vmem:[%s3 + $0x78] sm:$0xff] %v398
  $region21: #{_lambda_.40} parent=0 // pred_fallthru
    _
  // Predicated region
  $region22: #{_lambda_.40} parent=0 // pred_check
    _
  $region23: #{_lambda_.40} parent=0 // pred_check_branch
    %416 = sbr.rel (0) target = $region25
  $region24: #{_lambda_.40} parent=0 // pred_region
    _
  $region25: #{_lambda_.40} parent=0 // pred_fallthru
    _
  // Predicated region
  $region26: #{_lambda_.40} parent=0 // pred_check
    _
  $region27: #{_lambda_.40} parent=0 // pred_check_branch
    %418 = sbr.rel (0) target = $region29
  $region28: #{_lambda_.40} parent=0 // pred_region
    _
  $region29: #{_lambda_.40} parent=0 // pred_fallthru
    _

// kernel: _lambda_.41
$region0: #{_lambda_.41}
  #allocation0 [shape = 'u32[]', space=smem, size = 0x4, offset = 0x4, fixed_abs, tag = 'smem constant byte address 0x4 - core index']
  #allocation1 [shape = 'u32[144,128]{1,0:T(1,128)}', space=vmem, size = 0x12000, scoped, tag = 'internal scratch']
  #allocation2 [shape = 'f32[1,128]{1,0:T(1,128)}', space=vmem, size = 0x200, scoped, tag = 'scratch operand']
  #allocation3 [shape = 'f32[1,128]{1,0:T(1,128)}', space=vmem, size = 0x200, scoped, tag = 'scratch operand']
  %s0 = inlined_call_operand.vmem [shape: f32[16,128], index: 0, kind: input, shape index: {}]
  %s1 = inlined_call_operand.vmem [shape: f32[1,128], index: 1, kind: output, shape index: {0}]
  %s2 = inlined_call_operand.vmem [shape: f32[1,128], index: 2, kind: output, shape index: {1}]
  %3 = xla_tuple %s1, %s2
  %s4 = sld [smem:[#allocation0]]
  $region30: #{_lambda_.41} parent=0
    _
  %s6 = ssub.s32 1, %s4
  %s7 = scalar_select 0, %s6, %s4
  // Predicated region
  $region2: #{_lambda_.41} parent=0 // pred_check
    _
  $region3: #{_lambda_.41} parent=0 // pred_check_branch
    %9 = sbr.rel (0) target = $region5
  $region4: #{_lambda_.41} parent=0 // pred_region
    _
  $region5: #{_lambda_.41} parent=0 // pred_fallthru
    _
  %p10 = scmp.eq.s32.totalorder 0, 0
  // Predicated region
  $region6: #{_lambda_.41} parent=0 // pred_check
    %p11 = pneg %p10
  $region7: #{_lambda_.41} parent=0 // pred_check_branch
    %13 = sbr.rel (%p11) target = $region9
  $region8: #{_lambda_.41} parent=0 // pred_region
    %14 = vst [vmem:[#allocation2] sm:$0x1] 0.0
    %15 = vst [vmem:[#allocation3] sm:$0x1] 0.0
  $region9: #{_lambda_.41} parent=0 // pred_fallthru
    _
  %v16 = vld [vmem:[%s0] sm:$0xff]
  %v17 = vld [vmem:[%s0 + $0x8] sm:$0xff]
  %v18 = vld [vmem:[#allocation2] sm:$0x1]
  %v19 = vadd.f32 %v16, %v17
  %v20 = vrot.slane %v19, 4
  %v21 = vadd.f32 %v19, %v20
  %v22 = vrot.slane %v21, 2
  %v23 = vadd.f32 %v21, %v22
  %v24 = vrot.slane %v23, 1
  %v25 = vadd.f32 %v23, %v24
  %v26 = vadd.f32 %v18, %v25
  %27 = vst [vmem:[#allocation2] sm:$0x1] %v26
  %v28 = vld [vmem:[#allocation3] sm:$0x1]
  %v29 = vmul.f32 %v16, %v16
  %v30 = vmul.f32 %v17, %v17
  %v31 = vadd.f32 %v29, %v30
  %v32 = vrot.slane %v31, 4
  %v33 = vadd.f32 %v31, %v32
  %v34 = vrot.slane %v33, 2
  %v35 = vadd.f32 %v33, %v34
  %v36 = vrot.slane %v35, 1
  %v37 = vadd.f32 %v35, %v36
  %v38 = vadd.f32 %v28, %v37
  %39 = vst [vmem:[#allocation3] sm:$0x1] %v38
  // Predicated region
  $region10: #{_lambda_.41} parent=0 // pred_check
    %p40 = pneg %p10
  $region11: #{_lambda_.41} parent=0 // pred_check_branch
    %42 = sbr.rel (%p40) target = $region13
  $region12: #{_lambda_.41} parent=0 // pred_region
    %v43 = vld [vmem:[#allocation2] sm:$0x1]
    %44 = vst [vmem:[%s1] sm:$0x1] %v43
    %v45 = vld [vmem:[#allocation3] sm:$0x1]
    %46 = vst [vmem:[%s2] sm:$0x1] %v45
  $region13: #{_lambda_.41} parent=0 // pred_fallthru
    _
  // Predicated region
  $region14: #{_lambda_.41} parent=0 // pred_check
    _
  $region15: #{_lambda_.41} parent=0 // pred_check_branch
    %48 = sbr.rel (0) target = $region17
  $region16: #{_lambda_.41} parent=0 // pred_region
    _
  $region17: #{_lambda_.41} parent=0 // pred_fallthru
    _
  // Predicated region
  $region18: #{_lambda_.41} parent=0 // pred_check
    _
  $region19: #{_lambda_.41} parent=0 // pred_check_branch
    %50 = sbr.rel (0) target = $region21
  $region20: #{_lambda_.41} parent=0 // pred_region
    _
  $region21: #{_lambda_.41} parent=0 // pred_fallthru
    _
  // Predicated region
  $region22: #{_lambda_.41} parent=0 // pred_check
    _
  $region23: #{_lambda_.41} parent=0 // pred_check_branch
    %52 = sbr.rel (0) target = $region25
  $region24: #{_lambda_.41} parent=0 // pred_region
    _
  $region25: #{_lambda_.41} parent=0 // pred_fallthru
    _
  // Predicated region
  $region26: #{_lambda_.41} parent=0 // pred_check
    _
  $region27: #{_lambda_.41} parent=0 // pred_check_branch
    %54 = sbr.rel (0) target = $region29
  $region28: #{_lambda_.41} parent=0 // pred_region
    _
  $region29: #{_lambda_.41} parent=0 // pred_fallthru
    _

// kernel: tile.78
$region0: #{tile.78}
  #allocation0 [shape = 's32[1]{0}', space=sflag, size = 0x4, scoped, tag = 'scoped memory for tile.78']
  %s0 = inlined_call_operand.vmem [shape: f32[16], index: 0, kind: input, shape index: {}]
  %s1 = inlined_call_operand.vmem [shape: f32[8,16], index: 1, kind: output, shape index: {}]
  // Predicated region
  $region2: #{tile.78} parent=0 // pred_check
    _
  $region3: #{tile.78} parent=0 // pred_check_branch
    %3 = sbr.rel (0) target = $region5
  $region4: #{tile.78} parent=0 // pred_region
    _
  $region5: #{tile.78} parent=0 // pred_fallthru
    _
  %v4 = vld [vmem:[%s0] ss:$0 sm:$0xff]
  %5 = vst [vmem:[%s1] sm:$0xff] %v4

// kernel: tile.79
$region0: #{tile.79}
  %s0 = inlined_call_operand.vmem [shape: f32[8,16], index: 0, kind: input, shape index: {}]
  %s1 = inlined_call_operand.vmem [shape: f32[1,128], index: 1, kind: output, shape index: {}]
  $region1: #{tile.79} parent=0
    #allocation0 [shape = 'u8[4096]{0}', space=vmem, size = 0x1000, scoped, tag = 'scoped mem for output reshape']
    %v2 = vld [vmem:[%s0] sm:$0x1]
    %vm3 = vcmask 130048
    %4 = vst.msk [vmem:[#allocation0] sm:$0x1] %vm3, %v2
    %s5 = scalar_lea.vmem %s0, 7
    %v6 = vld [vmem:[%s5] sm:$0x1]
    %7 = vrot.lane.b32.xlu0 %v6, 112
    %v8 = vpop.permute.xlu0 %7
    %vm9 = vcmask 1048448
    %10 = vst.msk [vmem:[#allocation0] sm:$0x1] %vm9, %v8
    %s11 = scalar_lea.vmem %s0, 6
    %v12 = vld [vmem:[%s11] sm:$0x1]
    %13 = vrot.lane.b32.xlu0 %v12, 96
    %v14 = vpop.permute.xlu0 %13
    %vm15 = vcmask 917248
    %16 = vst.msk [vmem:[#allocation0] sm:$0x1] %vm15, %v14
    %s17 = scalar_lea.vmem %s0, 5
    %v18 = vld [vmem:[%s17] sm:$0x1]
    %19 = vrot.lane.b32.xlu0 %v18, 80
    %v20 = vpop.permute.xlu0 %19
    %vm21 = vcmask 786048
    %22 = vst.msk [vmem:[#allocation0] sm:$0x1] %vm21, %v20
    %s23 = scalar_lea.vmem %s0, 4
    %v24 = vld [vmem:[%s23] sm:$0x1]
    %25 = vrot.lane.b32.xlu0 %v24, 64
    %v26 = vpop.permute.xlu0 %25
    %vm27 = vcmask 654848
    %28 = vst.msk [vmem:[#allocation0] sm:$0x1] %vm27, %v26
    %s29 = scalar_lea.vmem %s0, 3
    %v30 = vld [vmem:[%s29] sm:$0x1]
    %31 = vrot.lane.b32.xlu0 %v30, 48
    %v32 = vpop.permute.xlu0 %31
    %vm33 = vcmask 523648
    %34 = vst.msk [vmem:[#allocation0] sm:$0x1] %vm33, %v32
    %s35 = scalar_lea.vmem %s0, 2
    %v36 = vld [vmem:[%s35] sm:$0x1]
    %37 = vrot.lane.b32.xlu0 %v36, 32
    %v38 = vpop.permute.xlu0 %37
    %vm39 = vcmask 392448
    %40 = vst.msk [vmem:[#allocation0] sm:$0x1] %vm39, %v38
    %s41 = scalar_lea.vmem %s0, 1
    %v42 = vld [vmem:[%s41] sm:$0x1]
    %43 = vrot.lane.b32.xlu0 %v42, 16
    %v44 = vpop.permute.xlu0 %43
    %vm45 = vcmask 261248
    %46 = vst.msk [vmem:[#allocation0] sm:$0x1] %vm45, %v44
    %s48 = sshll.u32 1, 1
    %s49 = ssub.s32 %s48, 1
    %v51 = vld [vmem:[#allocation0] sm:%s49]
    %s52 = sshll.u32 1, 1
    %s53 = ssub.s32 %s52, 1
    %54 = vst [vmem:[%s1] sm:%s53] %v51

// kernel: _lambda_.42
$region0: #{_lambda_.42}
  #allocation0 [shape = 'u32[]', space=smem, size = 0x4, offset = 0x4, fixed_abs, tag = 'smem constant byte address 0x4 - core index']
  #allocation1 [shape = 'u32[144,128]{1,0:T(1,128)}', space=vmem, size = 0x12000, scoped, tag = 'internal scratch']
  %s0 = inlined_call_operand.vmem [shape: f32[16,128], index: 0, kind: input, shape index: {}]
  %s1 = inlined_call_operand.vmem [shape: f32[1,128], index: 1, kind: input, shape index: {}]
  %s2 = inlined_call_operand.vmem [shape: f32[1,128], index: 2, kind: input, shape index: {}]
  %s3 = inlined_call_operand.vmem [shape: f32[16,128], index: 3, kind: output, shape index: {}]
  %s4 = sld [smem:[#allocation0]]
  $region22: #{_lambda_.42} parent=0
    _
  %s6 = ssub.s32 1, %s4
  %s7 = scalar_select 0, %s6, %s4
  // Predicated region
  $region2: #{_lambda_.42} parent=0 // pred_check
    _
  $region3: #{_lambda_.42} parent=0 // pred_check_branch
    %9 = sbr.rel (0) target = $region5
  $region4: #{_lambda_.42} parent=0 // pred_region
    _
  $region5: #{_lambda_.42} parent=0 // pred_fallthru
    _
  // Predicated region
  $region6: #{_lambda_.42} parent=0 // pred_check
    _
  $region7: #{_lambda_.42} parent=0 // pred_check_branch
    %11 = sbr.rel (0) target = $region9
  $region8: #{_lambda_.42} parent=0 // pred_region
    _
  $region9: #{_lambda_.42} parent=0 // pred_fallthru
    _
  // Predicated region
  $region10: #{_lambda_.42} parent=0 // pred_check
    _
  $region11: #{_lambda_.42} parent=0 // pred_check_branch
    %13 = sbr.rel (0) target = $region13
  $region12: #{_lambda_.42} parent=0 // pred_region
    _
  $region13: #{_lambda_.42} parent=0 // pred_fallthru
    _
  %v14 = vld [vmem:[%s0] sm:$0xff]
  %v15 = vld [vmem:[%s0 + $0x8] sm:$0xff]
  %v16 = vld [vmem:[%s1] sm:$0x1]
  %v18 = vlaneseq
  %v19 = vshrl.u32 %v18, 7
  %v20 = vsub.s32 0, %v19
  %v21 = vrot.slane %v16, %v20
  %v23 = vsub.f32 %v14, %v21
  %v24 = vsub.f32 %v15, %v21
  %v25 = vld [vmem:[%s2] sm:$0x1]
  %v27 = vlaneseq
  %v28 = vshrl.u32 %v27, 7
  %v29 = vsub.s32 0, %v28
  %v30 = vrot.slane %v25, %v29
  %v32 = vmul.f32 %v23, %v30
  %v33 = vmul.f32 %v24, %v30
  %34 = vst [vmem:[%s3] sm:$0xff] %v32
  %35 = vst [vmem:[%s3 + $0x8] sm:$0xff] %v33
  // Predicated region
  $region14: #{_lambda_.42} parent=0 // pred_check
    _
  $region15: #{_lambda_.42} parent=0 // pred_check_branch
    %37 = sbr.rel (0) target = $region17
  $region16: #{_lambda_.42} parent=0 // pred_region
    _
  $region17: #{_lambda_.42} parent=0 // pred_fallthru
    _
  // Predicated region
  $region18: #{_lambda_.42} parent=0 // pred_check
    _
  $region19: #{_lambda_.42} parent=0 // pred_check_branch
    %39 = sbr.rel (0) target = $region21
  $region20: #{_lambda_.42} parent=0 // pred_region
    _
  $region21: #{_lambda_.42} parent=0 // pred_fallthru
    _

// kernel: _lambda_.44
$region0: #{_lambda_.44}
  #allocation0 [shape = 'u32[]', space=smem, size = 0x4, offset = 0x4, fixed_abs, tag = 'smem constant byte address 0x4 - core index']
  #allocation1 [shape = 'u32[144,128]{1,0:T(1,128)}', space=vmem, size = 0x12000, scoped, tag = 'internal scratch']
  #allocation2 [shape = 'f32[1,128]{1,0:T(1,128)}', space=vmem, size = 0x200, scoped, tag = 'scratch operand']
  #allocation3 [shape = 'f32[1,128]{1,0:T(1,128)}', space=vmem, size = 0x200, scoped, tag = 'scratch operand']
  %s0 = inlined_call_operand.vmem [shape: f32[8,128], index: 0, kind: input, shape index: {}]
  %s1 = inlined_call_operand.vmem [shape: f32[1,128], index: 1, kind: output, shape index: {0}]
  %s2 = inlined_call_operand.vmem [shape: f32[1,128], index: 2, kind: output, shape index: {1}]
  %3 = xla_tuple %s1, %s2
  %s4 = sld [smem:[#allocation0]]
  $region30: #{_lambda_.44} parent=0
    _
  %s6 = ssub.s32 1, %s4
  %s7 = scalar_select 0, %s6, %s4
  // Predicated region
  $region2: #{_lambda_.44} parent=0 // pred_check
    _
  $region3: #{_lambda_.44} parent=0 // pred_check_branch
    %9 = sbr.rel (0) target = $region5
  $region4: #{_lambda_.44} parent=0 // pred_region
    _
  $region5: #{_lambda_.44} parent=0 // pred_fallthru
    _
  %p10 = scmp.eq.s32.totalorder 0, 0
  // Predicated region
  $region6: #{_lambda_.44} parent=0 // pred_check
    %p11 = pneg %p10
  $region7: #{_lambda_.44} parent=0 // pred_check_branch
    %13 = sbr.rel (%p11) target = $region9
  $region8: #{_lambda_.44} parent=0 // pred_region
    %14 = vst [vmem:[#allocation2] sm:$0x1] 0.0
    %15 = vst [vmem:[#allocation3] sm:$0x1] 0.0
  $region9: #{_lambda_.44} parent=0 // pred_fallthru
    _
  %v16 = vld [vmem:[%s0] sm:$0xff]
  %v17 = vld [vmem:[#allocation2] sm:$0x1]
  %v18 = vrot.slane %v16, 4
  %v19 = vadd.f32 %v16, %v18
  %v20 = vrot.slane %v19, 2
  %v21 = vadd.f32 %v19, %v20
  %v22 = vrot.slane %v21, 1
  %v23 = vadd.f32 %v21, %v22
  %v24 = vadd.f32 %v17, %v23
  %25 = vst [vmem:[#allocation2] sm:$0x1] %v24
  %v26 = vld [vmem:[#allocation3] sm:$0x1]
  %v27 = vmul.f32 %v16, %v16
  %v28 = vrot.slane %v27, 4
  %v29 = vadd.f32 %v27, %v28
  %v30 = vrot.slane %v29, 2
  %v31 = vadd.f32 %v29, %v30
  %v32 = vrot.slane %v31, 1
  %v33 = vadd.f32 %v31, %v32
  %v34 = vadd.f32 %v26, %v33
  %35 = vst [vmem:[#allocation3] sm:$0x1] %v34
  // Predicated region
  $region10: #{_lambda_.44} parent=0 // pred_check
    %p36 = pneg %p10
  $region11: #{_lambda_.44} parent=0 // pred_check_branch
    %38 = sbr.rel (%p36) target = $region13
  $region12: #{_lambda_.44} parent=0 // pred_region
    %v39 = vld [vmem:[#allocation2] sm:$0x1]
    %40 = vst [vmem:[%s1] sm:$0x1] %v39
    %v41 = vld [vmem:[#allocation3] sm:$0x1]
    %42 = vst [vmem:[%s2] sm:$0x1] %v41
  $region13: #{_lambda_.44} parent=0 // pred_fallthru
    _
  // Predicated region
  $region14: #{_lambda_.44} parent=0 // pred_check
    _
  $region15: #{_lambda_.44} parent=0 // pred_check_branch
    %44 = sbr.rel (0) target = $region17
  $region16: #{_lambda_.44} parent=0 // pred_region
    _
  $region17: #{_lambda_.44} parent=0 // pred_fallthru
    _
  // Predicated region
  $region18: #{_lambda_.44} parent=0 // pred_check
    _
  $region19: #{_lambda_.44} parent=0 // pred_check_branch
    %46 = sbr.rel (0) target = $region21
  $region20: #{_lambda_.44} parent=0 // pred_region
    _
  $region21: #{_lambda_.44} parent=0 // pred_fallthru
    _
  // Predicated region
  $region22: #{_lambda_.44} parent=0 // pred_check
    _
  $region23: #{_lambda_.44} parent=0 // pred_check_branch
    %48 = sbr.rel (0) target = $region25
  $region24: #{_lambda_.44} parent=0 // pred_region
    _
  $region25: #{_lambda_.44} parent=0 // pred_fallthru
    _
  // Predicated region
  $region26: #{_lambda_.44} parent=0 // pred_check
    _
  $region27: #{_lambda_.44} parent=0 // pred_check_branch
    %50 = sbr.rel (0) target = $region29
  $region28: #{_lambda_.44} parent=0 // pred_region
    _
  $region29: #{_lambda_.44} parent=0 // pred_fallthru
    _

// kernel: tile.88
$region0: #{tile.88}
  #allocation0 [shape = 's32[1]{0}', space=sflag, size = 0x4, scoped, tag = 'scoped memory for tile.88']
  %s0 = inlined_call_operand.vmem [shape: f32[32], index: 0, kind: input, shape index: {}]
  %s1 = inlined_call_operand.vmem [shape: f32[4,32], index: 1, kind: output, shape index: {}]
  // Predicated region
  $region2: #{tile.88} parent=0 // pred_check
    _
  $region3: #{tile.88} parent=0 // pred_check_branch
    %3 = sbr.rel (0) target = $region5
  $region4: #{tile.88} parent=0 // pred_region
    _
  $region5: #{tile.88} parent=0 // pred_fallthru
    _
  %v4 = vld [vmem:[%s0] ss:$0 sm:$0xff]
  %5 = vst [vmem:[%s1] sm:$0xf] %v4

// kernel: tile.89
$region0: #{tile.89}
  %s0 = inlined_call_operand.vmem [shape: f32[4,32], index: 0, kind: input, shape index: {}]
  %s1 = inlined_call_operand.vmem [shape: f32[1,128], index: 1, kind: output, shape index: {}]
  $region1: #{tile.89} parent=0
    #allocation0 [shape = 'u8[4096]{0}', space=vmem, size = 0x1000, scoped, tag = 'scoped mem for output reshape']
    #allocation1 [shape = 'u8[4096]{0}', space=vmem, size = 0x1000, scoped, tag = 'scoped mem for input reshape']
    %s3 = sshll.u32 1, 4
    %s4 = ssub.s32 %s3, 1
    %v5 = vld [vmem:[%s0] sm:%s4]
    %6 = vst [vmem:[#allocation1] sm:%s4] %v5
    %v7 = vld [vmem:[#allocation1] sm:$0x1]
    %vm8 = vcmask 261120
    %9 = vst.msk [vmem:[#allocation0] sm:$0x1] %vm8, %v7
    %s10 = scalar_lea.vmem [#allocation1], 3
    %v11 = vld [vmem:[%s10] sm:$0x1]
    %12 = vrot.lane.b32.xlu0 %v11, 96
    %v13 = vpop.permute.xlu0 %12
    %vm14 = vcmask 1048320
    %15 = vst.msk [vmem:[#allocation0] sm:$0x1] %vm14, %v13
    %s16 = scalar_lea.vmem [#allocation1], 2
    %v17 = vld [vmem:[%s16] sm:$0x1]
    %18 = vrot.lane.b32.xlu0 %v17, 64
    %v19 = vpop.permute.xlu0 %18
    %vm20 = vcmask 785920
    %21 = vst.msk [vmem:[#allocation0] sm:$0x1] %vm20, %v19
    %s22 = scalar_lea.vmem [#allocation1], 1
    %v23 = vld [vmem:[%s22] sm:$0x1]
    %24 = vrot.lane.b32.xlu0 %v23, 32
    %v25 = vpop.permute.xlu0 %24
    %vm26 = vcmask 523520
    %27 = vst.msk [vmem:[#allocation0] sm:$0x1] %vm26, %v25
    %s29 = sshll.u32 1, 1
    %s30 = ssub.s32 %s29, 1
    %v32 = vld [vmem:[#allocation0] sm:%s30]
    %s33 = sshll.u32 1, 1
    %s34 = ssub.s32 %s33, 1
    %35 = vst [vmem:[%s1] sm:%s34] %v32

// kernel: _lambda_.43
$region0: #{_lambda_.43}
  #allocation0 [shape = 'u32[]', space=smem, size = 0x4, offset = 0x4, fixed_abs, tag = 'smem constant byte address 0x4 - core index']
  #allocation1 [shape = 'u32[144,128]{1,0:T(1,128)}', space=vmem, size = 0x12000, scoped, tag = 'internal scratch']
  #allocation2 [shape = 'f32[32,128]{1,0:T(8,128)}', space=vmem, size = 0x4000, scoped, tag = 'scratch operand']
  %s0 = inlined_call_operand.vmem [shape: bf16[32,256], index: 0, kind: input, shape index: {}]
  %s1 = inlined_call_operand.vmem [shape: bf16[256,128], index: 1, kind: input, shape index: {}]
  %s2 = inlined_call_operand.vmem [shape: f32[1,128], index: 2, kind: input, shape index: {}]
  %s3 = inlined_call_operand.vmem [shape: f32[32,128], index: 3, kind: output, shape index: {}]
  %s4 = sld [smem:[#allocation0]]
  $region30: #{_lambda_.43} parent=0
    _
  %s6 = ssub.s32 1, %s4
  %s7 = scalar_select 0, %s6, %s4
  // Predicated region
  $region2: #{_lambda_.43} parent=0 // pred_check
    _
  $region3: #{_lambda_.43} parent=0 // pred_check_branch
    %9 = sbr.rel (0) target = $region5
  $region4: #{_lambda_.43} parent=0 // pred_region
    _
  $region5: #{_lambda_.43} parent=0 // pred_fallthru
    _
  // Predicated region
  $region6: #{_lambda_.43} parent=0 // pred_check
    _
  $region7: #{_lambda_.43} parent=0 // pred_check_branch
    %11 = sbr.rel (0) target = $region9
  $region8: #{_lambda_.43} parent=0 // pred_region
    _
  $region9: #{_lambda_.43} parent=0 // pred_fallthru
    _
  // Predicated region
  $region10: #{_lambda_.43} parent=0 // pred_check
    _
  $region11: #{_lambda_.43} parent=0 // pred_check_branch
    %13 = sbr.rel (0) target = $region13
  $region12: #{_lambda_.43} parent=0 // pred_region
    _
  $region13: #{_lambda_.43} parent=0 // pred_fallthru
    _
  %p16 = scmp.eq.s32.totalorder 0, 0
  // Predicated region
  $region14: #{_lambda_.43} parent=0 // pred_check
    %p17 = pneg %p16
  $region15: #{_lambda_.43} parent=0 // pred_check_branch
    %19 = sbr.rel (%p17) target = $region17
  $region16: #{_lambda_.43} parent=0 // pred_region
    %20 = vst [vmem:[#allocation2] sm:$0xff] 0.0
    %21 = vst [vmem:[#allocation2 + $0x8] sm:$0xff] 0.0
    %22 = vst [vmem:[#allocation2 + $0x10] sm:$0xff] 0.0
    %23 = vst [vmem:[#allocation2 + $0x18] sm:$0xff] 0.0
  $region17: #{_lambda_.43} parent=0 // pred_fallthru
    _
  %v24 = vld [vmem:[%s0] sm:$0xff]
  %v25 = vld [vmem:[%s0 + $0x8] sm:$0xff]
  %v26 = vld [vmem:[%s0 + $0x10] sm:$0xff]
  %v27 = vld [vmem:[%s0 + $0x18] sm:$0xff]
  %vm28 = vcmp.gt.bf16.partialorder %v24, 0
  %vm29 = vcmp.gt.bf16.partialorder %v25, 0
  %vm30 = vcmp.gt.bf16.partialorder %v26, 0
  %vm31 = vcmp.gt.bf16.partialorder %v27, 0
  %v32 = vmul.bf16 %v24, 1045249613
  %v33 = vmul.bf16 %v25, 1045249613
  %v34 = vmul.bf16 %v26, 1045249613
  %v35 = vmul.bf16 %v27, 1045249613
  %v36 = vsel %vm28, %v24, %v32
  %v37 = vsel %vm29, %v25, %v33
  %v38 = vsel %vm30, %v26, %v34
  %v39 = vsel %vm31, %v27, %v35
  %v40 = vld [vmem:[#allocation2] sm:$0xff]
  %v41 = vld [vmem:[#allocation2 + $0x8] sm:$0xff]
  %v42 = vld [vmem:[#allocation2 + $0x10] sm:$0xff]
  %v43 = vld [vmem:[#allocation2 + $0x18] sm:$0xff]
  %v44 = vld [vmem:[%s1] sm:$0xf]
  %v45 = vld [vmem:[%s1 + $0x4] sm:$0xf]
  %v46 = vld [vmem:[%s1 + $0x8] sm:$0xf]
  %v47 = vld [vmem:[%s1 + $0xc] sm:$0xf]
  %v48 = vld [vmem:[%s1 + $0x10] sm:$0xf]
  %v49 = vld [vmem:[%s1 + $0x14] sm:$0xf]
  %v50 = vld [vmem:[%s1 + $0x18] sm:$0xf]
  %v51 = vld [vmem:[%s1 + $0x1c] sm:$0xf]
  %v52 = vld [vmem:[%s1 + $0x20] sm:$0xf]
  %v53 = vld [vmem:[%s1 + $0x24] sm:$0xf]
  %v54 = vld [vmem:[%s1 + $0x28] sm:$0xf]
  %v55 = vld [vmem:[%s1 + $0x2c] sm:$0xf]
  %v56 = vld [vmem:[%s1 + $0x30] sm:$0xf]
  %v57 = vld [vmem:[%s1 + $0x34] sm:$0xf]
  %v58 = vld [vmem:[%s1 + $0x38] sm:$0xf]
  %v59 = vld [vmem:[%s1 + $0x3c] sm:$0xf]
  %v60 = vld [vmem:[%s1 + $0x40] sm:$0xf]
  %v61 = vld [vmem:[%s1 + $0x44] sm:$0xf]
  %v62 = vld [vmem:[%s1 + $0x48] sm:$0xf]
  %v63 = vld [vmem:[%s1 + $0x4c] sm:$0xf]
  %v64 = vld [vmem:[%s1 + $0x50] sm:$0xf]
  %v65 = vld [vmem:[%s1 + $0x54] sm:$0xf]
  %v66 = vld [vmem:[%s1 + $0x58] sm:$0xf]
  %v67 = vld [vmem:[%s1 + $0x5c] sm:$0xf]
  %v68 = vld [vmem:[%s1 + $0x60] sm:$0xf]
  %v69 = vld [vmem:[%s1 + $0x64] sm:$0xf]
  %v70 = vld [vmem:[%s1 + $0x68] sm:$0xf]
  %v71 = vld [vmem:[%s1 + $0x6c] sm:$0xf]
  %v72 = vld [vmem:[%s1 + $0x70] sm:$0xf]
  %v73 = vld [vmem:[%s1 + $0x74] sm:$0xf]
  %v74 = vld [vmem:[%s1 + $0x78] sm:$0xf]
  %v75 = vld [vmem:[%s1 + $0x7c] sm:$0xf]
  %v80 = vunpack.c.l.b16 %v36
  %v81 = vunpack.c.h.b16 %v36
  %v82 = vunpack.c.l.b16 %v37
  %v83 = vunpack.c.h.b16 %v37
  %v84 = vunpack.c.l.b16 %v38
  %v85 = vunpack.c.h.b16 %v38
  %v86 = vunpack.c.l.b16 %v39
  %v87 = vunpack.c.h.b16 %v39
  %v88 = vpack.c.b16 %v82, %v80
  %v89 = vpack.c.b16 %v83, %v81
  %v90 = vpack.c.b16 %v86, %v84
  %v91 = vpack.c.b16 %v87, %v85
  %v128 = vunpack.c.l.b16 %v44
  %v129 = vunpack.c.l.b16 %v45
  %v130 = vunpack.c.l.b16 %v46
  %v131 = vunpack.c.l.b16 %v47
  %v132 = vunpack.c.l.b16 %v48
  %v133 = vunpack.c.l.b16 %v49
  %v134 = vunpack.c.l.b16 %v50
  %v135 = vunpack.c.l.b16 %v51
  %v136 = vunpack.c.l.b16 %v52
  %v137 = vunpack.c.l.b16 %v53
  %v138 = vunpack.c.l.b16 %v54
  %v139 = vunpack.c.l.b16 %v55
  %v140 = vunpack.c.l.b16 %v56
  %v141 = vunpack.c.l.b16 %v57
  %v142 = vunpack.c.l.b16 %v58
  %v143 = vunpack.c.l.b16 %v59
  %v144 = vunpack.c.l.b16 %v60
  %v145 = vunpack.c.l.b16 %v61
  %v146 = vunpack.c.l.b16 %v62
  %v147 = vunpack.c.l.b16 %v63
  %v148 = vunpack.c.l.b16 %v64
  %v149 = vunpack.c.l.b16 %v65
  %v150 = vunpack.c.l.b16 %v66
  %v151 = vunpack.c.l.b16 %v67
  %v152 = vunpack.c.l.b16 %v68
  %v153 = vunpack.c.l.b16 %v69
  %v154 = vunpack.c.l.b16 %v70
  %v155 = vunpack.c.l.b16 %v71
  %v156 = vunpack.c.l.b16 %v72
  %v157 = vunpack.c.l.b16 %v73
  %v158 = vunpack.c.l.b16 %v74
  %v159 = vunpack.c.l.b16 %v75
  %v160 = vpack.c.b16 %v129, %v128
  %v161 = vpack.c.b16 %v131, %v130
  %v162 = vpack.c.b16 %v133, %v132
  %v163 = vpack.c.b16 %v135, %v134
  %v164 = vpack.c.b16 %v137, %v136
  %v165 = vpack.c.b16 %v139, %v138
  %v166 = vpack.c.b16 %v141, %v140
  %v167 = vpack.c.b16 %v143, %v142
  %v168 = vpack.c.b16 %v145, %v144
  %v169 = vpack.c.b16 %v147, %v146
  %v170 = vpack.c.b16 %v149, %v148
  %v171 = vpack.c.b16 %v151, %v150
  %v172 = vpack.c.b16 %v153, %v152
  %v173 = vpack.c.b16 %v155, %v154
  %v174 = vpack.c.b16 %v157, %v156
  %v175 = vpack.c.b16 %v159, %v158
  %192 = vmatprep.subr.bf16.mxu0 0
  %193 = vmatpush1.bf16.msra.mxu0 %v167
  %194 = vmatprep.subr.bf16.mxu0 0
  %195 = vmatpush1.bf16.msra.mxu0 %v166
  %196 = vmatprep.subr.bf16.mxu0 0
  %197 = vmatpush1.bf16.msra.mxu0 %v165
  %198 = vmatprep.subr.bf16.mxu0 0
  %199 = vmatpush1.bf16.msra.mxu0 %v164
  %200 = vmatprep.subr.bf16.mxu0 0
  %201 = vmatpush1.bf16.msra.mxu0 %v163
  %202 = vmatprep.subr.bf16.mxu0 0
  %203 = vmatpush1.bf16.msra.mxu0 %v162
  %204 = vmatprep.subr.bf16.mxu0 0
  %205 = vmatpush1.bf16.msra.mxu0 %v161
  %206 = vmatprep.subr.bf16.mxu0 0
  %207 = vmatpush1.bf16.msra.mxu0 %v160
  %208 = vmatprep.subr.bf16.mxu0 0
  %209 = vmatpush2.bf16.msra.mxu0 %v175
  %210 = vmatprep.subr.bf16.mxu0 0
  %211 = vmatpush2.bf16.msra.mxu0 %v174
  %212 = vmatprep.subr.bf16.mxu0 0
  %213 = vmatpush2.bf16.msra.mxu0 %v173
  %214 = vmatprep.subr.bf16.mxu0 0
  %215 = vmatpush2.bf16.msra.mxu0 %v172
  %216 = vmatprep.subr.bf16.mxu0 0
  %217 = vmatpush2.bf16.msra.mxu0 %v171
  %218 = vmatprep.subr.bf16.mxu0 0
  %219 = vmatpush2.bf16.msra.mxu0 %v170
  %220 = vmatprep.subr.bf16.mxu0 0
  %221 = vmatpush2.bf16.msra.mxu0 %v169
  %222 = vmatprep.subr.bf16.mxu0 0
  %223 = vmatpush2.bf16.msra.mxu0 %v168
  %224 = vmatprep.mubr.bf16.mxu0 %v89
  %225 = vmatmul.mubr.bf16.gmra.mxu0 %v88
  %v226 = vpop.f32.mrf.mxu0
  %v227 = vadd.f32 0.0, %v226
  %v228 = vpop.f32.mrf.mxu0
  %v229 = vpop.f32.mrf.mxu0
  %v230 = vadd.f32 0.0, %v229
  %v231 = vpop.f32.mrf.mxu0
  %232 = vmatprep.mubr.bf16.mxu0 %v91
  %233 = vmatmul.mubr.bf16.gmra.mxu0 %v90
  %v234 = vpop.f32.mrf.mxu0
  %v235 = vadd.f32 0.0, %v234
  %v236 = vpop.f32.mrf.mxu0
  %v237 = vpop.f32.mrf.mxu0
  %v238 = vadd.f32 0.0, %v237
  %v239 = vpop.f32.mrf.mxu0
  %240 = vdwg.mxu0
  %v241 = vadd.f32 %v40, %v227
  %v242 = vadd.f32 %v41, %v230
  %v243 = vadd.f32 %v42, %v235
  %v244 = vadd.f32 %v43, %v238
  %245 = vst [vmem:[#allocation2] sm:$0xff] %v241
  %246 = vst [vmem:[#allocation2 + $0x8] sm:$0xff] %v242
  %247 = vst [vmem:[#allocation2 + $0x10] sm:$0xff] %v243
  %248 = vst [vmem:[#allocation2 + $0x18] sm:$0xff] %v244
  // Predicated region
  $region18: #{_lambda_.43} parent=0 // pred_check
    %p249 = pneg %p16
  $region19: #{_lambda_.43} parent=0 // pred_check_branch
    %251 = sbr.rel (%p249) target = $region21
  $region20: #{_lambda_.43} parent=0 // pred_region
    %v252 = vld [vmem:[#allocation2] sm:$0xff]
    %v253 = vld [vmem:[#allocation2 + $0x8] sm:$0xff]
    %v254 = vld [vmem:[#allocation2 + $0x10] sm:$0xff]
    %v255 = vld [vmem:[#allocation2 + $0x18] sm:$0xff]
    %v256 = vld [vmem:[%s2] sm:$0x1]
    %v258 = vlaneseq
    %v259 = vshrl.u32 %v258, 7
    %v260 = vsub.s32 0, %v259
    %v261 = vrot.slane %v256, %v260
    %v263 = vadd.f32 %v252, %v261
    %v264 = vadd.f32 %v253, %v261
    %v265 = vadd.f32 %v254, %v261
    %v266 = vadd.f32 %v255, %v261
    %267 = vst [vmem:[%s3] sm:$0xff] %v263
    %268 = vst [vmem:[%s3 + $0x8] sm:$0xff] %v264
    %269 = vst [vmem:[%s3 + $0x10] sm:$0xff] %v265
    %270 = vst [vmem:[%s3 + $0x18] sm:$0xff] %v266
  $region21: #{_lambda_.43} parent=0 // pred_fallthru
    _
  // Predicated region
  $region22: #{_lambda_.43} parent=0 // pred_check
    _
  $region23: #{_lambda_.43} parent=0 // pred_check_branch
    %272 = sbr.rel (0) target = $region25
  $region24: #{_lambda_.43} parent=0 // pred_region
    _
  $region25: #{_lambda_.43} parent=0 // pred_fallthru
    _
  // Predicated region
  $region26: #{_lambda_.43} parent=0 // pred_check
    _
  $region27: #{_lambda_.43} parent=0 // pred_check_branch
    %274 = sbr.rel (0) target = $region29
  $region28: #{_lambda_.43} parent=0 // pred_region
    _
  $region29: #{_lambda_.43} parent=0 // pred_fallthru
    _

// kernel: _lambda_.45
$region0: #{_lambda_.45}
  #allocation0 [shape = 'u32[]', space=smem, size = 0x4, offset = 0x4, fixed_abs, tag = 'smem constant byte address 0x4 - core index']
  #allocation1 [shape = 'u32[144,128]{1,0:T(1,128)}', space=vmem, size = 0x12000, scoped, tag = 'internal scratch']
  %s0 = inlined_call_operand.vmem [shape: f32[8,128], index: 0, kind: input, shape index: {}]
  %s1 = inlined_call_operand.vmem [shape: f32[1,128], index: 1, kind: input, shape index: {}]
  %s2 = inlined_call_operand.vmem [shape: f32[1,128], index: 2, kind: input, shape index: {}]
  %s3 = inlined_call_operand.vmem [shape: f32[8,128], index: 3, kind: output, shape index: {}]
  %s4 = sld [smem:[#allocation0]]
  $region22: #{_lambda_.45} parent=0
    _
  %s6 = ssub.s32 1, %s4
  %s7 = scalar_select 0, %s6, %s4
  // Predicated region
  $region2: #{_lambda_.45} parent=0 // pred_check
    _
  $region3: #{_lambda_.45} parent=0 // pred_check_branch
    %9 = sbr.rel (0) target = $region5
  $region4: #{_lambda_.45} parent=0 // pred_region
    _
  $region5: #{_lambda_.45} parent=0 // pred_fallthru
    _
  // Predicated region
  $region6: #{_lambda_.45} parent=0 // pred_check
    _
  $region7: #{_lambda_.45} parent=0 // pred_check_branch
    %11 = sbr.rel (0) target = $region9
  $region8: #{_lambda_.45} parent=0 // pred_region
    _
  $region9: #{_lambda_.45} parent=0 // pred_fallthru
    _
  // Predicated region
  $region10: #{_lambda_.45} parent=0 // pred_check
    _
  $region11: #{_lambda_.45} parent=0 // pred_check_branch
    %13 = sbr.rel (0) target = $region13
  $region12: #{_lambda_.45} parent=0 // pred_region
    _
  $region13: #{_lambda_.45} parent=0 // pred_fallthru
    _
  %v14 = vld [vmem:[%s0] sm:$0xff]
  %v15 = vld [vmem:[%s1] sm:$0x1]
  %v17 = vlaneseq
  %v18 = vshrl.u32 %v17, 7
  %v19 = vsub.s32 0, %v18
  %v20 = vrot.slane %v15, %v19
  %v22 = vsub.f32 %v14, %v20
  %v23 = vld [vmem:[%s2] sm:$0x1]
  %v25 = vlaneseq
  %v26 = vshrl.u32 %v25, 7
  %v27 = vsub.s32 0, %v26
  %v28 = vrot.slane %v23, %v27
  %v30 = vmul.f32 %v22, %v28
  %31 = vst [vmem:[%s3] sm:$0xff] %v30
  // Predicated region
  $region14: #{_lambda_.45} parent=0 // pred_check
    _
  $region15: #{_lambda_.45} parent=0 // pred_check_branch
    %33 = sbr.rel (0) target = $region17
  $region16: #{_lambda_.45} parent=0 // pred_region
    _
  $region17: #{_lambda_.45} parent=0 // pred_fallthru
    _
  // Predicated region
  $region18: #{_lambda_.45} parent=0 // pred_check
    _
  $region19: #{_lambda_.45} parent=0 // pred_check_branch
    %35 = sbr.rel (0) target = $region21
  $region20: #{_lambda_.45} parent=0 // pred_region
    _
  $region21: #{_lambda_.45} parent=0 // pred_fallthru
    _

// kernel: tile.98
$region0: #{tile.98}
  #allocation0 [shape = 's32[1]{0}', space=sflag, size = 0x4, scoped, tag = 'scoped memory for tile.98']
  %s0 = inlined_call_operand.vmem [shape: f32[64], index: 0, kind: input, shape index: {}]
  %s1 = inlined_call_operand.vmem [shape: f32[2,64], index: 1, kind: output, shape index: {}]
  // Predicated region
  $region2: #{tile.98} parent=0 // pred_check
    _
  $region3: #{tile.98} parent=0 // pred_check_branch
    %3 = sbr.rel (0) target = $region5
  $region4: #{tile.98} parent=0 // pred_region
    _
  $region5: #{tile.98} parent=0 // pred_fallthru
    _
  %v4 = vld [vmem:[%s0] ss:$0 sm:$0xff]
  %5 = vst [vmem:[%s1] sm:$0x3] %v4

// kernel: tile.99
$region0: #{tile.99}
  %s0 = inlined_call_operand.vmem [shape: f32[2,64], index: 0, kind: input, shape index: {}]
  %s1 = inlined_call_operand.vmem [shape: f32[1,128], index: 1, kind: output, shape index: {}]
  $region1: #{tile.99} parent=0
    #allocation0 [shape = 'u8[4096]{0}', space=vmem, size = 0x1000, scoped, tag = 'scoped mem for output reshape']
    #allocation1 [shape = 'u8[4096]{0}', space=vmem, size = 0x1000, scoped, tag = 'scoped mem for input reshape']
    %s3 = sshll.u32 1, 2
    %s4 = ssub.s32 %s3, 1
    %v5 = vld [vmem:[%s0] sm:%s4]
    %6 = vst [vmem:[#allocation1] sm:%s4] %v5
    %v7 = vld [vmem:[#allocation1] sm:$0x1]
    %vm8 = vcmask 523264
    %9 = vst.msk [vmem:[#allocation0] sm:$0x1] %vm8, %v7
    %s10 = scalar_lea.vmem [#allocation1], 1
    %v11 = vld [vmem:[%s10] sm:$0x1]
    %12 = vrot.lane.b32.xlu0 %v11, 64
    %v13 = vpop.permute.xlu0 %12
    %vm14 = vcmask 1048064
    %15 = vst.msk [vmem:[#allocation0] sm:$0x1] %vm14, %v13
    %s17 = sshll.u32 1, 1
    %s18 = ssub.s32 %s17, 1
    %v20 = vld [vmem:[#allocation0] sm:%s18]
    %s21 = sshll.u32 1, 1
    %s22 = ssub.s32 %s21, 1
    %23 = vst [vmem:[%s1] sm:%s22] %v20

// kernel: _lambda_.46
$region0: #{_lambda_.46}
  #allocation0 [shape = 'u32[]', space=smem, size = 0x4, offset = 0x4, fixed_abs, tag = 'smem constant byte address 0x4 - core index']
  #allocation1 [shape = 'u32[144,128]{1,0:T(1,128)}', space=vmem, size = 0x12000, scoped, tag = 'internal scratch']
  #allocation2 [shape = 'f32[8,128]{1,0:T(8,128)}', space=vmem, size = 0x1000, scoped, tag = 'scratch operand']
  %s0 = inlined_call_operand.vmem [shape: bf16[8,512], index: 0, kind: input, shape index: {}]
  %s1 = inlined_call_operand.vmem [shape: bf16[512,128], index: 1, kind: input, shape index: {}]
  %s2 = inlined_call_operand.vmem [shape: f32[1,128], index: 2, kind: input, shape index: {}]
  %s3 = inlined_call_operand.vmem [shape: f32[8,128], index: 3, kind: output, shape index: {}]
  %s4 = sld [smem:[#allocation0]]
  $region53: #{_lambda_.46} parent=0
    _
  %s6 = ssub.s32 1, %s4
  %s7 = scalar_select 0, %s6, %s4
  loop: start=0, step=1, limit=4
  $region2: #{_lambda_.46} parent=0 // loop_pre_header
    _
  $region3: #{_lambda_.46} parent=0 // loop_header
    %s9 = sphi 0, %s13
    %p10 = scmp.ge.s32.totalorder %s9, 4
    %s16 = sphi 0, %s35
    %s17 = sphi 0, %s31
    %s18 = sphi 0, %s27
    %s19 = sphi 0, %s16
    %s20 = sphi 0, %s17
    %s21 = sphi 0, %s18
    %s22 = sphi 0, %s19
    %s23 = sphi 0, %s20
    %s24 = sphi 0, %s21
    %s40 = sphi 0, %s42
    %s43 = sphi 0, %s40
    %s44 = sphi 0, %s43
    %s60 = sphi 0, %s44
    %s68 = sphi 0, %s70
    %s71 = sphi 0, %s68
    %s72 = sphi 0, %s71
    %s88 = sphi 0, %s72
    %s94 = sphi 0, %s96
    %s97 = sphi 0, %s94
    %s98 = sphi 0, %s97
    %s114 = sphi 0, %s98
    %s122 = sphi 0, %s124
    %s125 = sphi 0, %s122
    %s126 = sphi 0, %s125
    %s142 = sphi 0, %s126
  $region4: #{_lambda_.46} parent=0 // loop_header_branch
    %12 = sbr.rel (%p10) target = $region8
  $region5: #{_lambda_.46} parent=0 // loop_body
    %s14 = ssub.s32 %s9, 1
    %s15 = ssub.s32 %s9, 2
    %s25 = sadd.s32 1, %s18
    %p26 = scmp.ge.s32.totalorder %s25, 2
    %s27 = scalar_select %p26, 0, %s25
    %s28 = sadd.s32 1, %s17
    %s29 = scalar_select %p26, %s28, %s17
    %p30 = scmp.ge.s32.totalorder %s29, 1
    %s31 = scalar_select %p30, 0, %s29
    %s32 = sadd.s32 1, %s16
    %s33 = scalar_select %p30, %s32, %s16
    %p34 = scmp.ge.s32.totalorder %s33, 1
    %s35 = scalar_select %p34, 0, %s33
    %s36 = ssub.s32 %s16, %s35
    %s37 = ssub.s32 %s18, %s27
    %s38 = sor.u32 %s36, %s37
    %p39 = scmp.eq.s32.totalorder %s38, 0
    %s41 = sadd.s32 %s40, 1
    %s42 = scalar_select %p39, %s40, %s41
    %p45 = pneg %p39
    %p46 = scmp.eq.s32.totalorder %s9, 1
    %p47 = por %p45, %p46
    %p48 = scmp.ne.s32.totalorder %s40, %s43
    %p49 = scmp.eq.s32.totalorder %s9, 0
    %p50 = por %p48, %p49
    %p51 = scmp.ne.s32.totalorder %s40, %s43
    %p52 = scmp.eq.s32.totalorder %s14, 1
    %p53 = por %p51, %p52
    %p54 = scmp.ne.s32.totalorder %s43, %s44
    %p55 = scmp.eq.s32.totalorder %s14, 0
    %p56 = por %p54, %p55
    %p57 = scmp.ne.s32.totalorder %s43, %s44
    %p58 = scmp.eq.s32.totalorder %s15, 1
    %p59 = por %p57, %p58
    %p61 = scmp.ne.s32.totalorder %s44, %s60
    %p62 = scmp.eq.s32.totalorder %s15, 0
    %p63 = por %p61, %p62
    %s64 = ssub.s32 %s18, %s27
    %s65 = ssub.s32 %s17, %s31
    %s66 = sor.u32 %s64, %s65
    %p67 = scmp.eq.s32.totalorder %s66, 0
    %s69 = sadd.s32 %s68, 1
    %s70 = scalar_select %p67, %s68, %s69
    %p73 = pneg %p67
    %p74 = scmp.eq.s32.totalorder %s9, 1
    %p75 = por %p73, %p74
    %p76 = scmp.ne.s32.totalorder %s68, %s71
    %p77 = scmp.eq.s32.totalorder %s9, 0
    %p78 = por %p76, %p77
    %p79 = scmp.ne.s32.totalorder %s68, %s71
    %p80 = scmp.eq.s32.totalorder %s14, 1
    %p81 = por %p79, %p80
    %p82 = scmp.ne.s32.totalorder %s71, %s72
    %p83 = scmp.eq.s32.totalorder %s14, 0
    %p84 = por %p82, %p83
    %p85 = scmp.ne.s32.totalorder %s71, %s72
    %p86 = scmp.eq.s32.totalorder %s15, 1
    %p87 = por %p85, %p86
    %p89 = scmp.ne.s32.totalorder %s72, %s88
    %p90 = scmp.eq.s32.totalorder %s15, 0
    %p91 = por %p89, %p90
    %s92 = ssub.s32 %s17, %s31
    %p93 = scmp.eq.s32.totalorder %s92, 0
    %s95 = sadd.s32 %s94, 1
    %s96 = scalar_select %p93, %s94, %s95
    %p99 = pneg %p93
    %p100 = scmp.eq.s32.totalorder %s9, 1
    %p101 = por %p99, %p100
    %p102 = scmp.ne.s32.totalorder %s94, %s97
    %p103 = scmp.eq.s32.totalorder %s9, 0
    %p104 = por %p102, %p103
    %p105 = scmp.ne.s32.totalorder %s94, %s97
    %p106 = scmp.eq.s32.totalorder %s14, 1
    %p107 = por %p105, %p106
    %p108 = scmp.ne.s32.totalorder %s97, %s98
    %p109 = scmp.eq.s32.totalorder %s14, 0
    %p110 = por %p108, %p109
    %p111 = scmp.ne.s32.totalorder %s97, %s98
    %p112 = scmp.eq.s32.totalorder %s15, 1
    %p113 = por %p111, %p112
    %p115 = scmp.ne.s32.totalorder %s98, %s114
    %p116 = scmp.eq.s32.totalorder %s15, 0
    %p117 = por %p115, %p116
    %s118 = ssub.s32 %s16, %s35
    %s119 = ssub.s32 %s17, %s31
    %s120 = sor.u32 %s118, %s119
    %p121 = scmp.eq.s32.totalorder %s120, 0
    %s123 = sadd.s32 %s122, 1
    %s124 = scalar_select %p121, %s122, %s123
    %p127 = pneg %p121
    %p128 = scmp.eq.s32.totalorder %s9, 1
    %p129 = por %p127, %p128
    %p130 = scmp.ne.s32.totalorder %s122, %s125
    %p131 = scmp.eq.s32.totalorder %s9, 0
    %p132 = por %p130, %p131
    %p133 = scmp.ne.s32.totalorder %s122, %s125
    %p134 = scmp.eq.s32.totalorder %s14, 1
    %p135 = por %p133, %p134
    %p136 = scmp.ne.s32.totalorder %s125, %s126
    %p137 = scmp.eq.s32.totalorder %s14, 0
    %p138 = por %p136, %p137
    %p139 = scmp.ne.s32.totalorder %s125, %s126
    %p140 = scmp.eq.s32.totalorder %s15, 1
    %p141 = por %p139, %p140
    %p143 = scmp.ne.s32.totalorder %s126, %s142
    %p144 = scmp.eq.s32.totalorder %s15, 0
    %p145 = por %p143, %p144
    %p146 = scmp.le.s32.totalorder 1, %s9
    %p147 = scmp.lt.s32.totalorder %s9, 3
    %p148 = pnand %p146, %p147
    %p149 = pneg %p148
    // Predicated region
    $region9: #{_lambda_.46} parent=5 // pred_check
      _
    $region10: #{_lambda_.46} parent=5 // pred_check_branch
      %151 = sbr.rel (%p148) target = $region12
    $region11: #{_lambda_.46} parent=5 // pred_region
      %s152 = ssub.s32 %s9, 1
      // Predicated region
      $region13: #{_lambda_.46} parent=11 // pred_check
        %p153 = pneg %p110
      $region14: #{_lambda_.46} parent=11 // pred_check_branch
        %155 = sbr.rel (%p153) target = $region16
      $region15: #{_lambda_.46} parent=11 // pred_region
        %p156 = scmp.lt.s32.totalorder %s20, 0
        %s157 = scalar_select %p156, %s20, 0
        %s158 = scalar_lea.vmem %s2, %s157
      $region16: #{_lambda_.46} parent=11 // pred_fallthru
        _
    $region12: #{_lambda_.46} parent=5 // pred_fallthru
      _
    %p159 = scmp.lt.s32.totalorder %s9, 2
    // Predicated region
    $region17: #{_lambda_.46} parent=5 // pred_check
      %p160 = pneg %p159
    $region18: #{_lambda_.46} parent=5 // pred_check_branch
      %162 = sbr.rel (%p160) target = $region20
    $region19: #{_lambda_.46} parent=5 // pred_region
      // Predicated region
      $region21: #{_lambda_.46} parent=19 // pred_check
        %p163 = pneg %p50
      $region22: #{_lambda_.46} parent=19 // pred_check_branch
        %165 = sbr.rel (%p163) target = $region24
      $region23: #{_lambda_.46} parent=19 // pred_region
        %s166 = smul.u32 2, %s18
        %p167 = scmp.lt.s32.totalorder %s16, 0
        %s168 = scalar_select %p167, %s16, 0
        %p169 = scmp.lt.s32.totalorder %s166, 3
        %s170 = scalar_select %p169, %s166, 3
        %s171 = smul.addr %s168, 4
        %s172 = sadd.s32 %s170, %s171
        %s173 = smul.addr %s172, 4
        %s174 = scalar_lea.vmem %s0, %s173
        %s175 = smul.u32 2, %s18
      $region24: #{_lambda_.46} parent=19 // pred_fallthru
        _
      // Predicated region
      $region25: #{_lambda_.46} parent=19 // pred_check
        %p176 = pneg %p78
      $region26: #{_lambda_.46} parent=19 // pred_check_branch
        %178 = sbr.rel (%p176) target = $region28
      $region27: #{_lambda_.46} parent=19 // pred_region
        %s179 = smul.u32 32, %s18
        %p180 = scmp.lt.s32.totalorder %s179, 63
        %s181 = scalar_select %p180, %s179, 63
        %p182 = scmp.lt.s32.totalorder %s17, 0
        %s183 = scalar_select %p182, %s17, 0
        %s184 = sadd.s32 %s183, %s181
        %s185 = smul.addr %s184, 4
        %s186 = scalar_lea.vmem %s1, %s185
        %s187 = smul.u32 32, %s18
      $region28: #{_lambda_.46} parent=19 // pred_fallthru
        _
    $region20: #{_lambda_.46} parent=5 // pred_fallthru
      _
    %p188 = scmp.le.s32.totalorder 1, %s9
    %p189 = scmp.lt.s32.totalorder %s9, 3
    %p190 = pnand %p188, %p189
    %p191 = pneg %p190
    // Predicated region
    $region29: #{_lambda_.46} parent=5 // pred_check
      _
    $region30: #{_lambda_.46} parent=5 // pred_check_branch
      %193 = sbr.rel (%p190) target = $region32
    $region31: #{_lambda_.46} parent=5 // pred_region
      %s194 = ssub.s32 %s9, 1
      %s195 = smul.u32 2, %s21
      %p196 = scmp.lt.s32.totalorder %s19, 0
      %s197 = scalar_select %p196, %s19, 0
      %p198 = scmp.lt.s32.totalorder %s195, 3
      %s199 = scalar_select %p198, %s195, 3
      %s200 = smul.addr %s197, 4
      %s201 = sadd.s32 %s199, %s200
      %s202 = smul.addr %s201, 4
      %s203 = scalar_lea.vmem %s0, %s202
      %p204 = pneg %p56
      %p205 = pneg %p53
      %s206 = smul.u32 32, %s21
      %p207 = scmp.lt.s32.totalorder %s206, 63
      %s208 = scalar_select %p207, %s206, 63
      %p209 = scmp.lt.s32.totalorder %s20, 0
      %s210 = scalar_select %p209, %s20, 0
      %s211 = sadd.s32 %s210, %s208
      %s212 = smul.addr %s211, 4
      %s213 = scalar_lea.vmem %s1, %s212
      %p214 = pneg %p84
      %p215 = pneg %p81
      %p216 = scmp.lt.s32.totalorder %s20, 0
      %s217 = scalar_select %p216, %s20, 0
      %s218 = scalar_lea.vmem %s2, %s217
      %p219 = pneg %p110
      %p220 = pneg %p107
      %p221 = pneg %p138
      %p222 = pneg %p135
      %p223 = scmp.lt.s32.totalorder %s19, 0
      %s224 = scalar_select %p223, %s19, 0
      %p225 = scmp.lt.s32.totalorder %s20, 0
      %s226 = scalar_select %p225, %s20, 0
      %s227 = sadd.s32 %s226, %s224
      %s228 = smul.addr %s227, 8
      %s229 = scalar_lea.vmem %s3, %s228
      %s230 = smul.u32 2, %s21
      %p231 = scmp.lt.s32.totalorder %s19, 0
      %s232 = scalar_select %p231, %s19, 0
      %p233 = scmp.lt.s32.totalorder %s230, 3
      %s234 = scalar_select %p233, %s230, 3
      %s235 = smul.addr %s232, 4
      %s236 = sadd.s32 %s234, %s235
      %s237 = smul.addr %s236, 4
      %s238 = scalar_lea.vmem %s0, %s237
      %s239 = smul.u32 2, %s21
      %s240 = smul.u32 32, %s21
      %p241 = scmp.lt.s32.totalorder %s240, 63
      %s242 = scalar_select %p241, %s240, 63
      %p243 = scmp.lt.s32.totalorder %s20, 0
      %s244 = scalar_select %p243, %s20, 0
      %s245 = sadd.s32 %s244, %s242
      %s246 = smul.addr %s245, 4
      %s247 = scalar_lea.vmem %s1, %s246
      %s248 = smul.u32 32, %s21
      %p249 = scmp.lt.s32.totalorder %s20, 0
      %s250 = scalar_select %p249, %s20, 0
      %s251 = scalar_lea.vmem %s2, %s250
      %p252 = scmp.lt.s32.totalorder %s19, 0
      %s253 = scalar_select %p252, %s19, 0
      %p254 = scmp.lt.s32.totalorder %s20, 0
      %s255 = scalar_select %p254, %s20, 0
      %s256 = sadd.s32 %s255, %s253
      %s257 = smul.addr %s256, 8
      %s258 = scalar_lea.vmem %s3, %s257
      %p261 = scmp.eq.s32.totalorder %s21, 0
      // Predicated region
      $region33: #{_lambda_.46} parent=31 // pred_check
        %p262 = pneg %p261
      $region34: #{_lambda_.46} parent=31 // pred_check_branch
        %264 = sbr.rel (%p262) target = $region36
      $region35: #{_lambda_.46} parent=31 // pred_region
        %265 = vst [vmem:[#allocation2] sm:$0xff] 0.0
      $region36: #{_lambda_.46} parent=31 // pred_fallthru
        _
      %v266 = vld [vmem:[%s238] sm:$0xff]
      %vm267 = vcmp.gt.bf16.partialorder %v266, 0
      %v268 = vmul.bf16 %v266, 1045249613
      %v269 = vsel %vm267, %v266, %v268
      %v270 = vld [vmem:[#allocation2] sm:$0xff]
      %v271 = vld [vmem:[%s247] sm:$0xf]
      %v272 = vld [vmem:[%s247 + $0x4] sm:$0xf]
      %v273 = vld [vmem:[%s247 + $0x8] sm:$0xf]
      %v274 = vld [vmem:[%s247 + $0xc] sm:$0xf]
      %v275 = vld [vmem:[%s247 + $0x10] sm:$0xf]
      %v276 = vld [vmem:[%s247 + $0x14] sm:$0xf]
      %v277 = vld [vmem:[%s247 + $0x18] sm:$0xf]
      %v278 = vld [vmem:[%s247 + $0x1c] sm:$0xf]
      %v279 = vld [vmem:[%s247 + $0x20] sm:$0xf]
      %v280 = vld [vmem:[%s247 + $0x24] sm:$0xf]
      %v281 = vld [vmem:[%s247 + $0x28] sm:$0xf]
      %v282 = vld [vmem:[%s247 + $0x2c] sm:$0xf]
      %v283 = vld [vmem:[%s247 + $0x30] sm:$0xf]
      %v284 = vld [vmem:[%s247 + $0x34] sm:$0xf]
      %v285 = vld [vmem:[%s247 + $0x38] sm:$0xf]
      %v286 = vld [vmem:[%s247 + $0x3c] sm:$0xf]
      %v287 = vld [vmem:[%s247 + $0x40] sm:$0xf]
      %v288 = vld [vmem:[%s247 + $0x44] sm:$0xf]
      %v289 = vld [vmem:[%s247 + $0x48] sm:$0xf]
      %v290 = vld [vmem:[%s247 + $0x4c] sm:$0xf]
      %v291 = vld [vmem:[%s247 + $0x50] sm:$0xf]
      %v292 = vld [vmem:[%s247 + $0x54] sm:$0xf]
      %v293 = vld [vmem:[%s247 + $0x58] sm:$0xf]
      %v294 = vld [vmem:[%s247 + $0x5c] sm:$0xf]
      %v295 = vld [vmem:[%s247 + $0x60] sm:$0xf]
      %v296 = vld [vmem:[%s247 + $0x64] sm:$0xf]
      %v297 = vld [vmem:[%s247 + $0x68] sm:$0xf]
      %v298 = vld [vmem:[%s247 + $0x6c] sm:$0xf]
      %v299 = vld [vmem:[%s247 + $0x70] sm:$0xf]
      %v300 = vld [vmem:[%s247 + $0x74] sm:$0xf]
      %v301 = vld [vmem:[%s247 + $0x78] sm:$0xf]
      %v302 = vld [vmem:[%s247 + $0x7c] sm:$0xf]
      %v304 = vunpack.c.l.b16 %v269
      %v305 = vunpack.c.h.b16 %v269
      %v306 = vpack.c.b16 %v304, %v304
      %v307 = vpack.c.b16 %v305, %v305
      %v342 = vunpack.c.l.b16 %v271
      %v343 = vunpack.c.l.b16 %v272
      %v344 = vunpack.c.l.b16 %v273
      %v345 = vunpack.c.l.b16 %v274
      %v346 = vunpack.c.l.b16 %v275
      %v347 = vunpack.c.l.b16 %v276
      %v348 = vunpack.c.l.b16 %v277
      %v349 = vunpack.c.l.b16 %v278
      %v350 = vunpack.c.l.b16 %v279
      %v351 = vunpack.c.l.b16 %v280
      %v352 = vunpack.c.l.b16 %v281
      %v353 = vunpack.c.l.b16 %v282
      %v354 = vunpack.c.l.b16 %v283
      %v355 = vunpack.c.l.b16 %v284
      %v356 = vunpack.c.l.b16 %v285
      %v357 = vunpack.c.l.b16 %v286
      %v358 = vunpack.c.l.b16 %v287
      %v359 = vunpack.c.l.b16 %v288
      %v360 = vunpack.c.l.b16 %v289
      %v361 = vunpack.c.l.b16 %v290
      %v362 = vunpack.c.l.b16 %v291
      %v363 = vunpack.c.l.b16 %v292
      %v364 = vunpack.c.l.b16 %v293
      %v365 = vunpack.c.l.b16 %v294
      %v366 = vunpack.c.l.b16 %v295
      %v367 = vunpack.c.l.b16 %v296
      %v368 = vunpack.c.l.b16 %v297
      %v369 = vunpack.c.l.b16 %v298
      %v370 = vunpack.c.l.b16 %v299
      %v371 = vunpack.c.l.b16 %v300
      %v372 = vunpack.c.l.b16 %v301
      %v373 = vunpack.c.l.b16 %v302
      %v374 = vpack.c.b16 %v343, %v342
      %v375 = vpack.c.b16 %v345, %v344
      %v376 = vpack.c.b16 %v347, %v346
      %v377 = vpack.c.b16 %v349, %v348
      %v378 = vpack.c.b16 %v351, %v350
      %v379 = vpack.c.b16 %v353, %v352
      %v380 = vpack.c.b16 %v355, %v354
      %v381 = vpack.c.b16 %v357, %v356
      %v382 = vpack.c.b16 %v359, %v358
      %v383 = vpack.c.b16 %v361, %v360
      %v384 = vpack.c.b16 %v363, %v362
      %v385 = vpack.c.b16 %v365, %v364
      %v386 = vpack.c.b16 %v367, %v366
      %v387 = vpack.c.b16 %v369, %v368
      %v388 = vpack.c.b16 %v371, %v370
      %v389 = vpack.c.b16 %v373, %v372
      %406 = vmatprep.subr.bf16.mxu0 0
      %407 = vmatpush1.bf16.msra.mxu0 %v381
      %408 = vmatprep.subr.bf16.mxu0 0
      %409 = vmatpush1.bf16.msra.mxu0 %v380
      %410 = vmatprep.subr.bf16.mxu0 0
      %411 = vmatpush1.bf16.msra.mxu0 %v379
      %412 = vmatprep.subr.bf16.mxu0 0
      %413 = vmatpush1.bf16.msra.mxu0 %v378
      %414 = vmatprep.subr.bf16.mxu0 0
      %415 = vmatpush1.bf16.msra.mxu0 %v377
      %416 = vmatprep.subr.bf16.mxu0 0
      %417 = vmatpush1.bf16.msra.mxu0 %v376
      %418 = vmatprep.subr.bf16.mxu0 0
      %419 = vmatpush1.bf16.msra.mxu0 %v375
      %420 = vmatprep.subr.bf16.mxu0 0
      %421 = vmatpush1.bf16.msra.mxu0 %v374
      %422 = vmatprep.subr.bf16.mxu0 0
      %423 = vmatpush2.bf16.msra.mxu0 %v389
      %424 = vmatprep.subr.bf16.mxu0 0
      %425 = vmatpush2.bf16.msra.mxu0 %v388
      %426 = vmatprep.subr.bf16.mxu0 0
      %427 = vmatpush2.bf16.msra.mxu0 %v387
      %428 = vmatprep.subr.bf16.mxu0 0
      %429 = vmatpush2.bf16.msra.mxu0 %v386
      %430 = vmatprep.subr.bf16.mxu0 0
      %431 = vmatpush2.bf16.msra.mxu0 %v385
      %432 = vmatprep.subr.bf16.mxu0 0
      %433 = vmatpush2.bf16.msra.mxu0 %v384
      %434 = vmatprep.subr.bf16.mxu0 0
      %435 = vmatpush2.bf16.msra.mxu0 %v383
      %436 = vmatprep.subr.bf16.mxu0 0
      %437 = vmatpush2.bf16.msra.mxu0 %v382
      %438 = vmatprep.mubr.bf16.mxu0 %v307
      %439 = vmatmul.mubr.bf16.gmra.mxu0 %v306
      %v440 = vpop.f32.mrf.mxu0
      %v441 = vadd.f32 0.0, %v440
      %v442 = vpop.f32.mrf.mxu0
      %v443 = vpop.f32.mrf.mxu0
      %v444 = vpop.f32.mrf.mxu0
      %445 = vdwg.mxu0
      %v446 = vadd.f32 %v270, %v441
      %447 = vst [vmem:[#allocation2] sm:$0xff] %v446
      %p448 = scmp.eq.s32.totalorder %s21, 1
      // Predicated region
      $region37: #{_lambda_.46} parent=31 // pred_check
        %p449 = pneg %p448
      $region38: #{_lambda_.46} parent=31 // pred_check_branch
        %451 = sbr.rel (%p449) target = $region40
      $region39: #{_lambda_.46} parent=31 // pred_region
        %v452 = vld [vmem:[#allocation2] sm:$0xff]
        %v453 = vld [vmem:[%s251] sm:$0x1]
        %v455 = vlaneseq
        %v456 = vshrl.u32 %v455, 7
        %v457 = vsub.s32 0, %v456
        %v458 = vrot.slane %v453, %v457
        %v460 = vadd.f32 %v452, %v458
        %461 = vst [vmem:[%s258] sm:$0xff] %v460
      $region40: #{_lambda_.46} parent=31 // pred_fallthru
        _
      %p462 = scmp.lt.s32.totalorder %s19, 0
      %s463 = scalar_select %p462, %s19, 0
      %p464 = scmp.lt.s32.totalorder %s20, 0
      %s465 = scalar_select %p464, %s20, 0
      %s466 = sadd.s32 %s465, %s463
      %s467 = smul.addr %s466, 8
      %s468 = scalar_lea.vmem %s3, %s467
      // Predicated region
      $region41: #{_lambda_.46} parent=31 // pred_check
        %p469 = pneg %p135
      $region42: #{_lambda_.46} parent=31 // pred_check_branch
        %471 = sbr.rel (%p469) target = $region44
      $region43: #{_lambda_.46} parent=31 // pred_region
        _
      $region44: #{_lambda_.46} parent=31 // pred_fallthru
        _
      // Predicated region
      $region45: #{_lambda_.46} parent=31 // pred_check
        %p472 = pneg %p135
      $region46: #{_lambda_.46} parent=31 // pred_check_branch
        %474 = sbr.rel (%p472) target = $region48
      $region47: #{_lambda_.46} parent=31 // pred_region
        %p475 = scmp.lt.s32.totalorder %s19, 0
        %s476 = scalar_select %p475, %s19, 0
        %p477 = scmp.lt.s32.totalorder %s20, 0
        %s478 = scalar_select %p477, %s20, 0
        %s479 = sadd.s32 %s478, %s476
        %s480 = smul.addr %s479, 8
        %s481 = scalar_lea.vmem %s3, %s480
      $region48: #{_lambda_.46} parent=31 // pred_fallthru
        _
    $region32: #{_lambda_.46} parent=5 // pred_fallthru
      _
    %p482 = scmp.le.s32.totalorder 2, %s9
    // Predicated region
    $region49: #{_lambda_.46} parent=5 // pred_check
      %p483 = pneg %p482
    $region50: #{_lambda_.46} parent=5 // pred_check_branch
      %485 = sbr.rel (%p483) target = $region52
    $region51: #{_lambda_.46} parent=5 // pred_region
      %s486 = ssub.s32 %s9, 2
    $region52: #{_lambda_.46} parent=5 // pred_fallthru
      _
  $region6: #{_lambda_.46} parent=0 // loop_footer
    %s13 = sadd.s32 1, %s9
  $region7: #{_lambda_.46} parent=0 // loop_footer_branch
    %8 = sbr.rel target = $region3
  $region8: #{_lambda_.46} parent=0 // loop_exit
    _

// kernel: _lambda_.51
$region0: #{_lambda_.51}
  #allocation0 [shape = 'u32[]', space=smem, size = 0x4, offset = 0x4, fixed_abs, tag = 'smem constant byte address 0x4 - core index']
  #allocation1 [shape = 'u32[144,128]{1,0:T(1,128)}', space=vmem, size = 0x12000, scoped, tag = 'internal scratch']
  #allocation2 [shape = 'f32[8,128]{1,0:T(8,128)}', space=vmem, size = 0x1000, scoped, tag = 'scratch operand']
  %s0 = inlined_call_operand.vmem [shape: bf16[8,256], index: 0, kind: input, shape index: {}]
  %s1 = inlined_call_operand.vmem [shape: bf16[256,128], index: 1, kind: input, shape index: {}]
  %s2 = inlined_call_operand.vmem [shape: f32[1,128], index: 2, kind: input, shape index: {}]
  %s3 = inlined_call_operand.vmem [shape: f32[8,128], index: 3, kind: output, shape index: {}]
  %s4 = sld [smem:[#allocation0]]
  $region30: #{_lambda_.51} parent=0
    _
  %s6 = ssub.s32 1, %s4
  %s7 = scalar_select 0, %s6, %s4
  // Predicated region
  $region2: #{_lambda_.51} parent=0 // pred_check
    _
  $region3: #{_lambda_.51} parent=0 // pred_check_branch
    %9 = sbr.rel (0) target = $region5
  $region4: #{_lambda_.51} parent=0 // pred_region
    _
  $region5: #{_lambda_.51} parent=0 // pred_fallthru
    _
  // Predicated region
  $region6: #{_lambda_.51} parent=0 // pred_check
    _
  $region7: #{_lambda_.51} parent=0 // pred_check_branch
    %11 = sbr.rel (0) target = $region9
  $region8: #{_lambda_.51} parent=0 // pred_region
    _
  $region9: #{_lambda_.51} parent=0 // pred_fallthru
    _
  // Predicated region
  $region10: #{_lambda_.51} parent=0 // pred_check
    _
  $region11: #{_lambda_.51} parent=0 // pred_check_branch
    %13 = sbr.rel (0) target = $region13
  $region12: #{_lambda_.51} parent=0 // pred_region
    _
  $region13: #{_lambda_.51} parent=0 // pred_fallthru
    _
  %p15 = scmp.eq.s32.totalorder 0, 0
  // Predicated region
  $region14: #{_lambda_.51} parent=0 // pred_check
    %p16 = pneg %p15
  $region15: #{_lambda_.51} parent=0 // pred_check_branch
    %18 = sbr.rel (%p16) target = $region17
  $region16: #{_lambda_.51} parent=0 // pred_region
    %19 = vst [vmem:[#allocation2] sm:$0xff] 0.0
  $region17: #{_lambda_.51} parent=0 // pred_fallthru
    _
  %v20 = vld [vmem:[%s0] sm:$0xff]
  %v21 = vmax.bf16 %v20, 0
  %v22 = vld [vmem:[#allocation2] sm:$0xff]
  %v23 = vld [vmem:[%s1] sm:$0xf]
  %v24 = vld [vmem:[%s1 + $0x4] sm:$0xf]
  %v25 = vld [vmem:[%s1 + $0x8] sm:$0xf]
  %v26 = vld [vmem:[%s1 + $0xc] sm:$0xf]
  %v27 = vld [vmem:[%s1 + $0x10] sm:$0xf]
  %v28 = vld [vmem:[%s1 + $0x14] sm:$0xf]
  %v29 = vld [vmem:[%s1 + $0x18] sm:$0xf]
  %v30 = vld [vmem:[%s1 + $0x1c] sm:$0xf]
  %v31 = vld [vmem:[%s1 + $0x20] sm:$0xf]
  %v32 = vld [vmem:[%s1 + $0x24] sm:$0xf]
  %v33 = vld [vmem:[%s1 + $0x28] sm:$0xf]
  %v34 = vld [vmem:[%s1 + $0x2c] sm:$0xf]
  %v35 = vld [vmem:[%s1 + $0x30] sm:$0xf]
  %v36 = vld [vmem:[%s1 + $0x34] sm:$0xf]
  %v37 = vld [vmem:[%s1 + $0x38] sm:$0xf]
  %v38 = vld [vmem:[%s1 + $0x3c] sm:$0xf]
  %v39 = vld [vmem:[%s1 + $0x40] sm:$0xf]
  %v40 = vld [vmem:[%s1 + $0x44] sm:$0xf]
  %v41 = vld [vmem:[%s1 + $0x48] sm:$0xf]
  %v42 = vld [vmem:[%s1 + $0x4c] sm:$0xf]
  %v43 = vld [vmem:[%s1 + $0x50] sm:$0xf]
  %v44 = vld [vmem:[%s1 + $0x54] sm:$0xf]
  %v45 = vld [vmem:[%s1 + $0x58] sm:$0xf]
  %v46 = vld [vmem:[%s1 + $0x5c] sm:$0xf]
  %v47 = vld [vmem:[%s1 + $0x60] sm:$0xf]
  %v48 = vld [vmem:[%s1 + $0x64] sm:$0xf]
  %v49 = vld [vmem:[%s1 + $0x68] sm:$0xf]
  %v50 = vld [vmem:[%s1 + $0x6c] sm:$0xf]
  %v51 = vld [vmem:[%s1 + $0x70] sm:$0xf]
  %v52 = vld [vmem:[%s1 + $0x74] sm:$0xf]
  %v53 = vld [vmem:[%s1 + $0x78] sm:$0xf]
  %v54 = vld [vmem:[%s1 + $0x7c] sm:$0xf]
  %v56 = vunpack.c.l.b16 %v21
  %v57 = vunpack.c.h.b16 %v21
  %v58 = vpack.c.b16 %v56, %v56
  %v59 = vpack.c.b16 %v57, %v57
  %v94 = vunpack.c.l.b16 %v23
  %v95 = vunpack.c.l.b16 %v24
  %v96 = vunpack.c.l.b16 %v25
  %v97 = vunpack.c.l.b16 %v26
  %v98 = vunpack.c.l.b16 %v27
  %v99 = vunpack.c.l.b16 %v28
  %v100 = vunpack.c.l.b16 %v29
  %v101 = vunpack.c.l.b16 %v30
  %v102 = vunpack.c.l.b16 %v31
  %v103 = vunpack.c.l.b16 %v32
  %v104 = vunpack.c.l.b16 %v33
  %v105 = vunpack.c.l.b16 %v34
  %v106 = vunpack.c.l.b16 %v35
  %v107 = vunpack.c.l.b16 %v36
  %v108 = vunpack.c.l.b16 %v37
  %v109 = vunpack.c.l.b16 %v38
  %v110 = vunpack.c.l.b16 %v39
  %v111 = vunpack.c.l.b16 %v40
  %v112 = vunpack.c.l.b16 %v41
  %v113 = vunpack.c.l.b16 %v42
  %v114 = vunpack.c.l.b16 %v43
  %v115 = vunpack.c.l.b16 %v44
  %v116 = vunpack.c.l.b16 %v45
  %v117 = vunpack.c.l.b16 %v46
  %v118 = vunpack.c.l.b16 %v47
  %v119 = vunpack.c.l.b16 %v48
  %v120 = vunpack.c.l.b16 %v49
  %v121 = vunpack.c.l.b16 %v50
  %v122 = vunpack.c.l.b16 %v51
  %v123 = vunpack.c.l.b16 %v52
  %v124 = vunpack.c.l.b16 %v53
  %v125 = vunpack.c.l.b16 %v54
  %v126 = vpack.c.b16 %v95, %v94
  %v127 = vpack.c.b16 %v97, %v96
  %v128 = vpack.c.b16 %v99, %v98
  %v129 = vpack.c.b16 %v101, %v100
  %v130 = vpack.c.b16 %v103, %v102
  %v131 = vpack.c.b16 %v105, %v104
  %v132 = vpack.c.b16 %v107, %v106
  %v133 = vpack.c.b16 %v109, %v108
  %v134 = vpack.c.b16 %v111, %v110
  %v135 = vpack.c.b16 %v113, %v112
  %v136 = vpack.c.b16 %v115, %v114
  %v137 = vpack.c.b16 %v117, %v116
  %v138 = vpack.c.b16 %v119, %v118
  %v139 = vpack.c.b16 %v121, %v120
  %v140 = vpack.c.b16 %v123, %v122
  %v141 = vpack.c.b16 %v125, %v124
  %158 = vmatprep.subr.bf16.mxu0 0
  %159 = vmatpush1.bf16.msra.mxu0 %v133
  %160 = vmatprep.subr.bf16.mxu0 0
  %161 = vmatpush1.bf16.msra.mxu0 %v132
  %162 = vmatprep.subr.bf16.mxu0 0
  %163 = vmatpush1.bf16.msra.mxu0 %v131
  %164 = vmatprep.subr.bf16.mxu0 0
  %165 = vmatpush1.bf16.msra.mxu0 %v130
  %166 = vmatprep.subr.bf16.mxu0 0
  %167 = vmatpush1.bf16.msra.mxu0 %v129
  %168 = vmatprep.subr.bf16.mxu0 0
  %169 = vmatpush1.bf16.msra.mxu0 %v128
  %170 = vmatprep.subr.bf16.mxu0 0
  %171 = vmatpush1.bf16.msra.mxu0 %v127
  %172 = vmatprep.subr.bf16.mxu0 0
  %173 = vmatpush1.bf16.msra.mxu0 %v126
  %174 = vmatprep.subr.bf16.mxu0 0
  %175 = vmatpush2.bf16.msra.mxu0 %v141
  %176 = vmatprep.subr.bf16.mxu0 0
  %177 = vmatpush2.bf16.msra.mxu0 %v140
  %178 = vmatprep.subr.bf16.mxu0 0
  %179 = vmatpush2.bf16.msra.mxu0 %v139
  %180 = vmatprep.subr.bf16.mxu0 0
  %181 = vmatpush2.bf16.msra.mxu0 %v138
  %182 = vmatprep.subr.bf16.mxu0 0
  %183 = vmatpush2.bf16.msra.mxu0 %v137
  %184 = vmatprep.subr.bf16.mxu0 0
  %185 = vmatpush2.bf16.msra.mxu0 %v136
  %186 = vmatprep.subr.bf16.mxu0 0
  %187 = vmatpush2.bf16.msra.mxu0 %v135
  %188 = vmatprep.subr.bf16.mxu0 0
  %189 = vmatpush2.bf16.msra.mxu0 %v134
  %190 = vmatprep.mubr.bf16.mxu0 %v59
  %191 = vmatmul.mubr.bf16.gmra.mxu0 %v58
  %v192 = vpop.f32.mrf.mxu0
  %v193 = vadd.f32 0.0, %v192
  %v194 = vpop.f32.mrf.mxu0
  %v195 = vpop.f32.mrf.mxu0
  %v196 = vpop.f32.mrf.mxu0
  %197 = vdwg.mxu0
  %v198 = vadd.f32 %v22, %v193
  %199 = vst [vmem:[#allocation2] sm:$0xff] %v198
  // Predicated region
  $region18: #{_lambda_.51} parent=0 // pred_check
    %p200 = pneg %p15
  $region19: #{_lambda_.51} parent=0 // pred_check_branch
    %202 = sbr.rel (%p200) target = $region21
  $region20: #{_lambda_.51} parent=0 // pred_region
    %v203 = vld [vmem:[#allocation2] sm:$0xff]
    %v204 = vld [vmem:[%s2] sm:$0x1]
    %v206 = vlaneseq
    %v207 = vshrl.u32 %v206, 7
    %v208 = vsub.s32 0, %v207
    %v209 = vrot.slane %v204, %v208
    %v211 = vadd.f32 %v203, %v209
    %212 = vst [vmem:[%s3] sm:$0xff] %v211
  $region21: #{_lambda_.51} parent=0 // pred_fallthru
    _
  // Predicated region
  $region22: #{_lambda_.51} parent=0 // pred_check
    _
  $region23: #{_lambda_.51} parent=0 // pred_check_branch
    %214 = sbr.rel (0) target = $region25
  $region24: #{_lambda_.51} parent=0 // pred_region
    _
  $region25: #{_lambda_.51} parent=0 // pred_fallthru
    _
  // Predicated region
  $region26: #{_lambda_.51} parent=0 // pred_check
    _
  $region27: #{_lambda_.51} parent=0 // pred_check_branch
    %216 = sbr.rel (0) target = $region29
  $region28: #{_lambda_.51} parent=0 // pred_region
    _
  $region29: #{_lambda_.51} parent=0 // pred_fallthru
    _

// kernel: _lambda_.49
$region0: #{_lambda_.49}
  #allocation0 [shape = 'u32[]', space=smem, size = 0x4, offset = 0x4, fixed_abs, tag = 'smem constant byte address 0x4 - core index']
  #allocation1 [shape = 'u32[144,128]{1,0:T(1,128)}', space=vmem, size = 0x12000, scoped, tag = 'internal scratch']
  #allocation2 [shape = 'f32[8,128]{1,0:T(8,128)}', space=vmem, size = 0x1000, scoped, tag = 'scratch operand']
  %s0 = inlined_call_operand.vmem [shape: bf16[8,1024], index: 0, kind: input, shape index: {}]
  %s1 = inlined_call_operand.vmem [shape: bf16[1024,128], index: 1, kind: input, shape index: {}]
  %s2 = inlined_call_operand.vmem [shape: f32[1,128], index: 2, kind: input, shape index: {}]
  %s3 = inlined_call_operand.vmem [shape: f32[8,128], index: 3, kind: output, shape index: {}]
  %s4 = sld [smem:[#allocation0]]
  $region53: #{_lambda_.49} parent=0
    _
  %s6 = ssub.s32 1, %s4
  %s7 = scalar_select 0, %s6, %s4
  loop: start=0, step=1, limit=6
  $region2: #{_lambda_.49} parent=0 // loop_pre_header
    _
  $region3: #{_lambda_.49} parent=0 // loop_header
    %s9 = sphi 0, %s13
    %p10 = scmp.ge.s32.totalorder %s9, 6
    %s16 = sphi 0, %s35
    %s17 = sphi 0, %s31
    %s18 = sphi 0, %s27
    %s19 = sphi 0, %s16
    %s20 = sphi 0, %s17
    %s21 = sphi 0, %s18
    %s22 = sphi 0, %s19
    %s23 = sphi 0, %s20
    %s24 = sphi 0, %s21
    %s40 = sphi 0, %s42
    %s43 = sphi 0, %s40
    %s44 = sphi 0, %s43
    %s60 = sphi 0, %s44
    %s68 = sphi 0, %s70
    %s71 = sphi 0, %s68
    %s72 = sphi 0, %s71
    %s88 = sphi 0, %s72
    %s94 = sphi 0, %s96
    %s97 = sphi 0, %s94
    %s98 = sphi 0, %s97
    %s114 = sphi 0, %s98
    %s122 = sphi 0, %s124
    %s125 = sphi 0, %s122
    %s126 = sphi 0, %s125
    %s142 = sphi 0, %s126
  $region4: #{_lambda_.49} parent=0 // loop_header_branch
    %12 = sbr.rel (%p10) target = $region8
  $region5: #{_lambda_.49} parent=0 // loop_body
    %s14 = ssub.s32 %s9, 1
    %s15 = ssub.s32 %s9, 2
    %s25 = sadd.s32 1, %s18
    %p26 = scmp.ge.s32.totalorder %s25, 4
    %s27 = scalar_select %p26, 0, %s25
    %s28 = sadd.s32 1, %s17
    %s29 = scalar_select %p26, %s28, %s17
    %p30 = scmp.ge.s32.totalorder %s29, 1
    %s31 = scalar_select %p30, 0, %s29
    %s32 = sadd.s32 1, %s16
    %s33 = scalar_select %p30, %s32, %s16
    %p34 = scmp.ge.s32.totalorder %s33, 1
    %s35 = scalar_select %p34, 0, %s33
    %s36 = ssub.s32 %s16, %s35
    %s37 = ssub.s32 %s18, %s27
    %s38 = sor.u32 %s36, %s37
    %p39 = scmp.eq.s32.totalorder %s38, 0
    %s41 = sadd.s32 %s40, 1
    %s42 = scalar_select %p39, %s40, %s41
    %p45 = pneg %p39
    %p46 = scmp.eq.s32.totalorder %s9, 3
    %p47 = por %p45, %p46
    %p48 = scmp.ne.s32.totalorder %s40, %s43
    %p49 = scmp.eq.s32.totalorder %s9, 0
    %p50 = por %p48, %p49
    %p51 = scmp.ne.s32.totalorder %s40, %s43
    %p52 = scmp.eq.s32.totalorder %s14, 3
    %p53 = por %p51, %p52
    %p54 = scmp.ne.s32.totalorder %s43, %s44
    %p55 = scmp.eq.s32.totalorder %s14, 0
    %p56 = por %p54, %p55
    %p57 = scmp.ne.s32.totalorder %s43, %s44
    %p58 = scmp.eq.s32.totalorder %s15, 3
    %p59 = por %p57, %p58
    %p61 = scmp.ne.s32.totalorder %s44, %s60
    %p62 = scmp.eq.s32.totalorder %s15, 0
    %p63 = por %p61, %p62
    %s64 = ssub.s32 %s18, %s27
    %s65 = ssub.s32 %s17, %s31
    %s66 = sor.u32 %s64, %s65
    %p67 = scmp.eq.s32.totalorder %s66, 0
    %s69 = sadd.s32 %s68, 1
    %s70 = scalar_select %p67, %s68, %s69
    %p73 = pneg %p67
    %p74 = scmp.eq.s32.totalorder %s9, 3
    %p75 = por %p73, %p74
    %p76 = scmp.ne.s32.totalorder %s68, %s71
    %p77 = scmp.eq.s32.totalorder %s9, 0
    %p78 = por %p76, %p77
    %p79 = scmp.ne.s32.totalorder %s68, %s71
    %p80 = scmp.eq.s32.totalorder %s14, 3
    %p81 = por %p79, %p80
    %p82 = scmp.ne.s32.totalorder %s71, %s72
    %p83 = scmp.eq.s32.totalorder %s14, 0
    %p84 = por %p82, %p83
    %p85 = scmp.ne.s32.totalorder %s71, %s72
    %p86 = scmp.eq.s32.totalorder %s15, 3
    %p87 = por %p85, %p86
    %p89 = scmp.ne.s32.totalorder %s72, %s88
    %p90 = scmp.eq.s32.totalorder %s15, 0
    %p91 = por %p89, %p90
    %s92 = ssub.s32 %s17, %s31
    %p93 = scmp.eq.s32.totalorder %s92, 0
    %s95 = sadd.s32 %s94, 1
    %s96 = scalar_select %p93, %s94, %s95
    %p99 = pneg %p93
    %p100 = scmp.eq.s32.totalorder %s9, 3
    %p101 = por %p99, %p100
    %p102 = scmp.ne.s32.totalorder %s94, %s97
    %p103 = scmp.eq.s32.totalorder %s9, 0
    %p104 = por %p102, %p103
    %p105 = scmp.ne.s32.totalorder %s94, %s97
    %p106 = scmp.eq.s32.totalorder %s14, 3
    %p107 = por %p105, %p106
    %p108 = scmp.ne.s32.totalorder %s97, %s98
    %p109 = scmp.eq.s32.totalorder %s14, 0
    %p110 = por %p108, %p109
    %p111 = scmp.ne.s32.totalorder %s97, %s98
    %p112 = scmp.eq.s32.totalorder %s15, 3
    %p113 = por %p111, %p112
    %p115 = scmp.ne.s32.totalorder %s98, %s114
    %p116 = scmp.eq.s32.totalorder %s15, 0
    %p117 = por %p115, %p116
    %s118 = ssub.s32 %s16, %s35
    %s119 = ssub.s32 %s17, %s31
    %s120 = sor.u32 %s118, %s119
    %p121 = scmp.eq.s32.totalorder %s120, 0
    %s123 = sadd.s32 %s122, 1
    %s124 = scalar_select %p121, %s122, %s123
    %p127 = pneg %p121
    %p128 = scmp.eq.s32.totalorder %s9, 3
    %p129 = por %p127, %p128
    %p130 = scmp.ne.s32.totalorder %s122, %s125
    %p131 = scmp.eq.s32.totalorder %s9, 0
    %p132 = por %p130, %p131
    %p133 = scmp.ne.s32.totalorder %s122, %s125
    %p134 = scmp.eq.s32.totalorder %s14, 3
    %p135 = por %p133, %p134
    %p136 = scmp.ne.s32.totalorder %s125, %s126
    %p137 = scmp.eq.s32.totalorder %s14, 0
    %p138 = por %p136, %p137
    %p139 = scmp.ne.s32.totalorder %s125, %s126
    %p140 = scmp.eq.s32.totalorder %s15, 3
    %p141 = por %p139, %p140
    %p143 = scmp.ne.s32.totalorder %s126, %s142
    %p144 = scmp.eq.s32.totalorder %s15, 0
    %p145 = por %p143, %p144
    %p146 = scmp.le.s32.totalorder 1, %s9
    %p147 = scmp.lt.s32.totalorder %s9, 5
    %p148 = pnand %p146, %p147
    %p149 = pneg %p148
    // Predicated region
    $region9: #{_lambda_.49} parent=5 // pred_check
      _
    $region10: #{_lambda_.49} parent=5 // pred_check_branch
      %151 = sbr.rel (%p148) target = $region12
    $region11: #{_lambda_.49} parent=5 // pred_region
      %s152 = ssub.s32 %s9, 1
      // Predicated region
      $region13: #{_lambda_.49} parent=11 // pred_check
        %p153 = pneg %p110
      $region14: #{_lambda_.49} parent=11 // pred_check_branch
        %155 = sbr.rel (%p153) target = $region16
      $region15: #{_lambda_.49} parent=11 // pred_region
        %p156 = scmp.lt.s32.totalorder %s20, 0
        %s157 = scalar_select %p156, %s20, 0
        %s158 = scalar_lea.vmem %s2, %s157
      $region16: #{_lambda_.49} parent=11 // pred_fallthru
        _
    $region12: #{_lambda_.49} parent=5 // pred_fallthru
      _
    %p159 = scmp.lt.s32.totalorder %s9, 4
    // Predicated region
    $region17: #{_lambda_.49} parent=5 // pred_check
      %p160 = pneg %p159
    $region18: #{_lambda_.49} parent=5 // pred_check_branch
      %162 = sbr.rel (%p160) target = $region20
    $region19: #{_lambda_.49} parent=5 // pred_region
      // Predicated region
      $region21: #{_lambda_.49} parent=19 // pred_check
        %p163 = pneg %p50
      $region22: #{_lambda_.49} parent=19 // pred_check_branch
        %165 = sbr.rel (%p163) target = $region24
      $region23: #{_lambda_.49} parent=19 // pred_region
        %s166 = smul.u32 2, %s18
        %p167 = scmp.lt.s32.totalorder %s16, 0
        %s168 = scalar_select %p167, %s16, 0
        %p169 = scmp.lt.s32.totalorder %s166, 7
        %s170 = scalar_select %p169, %s166, 7
        %s171 = smul.addr %s168, 8
        %s172 = sadd.s32 %s170, %s171
        %s173 = smul.addr %s172, 4
        %s174 = scalar_lea.vmem %s0, %s173
        %s175 = smul.u32 2, %s18
      $region24: #{_lambda_.49} parent=19 // pred_fallthru
        _
      // Predicated region
      $region25: #{_lambda_.49} parent=19 // pred_check
        %p176 = pneg %p78
      $region26: #{_lambda_.49} parent=19 // pred_check_branch
        %178 = sbr.rel (%p176) target = $region28
      $region27: #{_lambda_.49} parent=19 // pred_region
        %s179 = smul.u32 32, %s18
        %p180 = scmp.lt.s32.totalorder %s179, 127
        %s181 = scalar_select %p180, %s179, 127
        %p182 = scmp.lt.s32.totalorder %s17, 0
        %s183 = scalar_select %p182, %s17, 0
        %s184 = sadd.s32 %s183, %s181
        %s185 = smul.addr %s184, 4
        %s186 = scalar_lea.vmem %s1, %s185
        %s187 = smul.u32 32, %s18
      $region28: #{_lambda_.49} parent=19 // pred_fallthru
        _
    $region20: #{_lambda_.49} parent=5 // pred_fallthru
      _
    %p188 = scmp.le.s32.totalorder 1, %s9
    %p189 = scmp.lt.s32.totalorder %s9, 5
    %p190 = pnand %p188, %p189
    %p191 = pneg %p190
    // Predicated region
    $region29: #{_lambda_.49} parent=5 // pred_check
      _
    $region30: #{_lambda_.49} parent=5 // pred_check_branch
      %193 = sbr.rel (%p190) target = $region32
    $region31: #{_lambda_.49} parent=5 // pred_region
      %s194 = ssub.s32 %s9, 1
      %s195 = smul.u32 2, %s21
      %p196 = scmp.lt.s32.totalorder %s19, 0
      %s197 = scalar_select %p196, %s19, 0
      %p198 = scmp.lt.s32.totalorder %s195, 7
      %s199 = scalar_select %p198, %s195, 7
      %s200 = smul.addr %s197, 8
      %s201 = sadd.s32 %s199, %s200
      %s202 = smul.addr %s201, 4
      %s203 = scalar_lea.vmem %s0, %s202
      %p204 = pneg %p56
      %p205 = pneg %p53
      %s206 = smul.u32 32, %s21
      %p207 = scmp.lt.s32.totalorder %s206, 127
      %s208 = scalar_select %p207, %s206, 127
      %p209 = scmp.lt.s32.totalorder %s20, 0
      %s210 = scalar_select %p209, %s20, 0
      %s211 = sadd.s32 %s210, %s208
      %s212 = smul.addr %s211, 4
      %s213 = scalar_lea.vmem %s1, %s212
      %p214 = pneg %p84
      %p215 = pneg %p81
      %p216 = scmp.lt.s32.totalorder %s20, 0
      %s217 = scalar_select %p216, %s20, 0
      %s218 = scalar_lea.vmem %s2, %s217
      %p219 = pneg %p110
      %p220 = pneg %p107
      %p221 = pneg %p138
      %p222 = pneg %p135
      %p223 = scmp.lt.s32.totalorder %s19, 0
      %s224 = scalar_select %p223, %s19, 0
      %p225 = scmp.lt.s32.totalorder %s20, 0
      %s226 = scalar_select %p225, %s20, 0
      %s227 = sadd.s32 %s226, %s224
      %s228 = smul.addr %s227, 8
      %s229 = scalar_lea.vmem %s3, %s228
      %s230 = smul.u32 2, %s21
      %p231 = scmp.lt.s32.totalorder %s19, 0
      %s232 = scalar_select %p231, %s19, 0
      %p233 = scmp.lt.s32.totalorder %s230, 7
      %s234 = scalar_select %p233, %s230, 7
      %s235 = smul.addr %s232, 8
      %s236 = sadd.s32 %s234, %s235
      %s237 = smul.addr %s236, 4
      %s238 = scalar_lea.vmem %s0, %s237
      %s239 = smul.u32 2, %s21
      %s240 = smul.u32 32, %s21
      %p241 = scmp.lt.s32.totalorder %s240, 127
      %s242 = scalar_select %p241, %s240, 127
      %p243 = scmp.lt.s32.totalorder %s20, 0
      %s244 = scalar_select %p243, %s20, 0
      %s245 = sadd.s32 %s244, %s242
      %s246 = smul.addr %s245, 4
      %s247 = scalar_lea.vmem %s1, %s246
      %s248 = smul.u32 32, %s21
      %p249 = scmp.lt.s32.totalorder %s20, 0
      %s250 = scalar_select %p249, %s20, 0
      %s251 = scalar_lea.vmem %s2, %s250
      %p252 = scmp.lt.s32.totalorder %s19, 0
      %s253 = scalar_select %p252, %s19, 0
      %p254 = scmp.lt.s32.totalorder %s20, 0
      %s255 = scalar_select %p254, %s20, 0
      %s256 = sadd.s32 %s255, %s253
      %s257 = smul.addr %s256, 8
      %s258 = scalar_lea.vmem %s3, %s257
      %p261 = scmp.eq.s32.totalorder %s21, 0
      // Predicated region
      $region33: #{_lambda_.49} parent=31 // pred_check
        %p262 = pneg %p261
      $region34: #{_lambda_.49} parent=31 // pred_check_branch
        %264 = sbr.rel (%p262) target = $region36
      $region35: #{_lambda_.49} parent=31 // pred_region
        %265 = vst [vmem:[#allocation2] sm:$0xff] 0.0
      $region36: #{_lambda_.49} parent=31 // pred_fallthru
        _
      %v266 = vld [vmem:[%s238] sm:$0xff]
      %vm267 = vcmp.gt.bf16.partialorder %v266, 0
      %v268 = vmul.bf16 %v266, 1045249613
      %v269 = vsel %vm267, %v266, %v268
      %v270 = vld [vmem:[#allocation2] sm:$0xff]
      %v271 = vld [vmem:[%s247] sm:$0xf]
      %v272 = vld [vmem:[%s247 + $0x4] sm:$0xf]
      %v273 = vld [vmem:[%s247 + $0x8] sm:$0xf]
      %v274 = vld [vmem:[%s247 + $0xc] sm:$0xf]
      %v275 = vld [vmem:[%s247 + $0x10] sm:$0xf]
      %v276 = vld [vmem:[%s247 + $0x14] sm:$0xf]
      %v277 = vld [vmem:[%s247 + $0x18] sm:$0xf]
      %v278 = vld [vmem:[%s247 + $0x1c] sm:$0xf]
      %v279 = vld [vmem:[%s247 + $0x20] sm:$0xf]
      %v280 = vld [vmem:[%s247 + $0x24] sm:$0xf]
      %v281 = vld [vmem:[%s247 + $0x28] sm:$0xf]
      %v282 = vld [vmem:[%s247 + $0x2c] sm:$0xf]
      %v283 = vld [vmem:[%s247 + $0x30] sm:$0xf]
      %v284 = vld [vmem:[%s247 + $0x34] sm:$0xf]
      %v285 = vld [vmem:[%s247 + $0x38] sm:$0xf]
      %v286 = vld [vmem:[%s247 + $0x3c] sm:$0xf]
      %v287 = vld [vmem:[%s247 + $0x40] sm:$0xf]
      %v288 = vld [vmem:[%s247 + $0x44] sm:$0xf]
      %v289 = vld [vmem:[%s247 + $0x48] sm:$0xf]
      %v290 = vld [vmem:[%s247 + $0x4c] sm:$0xf]
      %v291 = vld [vmem:[%s247 + $0x50] sm:$0xf]
      %v292 = vld [vmem:[%s247 + $0x54] sm:$0xf]
      %v293 = vld [vmem:[%s247 + $0x58] sm:$0xf]
      %v294 = vld [vmem:[%s247 + $0x5c] sm:$0xf]
      %v295 = vld [vmem:[%s247 + $0x60] sm:$0xf]
      %v296 = vld [vmem:[%s247 + $0x64] sm:$0xf]
      %v297 = vld [vmem:[%s247 + $0x68] sm:$0xf]
      %v298 = vld [vmem:[%s247 + $0x6c] sm:$0xf]
      %v299 = vld [vmem:[%s247 + $0x70] sm:$0xf]
      %v300 = vld [vmem:[%s247 + $0x74] sm:$0xf]
      %v301 = vld [vmem:[%s247 + $0x78] sm:$0xf]
      %v302 = vld [vmem:[%s247 + $0x7c] sm:$0xf]
      %v304 = vunpack.c.l.b16 %v269
      %v305 = vunpack.c.h.b16 %v269
      %v306 = vpack.c.b16 %v304, %v304
      %v307 = vpack.c.b16 %v305, %v305
      %v342 = vunpack.c.l.b16 %v271
      %v343 = vunpack.c.l.b16 %v272
      %v344 = vunpack.c.l.b16 %v273
      %v345 = vunpack.c.l.b16 %v274
      %v346 = vunpack.c.l.b16 %v275
      %v347 = vunpack.c.l.b16 %v276
      %v348 = vunpack.c.l.b16 %v277
      %v349 = vunpack.c.l.b16 %v278
      %v350 = vunpack.c.l.b16 %v279
      %v351 = vunpack.c.l.b16 %v280
      %v352 = vunpack.c.l.b16 %v281
      %v353 = vunpack.c.l.b16 %v282
      %v354 = vunpack.c.l.b16 %v283
      %v355 = vunpack.c.l.b16 %v284
      %v356 = vunpack.c.l.b16 %v285
      %v357 = vunpack.c.l.b16 %v286
      %v358 = vunpack.c.l.b16 %v287
      %v359 = vunpack.c.l.b16 %v288
      %v360 = vunpack.c.l.b16 %v289
      %v361 = vunpack.c.l.b16 %v290
      %v362 = vunpack.c.l.b16 %v291
      %v363 = vunpack.c.l.b16 %v292
      %v364 = vunpack.c.l.b16 %v293
      %v365 = vunpack.c.l.b16 %v294
      %v366 = vunpack.c.l.b16 %v295
      %v367 = vunpack.c.l.b16 %v296
      %v368 = vunpack.c.l.b16 %v297
      %v369 = vunpack.c.l.b16 %v298
      %v370 = vunpack.c.l.b16 %v299
      %v371 = vunpack.c.l.b16 %v300
      %v372 = vunpack.c.l.b16 %v301
      %v373 = vunpack.c.l.b16 %v302
      %v374 = vpack.c.b16 %v343, %v342
      %v375 = vpack.c.b16 %v345, %v344
      %v376 = vpack.c.b16 %v347, %v346
      %v377 = vpack.c.b16 %v349, %v348
      %v378 = vpack.c.b16 %v351, %v350
      %v379 = vpack.c.b16 %v353, %v352
      %v380 = vpack.c.b16 %v355, %v354
      %v381 = vpack.c.b16 %v357, %v356
      %v382 = vpack.c.b16 %v359, %v358
      %v383 = vpack.c.b16 %v361, %v360
      %v384 = vpack.c.b16 %v363, %v362
      %v385 = vpack.c.b16 %v365, %v364
      %v386 = vpack.c.b16 %v367, %v366
      %v387 = vpack.c.b16 %v369, %v368
      %v388 = vpack.c.b16 %v371, %v370
      %v389 = vpack.c.b16 %v373, %v372
      %406 = vmatprep.subr.bf16.mxu0 0
      %407 = vmatpush1.bf16.msra.mxu0 %v381
      %408 = vmatprep.subr.bf16.mxu0 0
      %409 = vmatpush1.bf16.msra.mxu0 %v380
      %410 = vmatprep.subr.bf16.mxu0 0
      %411 = vmatpush1.bf16.msra.mxu0 %v379
      %412 = vmatprep.subr.bf16.mxu0 0
      %413 = vmatpush1.bf16.msra.mxu0 %v378
      %414 = vmatprep.subr.bf16.mxu0 0
      %415 = vmatpush1.bf16.msra.mxu0 %v377
      %416 = vmatprep.subr.bf16.mxu0 0
      %417 = vmatpush1.bf16.msra.mxu0 %v376
      %418 = vmatprep.subr.bf16.mxu0 0
      %419 = vmatpush1.bf16.msra.mxu0 %v375
      %420 = vmatprep.subr.bf16.mxu0 0
      %421 = vmatpush1.bf16.msra.mxu0 %v374
      %422 = vmatprep.subr.bf16.mxu0 0
      %423 = vmatpush2.bf16.msra.mxu0 %v389
      %424 = vmatprep.subr.bf16.mxu0 0
      %425 = vmatpush2.bf16.msra.mxu0 %v388
      %426 = vmatprep.subr.bf16.mxu0 0
      %427 = vmatpush2.bf16.msra.mxu0 %v387
      %428 = vmatprep.subr.bf16.mxu0 0
      %429 = vmatpush2.bf16.msra.mxu0 %v386
      %430 = vmatprep.subr.bf16.mxu0 0
      %431 = vmatpush2.bf16.msra.mxu0 %v385
      %432 = vmatprep.subr.bf16.mxu0 0
      %433 = vmatpush2.bf16.msra.mxu0 %v384
      %434 = vmatprep.subr.bf16.mxu0 0
      %435 = vmatpush2.bf16.msra.mxu0 %v383
      %436 = vmatprep.subr.bf16.mxu0 0
      %437 = vmatpush2.bf16.msra.mxu0 %v382
      %438 = vmatprep.mubr.bf16.mxu0 %v307
      %439 = vmatmul.mubr.bf16.gmra.mxu0 %v306
      %v440 = vpop.f32.mrf.mxu0
      %v441 = vadd.f32 0.0, %v440
      %v442 = vpop.f32.mrf.mxu0
      %v443 = vpop.f32.mrf.mxu0
      %v444 = vpop.f32.mrf.mxu0
      %445 = vdwg.mxu0
      %v446 = vadd.f32 %v270, %v441
      %447 = vst [vmem:[#allocation2] sm:$0xff] %v446
      %p448 = scmp.eq.s32.totalorder %s21, 3
      // Predicated region
      $region37: #{_lambda_.49} parent=31 // pred_check
        %p449 = pneg %p448
      $region38: #{_lambda_.49} parent=31 // pred_check_branch
        %451 = sbr.rel (%p449) target = $region40
      $region39: #{_lambda_.49} parent=31 // pred_region
        %v452 = vld [vmem:[#allocation2] sm:$0xff]
        %v453 = vld [vmem:[%s251] sm:$0x1]
        %v455 = vlaneseq
        %v456 = vshrl.u32 %v455, 7
        %v457 = vsub.s32 0, %v456
        %v458 = vrot.slane %v453, %v457
        %v460 = vadd.f32 %v452, %v458
        %461 = vst [vmem:[%s258] sm:$0xff] %v460
      $region40: #{_lambda_.49} parent=31 // pred_fallthru
        _
      %p462 = scmp.lt.s32.totalorder %s19, 0
      %s463 = scalar_select %p462, %s19, 0
      %p464 = scmp.lt.s32.totalorder %s20, 0
      %s465 = scalar_select %p464, %s20, 0
      %s466 = sadd.s32 %s465, %s463
      %s467 = smul.addr %s466, 8
      %s468 = scalar_lea.vmem %s3, %s467
      // Predicated region
      $region41: #{_lambda_.49} parent=31 // pred_check
        %p469 = pneg %p135
      $region42: #{_lambda_.49} parent=31 // pred_check_branch
        %471 = sbr.rel (%p469) target = $region44
      $region43: #{_lambda_.49} parent=31 // pred_region
        _
      $region44: #{_lambda_.49} parent=31 // pred_fallthru
        _
      // Predicated region
      $region45: #{_lambda_.49} parent=31 // pred_check
        %p472 = pneg %p135
      $region46: #{_lambda_.49} parent=31 // pred_check_branch
        %474 = sbr.rel (%p472) target = $region48
      $region47: #{_lambda_.49} parent=31 // pred_region
        %p475 = scmp.lt.s32.totalorder %s19, 0
        %s476 = scalar_select %p475, %s19, 0
        %p477 = scmp.lt.s32.totalorder %s20, 0
        %s478 = scalar_select %p477, %s20, 0
        %s479 = sadd.s32 %s478, %s476
        %s480 = smul.addr %s479, 8
        %s481 = scalar_lea.vmem %s3, %s480
      $region48: #{_lambda_.49} parent=31 // pred_fallthru
        _
    $region32: #{_lambda_.49} parent=5 // pred_fallthru
      _
    %p482 = scmp.le.s32.totalorder 2, %s9
    // Predicated region
    $region49: #{_lambda_.49} parent=5 // pred_check
      %p483 = pneg %p482
    $region50: #{_lambda_.49} parent=5 // pred_check_branch
      %485 = sbr.rel (%p483) target = $region52
    $region51: #{_lambda_.49} parent=5 // pred_region
      %s486 = ssub.s32 %s9, 2
    $region52: #{_lambda_.49} parent=5 // pred_fallthru
      _
  $region6: #{_lambda_.49} parent=0 // loop_footer
    %s13 = sadd.s32 1, %s9
  $region7: #{_lambda_.49} parent=0 // loop_footer_branch
    %8 = sbr.rel target = $region3
  $region8: #{_lambda_.49} parent=0 // loop_exit
    _

// kernel: _lambda_.58
$region0: #{_lambda_.58}
  #allocation0 [shape = 'u32[]', space=smem, size = 0x4, offset = 0x4, fixed_abs, tag = 'smem constant byte address 0x4 - core index']
  #allocation1 [shape = 'u32[144,128]{1,0:T(1,128)}', space=vmem, size = 0x12000, scoped, tag = 'internal scratch']
  #allocation2 [shape = 'f32[8,128]{1,0:T(8,128)}', space=vmem, size = 0x1000, scoped, tag = 'scratch operand']
  %s0 = inlined_call_operand.vmem [shape: bf16[8,512], index: 0, kind: input, shape index: {}]
  %s1 = inlined_call_operand.vmem [shape: bf16[512,128], index: 1, kind: input, shape index: {}]
  %s2 = inlined_call_operand.vmem [shape: f32[1,128], index: 2, kind: input, shape index: {}]
  %s3 = inlined_call_operand.vmem [shape: f32[8,128], index: 3, kind: output, shape index: {}]
  %s4 = sld [smem:[#allocation0]]
  $region53: #{_lambda_.58} parent=0
    _
  %s6 = ssub.s32 1, %s4
  %s7 = scalar_select 0, %s6, %s4
  loop: start=0, step=1, limit=4
  $region2: #{_lambda_.58} parent=0 // loop_pre_header
    _
  $region3: #{_lambda_.58} parent=0 // loop_header
    %s9 = sphi 0, %s13
    %p10 = scmp.ge.s32.totalorder %s9, 4
    %s16 = sphi 0, %s35
    %s17 = sphi 0, %s31
    %s18 = sphi 0, %s27
    %s19 = sphi 0, %s16
    %s20 = sphi 0, %s17
    %s21 = sphi 0, %s18
    %s22 = sphi 0, %s19
    %s23 = sphi 0, %s20
    %s24 = sphi 0, %s21
    %s40 = sphi 0, %s42
    %s43 = sphi 0, %s40
    %s44 = sphi 0, %s43
    %s60 = sphi 0, %s44
    %s68 = sphi 0, %s70
    %s71 = sphi 0, %s68
    %s72 = sphi 0, %s71
    %s88 = sphi 0, %s72
    %s94 = sphi 0, %s96
    %s97 = sphi 0, %s94
    %s98 = sphi 0, %s97
    %s114 = sphi 0, %s98
    %s122 = sphi 0, %s124
    %s125 = sphi 0, %s122
    %s126 = sphi 0, %s125
    %s142 = sphi 0, %s126
  $region4: #{_lambda_.58} parent=0 // loop_header_branch
    %12 = sbr.rel (%p10) target = $region8
  $region5: #{_lambda_.58} parent=0 // loop_body
    %s14 = ssub.s32 %s9, 1
    %s15 = ssub.s32 %s9, 2
    %s25 = sadd.s32 1, %s18
    %p26 = scmp.ge.s32.totalorder %s25, 2
    %s27 = scalar_select %p26, 0, %s25
    %s28 = sadd.s32 1, %s17
    %s29 = scalar_select %p26, %s28, %s17
    %p30 = scmp.ge.s32.totalorder %s29, 1
    %s31 = scalar_select %p30, 0, %s29
    %s32 = sadd.s32 1, %s16
    %s33 = scalar_select %p30, %s32, %s16
    %p34 = scmp.ge.s32.totalorder %s33, 1
    %s35 = scalar_select %p34, 0, %s33
    %s36 = ssub.s32 %s16, %s35
    %s37 = ssub.s32 %s18, %s27
    %s38 = sor.u32 %s36, %s37
    %p39 = scmp.eq.s32.totalorder %s38, 0
    %s41 = sadd.s32 %s40, 1
    %s42 = scalar_select %p39, %s40, %s41
    %p45 = pneg %p39
    %p46 = scmp.eq.s32.totalorder %s9, 1
    %p47 = por %p45, %p46
    %p48 = scmp.ne.s32.totalorder %s40, %s43
    %p49 = scmp.eq.s32.totalorder %s9, 0
    %p50 = por %p48, %p49
    %p51 = scmp.ne.s32.totalorder %s40, %s43
    %p52 = scmp.eq.s32.totalorder %s14, 1
    %p53 = por %p51, %p52
    %p54 = scmp.ne.s32.totalorder %s43, %s44
    %p55 = scmp.eq.s32.totalorder %s14, 0
    %p56 = por %p54, %p55
    %p57 = scmp.ne.s32.totalorder %s43, %s44
    %p58 = scmp.eq.s32.totalorder %s15, 1
    %p59 = por %p57, %p58
    %p61 = scmp.ne.s32.totalorder %s44, %s60
    %p62 = scmp.eq.s32.totalorder %s15, 0
    %p63 = por %p61, %p62
    %s64 = ssub.s32 %s18, %s27
    %s65 = ssub.s32 %s17, %s31
    %s66 = sor.u32 %s64, %s65
    %p67 = scmp.eq.s32.totalorder %s66, 0
    %s69 = sadd.s32 %s68, 1
    %s70 = scalar_select %p67, %s68, %s69
    %p73 = pneg %p67
    %p74 = scmp.eq.s32.totalorder %s9, 1
    %p75 = por %p73, %p74
    %p76 = scmp.ne.s32.totalorder %s68, %s71
    %p77 = scmp.eq.s32.totalorder %s9, 0
    %p78 = por %p76, %p77
    %p79 = scmp.ne.s32.totalorder %s68, %s71
    %p80 = scmp.eq.s32.totalorder %s14, 1
    %p81 = por %p79, %p80
    %p82 = scmp.ne.s32.totalorder %s71, %s72
    %p83 = scmp.eq.s32.totalorder %s14, 0
    %p84 = por %p82, %p83
    %p85 = scmp.ne.s32.totalorder %s71, %s72
    %p86 = scmp.eq.s32.totalorder %s15, 1
    %p87 = por %p85, %p86
    %p89 = scmp.ne.s32.totalorder %s72, %s88
    %p90 = scmp.eq.s32.totalorder %s15, 0
    %p91 = por %p89, %p90
    %s92 = ssub.s32 %s17, %s31
    %p93 = scmp.eq.s32.totalorder %s92, 0
    %s95 = sadd.s32 %s94, 1
    %s96 = scalar_select %p93, %s94, %s95
    %p99 = pneg %p93
    %p100 = scmp.eq.s32.totalorder %s9, 1
    %p101 = por %p99, %p100
    %p102 = scmp.ne.s32.totalorder %s94, %s97
    %p103 = scmp.eq.s32.totalorder %s9, 0
    %p104 = por %p102, %p103
    %p105 = scmp.ne.s32.totalorder %s94, %s97
    %p106 = scmp.eq.s32.totalorder %s14, 1
    %p107 = por %p105, %p106
    %p108 = scmp.ne.s32.totalorder %s97, %s98
    %p109 = scmp.eq.s32.totalorder %s14, 0
    %p110 = por %p108, %p109
    %p111 = scmp.ne.s32.totalorder %s97, %s98
    %p112 = scmp.eq.s32.totalorder %s15, 1
    %p113 = por %p111, %p112
    %p115 = scmp.ne.s32.totalorder %s98, %s114
    %p116 = scmp.eq.s32.totalorder %s15, 0
    %p117 = por %p115, %p116
    %s118 = ssub.s32 %s16, %s35
    %s119 = ssub.s32 %s17, %s31
    %s120 = sor.u32 %s118, %s119
    %p121 = scmp.eq.s32.totalorder %s120, 0
    %s123 = sadd.s32 %s122, 1
    %s124 = scalar_select %p121, %s122, %s123
    %p127 = pneg %p121
    %p128 = scmp.eq.s32.totalorder %s9, 1
    %p129 = por %p127, %p128
    %p130 = scmp.ne.s32.totalorder %s122, %s125
    %p131 = scmp.eq.s32.totalorder %s9, 0
    %p132 = por %p130, %p131
    %p133 = scmp.ne.s32.totalorder %s122, %s125
    %p134 = scmp.eq.s32.totalorder %s14, 1
    %p135 = por %p133, %p134
    %p136 = scmp.ne.s32.totalorder %s125, %s126
    %p137 = scmp.eq.s32.totalorder %s14, 0
    %p138 = por %p136, %p137
    %p139 = scmp.ne.s32.totalorder %s125, %s126
    %p140 = scmp.eq.s32.totalorder %s15, 1
    %p141 = por %p139, %p140
    %p143 = scmp.ne.s32.totalorder %s126, %s142
    %p144 = scmp.eq.s32.totalorder %s15, 0
    %p145 = por %p143, %p144
    %p146 = scmp.le.s32.totalorder 1, %s9
    %p147 = scmp.lt.s32.totalorder %s9, 3
    %p148 = pnand %p146, %p147
    %p149 = pneg %p148
    // Predicated region
    $region9: #{_lambda_.58} parent=5 // pred_check
      _
    $region10: #{_lambda_.58} parent=5 // pred_check_branch
      %151 = sbr.rel (%p148) target = $region12
    $region11: #{_lambda_.58} parent=5 // pred_region
      %s152 = ssub.s32 %s9, 1
      // Predicated region
      $region13: #{_lambda_.58} parent=11 // pred_check
        %p153 = pneg %p110
      $region14: #{_lambda_.58} parent=11 // pred_check_branch
        %155 = sbr.rel (%p153) target = $region16
      $region15: #{_lambda_.58} parent=11 // pred_region
        %p156 = scmp.lt.s32.totalorder %s20, 0
        %s157 = scalar_select %p156, %s20, 0
        %s158 = scalar_lea.vmem %s2, %s157
      $region16: #{_lambda_.58} parent=11 // pred_fallthru
        _
    $region12: #{_lambda_.58} parent=5 // pred_fallthru
      _
    %p159 = scmp.lt.s32.totalorder %s9, 2
    // Predicated region
    $region17: #{_lambda_.58} parent=5 // pred_check
      %p160 = pneg %p159
    $region18: #{_lambda_.58} parent=5 // pred_check_branch
      %162 = sbr.rel (%p160) target = $region20
    $region19: #{_lambda_.58} parent=5 // pred_region
      // Predicated region
      $region21: #{_lambda_.58} parent=19 // pred_check
        %p163 = pneg %p50
      $region22: #{_lambda_.58} parent=19 // pred_check_branch
        %165 = sbr.rel (%p163) target = $region24
      $region23: #{_lambda_.58} parent=19 // pred_region
        %s166 = smul.u32 2, %s18
        %p167 = scmp.lt.s32.totalorder %s16, 0
        %s168 = scalar_select %p167, %s16, 0
        %p169 = scmp.lt.s32.totalorder %s166, 3
        %s170 = scalar_select %p169, %s166, 3
        %s171 = smul.addr %s168, 4
        %s172 = sadd.s32 %s170, %s171
        %s173 = smul.addr %s172, 4
        %s174 = scalar_lea.vmem %s0, %s173
        %s175 = smul.u32 2, %s18
      $region24: #{_lambda_.58} parent=19 // pred_fallthru
        _
      // Predicated region
      $region25: #{_lambda_.58} parent=19 // pred_check
        %p176 = pneg %p78
      $region26: #{_lambda_.58} parent=19 // pred_check_branch
        %178 = sbr.rel (%p176) target = $region28
      $region27: #{_lambda_.58} parent=19 // pred_region
        %s179 = smul.u32 32, %s18
        %p180 = scmp.lt.s32.totalorder %s179, 63
        %s181 = scalar_select %p180, %s179, 63
        %p182 = scmp.lt.s32.totalorder %s17, 0
        %s183 = scalar_select %p182, %s17, 0
        %s184 = sadd.s32 %s183, %s181
        %s185 = smul.addr %s184, 4
        %s186 = scalar_lea.vmem %s1, %s185
        %s187 = smul.u32 32, %s18
      $region28: #{_lambda_.58} parent=19 // pred_fallthru
        _
    $region20: #{_lambda_.58} parent=5 // pred_fallthru
      _
    %p188 = scmp.le.s32.totalorder 1, %s9
    %p189 = scmp.lt.s32.totalorder %s9, 3
    %p190 = pnand %p188, %p189
    %p191 = pneg %p190
    // Predicated region
    $region29: #{_lambda_.58} parent=5 // pred_check
      _
    $region30: #{_lambda_.58} parent=5 // pred_check_branch
      %193 = sbr.rel (%p190) target = $region32
    $region31: #{_lambda_.58} parent=5 // pred_region
      %s194 = ssub.s32 %s9, 1
      %s195 = smul.u32 2, %s21
      %p196 = scmp.lt.s32.totalorder %s19, 0
      %s197 = scalar_select %p196, %s19, 0
      %p198 = scmp.lt.s32.totalorder %s195, 3
      %s199 = scalar_select %p198, %s195, 3
      %s200 = smul.addr %s197, 4
      %s201 = sadd.s32 %s199, %s200
      %s202 = smul.addr %s201, 4
      %s203 = scalar_lea.vmem %s0, %s202
      %p204 = pneg %p56
      %p205 = pneg %p53
      %s206 = smul.u32 32, %s21
      %p207 = scmp.lt.s32.totalorder %s206, 63
      %s208 = scalar_select %p207, %s206, 63
      %p209 = scmp.lt.s32.totalorder %s20, 0
      %s210 = scalar_select %p209, %s20, 0
      %s211 = sadd.s32 %s210, %s208
      %s212 = smul.addr %s211, 4
      %s213 = scalar_lea.vmem %s1, %s212
      %p214 = pneg %p84
      %p215 = pneg %p81
      %p216 = scmp.lt.s32.totalorder %s20, 0
      %s217 = scalar_select %p216, %s20, 0
      %s218 = scalar_lea.vmem %s2, %s217
      %p219 = pneg %p110
      %p220 = pneg %p107
      %p221 = pneg %p138
      %p222 = pneg %p135
      %p223 = scmp.lt.s32.totalorder %s19, 0
      %s224 = scalar_select %p223, %s19, 0
      %p225 = scmp.lt.s32.totalorder %s20, 0
      %s226 = scalar_select %p225, %s20, 0
      %s227 = sadd.s32 %s226, %s224
      %s228 = smul.addr %s227, 8
      %s229 = scalar_lea.vmem %s3, %s228
      %s230 = smul.u32 2, %s21
      %p231 = scmp.lt.s32.totalorder %s19, 0
      %s232 = scalar_select %p231, %s19, 0
      %p233 = scmp.lt.s32.totalorder %s230, 3
      %s234 = scalar_select %p233, %s230, 3
      %s235 = smul.addr %s232, 4
      %s236 = sadd.s32 %s234, %s235
      %s237 = smul.addr %s236, 4
      %s238 = scalar_lea.vmem %s0, %s237
      %s239 = smul.u32 2, %s21
      %s240 = smul.u32 32, %s21
      %p241 = scmp.lt.s32.totalorder %s240, 63
      %s242 = scalar_select %p241, %s240, 63
      %p243 = scmp.lt.s32.totalorder %s20, 0
      %s244 = scalar_select %p243, %s20, 0
      %s245 = sadd.s32 %s244, %s242
      %s246 = smul.addr %s245, 4
      %s247 = scalar_lea.vmem %s1, %s246
      %s248 = smul.u32 32, %s21
      %p249 = scmp.lt.s32.totalorder %s20, 0
      %s250 = scalar_select %p249, %s20, 0
      %s251 = scalar_lea.vmem %s2, %s250
      %p252 = scmp.lt.s32.totalorder %s19, 0
      %s253 = scalar_select %p252, %s19, 0
      %p254 = scmp.lt.s32.totalorder %s20, 0
      %s255 = scalar_select %p254, %s20, 0
      %s256 = sadd.s32 %s255, %s253
      %s257 = smul.addr %s256, 8
      %s258 = scalar_lea.vmem %s3, %s257
      %p260 = scmp.eq.s32.totalorder %s21, 0
      // Predicated region
      $region33: #{_lambda_.58} parent=31 // pred_check
        %p261 = pneg %p260
      $region34: #{_lambda_.58} parent=31 // pred_check_branch
        %263 = sbr.rel (%p261) target = $region36
      $region35: #{_lambda_.58} parent=31 // pred_region
        %264 = vst [vmem:[#allocation2] sm:$0xff] 0.0
      $region36: #{_lambda_.58} parent=31 // pred_fallthru
        _
      %v265 = vld [vmem:[%s238] sm:$0xff]
      %v266 = vmax.bf16 %v265, 0
      %v267 = vld [vmem:[#allocation2] sm:$0xff]
      %v268 = vld [vmem:[%s247] sm:$0xf]
      %v269 = vld [vmem:[%s247 + $0x4] sm:$0xf]
      %v270 = vld [vmem:[%s247 + $0x8] sm:$0xf]
      %v271 = vld [vmem:[%s247 + $0xc] sm:$0xf]
      %v272 = vld [vmem:[%s247 + $0x10] sm:$0xf]
      %v273 = vld [vmem:[%s247 + $0x14] sm:$0xf]
      %v274 = vld [vmem:[%s247 + $0x18] sm:$0xf]
      %v275 = vld [vmem:[%s247 + $0x1c] sm:$0xf]
      %v276 = vld [vmem:[%s247 + $0x20] sm:$0xf]
      %v277 = vld [vmem:[%s247 + $0x24] sm:$0xf]
      %v278 = vld [vmem:[%s247 + $0x28] sm:$0xf]
      %v279 = vld [vmem:[%s247 + $0x2c] sm:$0xf]
      %v280 = vld [vmem:[%s247 + $0x30] sm:$0xf]
      %v281 = vld [vmem:[%s247 + $0x34] sm:$0xf]
      %v282 = vld [vmem:[%s247 + $0x38] sm:$0xf]
      %v283 = vld [vmem:[%s247 + $0x3c] sm:$0xf]
      %v284 = vld [vmem:[%s247 + $0x40] sm:$0xf]
      %v285 = vld [vmem:[%s247 + $0x44] sm:$0xf]
      %v286 = vld [vmem:[%s247 + $0x48] sm:$0xf]
      %v287 = vld [vmem:[%s247 + $0x4c] sm:$0xf]
      %v288 = vld [vmem:[%s247 + $0x50] sm:$0xf]
      %v289 = vld [vmem:[%s247 + $0x54] sm:$0xf]
      %v290 = vld [vmem:[%s247 + $0x58] sm:$0xf]
      %v291 = vld [vmem:[%s247 + $0x5c] sm:$0xf]
      %v292 = vld [vmem:[%s247 + $0x60] sm:$0xf]
      %v293 = vld [vmem:[%s247 + $0x64] sm:$0xf]
      %v294 = vld [vmem:[%s247 + $0x68] sm:$0xf]
      %v295 = vld [vmem:[%s247 + $0x6c] sm:$0xf]
      %v296 = vld [vmem:[%s247 + $0x70] sm:$0xf]
      %v297 = vld [vmem:[%s247 + $0x74] sm:$0xf]
      %v298 = vld [vmem:[%s247 + $0x78] sm:$0xf]
      %v299 = vld [vmem:[%s247 + $0x7c] sm:$0xf]
      %v301 = vunpack.c.l.b16 %v266
      %v302 = vunpack.c.h.b16 %v266
      %v303 = vpack.c.b16 %v301, %v301
      %v304 = vpack.c.b16 %v302, %v302
      %v339 = vunpack.c.l.b16 %v268
      %v340 = vunpack.c.l.b16 %v269
      %v341 = vunpack.c.l.b16 %v270
      %v342 = vunpack.c.l.b16 %v271
      %v343 = vunpack.c.l.b16 %v272
      %v344 = vunpack.c.l.b16 %v273
      %v345 = vunpack.c.l.b16 %v274
      %v346 = vunpack.c.l.b16 %v275
      %v347 = vunpack.c.l.b16 %v276
      %v348 = vunpack.c.l.b16 %v277
      %v349 = vunpack.c.l.b16 %v278
      %v350 = vunpack.c.l.b16 %v279
      %v351 = vunpack.c.l.b16 %v280
      %v352 = vunpack.c.l.b16 %v281
      %v353 = vunpack.c.l.b16 %v282
      %v354 = vunpack.c.l.b16 %v283
      %v355 = vunpack.c.l.b16 %v284
      %v356 = vunpack.c.l.b16 %v285
      %v357 = vunpack.c.l.b16 %v286
      %v358 = vunpack.c.l.b16 %v287
      %v359 = vunpack.c.l.b16 %v288
      %v360 = vunpack.c.l.b16 %v289
      %v361 = vunpack.c.l.b16 %v290
      %v362 = vunpack.c.l.b16 %v291
      %v363 = vunpack.c.l.b16 %v292
      %v364 = vunpack.c.l.b16 %v293
      %v365 = vunpack.c.l.b16 %v294
      %v366 = vunpack.c.l.b16 %v295
      %v367 = vunpack.c.l.b16 %v296
      %v368 = vunpack.c.l.b16 %v297
      %v369 = vunpack.c.l.b16 %v298
      %v370 = vunpack.c.l.b16 %v299
      %v371 = vpack.c.b16 %v340, %v339
      %v372 = vpack.c.b16 %v342, %v341
      %v373 = vpack.c.b16 %v344, %v343
      %v374 = vpack.c.b16 %v346, %v345
      %v375 = vpack.c.b16 %v348, %v347
      %v376 = vpack.c.b16 %v350, %v349
      %v377 = vpack.c.b16 %v352, %v351
      %v378 = vpack.c.b16 %v354, %v353
      %v379 = vpack.c.b16 %v356, %v355
      %v380 = vpack.c.b16 %v358, %v357
      %v381 = vpack.c.b16 %v360, %v359
      %v382 = vpack.c.b16 %v362, %v361
      %v383 = vpack.c.b16 %v364, %v363
      %v384 = vpack.c.b16 %v366, %v365
      %v385 = vpack.c.b16 %v368, %v367
      %v386 = vpack.c.b16 %v370, %v369
      %403 = vmatprep.subr.bf16.mxu0 0
      %404 = vmatpush1.bf16.msra.mxu0 %v378
      %405 = vmatprep.subr.bf16.mxu0 0
      %406 = vmatpush1.bf16.msra.mxu0 %v377
      %407 = vmatprep.subr.bf16.mxu0 0
      %408 = vmatpush1.bf16.msra.mxu0 %v376
      %409 = vmatprep.subr.bf16.mxu0 0
      %410 = vmatpush1.bf16.msra.mxu0 %v375
      %411 = vmatprep.subr.bf16.mxu0 0
      %412 = vmatpush1.bf16.msra.mxu0 %v374
      %413 = vmatprep.subr.bf16.mxu0 0
      %414 = vmatpush1.bf16.msra.mxu0 %v373
      %415 = vmatprep.subr.bf16.mxu0 0
      %416 = vmatpush1.bf16.msra.mxu0 %v372
      %417 = vmatprep.subr.bf16.mxu0 0
      %418 = vmatpush1.bf16.msra.mxu0 %v371
      %419 = vmatprep.subr.bf16.mxu0 0
      %420 = vmatpush2.bf16.msra.mxu0 %v386
      %421 = vmatprep.subr.bf16.mxu0 0
      %422 = vmatpush2.bf16.msra.mxu0 %v385
      %423 = vmatprep.subr.bf16.mxu0 0
      %424 = vmatpush2.bf16.msra.mxu0 %v384
      %425 = vmatprep.subr.bf16.mxu0 0
      %426 = vmatpush2.bf16.msra.mxu0 %v383
      %427 = vmatprep.subr.bf16.mxu0 0
      %428 = vmatpush2.bf16.msra.mxu0 %v382
      %429 = vmatprep.subr.bf16.mxu0 0
      %430 = vmatpush2.bf16.msra.mxu0 %v381
      %431 = vmatprep.subr.bf16.mxu0 0
      %432 = vmatpush2.bf16.msra.mxu0 %v380
      %433 = vmatprep.subr.bf16.mxu0 0
      %434 = vmatpush2.bf16.msra.mxu0 %v379
      %435 = vmatprep.mubr.bf16.mxu0 %v304
      %436 = vmatmul.mubr.bf16.gmra.mxu0 %v303
      %v437 = vpop.f32.mrf.mxu0
      %v438 = vadd.f32 0.0, %v437
      %v439 = vpop.f32.mrf.mxu0
      %v440 = vpop.f32.mrf.mxu0
      %v441 = vpop.f32.mrf.mxu0
      %442 = vdwg.mxu0
      %v443 = vadd.f32 %v267, %v438
      %444 = vst [vmem:[#allocation2] sm:$0xff] %v443
      %p445 = scmp.eq.s32.totalorder %s21, 1
      // Predicated region
      $region37: #{_lambda_.58} parent=31 // pred_check
        %p446 = pneg %p445
      $region38: #{_lambda_.58} parent=31 // pred_check_branch
        %448 = sbr.rel (%p446) target = $region40
      $region39: #{_lambda_.58} parent=31 // pred_region
        %v449 = vld [vmem:[#allocation2] sm:$0xff]
        %v450 = vld [vmem:[%s251] sm:$0x1]
        %v452 = vlaneseq
        %v453 = vshrl.u32 %v452, 7
        %v454 = vsub.s32 0, %v453
        %v455 = vrot.slane %v450, %v454
        %v457 = vadd.f32 %v449, %v455
        %458 = vst [vmem:[%s258] sm:$0xff] %v457
      $region40: #{_lambda_.58} parent=31 // pred_fallthru
        _
      %p459 = scmp.lt.s32.totalorder %s19, 0
      %s460 = scalar_select %p459, %s19, 0
      %p461 = scmp.lt.s32.totalorder %s20, 0
      %s462 = scalar_select %p461, %s20, 0
      %s463 = sadd.s32 %s462, %s460
      %s464 = smul.addr %s463, 8
      %s465 = scalar_lea.vmem %s3, %s464
      // Predicated region
      $region41: #{_lambda_.58} parent=31 // pred_check
        %p466 = pneg %p135
      $region42: #{_lambda_.58} parent=31 // pred_check_branch
        %468 = sbr.rel (%p466) target = $region44
      $region43: #{_lambda_.58} parent=31 // pred_region
        _
      $region44: #{_lambda_.58} parent=31 // pred_fallthru
        _
      // Predicated region
      $region45: #{_lambda_.58} parent=31 // pred_check
        %p469 = pneg %p135
      $region46: #{_lambda_.58} parent=31 // pred_check_branch
        %471 = sbr.rel (%p469) target = $region48
      $region47: #{_lambda_.58} parent=31 // pred_region
        %p472 = scmp.lt.s32.totalorder %s19, 0
        %s473 = scalar_select %p472, %s19, 0
        %p474 = scmp.lt.s32.totalorder %s20, 0
        %s475 = scalar_select %p474, %s20, 0
        %s476 = sadd.s32 %s475, %s473
        %s477 = smul.addr %s476, 8
        %s478 = scalar_lea.vmem %s3, %s477
      $region48: #{_lambda_.58} parent=31 // pred_fallthru
        _
    $region32: #{_lambda_.58} parent=5 // pred_fallthru
      _
    %p479 = scmp.le.s32.totalorder 2, %s9
    // Predicated region
    $region49: #{_lambda_.58} parent=5 // pred_check
      %p480 = pneg %p479
    $region50: #{_lambda_.58} parent=5 // pred_check_branch
      %482 = sbr.rel (%p480) target = $region52
    $region51: #{_lambda_.58} parent=5 // pred_region
      %s483 = ssub.s32 %s9, 2
    $region52: #{_lambda_.58} parent=5 // pred_fallthru
      _
  $region6: #{_lambda_.58} parent=0 // loop_footer
    %s13 = sadd.s32 1, %s9
  $region7: #{_lambda_.58} parent=0 // loop_footer_branch
    %8 = sbr.rel target = $region3
  $region8: #{_lambda_.58} parent=0 // loop_exit
    _

// kernel: _lambda_.64
$region0: #{_lambda_.64}
  #allocation0 [shape = 'u32[]', space=smem, size = 0x4, offset = 0x4, fixed_abs, tag = 'smem constant byte address 0x4 - core index']
  #allocation1 [shape = 'u32[144,128]{1,0:T(1,128)}', space=vmem, size = 0x12000, scoped, tag = 'internal scratch']
  #allocation2 [shape = 'f32[32,128]{1,0:T(8,128)}', space=vmem, size = 0x4000, scoped, tag = 'scratch operand']
  %s0 = inlined_call_operand.vmem [shape: bf16[32,256], index: 0, kind: input, shape index: {}]
  %s1 = inlined_call_operand.vmem [shape: bf16[256,128], index: 1, kind: input, shape index: {}]
  %s2 = inlined_call_operand.vmem [shape: f32[1,128], index: 2, kind: input, shape index: {}]
  %s3 = inlined_call_operand.vmem [shape: f32[32,128], index: 3, kind: output, shape index: {}]
  %s4 = sld [smem:[#allocation0]]
  $region30: #{_lambda_.64} parent=0
    _
  %s6 = ssub.s32 1, %s4
  %s7 = scalar_select 0, %s6, %s4
  // Predicated region
  $region2: #{_lambda_.64} parent=0 // pred_check
    _
  $region3: #{_lambda_.64} parent=0 // pred_check_branch
    %9 = sbr.rel (0) target = $region5
  $region4: #{_lambda_.64} parent=0 // pred_region
    _
  $region5: #{_lambda_.64} parent=0 // pred_fallthru
    _
  // Predicated region
  $region6: #{_lambda_.64} parent=0 // pred_check
    _
  $region7: #{_lambda_.64} parent=0 // pred_check_branch
    %11 = sbr.rel (0) target = $region9
  $region8: #{_lambda_.64} parent=0 // pred_region
    _
  $region9: #{_lambda_.64} parent=0 // pred_fallthru
    _
  // Predicated region
  $region10: #{_lambda_.64} parent=0 // pred_check
    _
  $region11: #{_lambda_.64} parent=0 // pred_check_branch
    %13 = sbr.rel (0) target = $region13
  $region12: #{_lambda_.64} parent=0 // pred_region
    _
  $region13: #{_lambda_.64} parent=0 // pred_fallthru
    _
  %p15 = scmp.eq.s32.totalorder 0, 0
  // Predicated region
  $region14: #{_lambda_.64} parent=0 // pred_check
    %p16 = pneg %p15
  $region15: #{_lambda_.64} parent=0 // pred_check_branch
    %18 = sbr.rel (%p16) target = $region17
  $region16: #{_lambda_.64} parent=0 // pred_region
    %19 = vst [vmem:[#allocation2] sm:$0xff] 0.0
    %20 = vst [vmem:[#allocation2 + $0x8] sm:$0xff] 0.0
    %21 = vst [vmem:[#allocation2 + $0x10] sm:$0xff] 0.0
    %22 = vst [vmem:[#allocation2 + $0x18] sm:$0xff] 0.0
  $region17: #{_lambda_.64} parent=0 // pred_fallthru
    _
  %v23 = vld [vmem:[%s0] sm:$0xff]
  %v24 = vld [vmem:[%s0 + $0x8] sm:$0xff]
  %v25 = vld [vmem:[%s0 + $0x10] sm:$0xff]
  %v26 = vld [vmem:[%s0 + $0x18] sm:$0xff]
  %v27 = vmax.bf16 %v23, 0
  %v28 = vmax.bf16 %v24, 0
  %v29 = vmax.bf16 %v25, 0
  %v30 = vmax.bf16 %v26, 0
  %v31 = vld [vmem:[#allocation2] sm:$0xff]
  %v32 = vld [vmem:[#allocation2 + $0x8] sm:$0xff]
  %v33 = vld [vmem:[#allocation2 + $0x10] sm:$0xff]
  %v34 = vld [vmem:[#allocation2 + $0x18] sm:$0xff]
  %v35 = vld [vmem:[%s1] sm:$0xf]
  %v36 = vld [vmem:[%s1 + $0x4] sm:$0xf]
  %v37 = vld [vmem:[%s1 + $0x8] sm:$0xf]
  %v38 = vld [vmem:[%s1 + $0xc] sm:$0xf]
  %v39 = vld [vmem:[%s1 + $0x10] sm:$0xf]
  %v40 = vld [vmem:[%s1 + $0x14] sm:$0xf]
  %v41 = vld [vmem:[%s1 + $0x18] sm:$0xf]
  %v42 = vld [vmem:[%s1 + $0x1c] sm:$0xf]
  %v43 = vld [vmem:[%s1 + $0x20] sm:$0xf]
  %v44 = vld [vmem:[%s1 + $0x24] sm:$0xf]
  %v45 = vld [vmem:[%s1 + $0x28] sm:$0xf]
  %v46 = vld [vmem:[%s1 + $0x2c] sm:$0xf]
  %v47 = vld [vmem:[%s1 + $0x30] sm:$0xf]
  %v48 = vld [vmem:[%s1 + $0x34] sm:$0xf]
  %v49 = vld [vmem:[%s1 + $0x38] sm:$0xf]
  %v50 = vld [vmem:[%s1 + $0x3c] sm:$0xf]
  %v51 = vld [vmem:[%s1 + $0x40] sm:$0xf]
  %v52 = vld [vmem:[%s1 + $0x44] sm:$0xf]
  %v53 = vld [vmem:[%s1 + $0x48] sm:$0xf]
  %v54 = vld [vmem:[%s1 + $0x4c] sm:$0xf]
  %v55 = vld [vmem:[%s1 + $0x50] sm:$0xf]
  %v56 = vld [vmem:[%s1 + $0x54] sm:$0xf]
  %v57 = vld [vmem:[%s1 + $0x58] sm:$0xf]
  %v58 = vld [vmem:[%s1 + $0x5c] sm:$0xf]
  %v59 = vld [vmem:[%s1 + $0x60] sm:$0xf]
  %v60 = vld [vmem:[%s1 + $0x64] sm:$0xf]
  %v61 = vld [vmem:[%s1 + $0x68] sm:$0xf]
  %v62 = vld [vmem:[%s1 + $0x6c] sm:$0xf]
  %v63 = vld [vmem:[%s1 + $0x70] sm:$0xf]
  %v64 = vld [vmem:[%s1 + $0x74] sm:$0xf]
  %v65 = vld [vmem:[%s1 + $0x78] sm:$0xf]
  %v66 = vld [vmem:[%s1 + $0x7c] sm:$0xf]
  %v71 = vunpack.c.l.b16 %v27
  %v72 = vunpack.c.h.b16 %v27
  %v73 = vunpack.c.l.b16 %v28
  %v74 = vunpack.c.h.b16 %v28
  %v75 = vunpack.c.l.b16 %v29
  %v76 = vunpack.c.h.b16 %v29
  %v77 = vunpack.c.l.b16 %v30
  %v78 = vunpack.c.h.b16 %v30
  %v79 = vpack.c.b16 %v73, %v71
  %v80 = vpack.c.b16 %v74, %v72
  %v81 = vpack.c.b16 %v77, %v75
  %v82 = vpack.c.b16 %v78, %v76
  %v119 = vunpack.c.l.b16 %v35
  %v120 = vunpack.c.l.b16 %v36
  %v121 = vunpack.c.l.b16 %v37
  %v122 = vunpack.c.l.b16 %v38
  %v123 = vunpack.c.l.b16 %v39
  %v124 = vunpack.c.l.b16 %v40
  %v125 = vunpack.c.l.b16 %v41
  %v126 = vunpack.c.l.b16 %v42
  %v127 = vunpack.c.l.b16 %v43
  %v128 = vunpack.c.l.b16 %v44
  %v129 = vunpack.c.l.b16 %v45
  %v130 = vunpack.c.l.b16 %v46
  %v131 = vunpack.c.l.b16 %v47
  %v132 = vunpack.c.l.b16 %v48
  %v133 = vunpack.c.l.b16 %v49
  %v134 = vunpack.c.l.b16 %v50
  %v135 = vunpack.c.l.b16 %v51
  %v136 = vunpack.c.l.b16 %v52
  %v137 = vunpack.c.l.b16 %v53
  %v138 = vunpack.c.l.b16 %v54
  %v139 = vunpack.c.l.b16 %v55
  %v140 = vunpack.c.l.b16 %v56
  %v141 = vunpack.c.l.b16 %v57
  %v142 = vunpack.c.l.b16 %v58
  %v143 = vunpack.c.l.b16 %v59
  %v144 = vunpack.c.l.b16 %v60
  %v145 = vunpack.c.l.b16 %v61
  %v146 = vunpack.c.l.b16 %v62
  %v147 = vunpack.c.l.b16 %v63
  %v148 = vunpack.c.l.b16 %v64
  %v149 = vunpack.c.l.b16 %v65
  %v150 = vunpack.c.l.b16 %v66
  %v151 = vpack.c.b16 %v120, %v119
  %v152 = vpack.c.b16 %v122, %v121
  %v153 = vpack.c.b16 %v124, %v123
  %v154 = vpack.c.b16 %v126, %v125
  %v155 = vpack.c.b16 %v128, %v127
  %v156 = vpack.c.b16 %v130, %v129
  %v157 = vpack.c.b16 %v132, %v131
  %v158 = vpack.c.b16 %v134, %v133
  %v159 = vpack.c.b16 %v136, %v135
  %v160 = vpack.c.b16 %v138, %v137
  %v161 = vpack.c.b16 %v140, %v139
  %v162 = vpack.c.b16 %v142, %v141
  %v163 = vpack.c.b16 %v144, %v143
  %v164 = vpack.c.b16 %v146, %v145
  %v165 = vpack.c.b16 %v148, %v147
  %v166 = vpack.c.b16 %v150, %v149
  %183 = vmatprep.subr.bf16.mxu0 0
  %184 = vmatpush1.bf16.msra.mxu0 %v158
  %185 = vmatprep.subr.bf16.mxu0 0
  %186 = vmatpush1.bf16.msra.mxu0 %v157
  %187 = vmatprep.subr.bf16.mxu0 0
  %188 = vmatpush1.bf16.msra.mxu0 %v156
  %189 = vmatprep.subr.bf16.mxu0 0
  %190 = vmatpush1.bf16.msra.mxu0 %v155
  %191 = vmatprep.subr.bf16.mxu0 0
  %192 = vmatpush1.bf16.msra.mxu0 %v154
  %193 = vmatprep.subr.bf16.mxu0 0
  %194 = vmatpush1.bf16.msra.mxu0 %v153
  %195 = vmatprep.subr.bf16.mxu0 0
  %196 = vmatpush1.bf16.msra.mxu0 %v152
  %197 = vmatprep.subr.bf16.mxu0 0
  %198 = vmatpush1.bf16.msra.mxu0 %v151
  %199 = vmatprep.subr.bf16.mxu0 0
  %200 = vmatpush2.bf16.msra.mxu0 %v166
  %201 = vmatprep.subr.bf16.mxu0 0
  %202 = vmatpush2.bf16.msra.mxu0 %v165
  %203 = vmatprep.subr.bf16.mxu0 0
  %204 = vmatpush2.bf16.msra.mxu0 %v164
  %205 = vmatprep.subr.bf16.mxu0 0
  %206 = vmatpush2.bf16.msra.mxu0 %v163
  %207 = vmatprep.subr.bf16.mxu0 0
  %208 = vmatpush2.bf16.msra.mxu0 %v162
  %209 = vmatprep.subr.bf16.mxu0 0
  %210 = vmatpush2.bf16.msra.mxu0 %v161
  %211 = vmatprep.subr.bf16.mxu0 0
  %212 = vmatpush2.bf16.msra.mxu0 %v160
  %213 = vmatprep.subr.bf16.mxu0 0
  %214 = vmatpush2.bf16.msra.mxu0 %v159
  %215 = vmatprep.mubr.bf16.mxu0 %v80
  %216 = vmatmul.mubr.bf16.gmra.mxu0 %v79
  %v217 = vpop.f32.mrf.mxu0
  %v218 = vadd.f32 0.0, %v217
  %v219 = vpop.f32.mrf.mxu0
  %v220 = vpop.f32.mrf.mxu0
  %v221 = vadd.f32 0.0, %v220
  %v222 = vpop.f32.mrf.mxu0
  %223 = vmatprep.mubr.bf16.mxu0 %v82
  %224 = vmatmul.mubr.bf16.gmra.mxu0 %v81
  %v225 = vpop.f32.mrf.mxu0
  %v226 = vadd.f32 0.0, %v225
  %v227 = vpop.f32.mrf.mxu0
  %v228 = vpop.f32.mrf.mxu0
  %v229 = vadd.f32 0.0, %v228
  %v230 = vpop.f32.mrf.mxu0
  %231 = vdwg.mxu0
  %v232 = vadd.f32 %v31, %v218
  %v233 = vadd.f32 %v32, %v221
  %v234 = vadd.f32 %v33, %v226
  %v235 = vadd.f32 %v34, %v229
  %236 = vst [vmem:[#allocation2] sm:$0xff] %v232
  %237 = vst [vmem:[#allocation2 + $0x8] sm:$0xff] %v233
  %238 = vst [vmem:[#allocation2 + $0x10] sm:$0xff] %v234
  %239 = vst [vmem:[#allocation2 + $0x18] sm:$0xff] %v235
  // Predicated region
  $region18: #{_lambda_.64} parent=0 // pred_check
    %p240 = pneg %p15
  $region19: #{_lambda_.64} parent=0 // pred_check_branch
    %242 = sbr.rel (%p240) target = $region21
  $region20: #{_lambda_.64} parent=0 // pred_region
    %v243 = vld [vmem:[#allocation2] sm:$0xff]
    %v244 = vld [vmem:[#allocation2 + $0x8] sm:$0xff]
    %v245 = vld [vmem:[#allocation2 + $0x10] sm:$0xff]
    %v246 = vld [vmem:[#allocation2 + $0x18] sm:$0xff]
    %v247 = vld [vmem:[%s2] sm:$0x1]
    %v249 = vlaneseq
    %v250 = vshrl.u32 %v249, 7
    %v251 = vsub.s32 0, %v250
    %v252 = vrot.slane %v247, %v251
    %v254 = vadd.f32 %v243, %v252
    %v255 = vadd.f32 %v244, %v252
    %v256 = vadd.f32 %v245, %v252
    %v257 = vadd.f32 %v246, %v252
    %258 = vst [vmem:[%s3] sm:$0xff] %v254
    %259 = vst [vmem:[%s3 + $0x8] sm:$0xff] %v255
    %260 = vst [vmem:[%s3 + $0x10] sm:$0xff] %v256
    %261 = vst [vmem:[%s3 + $0x18] sm:$0xff] %v257
  $region21: #{_lambda_.64} parent=0 // pred_fallthru
    _
  // Predicated region
  $region22: #{_lambda_.64} parent=0 // pred_check
    _
  $region23: #{_lambda_.64} parent=0 // pred_check_branch
    %263 = sbr.rel (0) target = $region25
  $region24: #{_lambda_.64} parent=0 // pred_region
    _
  $region25: #{_lambda_.64} parent=0 // pred_fallthru
    _
  // Predicated region
  $region26: #{_lambda_.64} parent=0 // pred_check
    _
  $region27: #{_lambda_.64} parent=0 // pred_check_branch
    %265 = sbr.rel (0) target = $region29
  $region28: #{_lambda_.64} parent=0 // pred_region
    _
  $region29: #{_lambda_.64} parent=0 // pred_fallthru
    _

// kernel: _lambda_.70
$region0: #{_lambda_.70}
  #allocation0 [shape = 'u32[]', space=smem, size = 0x4, offset = 0x4, fixed_abs, tag = 'smem constant byte address 0x4 - core index']
  #allocation1 [shape = 'u32[144,128]{1,0:T(1,128)}', space=vmem, size = 0x12000, scoped, tag = 'internal scratch']
  #allocation2 [shape = 'f32[128,128]{1,0:T(8,128)}', space=vmem, size = 0x10000, scoped, tag = 'scratch operand']
  %s0 = inlined_call_operand.vmem [shape: bf16[128,128], index: 0, kind: input, shape index: {}]
  %s1 = inlined_call_operand.vmem [shape: bf16[128,128], index: 1, kind: input, shape index: {}]
  %s2 = inlined_call_operand.vmem [shape: f32[1,128], index: 2, kind: input, shape index: {}]
  %s3 = inlined_call_operand.vmem [shape: f32[128,128], index: 3, kind: output, shape index: {}]
  %s4 = sld [smem:[#allocation0]]
  $region30: #{_lambda_.70} parent=0
    _
  %s6 = ssub.s32 1, %s4
  %s7 = scalar_select 0, %s6, %s4
  // Predicated region
  $region2: #{_lambda_.70} parent=0 // pred_check
    _
  $region3: #{_lambda_.70} parent=0 // pred_check_branch
    %9 = sbr.rel (0) target = $region5
  $region4: #{_lambda_.70} parent=0 // pred_region
    _
  $region5: #{_lambda_.70} parent=0 // pred_fallthru
    _
  // Predicated region
  $region6: #{_lambda_.70} parent=0 // pred_check
    _
  $region7: #{_lambda_.70} parent=0 // pred_check_branch
    %11 = sbr.rel (0) target = $region9
  $region8: #{_lambda_.70} parent=0 // pred_region
    _
  $region9: #{_lambda_.70} parent=0 // pred_fallthru
    _
  // Predicated region
  $region10: #{_lambda_.70} parent=0 // pred_check
    _
  $region11: #{_lambda_.70} parent=0 // pred_check_branch
    %13 = sbr.rel (0) target = $region13
  $region12: #{_lambda_.70} parent=0 // pred_region
    _
  $region13: #{_lambda_.70} parent=0 // pred_fallthru
    _
  %p15 = scmp.eq.s32.totalorder 0, 0
  // Predicated region
  $region14: #{_lambda_.70} parent=0 // pred_check
    %p16 = pneg %p15
  $region15: #{_lambda_.70} parent=0 // pred_check_branch
    %18 = sbr.rel (%p16) target = $region17
  $region16: #{_lambda_.70} parent=0 // pred_region
    %19 = vst [vmem:[#allocation2] sm:$0xff] 0.0
    %20 = vst [vmem:[#allocation2 + $0x8] sm:$0xff] 0.0
    %21 = vst [vmem:[#allocation2 + $0x10] sm:$0xff] 0.0
    %22 = vst [vmem:[#allocation2 + $0x18] sm:$0xff] 0.0
    %23 = vst [vmem:[#allocation2 + $0x20] sm:$0xff] 0.0
    %24 = vst [vmem:[#allocation2 + $0x28] sm:$0xff] 0.0
    %25 = vst [vmem:[#allocation2 + $0x30] sm:$0xff] 0.0
    %26 = vst [vmem:[#allocation2 + $0x38] sm:$0xff] 0.0
    %27 = vst [vmem:[#allocation2 + $0x40] sm:$0xff] 0.0
    %28 = vst [vmem:[#allocation2 + $0x48] sm:$0xff] 0.0
    %29 = vst [vmem:[#allocation2 + $0x50] sm:$0xff] 0.0
    %30 = vst [vmem:[#allocation2 + $0x58] sm:$0xff] 0.0
    %31 = vst [vmem:[#allocation2 + $0x60] sm:$0xff] 0.0
    %32 = vst [vmem:[#allocation2 + $0x68] sm:$0xff] 0.0
    %33 = vst [vmem:[#allocation2 + $0x70] sm:$0xff] 0.0
    %34 = vst [vmem:[#allocation2 + $0x78] sm:$0xff] 0.0
  $region17: #{_lambda_.70} parent=0 // pred_fallthru
    _
  %v35 = vld [vmem:[%s0] sm:$0xf]
  %v36 = vld [vmem:[%s0 + $0x4] sm:$0xf]
  %v37 = vld [vmem:[%s0 + $0x8] sm:$0xf]
  %v38 = vld [vmem:[%s0 + $0xc] sm:$0xf]
  %v39 = vld [vmem:[%s0 + $0x10] sm:$0xf]
  %v40 = vld [vmem:[%s0 + $0x14] sm:$0xf]
  %v41 = vld [vmem:[%s0 + $0x18] sm:$0xf]
  %v42 = vld [vmem:[%s0 + $0x1c] sm:$0xf]
  %v43 = vld [vmem:[%s0 + $0x20] sm:$0xf]
  %v44 = vld [vmem:[%s0 + $0x24] sm:$0xf]
  %v45 = vld [vmem:[%s0 + $0x28] sm:$0xf]
  %v46 = vld [vmem:[%s0 + $0x2c] sm:$0xf]
  %v47 = vld [vmem:[%s0 + $0x30] sm:$0xf]
  %v48 = vld [vmem:[%s0 + $0x34] sm:$0xf]
  %v49 = vld [vmem:[%s0 + $0x38] sm:$0xf]
  %v50 = vld [vmem:[%s0 + $0x3c] sm:$0xf]
  %v51 = vmax.bf16 %v35, 0
  %v52 = vmax.bf16 %v36, 0
  %v53 = vmax.bf16 %v37, 0
  %v54 = vmax.bf16 %v38, 0
  %v55 = vmax.bf16 %v39, 0
  %v56 = vmax.bf16 %v40, 0
  %v57 = vmax.bf16 %v41, 0
  %v58 = vmax.bf16 %v42, 0
  %v59 = vmax.bf16 %v43, 0
  %v60 = vmax.bf16 %v44, 0
  %v61 = vmax.bf16 %v45, 0
  %v62 = vmax.bf16 %v46, 0
  %v63 = vmax.bf16 %v47, 0
  %v64 = vmax.bf16 %v48, 0
  %v65 = vmax.bf16 %v49, 0
  %v66 = vmax.bf16 %v50, 0
  %v67 = vld [vmem:[#allocation2] sm:$0xff]
  %v68 = vld [vmem:[#allocation2 + $0x8] sm:$0xff]
  %v69 = vld [vmem:[#allocation2 + $0x10] sm:$0xff]
  %v70 = vld [vmem:[#allocation2 + $0x18] sm:$0xff]
  %v71 = vld [vmem:[#allocation2 + $0x20] sm:$0xff]
  %v72 = vld [vmem:[#allocation2 + $0x28] sm:$0xff]
  %v73 = vld [vmem:[#allocation2 + $0x30] sm:$0xff]
  %v74 = vld [vmem:[#allocation2 + $0x38] sm:$0xff]
  %v75 = vld [vmem:[#allocation2 + $0x40] sm:$0xff]
  %v76 = vld [vmem:[#allocation2 + $0x48] sm:$0xff]
  %v77 = vld [vmem:[#allocation2 + $0x50] sm:$0xff]
  %v78 = vld [vmem:[#allocation2 + $0x58] sm:$0xff]
  %v79 = vld [vmem:[#allocation2 + $0x60] sm:$0xff]
  %v80 = vld [vmem:[#allocation2 + $0x68] sm:$0xff]
  %v81 = vld [vmem:[#allocation2 + $0x70] sm:$0xff]
  %v82 = vld [vmem:[#allocation2 + $0x78] sm:$0xff]
  %v83 = vld [vmem:[%s1] sm:$0xf]
  %v84 = vld [vmem:[%s1 + $0x4] sm:$0xf]
  %v85 = vld [vmem:[%s1 + $0x8] sm:$0xf]
  %v86 = vld [vmem:[%s1 + $0xc] sm:$0xf]
  %v87 = vld [vmem:[%s1 + $0x10] sm:$0xf]
  %v88 = vld [vmem:[%s1 + $0x14] sm:$0xf]
  %v89 = vld [vmem:[%s1 + $0x18] sm:$0xf]
  %v90 = vld [vmem:[%s1 + $0x1c] sm:$0xf]
  %v91 = vld [vmem:[%s1 + $0x20] sm:$0xf]
  %v92 = vld [vmem:[%s1 + $0x24] sm:$0xf]
  %v93 = vld [vmem:[%s1 + $0x28] sm:$0xf]
  %v94 = vld [vmem:[%s1 + $0x2c] sm:$0xf]
  %v95 = vld [vmem:[%s1 + $0x30] sm:$0xf]
  %v96 = vld [vmem:[%s1 + $0x34] sm:$0xf]
  %v97 = vld [vmem:[%s1 + $0x38] sm:$0xf]
  %v98 = vld [vmem:[%s1 + $0x3c] sm:$0xf]
  %v115 = vunpack.c.l.b16 %v51
  %v116 = vunpack.c.l.b16 %v52
  %v117 = vunpack.c.l.b16 %v53
  %v118 = vunpack.c.l.b16 %v54
  %v119 = vunpack.c.l.b16 %v55
  %v120 = vunpack.c.l.b16 %v56
  %v121 = vunpack.c.l.b16 %v57
  %v122 = vunpack.c.l.b16 %v58
  %v123 = vunpack.c.l.b16 %v59
  %v124 = vunpack.c.l.b16 %v60
  %v125 = vunpack.c.l.b16 %v61
  %v126 = vunpack.c.l.b16 %v62
  %v127 = vunpack.c.l.b16 %v63
  %v128 = vunpack.c.l.b16 %v64
  %v129 = vunpack.c.l.b16 %v65
  %v130 = vunpack.c.l.b16 %v66
  %v131 = vpack.c.b16 %v116, %v115
  %v132 = vpack.c.b16 %v118, %v117
  %v133 = vpack.c.b16 %v120, %v119
  %v134 = vpack.c.b16 %v122, %v121
  %v135 = vpack.c.b16 %v124, %v123
  %v136 = vpack.c.b16 %v126, %v125
  %v137 = vpack.c.b16 %v128, %v127
  %v138 = vpack.c.b16 %v130, %v129
  %v163 = vunpack.c.l.b16 %v83
  %v164 = vunpack.c.l.b16 %v84
  %v165 = vunpack.c.l.b16 %v85
  %v166 = vunpack.c.l.b16 %v86
  %v167 = vunpack.c.l.b16 %v87
  %v168 = vunpack.c.l.b16 %v88
  %v169 = vunpack.c.l.b16 %v89
  %v170 = vunpack.c.l.b16 %v90
  %v171 = vunpack.c.l.b16 %v91
  %v172 = vunpack.c.l.b16 %v92
  %v173 = vunpack.c.l.b16 %v93
  %v174 = vunpack.c.l.b16 %v94
  %v175 = vunpack.c.l.b16 %v95
  %v176 = vunpack.c.l.b16 %v96
  %v177 = vunpack.c.l.b16 %v97
  %v178 = vunpack.c.l.b16 %v98
  %v179 = vpack.c.b16 %v164, %v163
  %v180 = vpack.c.b16 %v166, %v165
  %v181 = vpack.c.b16 %v168, %v167
  %v182 = vpack.c.b16 %v170, %v169
  %v183 = vpack.c.b16 %v172, %v171
  %v184 = vpack.c.b16 %v174, %v173
  %v185 = vpack.c.b16 %v176, %v175
  %v186 = vpack.c.b16 %v178, %v177
  %195 = vmatprep.subr.bf16.mxu0 0
  %196 = vmatpush1.bf16.msra.mxu0 %v186
  %197 = vmatprep.subr.bf16.mxu0 0
  %198 = vmatpush1.bf16.msra.mxu0 %v185
  %199 = vmatprep.subr.bf16.mxu0 0
  %200 = vmatpush1.bf16.msra.mxu0 %v184
  %201 = vmatprep.subr.bf16.mxu0 0
  %202 = vmatpush1.bf16.msra.mxu0 %v183
  %203 = vmatprep.subr.bf16.mxu0 0
  %204 = vmatpush1.bf16.msra.mxu0 %v182
  %205 = vmatprep.subr.bf16.mxu0 0
  %206 = vmatpush1.bf16.msra.mxu0 %v181
  %207 = vmatprep.subr.bf16.mxu0 0
  %208 = vmatpush1.bf16.msra.mxu0 %v180
  %209 = vmatprep.subr.bf16.mxu0 0
  %210 = vmatpush1.bf16.msra.mxu0 %v179
  %211 = vmatprep.subr.bf16.mxu0 0
  %212 = vmatpush2.bf16.msra.mxu0 0
  %213 = vmatprep.subr.bf16.mxu0 0
  %214 = vmatpush2.bf16.msra.mxu0 0
  %215 = vmatprep.subr.bf16.mxu0 0
  %216 = vmatpush2.bf16.msra.mxu0 0
  %217 = vmatprep.subr.bf16.mxu0 0
  %218 = vmatpush2.bf16.msra.mxu0 0
  %219 = vmatprep.subr.bf16.mxu0 0
  %220 = vmatpush2.bf16.msra.mxu0 0
  %221 = vmatprep.subr.bf16.mxu0 0
  %222 = vmatpush2.bf16.msra.mxu0 0
  %223 = vmatprep.subr.bf16.mxu0 0
  %224 = vmatpush2.bf16.msra.mxu0 0
  %225 = vmatprep.subr.bf16.mxu0 0
  %226 = vmatpush2.bf16.msra.mxu0 0
  %227 = vmatprep.mubr.bf16.mxu0 0
  %228 = vmatmul.mubr.bf16.gmra.mxu0 %v131
  %v229 = vpop.f32.mrf.mxu0
  %v230 = vadd.f32 0.0, %v229
  %v231 = vpop.f32.mrf.mxu0
  %v232 = vpop.f32.mrf.mxu0
  %v233 = vadd.f32 0.0, %v232
  %v234 = vpop.f32.mrf.mxu0
  %235 = vmatprep.mubr.bf16.mxu0 0
  %236 = vmatmul.mubr.bf16.gmra.mxu0 %v132
  %v237 = vpop.f32.mrf.mxu0
  %v238 = vadd.f32 0.0, %v237
  %v239 = vpop.f32.mrf.mxu0
  %v240 = vpop.f32.mrf.mxu0
  %v241 = vadd.f32 0.0, %v240
  %v242 = vpop.f32.mrf.mxu0
  %243 = vmatprep.mubr.bf16.mxu0 0
  %244 = vmatmul.mubr.bf16.gmra.mxu0 %v133
  %v245 = vpop.f32.mrf.mxu0
  %v246 = vadd.f32 0.0, %v245
  %v247 = vpop.f32.mrf.mxu0
  %v248 = vpop.f32.mrf.mxu0
  %v249 = vadd.f32 0.0, %v248
  %v250 = vpop.f32.mrf.mxu0
  %251 = vmatprep.mubr.bf16.mxu0 0
  %252 = vmatmul.mubr.bf16.gmra.mxu0 %v134
  %v253 = vpop.f32.mrf.mxu0
  %v254 = vadd.f32 0.0, %v253
  %v255 = vpop.f32.mrf.mxu0
  %v256 = vpop.f32.mrf.mxu0
  %v257 = vadd.f32 0.0, %v256
  %v258 = vpop.f32.mrf.mxu0
  %259 = vmatprep.mubr.bf16.mxu0 0
  %260 = vmatmul.mubr.bf16.gmra.mxu0 %v135
  %v261 = vpop.f32.mrf.mxu0
  %v262 = vadd.f32 0.0, %v261
  %v263 = vpop.f32.mrf.mxu0
  %v264 = vpop.f32.mrf.mxu0
  %v265 = vadd.f32 0.0, %v264
  %v266 = vpop.f32.mrf.mxu0
  %267 = vmatprep.mubr.bf16.mxu0 0
  %268 = vmatmul.mubr.bf16.gmra.mxu0 %v136
  %v269 = vpop.f32.mrf.mxu0
  %v270 = vadd.f32 0.0, %v269
  %v271 = vpop.f32.mrf.mxu0
  %v272 = vpop.f32.mrf.mxu0
  %v273 = vadd.f32 0.0, %v272
  %v274 = vpop.f32.mrf.mxu0
  %275 = vmatprep.mubr.bf16.mxu0 0
  %276 = vmatmul.mubr.bf16.gmra.mxu0 %v137
  %v277 = vpop.f32.mrf.mxu0
  %v278 = vadd.f32 0.0, %v277
  %v279 = vpop.f32.mrf.mxu0
  %v280 = vpop.f32.mrf.mxu0
  %v281 = vadd.f32 0.0, %v280
  %v282 = vpop.f32.mrf.mxu0
  %283 = vmatprep.mubr.bf16.mxu0 0
  %284 = vmatmul.mubr.bf16.gmra.mxu0 %v138
  %v285 = vpop.f32.mrf.mxu0
  %v286 = vadd.f32 0.0, %v285
  %v287 = vpop.f32.mrf.mxu0
  %v288 = vpop.f32.mrf.mxu0
  %v289 = vadd.f32 0.0, %v288
  %v290 = vpop.f32.mrf.mxu0
  %291 = vdwg.mxu0
  %v292 = vadd.f32 %v67, %v230
  %v293 = vadd.f32 %v68, %v233
  %v294 = vadd.f32 %v69, %v238
  %v295 = vadd.f32 %v70, %v241
  %v296 = vadd.f32 %v71, %v246
  %v297 = vadd.f32 %v72, %v249
  %v298 = vadd.f32 %v73, %v254
  %v299 = vadd.f32 %v74, %v257
  %v300 = vadd.f32 %v75, %v262
  %v301 = vadd.f32 %v76, %v265
  %v302 = vadd.f32 %v77, %v270
  %v303 = vadd.f32 %v78, %v273
  %v304 = vadd.f32 %v79, %v278
  %v305 = vadd.f32 %v80, %v281
  %v306 = vadd.f32 %v81, %v286
  %v307 = vadd.f32 %v82, %v289
  %308 = vst [vmem:[#allocation2] sm:$0xff] %v292
  %309 = vst [vmem:[#allocation2 + $0x8] sm:$0xff] %v293
  %310 = vst [vmem:[#allocation2 + $0x10] sm:$0xff] %v294
  %311 = vst [vmem:[#allocation2 + $0x18] sm:$0xff] %v295
  %312 = vst [vmem:[#allocation2 + $0x20] sm:$0xff] %v296
  %313 = vst [vmem:[#allocation2 + $0x28] sm:$0xff] %v297
  %314 = vst [vmem:[#allocation2 + $0x30] sm:$0xff] %v298
  %315 = vst [vmem:[#allocation2 + $0x38] sm:$0xff] %v299
  %316 = vst [vmem:[#allocation2 + $0x40] sm:$0xff] %v300
  %317 = vst [vmem:[#allocation2 + $0x48] sm:$0xff] %v301
  %318 = vst [vmem:[#allocation2 + $0x50] sm:$0xff] %v302
  %319 = vst [vmem:[#allocation2 + $0x58] sm:$0xff] %v303
  %320 = vst [vmem:[#allocation2 + $0x60] sm:$0xff] %v304
  %321 = vst [vmem:[#allocation2 + $0x68] sm:$0xff] %v305
  %322 = vst [vmem:[#allocation2 + $0x70] sm:$0xff] %v306
  %323 = vst [vmem:[#allocation2 + $0x78] sm:$0xff] %v307
  // Predicated region
  $region18: #{_lambda_.70} parent=0 // pred_check
    %p324 = pneg %p15
  $region19: #{_lambda_.70} parent=0 // pred_check_branch
    %326 = sbr.rel (%p324) target = $region21
  $region20: #{_lambda_.70} parent=0 // pred_region
    %v327 = vld [vmem:[#allocation2] sm:$0xff]
    %v328 = vld [vmem:[#allocation2 + $0x8] sm:$0xff]
    %v329 = vld [vmem:[#allocation2 + $0x10] sm:$0xff]
    %v330 = vld [vmem:[#allocation2 + $0x18] sm:$0xff]
    %v331 = vld [vmem:[#allocation2 + $0x20] sm:$0xff]
    %v332 = vld [vmem:[#allocation2 + $0x28] sm:$0xff]
    %v333 = vld [vmem:[#allocation2 + $0x30] sm:$0xff]
    %v334 = vld [vmem:[#allocation2 + $0x38] sm:$0xff]
    %v335 = vld [vmem:[#allocation2 + $0x40] sm:$0xff]
    %v336 = vld [vmem:[#allocation2 + $0x48] sm:$0xff]
    %v337 = vld [vmem:[#allocation2 + $0x50] sm:$0xff]
    %v338 = vld [vmem:[#allocation2 + $0x58] sm:$0xff]
    %v339 = vld [vmem:[#allocation2 + $0x60] sm:$0xff]
    %v340 = vld [vmem:[#allocation2 + $0x68] sm:$0xff]
    %v341 = vld [vmem:[#allocation2 + $0x70] sm:$0xff]
    %v342 = vld [vmem:[#allocation2 + $0x78] sm:$0xff]
    %v343 = vld [vmem:[%s2] sm:$0x1]
    %v345 = vlaneseq
    %v346 = vshrl.u32 %v345, 7
    %v347 = vsub.s32 0, %v346
    %v348 = vrot.slane %v343, %v347
    %v350 = vadd.f32 %v327, %v348
    %v351 = vadd.f32 %v328, %v348
    %v352 = vadd.f32 %v329, %v348
    %v353 = vadd.f32 %v330, %v348
    %v354 = vadd.f32 %v331, %v348
    %v355 = vadd.f32 %v332, %v348
    %v356 = vadd.f32 %v333, %v348
    %v357 = vadd.f32 %v334, %v348
    %v358 = vadd.f32 %v335, %v348
    %v359 = vadd.f32 %v336, %v348
    %v360 = vadd.f32 %v337, %v348
    %v361 = vadd.f32 %v338, %v348
    %v362 = vadd.f32 %v339, %v348
    %v363 = vadd.f32 %v340, %v348
    %v364 = vadd.f32 %v341, %v348
    %v365 = vadd.f32 %v342, %v348
    %366 = vst [vmem:[%s3] sm:$0xff] %v350
    %367 = vst [vmem:[%s3 + $0x8] sm:$0xff] %v351
    %368 = vst [vmem:[%s3 + $0x10] sm:$0xff] %v352
    %369 = vst [vmem:[%s3 + $0x18] sm:$0xff] %v353
    %370 = vst [vmem:[%s3 + $0x20] sm:$0xff] %v354
    %371 = vst [vmem:[%s3 + $0x28] sm:$0xff] %v355
    %372 = vst [vmem:[%s3 + $0x30] sm:$0xff] %v356
    %373 = vst [vmem:[%s3 + $0x38] sm:$0xff] %v357
    %374 = vst [vmem:[%s3 + $0x40] sm:$0xff] %v358
    %375 = vst [vmem:[%s3 + $0x48] sm:$0xff] %v359
    %376 = vst [vmem:[%s3 + $0x50] sm:$0xff] %v360
    %377 = vst [vmem:[%s3 + $0x58] sm:$0xff] %v361
    %378 = vst [vmem:[%s3 + $0x60] sm:$0xff] %v362
    %379 = vst [vmem:[%s3 + $0x68] sm:$0xff] %v363
    %380 = vst [vmem:[%s3 + $0x70] sm:$0xff] %v364
    %381 = vst [vmem:[%s3 + $0x78] sm:$0xff] %v365
  $region21: #{_lambda_.70} parent=0 // pred_fallthru
    _
  // Predicated region
  $region22: #{_lambda_.70} parent=0 // pred_check
    _
  $region23: #{_lambda_.70} parent=0 // pred_check_branch
    %383 = sbr.rel (0) target = $region25
  $region24: #{_lambda_.70} parent=0 // pred_region
    _
  $region25: #{_lambda_.70} parent=0 // pred_fallthru
    _
  // Predicated region
  $region26: #{_lambda_.70} parent=0 // pred_check
    _
  $region27: #{_lambda_.70} parent=0 // pred_check_branch
    %385 = sbr.rel (0) target = $region29
  $region28: #{_lambda_.70} parent=0 // pred_region
    _
  $region29: #{_lambda_.70} parent=0 // pred_fallthru
    _

// kernel: tile.138
$region0: #{tile.138}
  #allocation0 [shape = 's32[1]{0}', space=sflag, size = 0x4, scoped, tag = 'scoped memory for tile.138']
  %s0 = inlined_call_operand.vmem [shape: f32[8], index: 0, kind: input, shape index: {}]
  %s1 = inlined_call_operand.vmem [shape: f32[16,8], index: 1, kind: output, shape index: {}]
  // Predicated region
  $region2: #{tile.138} parent=0 // pred_check
    _
  $region3: #{tile.138} parent=0 // pred_check_branch
    %3 = sbr.rel (0) target = $region5
  $region4: #{tile.138} parent=0 // pred_region
    _
  $region5: #{tile.138} parent=0 // pred_fallthru
    _
  %v4 = vld [vmem:[%s0] ss:$0 sm:$0xff]
  %5 = vst [vmem:[%s1] sm:$0xff] %v4
  %s6 = scalar_lea.vmem %s1, 8
  %7 = vst [vmem:[%s6] sm:$0xff] %v4

// kernel: tile.139
$region0: #{tile.139}
  %s0 = inlined_call_operand.vmem [shape: f32[16,8], index: 0, kind: input, shape index: {}]
  %s1 = inlined_call_operand.vmem [shape: f32[1,128], index: 1, kind: output, shape index: {}]
  $region1: #{tile.139} parent=0
    #allocation0 [shape = 'u8[4096]{0}', space=vmem, size = 0x1000, scoped, tag = 'scoped mem for output reshape']
    %v2 = vld [vmem:[%s0] sm:$0x1]
    %vm3 = vcmask 64512
    %4 = vst.msk [vmem:[#allocation0] sm:$0x1] %vm3, %v2
    %s5 = scalar_lea.vmem %s0, 15
    %v6 = vld [vmem:[%s5] sm:$0x1]
    %7 = vrot.lane.b32.xlu0 %v6, 120
    %v8 = vpop.permute.xlu0 %7
    %vm9 = vcmask 1048512
    %10 = vst.msk [vmem:[#allocation0] sm:$0x1] %vm9, %v8
    %s11 = scalar_lea.vmem %s0, 14
    %v12 = vld [vmem:[%s11] sm:$0x1]
    %13 = vrot.lane.b32.xlu0 %v12, 112
    %v14 = vpop.permute.xlu0 %13
    %vm15 = vcmask 982912
    %16 = vst.msk [vmem:[#allocation0] sm:$0x1] %vm15, %v14
    %s17 = scalar_lea.vmem %s0, 13
    %v18 = vld [vmem:[%s17] sm:$0x1]
    %19 = vrot.lane.b32.xlu0 %v18, 104
    %v20 = vpop.permute.xlu0 %19
    %vm21 = vcmask 917312
    %22 = vst.msk [vmem:[#allocation0] sm:$0x1] %vm21, %v20
    %s23 = scalar_lea.vmem %s0, 12
    %v24 = vld [vmem:[%s23] sm:$0x1]
    %25 = vrot.lane.b32.xlu0 %v24, 96
    %v26 = vpop.permute.xlu0 %25
    %vm27 = vcmask 851712
    %28 = vst.msk [vmem:[#allocation0] sm:$0x1] %vm27, %v26
    %s29 = scalar_lea.vmem %s0, 11
    %v30 = vld [vmem:[%s29] sm:$0x1]
    %31 = vrot.lane.b32.xlu0 %v30, 88
    %v32 = vpop.permute.xlu0 %31
    %vm33 = vcmask 786112
    %34 = vst.msk [vmem:[#allocation0] sm:$0x1] %vm33, %v32
    %s35 = scalar_lea.vmem %s0, 10
    %v36 = vld [vmem:[%s35] sm:$0x1]
    %37 = vrot.lane.b32.xlu0 %v36, 80
    %v38 = vpop.permute.xlu0 %37
    %vm39 = vcmask 720512
    %40 = vst.msk [vmem:[#allocation0] sm:$0x1] %vm39, %v38
    %s41 = scalar_lea.vmem %s0, 9
    %v42 = vld [vmem:[%s41] sm:$0x1]
    %43 = vrot.lane.b32.xlu0 %v42, 72
    %v44 = vpop.permute.xlu0 %43
    %vm45 = vcmask 654912
    %46 = vst.msk [vmem:[#allocation0] sm:$0x1] %vm45, %v44
    %s47 = scalar_lea.vmem %s0, 8
    %v48 = vld [vmem:[%s47] sm:$0x1]
    %49 = vrot.lane.b32.xlu0 %v48, 64
    %v50 = vpop.permute.xlu0 %49
    %vm51 = vcmask 589312
    %52 = vst.msk [vmem:[#allocation0] sm:$0x1] %vm51, %v50
    %s53 = scalar_lea.vmem %s0, 7
    %v54 = vld [vmem:[%s53] sm:$0x1]
    %55 = vrot.lane.b32.xlu0 %v54, 56
    %v56 = vpop.permute.xlu0 %55
    %vm57 = vcmask 523712
    %58 = vst.msk [vmem:[#allocation0] sm:$0x1] %vm57, %v56
    %s59 = scalar_lea.vmem %s0, 6
    %v60 = vld [vmem:[%s59] sm:$0x1]
    %61 = vrot.lane.b32.xlu0 %v60, 48
    %v62 = vpop.permute.xlu0 %61
    %vm63 = vcmask 458112
    %64 = vst.msk [vmem:[#allocation0] sm:$0x1] %vm63, %v62
    %s65 = scalar_lea.vmem %s0, 5
    %v66 = vld [vmem:[%s65] sm:$0x1]
    %67 = vrot.lane.b32.xlu0 %v66, 40
    %v68 = vpop.permute.xlu0 %67
    %vm69 = vcmask 392512
    %70 = vst.msk [vmem:[#allocation0] sm:$0x1] %vm69, %v68
    %s71 = scalar_lea.vmem %s0, 4
    %v72 = vld [vmem:[%s71] sm:$0x1]
    %73 = vrot.lane.b32.xlu0 %v72, 32
    %v74 = vpop.permute.xlu0 %73
    %vm75 = vcmask 326912
    %76 = vst.msk [vmem:[#allocation0] sm:$0x1] %vm75, %v74
    %s77 = scalar_lea.vmem %s0, 3
    %v78 = vld [vmem:[%s77] sm:$0x1]
    %79 = vrot.lane.b32.xlu0 %v78, 24
    %v80 = vpop.permute.xlu0 %79
    %vm81 = vcmask 261312
    %82 = vst.msk [vmem:[#allocation0] sm:$0x1] %vm81, %v80
    %s83 = scalar_lea.vmem %s0, 2
    %v84 = vld [vmem:[%s83] sm:$0x1]
    %85 = vrot.lane.b32.xlu0 %v84, 16
    %v86 = vpop.permute.xlu0 %85
    %vm87 = vcmask 195712
    %88 = vst.msk [vmem:[#allocation0] sm:$0x1] %vm87, %v86
    %s89 = scalar_lea.vmem %s0, 1
    %v90 = vld [vmem:[%s89] sm:$0x1]
    %91 = vrot.lane.b32.xlu0 %v90, 8
    %v92 = vpop.permute.xlu0 %91
    %vm93 = vcmask 130112
    %94 = vst.msk [vmem:[#allocation0] sm:$0x1] %vm93, %v92
    %s96 = sshll.u32 1, 1
    %s97 = ssub.s32 %s96, 1
    %v99 = vld [vmem:[#allocation0] sm:%s97]
    %s100 = sshll.u32 1, 1
    %s101 = ssub.s32 %s100, 1
    %102 = vst [vmem:[%s1] sm:%s101] %v99

// kernel: _lambda_.72
$region0: #{_lambda_.72}
  #allocation0 [shape = 'u32[]', space=smem, size = 0x4, offset = 0x4, fixed_abs, tag = 'smem constant byte address 0x4 - core index']
  #allocation1 [shape = 'u32[144,128]{1,0:T(1,128)}', space=vmem, size = 0x12000, scoped, tag = 'internal scratch']
  #allocation2 [shape = 'f32[1,128]{1,0:T(1,128)}', space=vmem, size = 0x200, scoped, tag = 'scratch operand']
  #allocation3 [shape = 'f32[1,128]{1,0:T(1,128)}', space=vmem, size = 0x200, scoped, tag = 'scratch operand']
  %s0 = inlined_call_operand.vmem [shape: f32[32,128], index: 0, kind: input, shape index: {}]
  %s1 = inlined_call_operand.vmem [shape: f32[1,128], index: 1, kind: output, shape index: {0}]
  %s2 = inlined_call_operand.vmem [shape: f32[1,128], index: 2, kind: output, shape index: {1}]
  %3 = xla_tuple %s1, %s2
  %s4 = sld [smem:[#allocation0]]
  $region30: #{_lambda_.72} parent=0
    _
  %s6 = ssub.s32 1, %s4
  %s7 = scalar_select 0, %s6, %s4
  // Predicated region
  $region2: #{_lambda_.72} parent=0 // pred_check
    _
  $region3: #{_lambda_.72} parent=0 // pred_check_branch
    %9 = sbr.rel (0) target = $region5
  $region4: #{_lambda_.72} parent=0 // pred_region
    _
  $region5: #{_lambda_.72} parent=0 // pred_fallthru
    _
  %p10 = scmp.eq.s32.totalorder 0, 0
  // Predicated region
  $region6: #{_lambda_.72} parent=0 // pred_check
    %p11 = pneg %p10
  $region7: #{_lambda_.72} parent=0 // pred_check_branch
    %13 = sbr.rel (%p11) target = $region9
  $region8: #{_lambda_.72} parent=0 // pred_region
    %14 = vst [vmem:[#allocation2] sm:$0x1] 0.0
    %15 = vst [vmem:[#allocation3] sm:$0x1] 0.0
  $region9: #{_lambda_.72} parent=0 // pred_fallthru
    _
  %v16 = vld [vmem:[%s0] sm:$0xff]
  %v17 = vld [vmem:[%s0 + $0x8] sm:$0xff]
  %v18 = vld [vmem:[%s0 + $0x10] sm:$0xff]
  %v19 = vld [vmem:[%s0 + $0x18] sm:$0xff]
  %v20 = vld [vmem:[#allocation2] sm:$0x1]
  %v21 = vadd.f32 %v16, %v17
  %v22 = vadd.f32 %v21, %v18
  %v23 = vadd.f32 %v22, %v19
  %v24 = vrot.slane %v23, 4
  %v25 = vadd.f32 %v23, %v24
  %v26 = vrot.slane %v25, 2
  %v27 = vadd.f32 %v25, %v26
  %v28 = vrot.slane %v27, 1
  %v29 = vadd.f32 %v27, %v28
  %v30 = vadd.f32 %v20, %v29
  %31 = vst [vmem:[#allocation2] sm:$0x1] %v30
  %v32 = vld [vmem:[#allocation3] sm:$0x1]
  %v33 = vmul.f32 %v16, %v16
  %v34 = vmul.f32 %v17, %v17
  %v35 = vmul.f32 %v18, %v18
  %v36 = vmul.f32 %v19, %v19
  %v37 = vadd.f32 %v33, %v34
  %v38 = vadd.f32 %v37, %v35
  %v39 = vadd.f32 %v38, %v36
  %v40 = vrot.slane %v39, 4
  %v41 = vadd.f32 %v39, %v40
  %v42 = vrot.slane %v41, 2
  %v43 = vadd.f32 %v41, %v42
  %v44 = vrot.slane %v43, 1
  %v45 = vadd.f32 %v43, %v44
  %v46 = vadd.f32 %v32, %v45
  %47 = vst [vmem:[#allocation3] sm:$0x1] %v46
  // Predicated region
  $region10: #{_lambda_.72} parent=0 // pred_check
    %p48 = pneg %p10
  $region11: #{_lambda_.72} parent=0 // pred_check_branch
    %50 = sbr.rel (%p48) target = $region13
  $region12: #{_lambda_.72} parent=0 // pred_region
    %v51 = vld [vmem:[#allocation2] sm:$0x1]
    %52 = vst [vmem:[%s1] sm:$0x1] %v51
    %v53 = vld [vmem:[#allocation3] sm:$0x1]
    %54 = vst [vmem:[%s2] sm:$0x1] %v53
  $region13: #{_lambda_.72} parent=0 // pred_fallthru
    _
  // Predicated region
  $region14: #{_lambda_.72} parent=0 // pred_check
    _
  $region15: #{_lambda_.72} parent=0 // pred_check_branch
    %56 = sbr.rel (0) target = $region17
  $region16: #{_lambda_.72} parent=0 // pred_region
    _
  $region17: #{_lambda_.72} parent=0 // pred_fallthru
    _
  // Predicated region
  $region18: #{_lambda_.72} parent=0 // pred_check
    _
  $region19: #{_lambda_.72} parent=0 // pred_check_branch
    %58 = sbr.rel (0) target = $region21
  $region20: #{_lambda_.72} parent=0 // pred_region
    _
  $region21: #{_lambda_.72} parent=0 // pred_fallthru
    _
  // Predicated region
  $region22: #{_lambda_.72} parent=0 // pred_check
    _
  $region23: #{_lambda_.72} parent=0 // pred_check_branch
    %60 = sbr.rel (0) target = $region25
  $region24: #{_lambda_.72} parent=0 // pred_region
    _
  $region25: #{_lambda_.72} parent=0 // pred_fallthru
    _
  // Predicated region
  $region26: #{_lambda_.72} parent=0 // pred_check
    _
  $region27: #{_lambda_.72} parent=0 // pred_check_branch
    %62 = sbr.rel (0) target = $region29
  $region28: #{_lambda_.72} parent=0 // pred_region
    _
  $region29: #{_lambda_.72} parent=0 // pred_fallthru
    _

// kernel: _lambda_.73
$region0: #{_lambda_.73}
  #allocation0 [shape = 'u32[]', space=smem, size = 0x4, offset = 0x4, fixed_abs, tag = 'smem constant byte address 0x4 - core index']
  #allocation1 [shape = 'u32[144,128]{1,0:T(1,128)}', space=vmem, size = 0x12000, scoped, tag = 'internal scratch']
  %s0 = inlined_call_operand.vmem [shape: f32[32,128], index: 0, kind: input, shape index: {}]
  %s1 = inlined_call_operand.vmem [shape: f32[1,128], index: 1, kind: input, shape index: {}]
  %s2 = inlined_call_operand.vmem [shape: f32[1,128], index: 2, kind: input, shape index: {}]
  %s3 = inlined_call_operand.vmem [shape: f32[32,128], index: 3, kind: output, shape index: {}]
  %s4 = sld [smem:[#allocation0]]
  $region22: #{_lambda_.73} parent=0
    _
  %s6 = ssub.s32 1, %s4
  %s7 = scalar_select 0, %s6, %s4
  // Predicated region
  $region2: #{_lambda_.73} parent=0 // pred_check
    _
  $region3: #{_lambda_.73} parent=0 // pred_check_branch
    %9 = sbr.rel (0) target = $region5
  $region4: #{_lambda_.73} parent=0 // pred_region
    _
  $region5: #{_lambda_.73} parent=0 // pred_fallthru
    _
  // Predicated region
  $region6: #{_lambda_.73} parent=0 // pred_check
    _
  $region7: #{_lambda_.73} parent=0 // pred_check_branch
    %11 = sbr.rel (0) target = $region9
  $region8: #{_lambda_.73} parent=0 // pred_region
    _
  $region9: #{_lambda_.73} parent=0 // pred_fallthru
    _
  // Predicated region
  $region10: #{_lambda_.73} parent=0 // pred_check
    _
  $region11: #{_lambda_.73} parent=0 // pred_check_branch
    %13 = sbr.rel (0) target = $region13
  $region12: #{_lambda_.73} parent=0 // pred_region
    _
  $region13: #{_lambda_.73} parent=0 // pred_fallthru
    _
  %v14 = vld [vmem:[%s0] sm:$0xff]
  %v15 = vld [vmem:[%s0 + $0x8] sm:$0xff]
  %v16 = vld [vmem:[%s0 + $0x10] sm:$0xff]
  %v17 = vld [vmem:[%s0 + $0x18] sm:$0xff]
  %v18 = vld [vmem:[%s1] sm:$0x1]
  %v20 = vlaneseq
  %v21 = vshrl.u32 %v20, 7
  %v22 = vsub.s32 0, %v21
  %v23 = vrot.slane %v18, %v22
  %v25 = vsub.f32 %v14, %v23
  %v26 = vsub.f32 %v15, %v23
  %v27 = vsub.f32 %v16, %v23
  %v28 = vsub.f32 %v17, %v23
  %v29 = vld [vmem:[%s2] sm:$0x1]
  %v31 = vlaneseq
  %v32 = vshrl.u32 %v31, 7
  %v33 = vsub.s32 0, %v32
  %v34 = vrot.slane %v29, %v33
  %v36 = vmul.f32 %v25, %v34
  %v37 = vmul.f32 %v26, %v34
  %v38 = vmul.f32 %v27, %v34
  %v39 = vmul.f32 %v28, %v34
  %40 = vst [vmem:[%s3] sm:$0xff] %v36
  %41 = vst [vmem:[%s3 + $0x8] sm:$0xff] %v37
  %42 = vst [vmem:[%s3 + $0x10] sm:$0xff] %v38
  %43 = vst [vmem:[%s3 + $0x18] sm:$0xff] %v39
  // Predicated region
  $region14: #{_lambda_.73} parent=0 // pred_check
    _
  $region15: #{_lambda_.73} parent=0 // pred_check_branch
    %45 = sbr.rel (0) target = $region17
  $region16: #{_lambda_.73} parent=0 // pred_region
    _
  $region17: #{_lambda_.73} parent=0 // pred_fallthru
    _
  // Predicated region
  $region18: #{_lambda_.73} parent=0 // pred_check
    _
  $region19: #{_lambda_.73} parent=0 // pred_check_branch
    %47 = sbr.rel (0) target = $region21
  $region20: #{_lambda_.73} parent=0 // pred_region
    _
  $region21: #{_lambda_.73} parent=0 // pred_fallthru
    _

// kernel: _lambda_.76
$region0: #{_lambda_.76}
  #allocation0 [shape = 'u32[]', space=smem, size = 0x4, offset = 0x4, fixed_abs, tag = 'smem constant byte address 0x4 - core index']
  #allocation1 [shape = 'u32[144,128]{1,0:T(1,128)}', space=vmem, size = 0x12000, scoped, tag = 'internal scratch']
  #allocation2 [shape = 'f32[256,128]{1,0:T(8,128)}', space=vmem, size = 0x20000, scoped, tag = 'scratch operand']
  %s0 = inlined_call_operand.vmem [shape: bf16[512,128], index: 0, kind: input, shape index: {}]
  %s1 = inlined_call_operand.vmem [shape: bf16[128,128], index: 1, kind: input, shape index: {}]
  %s2 = inlined_call_operand.vmem [shape: f32[1,128], index: 2, kind: input, shape index: {}]
  %s3 = inlined_call_operand.vmem [shape: f32[512,128], index: 3, kind: output, shape index: {}]
  %s4 = sld [smem:[#allocation0]]
  $region53: #{_lambda_.76} parent=0
    _
  %s6 = ssub.s32 1, %s4
  %s7 = scalar_select 0, %s6, %s4
  loop: start=0, step=1, limit=4
  $region2: #{_lambda_.76} parent=0 // loop_pre_header
    _
  $region3: #{_lambda_.76} parent=0 // loop_header
    %s9 = sphi 0, %s13
    %p10 = scmp.ge.s32.totalorder %s9, 4
    %s16 = sphi 0, %s35
    %s17 = sphi 0, %s31
    %s18 = sphi 0, %s27
    %s19 = sphi 0, %s16
    %s20 = sphi 0, %s17
    %s21 = sphi 0, %s18
    %s22 = sphi 0, %s19
    %s23 = sphi 0, %s20
    %s24 = sphi 0, %s21
    %s40 = sphi 0, %s42
    %s43 = sphi 0, %s40
    %s44 = sphi 0, %s43
    %s60 = sphi 0, %s44
    %s68 = sphi 0, %s70
    %s71 = sphi 0, %s68
    %s72 = sphi 0, %s71
    %s88 = sphi 0, %s72
    %s94 = sphi 0, %s96
    %s97 = sphi 0, %s94
    %s98 = sphi 0, %s97
    %s114 = sphi 0, %s98
    %s122 = sphi 0, %s124
    %s125 = sphi 0, %s122
    %s126 = sphi 0, %s125
    %s142 = sphi 0, %s126
  $region4: #{_lambda_.76} parent=0 // loop_header_branch
    %12 = sbr.rel (%p10) target = $region8
  $region5: #{_lambda_.76} parent=0 // loop_body
    %s14 = ssub.s32 %s9, 1
    %s15 = ssub.s32 %s9, 2
    %s25 = sadd.s32 1, %s18
    %p26 = scmp.ge.s32.totalorder %s25, 1
    %s27 = scalar_select %p26, 0, %s25
    %s28 = sadd.s32 1, %s17
    %s29 = scalar_select %p26, %s28, %s17
    %p30 = scmp.ge.s32.totalorder %s29, 1
    %s31 = scalar_select %p30, 0, %s29
    %s32 = sadd.s32 1, %s16
    %s33 = scalar_select %p30, %s32, %s16
    %p34 = scmp.ge.s32.totalorder %s33, 2
    %s35 = scalar_select %p34, 0, %s33
    %s36 = ssub.s32 %s16, %s35
    %s37 = ssub.s32 %s18, %s27
    %s38 = sor.u32 %s36, %s37
    %p39 = scmp.eq.s32.totalorder %s38, 0
    %s41 = sadd.s32 %s40, 1
    %s42 = scalar_select %p39, %s40, %s41
    %p45 = pneg %p39
    %p46 = scmp.eq.s32.totalorder %s9, 1
    %p47 = por %p45, %p46
    %p48 = scmp.ne.s32.totalorder %s40, %s43
    %p49 = scmp.eq.s32.totalorder %s9, 0
    %p50 = por %p48, %p49
    %p51 = scmp.ne.s32.totalorder %s40, %s43
    %p52 = scmp.eq.s32.totalorder %s14, 1
    %p53 = por %p51, %p52
    %p54 = scmp.ne.s32.totalorder %s43, %s44
    %p55 = scmp.eq.s32.totalorder %s14, 0
    %p56 = por %p54, %p55
    %p57 = scmp.ne.s32.totalorder %s43, %s44
    %p58 = scmp.eq.s32.totalorder %s15, 1
    %p59 = por %p57, %p58
    %p61 = scmp.ne.s32.totalorder %s44, %s60
    %p62 = scmp.eq.s32.totalorder %s15, 0
    %p63 = por %p61, %p62
    %s64 = ssub.s32 %s18, %s27
    %s65 = ssub.s32 %s17, %s31
    %s66 = sor.u32 %s64, %s65
    %p67 = scmp.eq.s32.totalorder %s66, 0
    %s69 = sadd.s32 %s68, 1
    %s70 = scalar_select %p67, %s68, %s69
    %p73 = pneg %p67
    %p74 = scmp.eq.s32.totalorder %s9, 1
    %p75 = por %p73, %p74
    %p76 = scmp.ne.s32.totalorder %s68, %s71
    %p77 = scmp.eq.s32.totalorder %s9, 0
    %p78 = por %p76, %p77
    %p79 = scmp.ne.s32.totalorder %s68, %s71
    %p80 = scmp.eq.s32.totalorder %s14, 1
    %p81 = por %p79, %p80
    %p82 = scmp.ne.s32.totalorder %s71, %s72
    %p83 = scmp.eq.s32.totalorder %s14, 0
    %p84 = por %p82, %p83
    %p85 = scmp.ne.s32.totalorder %s71, %s72
    %p86 = scmp.eq.s32.totalorder %s15, 1
    %p87 = por %p85, %p86
    %p89 = scmp.ne.s32.totalorder %s72, %s88
    %p90 = scmp.eq.s32.totalorder %s15, 0
    %p91 = por %p89, %p90
    %s92 = ssub.s32 %s17, %s31
    %p93 = scmp.eq.s32.totalorder %s92, 0
    %s95 = sadd.s32 %s94, 1
    %s96 = scalar_select %p93, %s94, %s95
    %p99 = pneg %p93
    %p100 = scmp.eq.s32.totalorder %s9, 1
    %p101 = por %p99, %p100
    %p102 = scmp.ne.s32.totalorder %s94, %s97
    %p103 = scmp.eq.s32.totalorder %s9, 0
    %p104 = por %p102, %p103
    %p105 = scmp.ne.s32.totalorder %s94, %s97
    %p106 = scmp.eq.s32.totalorder %s14, 1
    %p107 = por %p105, %p106
    %p108 = scmp.ne.s32.totalorder %s97, %s98
    %p109 = scmp.eq.s32.totalorder %s14, 0
    %p110 = por %p108, %p109
    %p111 = scmp.ne.s32.totalorder %s97, %s98
    %p112 = scmp.eq.s32.totalorder %s15, 1
    %p113 = por %p111, %p112
    %p115 = scmp.ne.s32.totalorder %s98, %s114
    %p116 = scmp.eq.s32.totalorder %s15, 0
    %p117 = por %p115, %p116
    %s118 = ssub.s32 %s16, %s35
    %s119 = ssub.s32 %s17, %s31
    %s120 = sor.u32 %s118, %s119
    %p121 = scmp.eq.s32.totalorder %s120, 0
    %s123 = sadd.s32 %s122, 1
    %s124 = scalar_select %p121, %s122, %s123
    %p127 = pneg %p121
    %p128 = scmp.eq.s32.totalorder %s9, 1
    %p129 = por %p127, %p128
    %p130 = scmp.ne.s32.totalorder %s122, %s125
    %p131 = scmp.eq.s32.totalorder %s9, 0
    %p132 = por %p130, %p131
    %p133 = scmp.ne.s32.totalorder %s122, %s125
    %p134 = scmp.eq.s32.totalorder %s14, 1
    %p135 = por %p133, %p134
    %p136 = scmp.ne.s32.totalorder %s125, %s126
    %p137 = scmp.eq.s32.totalorder %s14, 0
    %p138 = por %p136, %p137
    %p139 = scmp.ne.s32.totalorder %s125, %s126
    %p140 = scmp.eq.s32.totalorder %s15, 1
    %p141 = por %p139, %p140
    %p143 = scmp.ne.s32.totalorder %s126, %s142
    %p144 = scmp.eq.s32.totalorder %s15, 0
    %p145 = por %p143, %p144
    %p146 = scmp.le.s32.totalorder 1, %s9
    %p147 = scmp.lt.s32.totalorder %s9, 3
    %p148 = pnand %p146, %p147
    %p149 = pneg %p148
    // Predicated region
    $region9: #{_lambda_.76} parent=5 // pred_check
      _
    $region10: #{_lambda_.76} parent=5 // pred_check_branch
      %151 = sbr.rel (%p148) target = $region12
    $region11: #{_lambda_.76} parent=5 // pred_region
      %s152 = ssub.s32 %s9, 1
      // Predicated region
      $region13: #{_lambda_.76} parent=11 // pred_check
        %p153 = pneg %p84
      $region14: #{_lambda_.76} parent=11 // pred_check_branch
        %155 = sbr.rel (%p153) target = $region16
      $region15: #{_lambda_.76} parent=11 // pred_region
        %s156 = smul.u32 16, %s21
        %p157 = scmp.lt.s32.totalorder %s156, 15
        %s158 = scalar_select %p157, %s156, 15
        %p159 = scmp.lt.s32.totalorder %s20, 0
        %s160 = scalar_select %p159, %s20, 0
        %s161 = sadd.s32 %s160, %s158
        %s162 = smul.addr %s161, 4
        %s163 = scalar_lea.vmem %s1, %s162
        %s164 = smul.u32 16, %s21
      $region16: #{_lambda_.76} parent=11 // pred_fallthru
        _
      // Predicated region
      $region17: #{_lambda_.76} parent=11 // pred_check
        %p165 = pneg %p110
      $region18: #{_lambda_.76} parent=11 // pred_check_branch
        %167 = sbr.rel (%p165) target = $region20
      $region19: #{_lambda_.76} parent=11 // pred_region
        %p168 = scmp.lt.s32.totalorder %s20, 0
        %s169 = scalar_select %p168, %s20, 0
        %s170 = scalar_lea.vmem %s2, %s169
      $region20: #{_lambda_.76} parent=11 // pred_fallthru
        _
    $region12: #{_lambda_.76} parent=5 // pred_fallthru
      _
    %p171 = scmp.lt.s32.totalorder %s9, 2
    // Predicated region
    $region21: #{_lambda_.76} parent=5 // pred_check
      %p172 = pneg %p171
    $region22: #{_lambda_.76} parent=5 // pred_check_branch
      %174 = sbr.rel (%p172) target = $region24
    $region23: #{_lambda_.76} parent=5 // pred_region
      // Predicated region
      $region25: #{_lambda_.76} parent=23 // pred_check
        %p175 = pneg %p50
      $region26: #{_lambda_.76} parent=23 // pred_check_branch
        %177 = sbr.rel (%p175) target = $region28
      $region27: #{_lambda_.76} parent=23 // pred_region
        %s178 = smul.u32 32, %s16
        %p179 = scmp.lt.s32.totalorder %s178, 63
        %s180 = scalar_select %p179, %s178, 63
        %p181 = scmp.lt.s32.totalorder %s18, 0
        %s182 = scalar_select %p181, %s18, 0
        %s183 = sadd.s32 %s182, %s180
        %s184 = smul.addr %s183, 4
        %s185 = scalar_lea.vmem %s0, %s184
        %s186 = smul.u32 32, %s16
      $region28: #{_lambda_.76} parent=23 // pred_fallthru
        _
    $region24: #{_lambda_.76} parent=5 // pred_fallthru
      _
    %p187 = scmp.le.s32.totalorder 1, %s9
    %p188 = scmp.lt.s32.totalorder %s9, 3
    %p189 = pnand %p187, %p188
    %p190 = pneg %p189
    // Predicated region
    $region29: #{_lambda_.76} parent=5 // pred_check
      _
    $region30: #{_lambda_.76} parent=5 // pred_check_branch
      %192 = sbr.rel (%p189) target = $region32
    $region31: #{_lambda_.76} parent=5 // pred_region
      %s193 = ssub.s32 %s9, 1
      %s194 = smul.u32 32, %s19
      %p195 = scmp.lt.s32.totalorder %s194, 63
      %s196 = scalar_select %p195, %s194, 63
      %p197 = scmp.lt.s32.totalorder %s21, 0
      %s198 = scalar_select %p197, %s21, 0
      %s199 = sadd.s32 %s198, %s196
      %s200 = smul.addr %s199, 4
      %s201 = scalar_lea.vmem %s0, %s200
      %p202 = pneg %p56
      %p203 = pneg %p53
      %s204 = smul.u32 16, %s21
      %p205 = scmp.lt.s32.totalorder %s204, 15
      %s206 = scalar_select %p205, %s204, 15
      %p207 = scmp.lt.s32.totalorder %s20, 0
      %s208 = scalar_select %p207, %s20, 0
      %s209 = sadd.s32 %s208, %s206
      %s210 = smul.addr %s209, 4
      %s211 = scalar_lea.vmem %s1, %s210
      %p212 = pneg %p84
      %p213 = pneg %p81
      %p214 = scmp.lt.s32.totalorder %s20, 0
      %s215 = scalar_select %p214, %s20, 0
      %s216 = scalar_lea.vmem %s2, %s215
      %p217 = pneg %p110
      %p218 = pneg %p107
      %p219 = pneg %p138
      %p220 = pneg %p135
      %s221 = smul.u32 32, %s19
      %p222 = scmp.lt.s32.totalorder %s221, 63
      %s223 = scalar_select %p222, %s221, 63
      %p224 = scmp.lt.s32.totalorder %s20, 0
      %s225 = scalar_select %p224, %s20, 0
      %s226 = sadd.s32 %s225, %s223
      %s227 = smul.addr %s226, 8
      %s228 = scalar_lea.vmem %s3, %s227
      %s229 = smul.u32 32, %s19
      %p230 = scmp.lt.s32.totalorder %s229, 63
      %s231 = scalar_select %p230, %s229, 63
      %p232 = scmp.lt.s32.totalorder %s21, 0
      %s233 = scalar_select %p232, %s21, 0
      %s234 = sadd.s32 %s233, %s231
      %s235 = smul.addr %s234, 4
      %s236 = scalar_lea.vmem %s0, %s235
      %s237 = smul.u32 32, %s19
      %s238 = smul.u32 16, %s21
      %p239 = scmp.lt.s32.totalorder %s238, 15
      %s240 = scalar_select %p239, %s238, 15
      %p241 = scmp.lt.s32.totalorder %s20, 0
      %s242 = scalar_select %p241, %s20, 0
      %s243 = sadd.s32 %s242, %s240
      %s244 = smul.addr %s243, 4
      %s245 = scalar_lea.vmem %s1, %s244
      %s246 = smul.u32 16, %s21
      %p247 = scmp.lt.s32.totalorder %s20, 0
      %s248 = scalar_select %p247, %s20, 0
      %s249 = scalar_lea.vmem %s2, %s248
      %s250 = smul.u32 32, %s19
      %p251 = scmp.lt.s32.totalorder %s250, 63
      %s252 = scalar_select %p251, %s250, 63
      %p253 = scmp.lt.s32.totalorder %s20, 0
      %s254 = scalar_select %p253, %s20, 0
      %s255 = sadd.s32 %s254, %s252
      %s256 = smul.addr %s255, 8
      %s257 = scalar_lea.vmem %s3, %s256
      %s258 = smul.u32 32, %s19
      %p260 = scmp.eq.s32.totalorder %s21, 0
      // Predicated region
      $region33: #{_lambda_.76} parent=31 // pred_check
        %p261 = pneg %p260
      $region34: #{_lambda_.76} parent=31 // pred_check_branch
        %263 = sbr.rel (%p261) target = $region36
      $region35: #{_lambda_.76} parent=31 // pred_region
        %264 = vst [vmem:[#allocation2] sm:$0xff] 0.0
        %265 = vst [vmem:[#allocation2 + $0x8] sm:$0xff] 0.0
        %266 = vst [vmem:[#allocation2 + $0x10] sm:$0xff] 0.0
        %267 = vst [vmem:[#allocation2 + $0x18] sm:$0xff] 0.0
        %268 = vst [vmem:[#allocation2 + $0x20] sm:$0xff] 0.0
        %269 = vst [vmem:[#allocation2 + $0x28] sm:$0xff] 0.0
        %270 = vst [vmem:[#allocation2 + $0x30] sm:$0xff] 0.0
        %271 = vst [vmem:[#allocation2 + $0x38] sm:$0xff] 0.0
        %272 = vst [vmem:[#allocation2 + $0x40] sm:$0xff] 0.0
        %273 = vst [vmem:[#allocation2 + $0x48] sm:$0xff] 0.0
        %274 = vst [vmem:[#allocation2 + $0x50] sm:$0xff] 0.0
        %275 = vst [vmem:[#allocation2 + $0x58] sm:$0xff] 0.0
        %276 = vst [vmem:[#allocation2 + $0x60] sm:$0xff] 0.0
        %277 = vst [vmem:[#allocation2 + $0x68] sm:$0xff] 0.0
        %278 = vst [vmem:[#allocation2 + $0x70] sm:$0xff] 0.0
        %279 = vst [vmem:[#allocation2 + $0x78] sm:$0xff] 0.0
        %280 = vst [vmem:[#allocation2 + $0x80] sm:$0xff] 0.0
        %281 = vst [vmem:[#allocation2 + $0x88] sm:$0xff] 0.0
        %282 = vst [vmem:[#allocation2 + $0x90] sm:$0xff] 0.0
        %283 = vst [vmem:[#allocation2 + $0x98] sm:$0xff] 0.0
        %284 = vst [vmem:[#allocation2 + $0xa0] sm:$0xff] 0.0
        %285 = vst [vmem:[#allocation2 + $0xa8] sm:$0xff] 0.0
        %286 = vst [vmem:[#allocation2 + $0xb0] sm:$0xff] 0.0
        %287 = vst [vmem:[#allocation2 + $0xb8] sm:$0xff] 0.0
        %288 = vst [vmem:[#allocation2 + $0xc0] sm:$0xff] 0.0
        %289 = vst [vmem:[#allocation2 + $0xc8] sm:$0xff] 0.0
        %290 = vst [vmem:[#allocation2 + $0xd0] sm:$0xff] 0.0
        %291 = vst [vmem:[#allocation2 + $0xd8] sm:$0xff] 0.0
        %292 = vst [vmem:[#allocation2 + $0xe0] sm:$0xff] 0.0
        %293 = vst [vmem:[#allocation2 + $0xe8] sm:$0xff] 0.0
        %294 = vst [vmem:[#allocation2 + $0xf0] sm:$0xff] 0.0
        %295 = vst [vmem:[#allocation2 + $0xf8] sm:$0xff] 0.0
      $region36: #{_lambda_.76} parent=31 // pred_fallthru
        _
      %v296 = vld [vmem:[%s236] sm:$0xf]
      %v297 = vld [vmem:[%s236 + $0x4] sm:$0xf]
      %v298 = vld [vmem:[%s236 + $0x8] sm:$0xf]
      %v299 = vld [vmem:[%s236 + $0xc] sm:$0xf]
      %v300 = vld [vmem:[%s236 + $0x10] sm:$0xf]
      %v301 = vld [vmem:[%s236 + $0x14] sm:$0xf]
      %v302 = vld [vmem:[%s236 + $0x18] sm:$0xf]
      %v303 = vld [vmem:[%s236 + $0x1c] sm:$0xf]
      %v304 = vld [vmem:[%s236 + $0x20] sm:$0xf]
      %v305 = vld [vmem:[%s236 + $0x24] sm:$0xf]
      %v306 = vld [vmem:[%s236 + $0x28] sm:$0xf]
      %v307 = vld [vmem:[%s236 + $0x2c] sm:$0xf]
      %v308 = vld [vmem:[%s236 + $0x30] sm:$0xf]
      %v309 = vld [vmem:[%s236 + $0x34] sm:$0xf]
      %v310 = vld [vmem:[%s236 + $0x38] sm:$0xf]
      %v311 = vld [vmem:[%s236 + $0x3c] sm:$0xf]
      %v312 = vld [vmem:[%s236 + $0x40] sm:$0xf]
      %v313 = vld [vmem:[%s236 + $0x44] sm:$0xf]
      %v314 = vld [vmem:[%s236 + $0x48] sm:$0xf]
      %v315 = vld [vmem:[%s236 + $0x4c] sm:$0xf]
      %v316 = vld [vmem:[%s236 + $0x50] sm:$0xf]
      %v317 = vld [vmem:[%s236 + $0x54] sm:$0xf]
      %v318 = vld [vmem:[%s236 + $0x58] sm:$0xf]
      %v319 = vld [vmem:[%s236 + $0x5c] sm:$0xf]
      %v320 = vld [vmem:[%s236 + $0x60] sm:$0xf]
      %v321 = vld [vmem:[%s236 + $0x64] sm:$0xf]
      %v322 = vld [vmem:[%s236 + $0x68] sm:$0xf]
      %v323 = vld [vmem:[%s236 + $0x6c] sm:$0xf]
      %v324 = vld [vmem:[%s236 + $0x70] sm:$0xf]
      %v325 = vld [vmem:[%s236 + $0x74] sm:$0xf]
      %v326 = vld [vmem:[%s236 + $0x78] sm:$0xf]
      %v327 = vld [vmem:[%s236 + $0x7c] sm:$0xf]
      %v328 = vmax.bf16 %v296, 0
      %v329 = vmax.bf16 %v297, 0
      %v330 = vmax.bf16 %v298, 0
      %v331 = vmax.bf16 %v299, 0
      %v332 = vmax.bf16 %v300, 0
      %v333 = vmax.bf16 %v301, 0
      %v334 = vmax.bf16 %v302, 0
      %v335 = vmax.bf16 %v303, 0
      %v336 = vmax.bf16 %v304, 0
      %v337 = vmax.bf16 %v305, 0
      %v338 = vmax.bf16 %v306, 0
      %v339 = vmax.bf16 %v307, 0
      %v340 = vmax.bf16 %v308, 0
      %v341 = vmax.bf16 %v309, 0
      %v342 = vmax.bf16 %v310, 0
      %v343 = vmax.bf16 %v311, 0
      %v344 = vmax.bf16 %v312, 0
      %v345 = vmax.bf16 %v313, 0
      %v346 = vmax.bf16 %v314, 0
      %v347 = vmax.bf16 %v315, 0
      %v348 = vmax.bf16 %v316, 0
      %v349 = vmax.bf16 %v317, 0
      %v350 = vmax.bf16 %v318, 0
      %v351 = vmax.bf16 %v319, 0
      %v352 = vmax.bf16 %v320, 0
      %v353 = vmax.bf16 %v321, 0
      %v354 = vmax.bf16 %v322, 0
      %v355 = vmax.bf16 %v323, 0
      %v356 = vmax.bf16 %v324, 0
      %v357 = vmax.bf16 %v325, 0
      %v358 = vmax.bf16 %v326, 0
      %v359 = vmax.bf16 %v327, 0
      %v360 = vld [vmem:[#allocation2] sm:$0xff]
      %v361 = vld [vmem:[#allocation2 + $0x8] sm:$0xff]
      %v362 = vld [vmem:[#allocation2 + $0x10] sm:$0xff]
      %v363 = vld [vmem:[#allocation2 + $0x18] sm:$0xff]
      %v364 = vld [vmem:[#allocation2 + $0x20] sm:$0xff]
      %v365 = vld [vmem:[#allocation2 + $0x28] sm:$0xff]
      %v366 = vld [vmem:[#allocation2 + $0x30] sm:$0xff]
      %v367 = vld [vmem:[#allocation2 + $0x38] sm:$0xff]
      %v368 = vld [vmem:[#allocation2 + $0x40] sm:$0xff]
      %v369 = vld [vmem:[#allocation2 + $0x48] sm:$0xff]
      %v370 = vld [vmem:[#allocation2 + $0x50] sm:$0xff]
      %v371 = vld [vmem:[#allocation2 + $0x58] sm:$0xff]
      %v372 = vld [vmem:[#allocation2 + $0x60] sm:$0xff]
      %v373 = vld [vmem:[#allocation2 + $0x68] sm:$0xff]
      %v374 = vld [vmem:[#allocation2 + $0x70] sm:$0xff]
      %v375 = vld [vmem:[#allocation2 + $0x78] sm:$0xff]
      %v376 = vld [vmem:[#allocation2 + $0x80] sm:$0xff]
      %v377 = vld [vmem:[#allocation2 + $0x88] sm:$0xff]
      %v378 = vld [vmem:[#allocation2 + $0x90] sm:$0xff]
      %v379 = vld [vmem:[#allocation2 + $0x98] sm:$0xff]
      %v380 = vld [vmem:[#allocation2 + $0xa0] sm:$0xff]
      %v381 = vld [vmem:[#allocation2 + $0xa8] sm:$0xff]
      %v382 = vld [vmem:[#allocation2 + $0xb0] sm:$0xff]
      %v383 = vld [vmem:[#allocation2 + $0xb8] sm:$0xff]
      %v384 = vld [vmem:[#allocation2 + $0xc0] sm:$0xff]
      %v385 = vld [vmem:[#allocation2 + $0xc8] sm:$0xff]
      %v386 = vld [vmem:[#allocation2 + $0xd0] sm:$0xff]
      %v387 = vld [vmem:[#allocation2 + $0xd8] sm:$0xff]
      %v388 = vld [vmem:[#allocation2 + $0xe0] sm:$0xff]
      %v389 = vld [vmem:[#allocation2 + $0xe8] sm:$0xff]
      %v390 = vld [vmem:[#allocation2 + $0xf0] sm:$0xff]
      %v391 = vld [vmem:[#allocation2 + $0xf8] sm:$0xff]
      %v392 = vld [vmem:[%s245] sm:$0xf]
      %v393 = vld [vmem:[%s245 + $0x4] sm:$0xf]
      %v394 = vld [vmem:[%s245 + $0x8] sm:$0xf]
      %v395 = vld [vmem:[%s245 + $0xc] sm:$0xf]
      %v396 = vld [vmem:[%s245 + $0x10] sm:$0xf]
      %v397 = vld [vmem:[%s245 + $0x14] sm:$0xf]
      %v398 = vld [vmem:[%s245 + $0x18] sm:$0xf]
      %v399 = vld [vmem:[%s245 + $0x1c] sm:$0xf]
      %v400 = vld [vmem:[%s245 + $0x20] sm:$0xf]
      %v401 = vld [vmem:[%s245 + $0x24] sm:$0xf]
      %v402 = vld [vmem:[%s245 + $0x28] sm:$0xf]
      %v403 = vld [vmem:[%s245 + $0x2c] sm:$0xf]
      %v404 = vld [vmem:[%s245 + $0x30] sm:$0xf]
      %v405 = vld [vmem:[%s245 + $0x34] sm:$0xf]
      %v406 = vld [vmem:[%s245 + $0x38] sm:$0xf]
      %v407 = vld [vmem:[%s245 + $0x3c] sm:$0xf]
      %v440 = vunpack.c.l.b16 %v328
      %v441 = vunpack.c.l.b16 %v329
      %v442 = vunpack.c.l.b16 %v330
      %v443 = vunpack.c.l.b16 %v331
      %v444 = vunpack.c.l.b16 %v332
      %v445 = vunpack.c.l.b16 %v333
      %v446 = vunpack.c.l.b16 %v334
      %v447 = vunpack.c.l.b16 %v335
      %v448 = vunpack.c.l.b16 %v336
      %v449 = vunpack.c.l.b16 %v337
      %v450 = vunpack.c.l.b16 %v338
      %v451 = vunpack.c.l.b16 %v339
      %v452 = vunpack.c.l.b16 %v340
      %v453 = vunpack.c.l.b16 %v341
      %v454 = vunpack.c.l.b16 %v342
      %v455 = vunpack.c.l.b16 %v343
      %v456 = vunpack.c.l.b16 %v344
      %v457 = vunpack.c.l.b16 %v345
      %v458 = vunpack.c.l.b16 %v346
      %v459 = vunpack.c.l.b16 %v347
      %v460 = vunpack.c.l.b16 %v348
      %v461 = vunpack.c.l.b16 %v349
      %v462 = vunpack.c.l.b16 %v350
      %v463 = vunpack.c.l.b16 %v351
      %v464 = vunpack.c.l.b16 %v352
      %v465 = vunpack.c.l.b16 %v353
      %v466 = vunpack.c.l.b16 %v354
      %v467 = vunpack.c.l.b16 %v355
      %v468 = vunpack.c.l.b16 %v356
      %v469 = vunpack.c.l.b16 %v357
      %v470 = vunpack.c.l.b16 %v358
      %v471 = vunpack.c.l.b16 %v359
      %v472 = vpack.c.b16 %v441, %v440
      %v473 = vpack.c.b16 %v443, %v442
      %v474 = vpack.c.b16 %v445, %v444
      %v475 = vpack.c.b16 %v447, %v446
      %v476 = vpack.c.b16 %v449, %v448
      %v477 = vpack.c.b16 %v451, %v450
      %v478 = vpack.c.b16 %v453, %v452
      %v479 = vpack.c.b16 %v455, %v454
      %v480 = vpack.c.b16 %v457, %v456
      %v481 = vpack.c.b16 %v459, %v458
      %v482 = vpack.c.b16 %v461, %v460
      %v483 = vpack.c.b16 %v463, %v462
      %v484 = vpack.c.b16 %v465, %v464
      %v485 = vpack.c.b16 %v467, %v466
      %v486 = vpack.c.b16 %v469, %v468
      %v487 = vpack.c.b16 %v471, %v470
      %v520 = vunpack.c.l.b16 %v392
      %v521 = vunpack.c.l.b16 %v393
      %v522 = vunpack.c.l.b16 %v394
      %v523 = vunpack.c.l.b16 %v395
      %v524 = vunpack.c.l.b16 %v396
      %v525 = vunpack.c.l.b16 %v397
      %v526 = vunpack.c.l.b16 %v398
      %v527 = vunpack.c.l.b16 %v399
      %v528 = vunpack.c.l.b16 %v400
      %v529 = vunpack.c.l.b16 %v401
      %v530 = vunpack.c.l.b16 %v402
      %v531 = vunpack.c.l.b16 %v403
      %v532 = vunpack.c.l.b16 %v404
      %v533 = vunpack.c.l.b16 %v405
      %v534 = vunpack.c.l.b16 %v406
      %v535 = vunpack.c.l.b16 %v407
      %v536 = vpack.c.b16 %v521, %v520
      %v537 = vpack.c.b16 %v523, %v522
      %v538 = vpack.c.b16 %v525, %v524
      %v539 = vpack.c.b16 %v527, %v526
      %v540 = vpack.c.b16 %v529, %v528
      %v541 = vpack.c.b16 %v531, %v530
      %v542 = vpack.c.b16 %v533, %v532
      %v543 = vpack.c.b16 %v535, %v534
      %552 = vmatprep.subr.bf16.mxu0 0
      %553 = vmatpush1.bf16.msra.mxu0 %v543
      %554 = vmatprep.subr.bf16.mxu0 0
      %555 = vmatpush1.bf16.msra.mxu0 %v542
      %556 = vmatprep.subr.bf16.mxu0 0
      %557 = vmatpush1.bf16.msra.mxu0 %v541
      %558 = vmatprep.subr.bf16.mxu0 0
      %559 = vmatpush1.bf16.msra.mxu0 %v540
      %560 = vmatprep.subr.bf16.mxu0 0
      %561 = vmatpush1.bf16.msra.mxu0 %v539
      %562 = vmatprep.subr.bf16.mxu0 0
      %563 = vmatpush1.bf16.msra.mxu0 %v538
      %564 = vmatprep.subr.bf16.mxu0 0
      %565 = vmatpush1.bf16.msra.mxu0 %v537
      %566 = vmatprep.subr.bf16.mxu0 0
      %567 = vmatpush1.bf16.msra.mxu0 %v536
      %568 = vmatprep.subr.bf16.mxu0 0
      %569 = vmatpush2.bf16.msra.mxu0 0
      %570 = vmatprep.subr.bf16.mxu0 0
      %571 = vmatpush2.bf16.msra.mxu0 0
      %572 = vmatprep.subr.bf16.mxu0 0
      %573 = vmatpush2.bf16.msra.mxu0 0
      %574 = vmatprep.subr.bf16.mxu0 0
      %575 = vmatpush2.bf16.msra.mxu0 0
      %576 = vmatprep.subr.bf16.mxu0 0
      %577 = vmatpush2.bf16.msra.mxu0 0
      %578 = vmatprep.subr.bf16.mxu0 0
      %579 = vmatpush2.bf16.msra.mxu0 0
      %580 = vmatprep.subr.bf16.mxu0 0
      %581 = vmatpush2.bf16.msra.mxu0 0
      %582 = vmatprep.subr.bf16.mxu0 0
      %583 = vmatpush2.bf16.msra.mxu0 0
      %584 = vmatprep.mubr.bf16.mxu0 0
      %585 = vmatmul.mubr.bf16.gmra.mxu0 %v472
      %v586 = vpop.f32.mrf.mxu0
      %v587 = vadd.f32 0.0, %v586
      %v588 = vpop.f32.mrf.mxu0
      %v589 = vpop.f32.mrf.mxu0
      %v590 = vadd.f32 0.0, %v589
      %v591 = vpop.f32.mrf.mxu0
      %592 = vmatprep.mubr.bf16.mxu0 0
      %593 = vmatmul.mubr.bf16.gmra.mxu0 %v473
      %v594 = vpop.f32.mrf.mxu0
      %v595 = vadd.f32 0.0, %v594
      %v596 = vpop.f32.mrf.mxu0
      %v597 = vpop.f32.mrf.mxu0
      %v598 = vadd.f32 0.0, %v597
      %v599 = vpop.f32.mrf.mxu0
      %600 = vmatprep.mubr.bf16.mxu0 0
      %601 = vmatmul.mubr.bf16.gmra.mxu0 %v474
      %v602 = vpop.f32.mrf.mxu0
      %v603 = vadd.f32 0.0, %v602
      %v604 = vpop.f32.mrf.mxu0
      %v605 = vpop.f32.mrf.mxu0
      %v606 = vadd.f32 0.0, %v605
      %v607 = vpop.f32.mrf.mxu0
      %608 = vmatprep.mubr.bf16.mxu0 0
      %609 = vmatmul.mubr.bf16.gmra.mxu0 %v475
      %v610 = vpop.f32.mrf.mxu0
      %v611 = vadd.f32 0.0, %v610
      %v612 = vpop.f32.mrf.mxu0
      %v613 = vpop.f32.mrf.mxu0
      %v614 = vadd.f32 0.0, %v613
      %v615 = vpop.f32.mrf.mxu0
      %616 = vmatprep.mubr.bf16.mxu0 0
      %617 = vmatmul.mubr.bf16.gmra.mxu0 %v476
      %v618 = vpop.f32.mrf.mxu0
      %v619 = vadd.f32 0.0, %v618
      %v620 = vpop.f32.mrf.mxu0
      %v621 = vpop.f32.mrf.mxu0
      %v622 = vadd.f32 0.0, %v621
      %v623 = vpop.f32.mrf.mxu0
      %624 = vmatprep.mubr.bf16.mxu0 0
      %625 = vmatmul.mubr.bf16.gmra.mxu0 %v477
      %v626 = vpop.f32.mrf.mxu0
      %v627 = vadd.f32 0.0, %v626
      %v628 = vpop.f32.mrf.mxu0
      %v629 = vpop.f32.mrf.mxu0
      %v630 = vadd.f32 0.0, %v629
      %v631 = vpop.f32.mrf.mxu0
      %632 = vmatprep.mubr.bf16.mxu0 0
      %633 = vmatmul.mubr.bf16.gmra.mxu0 %v478
      %v634 = vpop.f32.mrf.mxu0
      %v635 = vadd.f32 0.0, %v634
      %v636 = vpop.f32.mrf.mxu0
      %v637 = vpop.f32.mrf.mxu0
      %v638 = vadd.f32 0.0, %v637
      %v639 = vpop.f32.mrf.mxu0
      %640 = vmatprep.mubr.bf16.mxu0 0
      %641 = vmatmul.mubr.bf16.gmra.mxu0 %v479
      %v642 = vpop.f32.mrf.mxu0
      %v643 = vadd.f32 0.0, %v642
      %v644 = vpop.f32.mrf.mxu0
      %v645 = vpop.f32.mrf.mxu0
      %v646 = vadd.f32 0.0, %v645
      %v647 = vpop.f32.mrf.mxu0
      %648 = vmatprep.mubr.bf16.mxu0 0
      %649 = vmatmul.mubr.bf16.gmra.mxu0 %v480
      %v650 = vpop.f32.mrf.mxu0
      %v651 = vadd.f32 0.0, %v650
      %v652 = vpop.f32.mrf.mxu0
      %v653 = vpop.f32.mrf.mxu0
      %v654 = vadd.f32 0.0, %v653
      %v655 = vpop.f32.mrf.mxu0
      %656 = vmatprep.mubr.bf16.mxu0 0
      %657 = vmatmul.mubr.bf16.gmra.mxu0 %v481
      %v658 = vpop.f32.mrf.mxu0
      %v659 = vadd.f32 0.0, %v658
      %v660 = vpop.f32.mrf.mxu0
      %v661 = vpop.f32.mrf.mxu0
      %v662 = vadd.f32 0.0, %v661
      %v663 = vpop.f32.mrf.mxu0
      %664 = vmatprep.mubr.bf16.mxu0 0
      %665 = vmatmul.mubr.bf16.gmra.mxu0 %v482
      %v666 = vpop.f32.mrf.mxu0
      %v667 = vadd.f32 0.0, %v666
      %v668 = vpop.f32.mrf.mxu0
      %v669 = vpop.f32.mrf.mxu0
      %v670 = vadd.f32 0.0, %v669
      %v671 = vpop.f32.mrf.mxu0
      %672 = vmatprep.mubr.bf16.mxu0 0
      %673 = vmatmul.mubr.bf16.gmra.mxu0 %v483
      %v674 = vpop.f32.mrf.mxu0
      %v675 = vadd.f32 0.0, %v674
      %v676 = vpop.f32.mrf.mxu0
      %v677 = vpop.f32.mrf.mxu0
      %v678 = vadd.f32 0.0, %v677
      %v679 = vpop.f32.mrf.mxu0
      %680 = vmatprep.mubr.bf16.mxu0 0
      %681 = vmatmul.mubr.bf16.gmra.mxu0 %v484
      %v682 = vpop.f32.mrf.mxu0
      %v683 = vadd.f32 0.0, %v682
      %v684 = vpop.f32.mrf.mxu0
      %v685 = vpop.f32.mrf.mxu0
      %v686 = vadd.f32 0.0, %v685
      %v687 = vpop.f32.mrf.mxu0
      %688 = vmatprep.mubr.bf16.mxu0 0
      %689 = vmatmul.mubr.bf16.gmra.mxu0 %v485
      %v690 = vpop.f32.mrf.mxu0
      %v691 = vadd.f32 0.0, %v690
      %v692 = vpop.f32.mrf.mxu0
      %v693 = vpop.f32.mrf.mxu0
      %v694 = vadd.f32 0.0, %v693
      %v695 = vpop.f32.mrf.mxu0
      %696 = vmatprep.mubr.bf16.mxu0 0
      %697 = vmatmul.mubr.bf16.gmra.mxu0 %v486
      %v698 = vpop.f32.mrf.mxu0
      %v699 = vadd.f32 0.0, %v698
      %v700 = vpop.f32.mrf.mxu0
      %v701 = vpop.f32.mrf.mxu0
      %v702 = vadd.f32 0.0, %v701
      %v703 = vpop.f32.mrf.mxu0
      %704 = vmatprep.mubr.bf16.mxu0 0
      %705 = vmatmul.mubr.bf16.gmra.mxu0 %v487
      %v706 = vpop.f32.mrf.mxu0
      %v707 = vadd.f32 0.0, %v706
      %v708 = vpop.f32.mrf.mxu0
      %v709 = vpop.f32.mrf.mxu0
      %v710 = vadd.f32 0.0, %v709
      %v711 = vpop.f32.mrf.mxu0
      %712 = vdwg.mxu0
      %v713 = vadd.f32 %v360, %v587
      %v714 = vadd.f32 %v361, %v590
      %v715 = vadd.f32 %v362, %v595
      %v716 = vadd.f32 %v363, %v598
      %v717 = vadd.f32 %v364, %v603
      %v718 = vadd.f32 %v365, %v606
      %v719 = vadd.f32 %v366, %v611
      %v720 = vadd.f32 %v367, %v614
      %v721 = vadd.f32 %v368, %v619
      %v722 = vadd.f32 %v369, %v622
      %v723 = vadd.f32 %v370, %v627
      %v724 = vadd.f32 %v371, %v630
      %v725 = vadd.f32 %v372, %v635
      %v726 = vadd.f32 %v373, %v638
      %v727 = vadd.f32 %v374, %v643
      %v728 = vadd.f32 %v375, %v646
      %v729 = vadd.f32 %v376, %v651
      %v730 = vadd.f32 %v377, %v654
      %v731 = vadd.f32 %v378, %v659
      %v732 = vadd.f32 %v379, %v662
      %v733 = vadd.f32 %v380, %v667
      %v734 = vadd.f32 %v381, %v670
      %v735 = vadd.f32 %v382, %v675
      %v736 = vadd.f32 %v383, %v678
      %v737 = vadd.f32 %v384, %v683
      %v738 = vadd.f32 %v385, %v686
      %v739 = vadd.f32 %v386, %v691
      %v740 = vadd.f32 %v387, %v694
      %v741 = vadd.f32 %v388, %v699
      %v742 = vadd.f32 %v389, %v702
      %v743 = vadd.f32 %v390, %v707
      %v744 = vadd.f32 %v391, %v710
      %745 = vst [vmem:[#allocation2] sm:$0xff] %v713
      %746 = vst [vmem:[#allocation2 + $0x8] sm:$0xff] %v714
      %747 = vst [vmem:[#allocation2 + $0x10] sm:$0xff] %v715
      %748 = vst [vmem:[#allocation2 + $0x18] sm:$0xff] %v716
      %749 = vst [vmem:[#allocation2 + $0x20] sm:$0xff] %v717
      %750 = vst [vmem:[#allocation2 + $0x28] sm:$0xff] %v718
      %751 = vst [vmem:[#allocation2 + $0x30] sm:$0xff] %v719
      %752 = vst [vmem:[#allocation2 + $0x38] sm:$0xff] %v720
      %753 = vst [vmem:[#allocation2 + $0x40] sm:$0xff] %v721
      %754 = vst [vmem:[#allocation2 + $0x48] sm:$0xff] %v722
      %755 = vst [vmem:[#allocation2 + $0x50] sm:$0xff] %v723
      %756 = vst [vmem:[#allocation2 + $0x58] sm:$0xff] %v724
      %757 = vst [vmem:[#allocation2 + $0x60] sm:$0xff] %v725
      %758 = vst [vmem:[#allocation2 + $0x68] sm:$0xff] %v726
      %759 = vst [vmem:[#allocation2 + $0x70] sm:$0xff] %v727
      %760 = vst [vmem:[#allocation2 + $0x78] sm:$0xff] %v728
      %761 = vst [vmem:[#allocation2 + $0x80] sm:$0xff] %v729
      %762 = vst [vmem:[#allocation2 + $0x88] sm:$0xff] %v730
      %763 = vst [vmem:[#allocation2 + $0x90] sm:$0xff] %v731
      %764 = vst [vmem:[#allocation2 + $0x98] sm:$0xff] %v732
      %765 = vst [vmem:[#allocation2 + $0xa0] sm:$0xff] %v733
      %766 = vst [vmem:[#allocation2 + $0xa8] sm:$0xff] %v734
      %767 = vst [vmem:[#allocation2 + $0xb0] sm:$0xff] %v735
      %768 = vst [vmem:[#allocation2 + $0xb8] sm:$0xff] %v736
      %769 = vst [vmem:[#allocation2 + $0xc0] sm:$0xff] %v737
      %770 = vst [vmem:[#allocation2 + $0xc8] sm:$0xff] %v738
      %771 = vst [vmem:[#allocation2 + $0xd0] sm:$0xff] %v739
      %772 = vst [vmem:[#allocation2 + $0xd8] sm:$0xff] %v740
      %773 = vst [vmem:[#allocation2 + $0xe0] sm:$0xff] %v741
      %774 = vst [vmem:[#allocation2 + $0xe8] sm:$0xff] %v742
      %775 = vst [vmem:[#allocation2 + $0xf0] sm:$0xff] %v743
      %776 = vst [vmem:[#allocation2 + $0xf8] sm:$0xff] %v744
      // Predicated region
      $region37: #{_lambda_.76} parent=31 // pred_check
        %p777 = pneg %p260
      $region38: #{_lambda_.76} parent=31 // pred_check_branch
        %779 = sbr.rel (%p777) target = $region40
      $region39: #{_lambda_.76} parent=31 // pred_region
        %v780 = vld [vmem:[#allocation2] sm:$0xff]
        %v781 = vld [vmem:[#allocation2 + $0x8] sm:$0xff]
        %v782 = vld [vmem:[#allocation2 + $0x10] sm:$0xff]
        %v783 = vld [vmem:[#allocation2 + $0x18] sm:$0xff]
        %v784 = vld [vmem:[#allocation2 + $0x20] sm:$0xff]
        %v785 = vld [vmem:[#allocation2 + $0x28] sm:$0xff]
        %v786 = vld [vmem:[#allocation2 + $0x30] sm:$0xff]
        %v787 = vld [vmem:[#allocation2 + $0x38] sm:$0xff]
        %v788 = vld [vmem:[#allocation2 + $0x40] sm:$0xff]
        %v789 = vld [vmem:[#allocation2 + $0x48] sm:$0xff]
        %v790 = vld [vmem:[#allocation2 + $0x50] sm:$0xff]
        %v791 = vld [vmem:[#allocation2 + $0x58] sm:$0xff]
        %v792 = vld [vmem:[#allocation2 + $0x60] sm:$0xff]
        %v793 = vld [vmem:[#allocation2 + $0x68] sm:$0xff]
        %v794 = vld [vmem:[#allocation2 + $0x70] sm:$0xff]
        %v795 = vld [vmem:[#allocation2 + $0x78] sm:$0xff]
        %v796 = vld [vmem:[#allocation2 + $0x80] sm:$0xff]
        %v797 = vld [vmem:[#allocation2 + $0x88] sm:$0xff]
        %v798 = vld [vmem:[#allocation2 + $0x90] sm:$0xff]
        %v799 = vld [vmem:[#allocation2 + $0x98] sm:$0xff]
        %v800 = vld [vmem:[#allocation2 + $0xa0] sm:$0xff]
        %v801 = vld [vmem:[#allocation2 + $0xa8] sm:$0xff]
        %v802 = vld [vmem:[#allocation2 + $0xb0] sm:$0xff]
        %v803 = vld [vmem:[#allocation2 + $0xb8] sm:$0xff]
        %v804 = vld [vmem:[#allocation2 + $0xc0] sm:$0xff]
        %v805 = vld [vmem:[#allocation2 + $0xc8] sm:$0xff]
        %v806 = vld [vmem:[#allocation2 + $0xd0] sm:$0xff]
        %v807 = vld [vmem:[#allocation2 + $0xd8] sm:$0xff]
        %v808 = vld [vmem:[#allocation2 + $0xe0] sm:$0xff]
        %v809 = vld [vmem:[#allocation2 + $0xe8] sm:$0xff]
        %v810 = vld [vmem:[#allocation2 + $0xf0] sm:$0xff]
        %v811 = vld [vmem:[#allocation2 + $0xf8] sm:$0xff]
        %v812 = vld [vmem:[%s249] sm:$0x1]
        %v814 = vlaneseq
        %v815 = vshrl.u32 %v814, 7
        %v816 = vsub.s32 0, %v815
        %v817 = vrot.slane %v812, %v816
        %v819 = vadd.f32 %v780, %v817
        %v820 = vadd.f32 %v781, %v817
        %v821 = vadd.f32 %v782, %v817
        %v822 = vadd.f32 %v783, %v817
        %v823 = vadd.f32 %v784, %v817
        %v824 = vadd.f32 %v785, %v817
        %v825 = vadd.f32 %v786, %v817
        %v826 = vadd.f32 %v787, %v817
        %v827 = vadd.f32 %v788, %v817
        %v828 = vadd.f32 %v789, %v817
        %v829 = vadd.f32 %v790, %v817
        %v830 = vadd.f32 %v791, %v817
        %v831 = vadd.f32 %v792, %v817
        %v832 = vadd.f32 %v793, %v817
        %v833 = vadd.f32 %v794, %v817
        %v834 = vadd.f32 %v795, %v817
        %v835 = vadd.f32 %v796, %v817
        %v836 = vadd.f32 %v797, %v817
        %v837 = vadd.f32 %v798, %v817
        %v838 = vadd.f32 %v799, %v817
        %v839 = vadd.f32 %v800, %v817
        %v840 = vadd.f32 %v801, %v817
        %v841 = vadd.f32 %v802, %v817
        %v842 = vadd.f32 %v803, %v817
        %v843 = vadd.f32 %v804, %v817
        %v844 = vadd.f32 %v805, %v817
        %v845 = vadd.f32 %v806, %v817
        %v846 = vadd.f32 %v807, %v817
        %v847 = vadd.f32 %v808, %v817
        %v848 = vadd.f32 %v809, %v817
        %v849 = vadd.f32 %v810, %v817
        %v850 = vadd.f32 %v811, %v817
        %v851 = vtanh.pop %v819
        %v852 = vtanh.pop %v820
        %v853 = vtanh.pop %v821
        %v854 = vtanh.pop %v822
        %v855 = vtanh.pop %v823
        %v856 = vtanh.pop %v824
        %v857 = vtanh.pop %v825
        %v858 = vtanh.pop %v826
        %v859 = vtanh.pop %v827
        %v860 = vtanh.pop %v828
        %v861 = vtanh.pop %v829
        %v862 = vtanh.pop %v830
        %v863 = vtanh.pop %v831
        %v864 = vtanh.pop %v832
        %v865 = vtanh.pop %v833
        %v866 = vtanh.pop %v834
        %v867 = vtanh.pop %v835
        %v868 = vtanh.pop %v836
        %v869 = vtanh.pop %v837
        %v870 = vtanh.pop %v838
        %v871 = vtanh.pop %v839
        %v872 = vtanh.pop %v840
        %v873 = vtanh.pop %v841
        %v874 = vtanh.pop %v842
        %v875 = vtanh.pop %v843
        %v876 = vtanh.pop %v844
        %v877 = vtanh.pop %v845
        %v878 = vtanh.pop %v846
        %v879 = vtanh.pop %v847
        %v880 = vtanh.pop %v848
        %v881 = vtanh.pop %v849
        %v882 = vtanh.pop %v850
        %883 = vst [vmem:[%s257] sm:$0xff] %v851
        %884 = vst [vmem:[%s257 + $0x8] sm:$0xff] %v852
        %885 = vst [vmem:[%s257 + $0x10] sm:$0xff] %v853
        %886 = vst [vmem:[%s257 + $0x18] sm:$0xff] %v854
        %887 = vst [vmem:[%s257 + $0x20] sm:$0xff] %v855
        %888 = vst [vmem:[%s257 + $0x28] sm:$0xff] %v856
        %889 = vst [vmem:[%s257 + $0x30] sm:$0xff] %v857
        %890 = vst [vmem:[%s257 + $0x38] sm:$0xff] %v858
        %891 = vst [vmem:[%s257 + $0x40] sm:$0xff] %v859
        %892 = vst [vmem:[%s257 + $0x48] sm:$0xff] %v860
        %893 = vst [vmem:[%s257 + $0x50] sm:$0xff] %v861
        %894 = vst [vmem:[%s257 + $0x58] sm:$0xff] %v862
        %895 = vst [vmem:[%s257 + $0x60] sm:$0xff] %v863
        %896 = vst [vmem:[%s257 + $0x68] sm:$0xff] %v864
        %897 = vst [vmem:[%s257 + $0x70] sm:$0xff] %v865
        %898 = vst [vmem:[%s257 + $0x78] sm:$0xff] %v866
        %899 = vst [vmem:[%s257 + $0x80] sm:$0xff] %v867
        %900 = vst [vmem:[%s257 + $0x88] sm:$0xff] %v868
        %901 = vst [vmem:[%s257 + $0x90] sm:$0xff] %v869
        %902 = vst [vmem:[%s257 + $0x98] sm:$0xff] %v870
        %903 = vst [vmem:[%s257 + $0xa0] sm:$0xff] %v871
        %904 = vst [vmem:[%s257 + $0xa8] sm:$0xff] %v872
        %905 = vst [vmem:[%s257 + $0xb0] sm:$0xff] %v873
        %906 = vst [vmem:[%s257 + $0xb8] sm:$0xff] %v874
        %907 = vst [vmem:[%s257 + $0xc0] sm:$0xff] %v875
        %908 = vst [vmem:[%s257 + $0xc8] sm:$0xff] %v876
        %909 = vst [vmem:[%s257 + $0xd0] sm:$0xff] %v877
        %910 = vst [vmem:[%s257 + $0xd8] sm:$0xff] %v878
        %911 = vst [vmem:[%s257 + $0xe0] sm:$0xff] %v879
        %912 = vst [vmem:[%s257 + $0xe8] sm:$0xff] %v880
        %913 = vst [vmem:[%s257 + $0xf0] sm:$0xff] %v881
        %914 = vst [vmem:[%s257 + $0xf8] sm:$0xff] %v882
      $region40: #{_lambda_.76} parent=31 // pred_fallthru
        _
      %s915 = smul.u32 32, %s19
      %p916 = scmp.lt.s32.totalorder %s915, 63
      %s917 = scalar_select %p916, %s915, 63
      %p918 = scmp.lt.s32.totalorder %s20, 0
      %s919 = scalar_select %p918, %s20, 0
      %s920 = sadd.s32 %s919, %s917
      %s921 = smul.addr %s920, 8
      %s922 = scalar_lea.vmem %s3, %s921
      // Predicated region
      $region41: #{_lambda_.76} parent=31 // pred_check
        %p923 = pneg %p135
      $region42: #{_lambda_.76} parent=31 // pred_check_branch
        %925 = sbr.rel (%p923) target = $region44
      $region43: #{_lambda_.76} parent=31 // pred_region
        %s926 = smul.u32 32, %s19
      $region44: #{_lambda_.76} parent=31 // pred_fallthru
        _
    $region32: #{_lambda_.76} parent=5 // pred_fallthru
      _
    %p927 = scmp.le.s32.totalorder 2, %s9
    // Predicated region
    $region45: #{_lambda_.76} parent=5 // pred_check
      %p928 = pneg %p927
    $region46: #{_lambda_.76} parent=5 // pred_check_branch
      %930 = sbr.rel (%p928) target = $region48
    $region47: #{_lambda_.76} parent=5 // pred_region
      %s931 = ssub.s32 %s9, 2
      // Predicated region
      $region49: #{_lambda_.76} parent=47 // pred_check
        %p932 = pneg %p141
      $region50: #{_lambda_.76} parent=47 // pred_check_branch
        %934 = sbr.rel (%p932) target = $region52
      $region51: #{_lambda_.76} parent=47 // pred_region
        %s935 = smul.u32 32, %s22
        %p936 = scmp.lt.s32.totalorder %s935, 63
        %s937 = scalar_select %p936, %s935, 63
        %p938 = scmp.lt.s32.totalorder %s23, 0
        %s939 = scalar_select %p938, %s23, 0
        %s940 = sadd.s32 %s939, %s937
        %s941 = smul.addr %s940, 8
        %s942 = scalar_lea.vmem %s3, %s941
      $region52: #{_lambda_.76} parent=47 // pred_fallthru
        _
    $region48: #{_lambda_.76} parent=5 // pred_fallthru
      _
  $region6: #{_lambda_.76} parent=0 // loop_footer
    %s13 = sadd.s32 1, %s9
  $region7: #{_lambda_.76} parent=0 // loop_footer_branch
    %8 = sbr.rel target = $region3
  $region8: #{_lambda_.76} parent=0 // loop_exit
    _

</llo_original>
